<compile_context>
chip_gen: v7x
topology: tpu7x:2x2x1
jax: 0.10.0
libtpu: 0.0.40
codegen_flags: <defaults>
</compile_context>

<pallas_src>
import functools

import jax
import jax.numpy as jnp
from jax import lax
from jax.experimental import pallas as pl
from jax.experimental.pallas import tpu as pltpu


# ----------------------------- in-kernel helpers ----------------------------
def _bn_act(x, gamma, beta, *, eps, slope):
    """Training-mode BatchNorm over all-but-last axes (+ optional LeakyReLU).

    One-pass statistics (E[x], E[x^2]) and a folded per-channel scale/shift:
    the large tensor is touched by exactly x*x, x*scale+shift and the
    activation select.  Matches PyTorch training-mode BN (biased variance) up
    to f32 rounding.
    """
    red = tuple(range(x.ndim - 1))
    mean = jnp.mean(x, axis=red, keepdims=True)
    meansq = jnp.mean(x * x, axis=red, keepdims=True)
    var = meansq - mean * mean
    bshape = (1,) * (x.ndim - 1) + (-1,)
    scale = gamma.reshape(bshape) * lax.rsqrt(var + eps)
    shift = beta.reshape(bshape) - mean * scale
    y = x * scale + shift
    if slope is not None:
        y = jnp.where(y >= 0.0, y, slope * y)
    return y


def _upsample2x_nn(x):
    """Nearest-neighbour 2x spatial upsample of an NHWC tensor, in VMEM.

    Built from static unit slices + concatenate only (no minor-dim reshapes),
    so it lowers robustly and never round-trips through HBM.
    """
    B, H, W, C = x.shape
    rows = []
    for h in range(H):
        xh = x[:, h:h + 1, :, :]
        rows.append(xh)
        rows.append(xh)
    x = jnp.concatenate(rows, axis=1)                      # (B, 2H, W, C)
    cols = []
    for w in range(W):
        xw = x[:, :, w:w + 1, :]
        cols.append(xw)
        cols.append(xw)
    return jnp.concatenate(cols, axis=2)                   # (B, 2H, 2W, C)


def _im2col3x3(x):
    """'Same'-padded 3x3 im2col: (B,H,W,Cin) -> (B,H,W,9*Cin).

    Zero padding is built in VMEM via concatenation; the 9 shifted taps are
    merged on the lane axis (tap order (kh, kw, cin)) so the conv becomes a
    single deep-K matmul.
    """
    B, H, W, Cin = x.shape
    zr = jnp.zeros((B, 1, W, Cin), x.dtype)
    xp = jnp.concatenate([zr, x, zr], axis=1)              # (B, H+2, W, Cin)
    zc = jnp.zeros((B, H + 2, 1, Cin), x.dtype)
    xp = jnp.concatenate([zc, xp, zc], axis=2)             # (B, H+2, W+2, Cin)
    taps = [xp[:, dh:dh + H, dw:dw + W, :]
            for dh in range(3) for dw in range(3)]
    return jnp.concatenate(taps, axis=-1)                  # (B, H, W, 9*Cin)


def _conv3x3(x, w, b):
    """3x3 'same' conv as ONE batched MXU matmul, bias fused.

    x: (B,H,W,Cin); w: (9*Cin, Cout) rows ordered (kh, kw, cin); b: (1, Cout).
    The im2col patches are flattened to (B*H*W, 9*Cin) (leading-dim collapse,
    lane dim untouched) so a single matmul covers the whole batch.
    """
    B, H, W, Cin = x.shape
    Cout = w.shape[-1]
    patches = _im2col3x3(x).reshape(B * H * W, 9 * Cin)
    y = jnp.dot(patches, w, preferred_element_type=jnp.float32) + b
    return y.reshape(B, H, W, Cout)


# ------------------------------ fused generator ------------------------------
def _generator_kernel(x_ref, w1_ref, b1_ref,
                      g1_ref, be1_ref,
                      cw1_ref, cb1_ref, g2_ref, be2_ref,
                      cw2_ref, cb2_ref, g3_ref, be3_ref,
                      cw3t_ref, cb3_ref,
                      o_ref, *, B, s):
    C = 128

    # ---- l1: Linear (one MXU matmul). Weight columns are pre-permuted so the
    # 128-channel block of spatial position p = h*s + w is the 128-aligned lane
    # slice [p*128, (p+1)*128); assemble straight into NHWC (B, s, s, 128).
    lin = jnp.dot(x_ref[...], w1_ref[...],
                  preferred_element_type=jnp.float32) + b1_ref[...]
    rows = []
    for hh in range(s):
        cols = [lin[:, None, None, (hh * s + ww) * C:(hh * s + ww + 1) * C]
                for ww in range(s)]
        rows.append(jnp.concatenate(cols, axis=2))         # (B, 1, s, 128)
    h = jnp.concatenate(rows, axis=1)                      # (B, s, s, 128)

    # ---- BatchNorm2d(128)  (default eps=1e-5, no activation)
    h = _bn_act(h, g1_ref[...], be1_ref[...], eps=1e-5, slope=None)

    # ---- Upsample x2 -> Conv(128->128) -> BatchNorm(eps=0.8) -> LeakyReLU(0.2)
    h = _upsample2x_nn(h)                                  # (B, 2s, 2s, 128)
    h = _conv3x3(h, cw1_ref[...], cb1_ref[...])
    h = _bn_act(h, g2_ref[...], be2_ref[...], eps=0.8, slope=0.2)

    # ---- Upsample x2 -> Conv(128->64) -> BatchNorm(eps=0.8) -> LeakyReLU(0.2)
    h = _upsample2x_nn(h)                                  # (B, 4s, 4s, 128)
    h = _conv3x3(h, cw2_ref[...], cb2_ref[...])            # (B, 4s, 4s, 64)
    h = _bn_act(h, g3_ref[...], be3_ref[...], eps=0.8, slope=0.2)

    # ---- Conv(64->channels) + Tanh, emitted lane-dense as (channels, B*H*W)
    # via a single A @ B^T contraction on the MXU; per-image 128-aligned lane
    # slices are stored straight into the (B, channels, H*W) output.
    H = W = 4 * s
    HW = H * W
    Cin3 = h.shape[-1]
    patches = _im2col3x3(h).reshape(B * HW, 9 * Cin3)      # (B*H*W, 9*Cin3)
    w3t = cw3t_ref[...]                                    # (channels, 9*Cin3)
    b3 = cb3_ref[...]                                      # (channels, 1)
    y = lax.dot_general(w3t, patches, (((1,), (1,)), ((), ())),
                        preferred_element_type=jnp.float32)  # (channels, B*H*W)
    y = jnp.tanh(y + b3)
    for bi in range(B):                                    # B is small & static
        o_ref[bi] = y[:, bi * HW:(bi + 1) * HW].astype(o_ref.dtype)


def _zero_map(ndim):
    return lambda *_: (0,) * ndim


def generator_forward(params, noise, labels, code, *, img_size, channels):
    gen_input = jnp.concatenate([noise, labels, code], axis=-1)
    B = gen_input.shape[0]
    s = img_size // 4
    HW = img_size * img_size

    arrays = [
        gen_input,
        params["l1_w"], params["l1_b"],
        params["bn1_g"], params["bn1_b"],
        params["c1_w"], params["c1_b"], params["bn2_g"], params["bn2_b"],
        params["c2_w"], params["c2_b"], params["bn3_g"], params["bn3_b"],
        params["c3_wt"], params["c3_b"],
    ]
    in_specs = [pl.BlockSpec(a.shape, _zero_map(a.ndim)) for a in arrays]

    # NOTE(v7x): grid=(1,) keeps the whole forward on one TensorCore; at B=2
    # that is latency-optimal.  A 2-TC split would need a two-pass BN-stats
    # scheme (batch stats couple the grid), not worth it at these sizes.
    kernel = functools.partial(_generator_kernel, B=B, s=s)
    img_flat = pl.pallas_call(
        kernel,
        out_shape=jax.ShapeDtypeStruct((B, channels, HW), jnp.float32),
        grid=(1,),
        in_specs=in_specs,
        out_specs=pl.BlockSpec((B, channels, HW), lambda i: (0, 0, 0)),
        compiler_params=pltpu.CompilerParams(
            dimension_semantics=("arbitrary",),
            # Whole forward needs < ~8 MiB of live VMEM; the explicit budget
            # leaves headroom and also fits v7x's 64 MiB physical VMEM.
            vmem_limit_bytes=48 * 1024 * 1024,
        ),
    )(*arrays)
    # (B, channels, H*W) -> (B, channels, H, W): pure metadata reshape (NCHW).
    return img_flat.reshape(B, channels, img_size, img_size)


# ----------------------------- parameter setup -------------------------------
def init_params(key, latent_dim, n_classes, code_dim, img_size, channels):
    """Random parameters, pre-converted (host-side, one time) to kernel layouts.

    * l1 weight is stored (in_dim, out_features) with its columns permuted so
      the linear output is already NHWC-ordered (removes view+transpose glue).
    * conv weights are HWIO (torch OIHW -> transpose(2,3,1,0)) flattened to
      (9*Cin, Cout) with row order (kh, kw, cin) matching the im2col taps.
    * the last conv weight is additionally transposed to (channels, 9*Cin) so
      the kernel can emit a lane-dense (channels, B*H*W) image directly.
    """
    input_dim = latent_dim + n_classes + code_dim
    s = img_size // 4
    F = 128 * s * s
    ks = jax.random.split(key, 8)

    l1_w = 0.05 * jax.random.normal(ks[0], (input_dim, F), jnp.float32)
    l1_b = 0.05 * jax.random.normal(ks[1], (F,), jnp.float32)
    # torch feature index after .view(B,128,s,s):  f = c*s*s + (h*s + w)
    # NHWC column index wanted by the kernel:      j = (h*s + w)*128 + c
    p_idx = jnp.arange(s * s)
    c_idx = jnp.arange(128)
    perm = (p_idx[:, None] + c_idx[None, :] * (s * s)).reshape(-1)

    def conv_w(k, cin, cout):
        w_hwio = 0.05 * jax.random.normal(k, (3, 3, cin, cout), jnp.float32)
        return w_hwio.reshape(9 * cin, cout)

    c3_w = conv_w(ks[6], 64, channels)
    return {
        "l1_w": l1_w[:, perm],                    # (D, s*s*128), NHWC columns
        "l1_b": l1_b[perm].reshape(1, F),
        "bn1_g": jnp.ones((1, 128), jnp.float32),
        "bn1_b": jnp.zeros((1, 128), jnp.float32),
        "c1_w": conv_w(ks[2], 128, 128),          # (1152, 128)
        "c1_b": 0.05 * jax.random.normal(ks[3], (1, 128), jnp.float32),
        "bn2_g": jnp.ones((1, 128), jnp.float32),
        "bn2_b": jnp.zeros((1, 128), jnp.float32),
        "c2_w": conv_w(ks[4], 128, 64),           # (1152, 64)
        "c2_b": 0.05 * jax.random.normal(ks[5], (1, 64), jnp.float32),
        "bn3_g": jnp.ones((1, 64), jnp.float32),
        "bn3_b": jnp.zeros((1, 64), jnp.float32),
        "c3_wt": c3_w.T,                          # (channels, 576)
        "c3_b": 0.05 * jax.random.normal(ks[7], (channels, 1), jnp.float32),
    }


# --------------------------- pure-JAX NCHW reference -------------------------
def reference_forward(params, noise, labels, code, *, img_size, channels):
    """Torch-semantics reference (NCHW, lax.conv) built from the stored layouts."""
    x = jnp.concatenate([noise, labels, code], axis=-1)
    B = x.shape[0]
    s = img_size // 4
    p_idx = jnp.arange(s * s)
    c_idx = jnp.arange(128)
    perm = (p_idx[:, None] + c_idx[None, :] * (s * s)).reshape(-1)
    # Undo the NHWC column permutation to recover torch-ordered features.
    w1 = params["l1_w"]
    b1 = params["l1_b"].reshape(-1)
    w1_t = jnp.zeros_like(w1).at[:, perm].set(w1)
    b1_t = jnp.zeros_like(b1).at[perm].set(b1)
    h = (x @ w1_t + b1_t).reshape(B, 128, s, s)            # NCHW

    def bn(h, g, b, eps):
        mean = h.mean(axis=(0, 2, 3), keepdims=True)
        var = ((h - mean) ** 2).mean(axis=(0, 2, 3), keepdims=True)
        return ((h - mean) / jnp.sqrt(var + eps) * g.reshape(1, -1, 1, 1)
                + b.reshape(1, -1, 1, 1))

    def up(h):
        return jnp.repeat(jnp.repeat(h, 2, axis=2), 2, axis=3)

    def conv(h, w_flat, b, cin, cout):
        w_hwio = w_flat.reshape(3, 3, cin, cout)
        y = lax.conv_general_dilated(h, w_hwio, (1, 1), "SAME",
                                     dimension_numbers=("NCHW", "HWIO", "NCHW"))
        return y + b.reshape(1, -1, 1, 1)

    h = bn(h, params["bn1_g"], params["bn1_b"], 1e-5)
    h = up(h)
    h = conv(h, params["c1_w"], params["c1_b"], 128, 128)
    h = bn(h, params["bn2_g"], params["bn2_b"], 0.8)
    h = jnp.where(h >= 0.0, h, 0.2 * h)
    h = up(h)
    h = conv(h, params["c2_w"], params["c2_b"], 128, 64)
    h = bn(h, params["bn3_g"], params["bn3_b"], 0.8)
    h = jnp.where(h >= 0.0, h, 0.2 * h)
    h = conv(h, params["c3_wt"].T, params["c3_b"], 64, channels)
    return jnp.tanh(h)


if __name__ == "__main__":
    latent_dim, n_classes, code_dim, img_size, channels = 8, 4, 2, 16, 3
    batch = 2

    key = jax.random.PRNGKey(0)
    kp, kn, kl, kc = jax.random.split(key, 4)
    params = init_params(kp, latent_dim, n_classes, code_dim, img_size, channels)

    noise = jax.random.normal(kn, (batch, latent_dim), jnp.float32)
    labels = jax.nn.one_hot(
        jax.random.randint(kl, (batch,), 0, n_classes), n_classes,
        dtype=jnp.float32)
    code = jax.random.uniform(kc, (batch, code_dim), jnp.float32,
                              minval=-1.0, maxval=1.0)

    fwd = jax.jit(functools.partial(generator_forward,
                                    img_size=img_size, channels=channels))
    img = fwd(params, noise, labels, code)
    img = jax.block_until_ready(img)
    assert img.shape == (batch, channels, img_size, img_size), img.shape
    assert bool(jnp.all(jnp.isfinite(img)))

    ref = reference_forward(params, noise, labels, code,
                            img_size=img_size, channels=channels)
    ref = jax.block_until_ready(ref)
    assert bool(jnp.allclose(img, ref, atol=2e-3, rtol=2e-3)), float(
        jnp.max(jnp.abs(img - ref)))
    print("KERNEL_OK")
</pallas_src>

<mosaic_0001>
module attributes {stable_mosaic.version = 11 : i64} {
  func.func @_generator_kernel(%arg0: i32, %arg1: memref<2x14xf32, #tpu.memory_space<vmem>>, %arg2: memref<14x2048xf32, #tpu.memory_space<vmem>>, %arg3: memref<1x2048xf32, #tpu.memory_space<vmem>>, %arg4: memref<1x128xf32, #tpu.memory_space<vmem>>, %arg5: memref<1x128xf32, #tpu.memory_space<vmem>>, %arg6: memref<1152x128xf32, #tpu.memory_space<vmem>>, %arg7: memref<1x128xf32, #tpu.memory_space<vmem>>, %arg8: memref<1x128xf32, #tpu.memory_space<vmem>>, %arg9: memref<1x128xf32, #tpu.memory_space<vmem>>, %arg10: memref<1152x64xf32, #tpu.memory_space<vmem>>, %arg11: memref<1x64xf32, #tpu.memory_space<vmem>>, %arg12: memref<1x64xf32, #tpu.memory_space<vmem>>, %arg13: memref<1x64xf32, #tpu.memory_space<vmem>>, %arg14: memref<3x576xf32, #tpu.memory_space<vmem>>, %arg15: memref<3x1xf32, #tpu.memory_space<vmem>>, %arg16: memref<2x3x256xf32, #tpu.memory_space<vmem>>) attributes {dimension_semantics = [#tpu.dimension_semantics<arbitrary>], iteration_bounds = array<i64: 1>, scalar_prefetch = 0 : i64, scratch_operands = 0 : i64, tpu.core_type = #tpu.core_type<tc>, window_params = [{pipeline_mode = #tpu.pipeline_mode<synchronous>, transform_indices = @transform_0, window_bounds = array<i64: 2, 14>}, {pipeline_mode = #tpu.pipeline_mode<synchronous>, transform_indices = @transform_1, window_bounds = array<i64: 14, 2048>}, {pipeline_mode = #tpu.pipeline_mode<synchronous>, transform_indices = @transform_2, window_bounds = array<i64: 1, 2048>}, {pipeline_mode = #tpu.pipeline_mode<synchronous>, transform_indices = @transform_3, window_bounds = array<i64: 1, 128>}, {pipeline_mode = #tpu.pipeline_mode<synchronous>, transform_indices = @transform_4, window_bounds = array<i64: 1, 128>}, {pipeline_mode = #tpu.pipeline_mode<synchronous>, transform_indices = @transform_5, window_bounds = array<i64: 1152, 128>}, {pipeline_mode = #tpu.pipeline_mode<synchronous>, transform_indices = @transform_6, window_bounds = array<i64: 1, 128>}, {pipeline_mode = #tpu.pipeline_mode<synchronous>, transform_indices = @transform_7, window_bounds = array<i64: 1, 128>}, {pipeline_mode = #tpu.pipeline_mode<synchronous>, transform_indices = @transform_8, window_bounds = array<i64: 1, 128>}, {pipeline_mode = #tpu.pipeline_mode<synchronous>, transform_indices = @transform_9, window_bounds = array<i64: 1152, 64>}, {pipeline_mode = #tpu.pipeline_mode<synchronous>, transform_indices = @transform_10, window_bounds = array<i64: 1, 64>}, {pipeline_mode = #tpu.pipeline_mode<synchronous>, transform_indices = @transform_11, window_bounds = array<i64: 1, 64>}, {pipeline_mode = #tpu.pipeline_mode<synchronous>, transform_indices = @transform_12, window_bounds = array<i64: 1, 64>}, {pipeline_mode = #tpu.pipeline_mode<synchronous>, transform_indices = @transform_13, window_bounds = array<i64: 3, 576>}, {pipeline_mode = #tpu.pipeline_mode<synchronous>, transform_indices = @transform_14, window_bounds = array<i64: 3, 1>}, {pipeline_mode = #tpu.pipeline_mode<synchronous>, transform_indices = @transform_15, window_bounds = array<i64: 2, 3, 256>}]} {
    %c0 = arith.constant 0 : index
    %c0_0 = arith.constant 0 : index
    %0 = vector.load %arg1[%c0, %c0_0] : memref<2x14xf32, #tpu.memory_space<vmem>>, vector<2x14xf32>
    %c0_1 = arith.constant 0 : index
    %c0_2 = arith.constant 0 : index
    %1 = vector.load %arg2[%c0_1, %c0_2] : memref<14x2048xf32, #tpu.memory_space<vmem>>, vector<14x2048xf32>
    %cst = arith.constant dense<0.000000e+00> : vector<2x2048xf32>
    %2 = tpu.matmul %0, %1, %cst {dimension_numbers = #tpu.dot_dimension_numbers<[1], [0], [0], [1], [0, 0, 1, 1], [], []>} : vector<2x14xf32>, vector<14x2048xf32>, vector<2x2048xf32> -> vector<2x2048xf32>
    %c0_3 = arith.constant 0 : index
    %c0_4 = arith.constant 0 : index
    %3 = vector.load %arg3[%c0_3, %c0_4] : memref<1x2048xf32, #tpu.memory_space<vmem>>, vector<1x2048xf32>
    %4 = vector.broadcast %3 : vector<1x2048xf32> to vector<2x2048xf32>
    %5 = arith.addf %2, %4 : vector<2x2048xf32>
    %6 = vector.extract_strided_slice %5 {offsets = [0, 0], sizes = [2, 128], strides = [1, 1]} : vector<2x2048xf32> to vector<2x128xf32>
    %7 = vector.shape_cast %6 : vector<2x128xf32> to vector<2x1x1x128xf32>
    %8 = vector.extract_strided_slice %5 {offsets = [0, 128], sizes = [2, 128], strides = [1, 1]} : vector<2x2048xf32> to vector<2x128xf32>
    %9 = vector.shape_cast %8 : vector<2x128xf32> to vector<2x1x1x128xf32>
    %10 = vector.extract_strided_slice %5 {offsets = [0, 256], sizes = [2, 128], strides = [1, 1]} : vector<2x2048xf32> to vector<2x128xf32>
    %11 = vector.shape_cast %10 : vector<2x128xf32> to vector<2x1x1x128xf32>
    %12 = vector.extract_strided_slice %5 {offsets = [0, 384], sizes = [2, 128], strides = [1, 1]} : vector<2x2048xf32> to vector<2x128xf32>
    %13 = vector.shape_cast %12 : vector<2x128xf32> to vector<2x1x1x128xf32>
    %14 = tpu.concatenate %7, %9, %11, %13 in 2 : vector<2x1x1x128xf32>, vector<2x1x1x128xf32>, vector<2x1x1x128xf32>, vector<2x1x1x128xf32> -> vector<2x1x4x128xf32>
    %15 = vector.extract_strided_slice %5 {offsets = [0, 512], sizes = [2, 128], strides = [1, 1]} : vector<2x2048xf32> to vector<2x128xf32>
    %16 = vector.shape_cast %15 : vector<2x128xf32> to vector<2x1x1x128xf32>
    %17 = vector.extract_strided_slice %5 {offsets = [0, 640], sizes = [2, 128], strides = [1, 1]} : vector<2x2048xf32> to vector<2x128xf32>
    %18 = vector.shape_cast %17 : vector<2x128xf32> to vector<2x1x1x128xf32>
    %19 = vector.extract_strided_slice %5 {offsets = [0, 768], sizes = [2, 128], strides = [1, 1]} : vector<2x2048xf32> to vector<2x128xf32>
    %20 = vector.shape_cast %19 : vector<2x128xf32> to vector<2x1x1x128xf32>
    %21 = vector.extract_strided_slice %5 {offsets = [0, 896], sizes = [2, 128], strides = [1, 1]} : vector<2x2048xf32> to vector<2x128xf32>
    %22 = vector.shape_cast %21 : vector<2x128xf32> to vector<2x1x1x128xf32>
    %23 = tpu.concatenate %16, %18, %20, %22 in 2 : vector<2x1x1x128xf32>, vector<2x1x1x128xf32>, vector<2x1x1x128xf32>, vector<2x1x1x128xf32> -> vector<2x1x4x128xf32>
    %24 = vector.extract_strided_slice %5 {offsets = [0, 1024], sizes = [2, 128], strides = [1, 1]} : vector<2x2048xf32> to vector<2x128xf32>
    %25 = vector.shape_cast %24 : vector<2x128xf32> to vector<2x1x1x128xf32>
    %26 = vector.extract_strided_slice %5 {offsets = [0, 1152], sizes = [2, 128], strides = [1, 1]} : vector<2x2048xf32> to vector<2x128xf32>
    %27 = vector.shape_cast %26 : vector<2x128xf32> to vector<2x1x1x128xf32>
    %28 = vector.extract_strided_slice %5 {offsets = [0, 1280], sizes = [2, 128], strides = [1, 1]} : vector<2x2048xf32> to vector<2x128xf32>
    %29 = vector.shape_cast %28 : vector<2x128xf32> to vector<2x1x1x128xf32>
    %30 = vector.extract_strided_slice %5 {offsets = [0, 1408], sizes = [2, 128], strides = [1, 1]} : vector<2x2048xf32> to vector<2x128xf32>
    %31 = vector.shape_cast %30 : vector<2x128xf32> to vector<2x1x1x128xf32>
    %32 = tpu.concatenate %25, %27, %29, %31 in 2 : vector<2x1x1x128xf32>, vector<2x1x1x128xf32>, vector<2x1x1x128xf32>, vector<2x1x1x128xf32> -> vector<2x1x4x128xf32>
    %33 = vector.extract_strided_slice %5 {offsets = [0, 1536], sizes = [2, 128], strides = [1, 1]} : vector<2x2048xf32> to vector<2x128xf32>
    %34 = vector.shape_cast %33 : vector<2x128xf32> to vector<2x1x1x128xf32>
    %35 = vector.extract_strided_slice %5 {offsets = [0, 1664], sizes = [2, 128], strides = [1, 1]} : vector<2x2048xf32> to vector<2x128xf32>
    %36 = vector.shape_cast %35 : vector<2x128xf32> to vector<2x1x1x128xf32>
    %37 = vector.extract_strided_slice %5 {offsets = [0, 1792], sizes = [2, 128], strides = [1, 1]} : vector<2x2048xf32> to vector<2x128xf32>
    %38 = vector.shape_cast %37 : vector<2x128xf32> to vector<2x1x1x128xf32>
    %39 = vector.extract_strided_slice %5 {offsets = [0, 1920], sizes = [2, 128], strides = [1, 1]} : vector<2x2048xf32> to vector<2x128xf32>
    %40 = vector.shape_cast %39 : vector<2x128xf32> to vector<2x1x1x128xf32>
    %41 = tpu.concatenate %34, %36, %38, %40 in 2 : vector<2x1x1x128xf32>, vector<2x1x1x128xf32>, vector<2x1x1x128xf32>, vector<2x1x1x128xf32> -> vector<2x1x4x128xf32>
    %42 = tpu.concatenate %14, %23, %32, %41 in 1 : vector<2x1x4x128xf32>, vector<2x1x4x128xf32>, vector<2x1x4x128xf32>, vector<2x1x4x128xf32> -> vector<2x4x4x128xf32>
    %c0_5 = arith.constant 0 : index
    %c0_6 = arith.constant 0 : index
    %43 = vector.load %arg4[%c0_5, %c0_6] : memref<1x128xf32, #tpu.memory_space<vmem>>, vector<1x128xf32>
    %c0_7 = arith.constant 0 : index
    %c0_8 = arith.constant 0 : index
    %44 = vector.load %arg5[%c0_7, %c0_8] : memref<1x128xf32, #tpu.memory_space<vmem>>, vector<1x128xf32>
    %cst_9 = arith.constant dense<0.000000e+00> : vector<128xf32>
    %45 = vector.multi_reduction <add>, %42, %cst_9 [0, 1, 2] : vector<2x4x4x128xf32> to vector<128xf32>
    %46 = vector.shape_cast %45 : vector<128xf32> to vector<1x1x1x128xf32>
    %cst_10 = arith.constant 3.200000e+01 : f32
    %47 = vector.broadcast %cst_10 : f32 to vector<1x1x1x128xf32>
    %48 = arith.divf %46, %47 : vector<1x1x1x128xf32>
    %49 = arith.mulf %42, %42 : vector<2x4x4x128xf32>
    %cst_11 = arith.constant dense<0.000000e+00> : vector<128xf32>
    %50 = vector.multi_reduction <add>, %49, %cst_11 [0, 1, 2] : vector<2x4x4x128xf32> to vector<128xf32>
    %51 = vector.shape_cast %50 : vector<128xf32> to vector<1x1x1x128xf32>
    %cst_12 = arith.constant 3.200000e+01 : f32
    %52 = vector.broadcast %cst_12 : f32 to vector<1x1x1x128xf32>
    %53 = arith.divf %51, %52 : vector<1x1x1x128xf32>
    %54 = arith.mulf %48, %48 : vector<1x1x1x128xf32>
    %55 = arith.subf %53, %54 : vector<1x1x1x128xf32>
    %56 = vector.shape_cast %43 : vector<1x128xf32> to vector<1x1x1x128xf32>
    %cst_13 = arith.constant 9.99999974E-6 : f32
    %57 = vector.broadcast %cst_13 : f32 to vector<1x1x1x128xf32>
    %58 = arith.addf %55, %57 : vector<1x1x1x128xf32>
    %59 = math.rsqrt %58 : vector<1x1x1x128xf32>
    %60 = arith.mulf %56, %59 : vector<1x1x1x128xf32>
    %61 = vector.shape_cast %44 : vector<1x128xf32> to vector<1x1x1x128xf32>
    %62 = arith.mulf %48, %60 : vector<1x1x1x128xf32>
    %63 = arith.subf %61, %62 : vector<1x1x1x128xf32>
    %64 = vector.broadcast %60 : vector<1x1x1x128xf32> to vector<2x4x4x128xf32>
    %65 = arith.mulf %42, %64 : vector<2x4x4x128xf32>
    %66 = vector.broadcast %63 : vector<1x1x1x128xf32> to vector<2x4x4x128xf32>
    %67 = arith.addf %65, %66 : vector<2x4x4x128xf32>
    %68 = vector.extract_strided_slice %67 {offsets = [0, 0, 0, 0], sizes = [2, 1, 4, 128], strides = [1, 1, 1, 1]} : vector<2x4x4x128xf32> to vector<2x1x4x128xf32>
    %69 = vector.extract_strided_slice %67 {offsets = [0, 1, 0, 0], sizes = [2, 1, 4, 128], strides = [1, 1, 1, 1]} : vector<2x4x4x128xf32> to vector<2x1x4x128xf32>
    %70 = vector.extract_strided_slice %67 {offsets = [0, 2, 0, 0], sizes = [2, 1, 4, 128], strides = [1, 1, 1, 1]} : vector<2x4x4x128xf32> to vector<2x1x4x128xf32>
    %71 = vector.extract_strided_slice %67 {offsets = [0, 3, 0, 0], sizes = [2, 1, 4, 128], strides = [1, 1, 1, 1]} : vector<2x4x4x128xf32> to vector<2x1x4x128xf32>
    %72 = tpu.concatenate %68, %68, %69, %69, %70, %70, %71, %71 in 1 : vector<2x1x4x128xf32>, vector<2x1x4x128xf32>, vector<2x1x4x128xf32>, vector<2x1x4x128xf32>, vector<2x1x4x128xf32>, vector<2x1x4x128xf32>, vector<2x1x4x128xf32>, vector<2x1x4x128xf32> -> vector<2x8x4x128xf32>
    %73 = vector.extract_strided_slice %72 {offsets = [0, 0, 0, 0], sizes = [2, 8, 1, 128], strides = [1, 1, 1, 1]} : vector<2x8x4x128xf32> to vector<2x8x1x128xf32>
    %74 = vector.extract_strided_slice %72 {offsets = [0, 0, 1, 0], sizes = [2, 8, 1, 128], strides = [1, 1, 1, 1]} : vector<2x8x4x128xf32> to vector<2x8x1x128xf32>
    %75 = vector.extract_strided_slice %72 {offsets = [0, 0, 2, 0], sizes = [2, 8, 1, 128], strides = [1, 1, 1, 1]} : vector<2x8x4x128xf32> to vector<2x8x1x128xf32>
    %76 = vector.extract_strided_slice %72 {offsets = [0, 0, 3, 0], sizes = [2, 8, 1, 128], strides = [1, 1, 1, 1]} : vector<2x8x4x128xf32> to vector<2x8x1x128xf32>
    %77 = tpu.concatenate %73, %73, %74, %74, %75, %75, %76, %76 in 2 : vector<2x8x1x128xf32>, vector<2x8x1x128xf32>, vector<2x8x1x128xf32>, vector<2x8x1x128xf32>, vector<2x8x1x128xf32>, vector<2x8x1x128xf32>, vector<2x8x1x128xf32>, vector<2x8x1x128xf32> -> vector<2x8x8x128xf32>
    %c0_14 = arith.constant 0 : index
    %c0_15 = arith.constant 0 : index
    %78 = vector.load %arg6[%c0_14, %c0_15] : memref<1152x128xf32, #tpu.memory_space<vmem>>, vector<1152x128xf32>
    %c0_16 = arith.constant 0 : index
    %c0_17 = arith.constant 0 : index
    %79 = vector.load %arg7[%c0_16, %c0_17] : memref<1x128xf32, #tpu.memory_space<vmem>>, vector<1x128xf32>
    %cst_18 = arith.constant 0.000000e+00 : f32
    %80 = vector.broadcast %cst_18 : f32 to vector<2x1x8x128xf32>
    %81 = tpu.concatenate %80, %77, %80 in 1 : vector<2x1x8x128xf32>, vector<2x8x8x128xf32>, vector<2x1x8x128xf32> -> vector<2x10x8x128xf32>
    %cst_19 = arith.constant 0.000000e+00 : f32
    %82 = vector.broadcast %cst_19 : f32 to vector<2x10x1x128xf32>
    %83 = tpu.concatenate %82, %81, %82 in 2 : vector<2x10x1x128xf32>, vector<2x10x8x128xf32>, vector<2x10x1x128xf32> -> vector<2x10x10x128xf32>
    %84 = vector.extract_strided_slice %83 {offsets = [0, 0, 0, 0], sizes = [2, 8, 8, 128], strides = [1, 1, 1, 1]} : vector<2x10x10x128xf32> to vector<2x8x8x128xf32>
    %85 = vector.extract_strided_slice %83 {offsets = [0, 0, 1, 0], sizes = [2, 8, 8, 128], strides = [1, 1, 1, 1]} : vector<2x10x10x128xf32> to vector<2x8x8x128xf32>
    %86 = vector.extract_strided_slice %83 {offsets = [0, 0, 2, 0], sizes = [2, 8, 8, 128], strides = [1, 1, 1, 1]} : vector<2x10x10x128xf32> to vector<2x8x8x128xf32>
    %87 = vector.extract_strided_slice %83 {offsets = [0, 1, 0, 0], sizes = [2, 8, 8, 128], strides = [1, 1, 1, 1]} : vector<2x10x10x128xf32> to vector<2x8x8x128xf32>
    %88 = vector.extract_strided_slice %83 {offsets = [0, 1, 1, 0], sizes = [2, 8, 8, 128], strides = [1, 1, 1, 1]} : vector<2x10x10x128xf32> to vector<2x8x8x128xf32>
    %89 = vector.extract_strided_slice %83 {offsets = [0, 1, 2, 0], sizes = [2, 8, 8, 128], strides = [1, 1, 1, 1]} : vector<2x10x10x128xf32> to vector<2x8x8x128xf32>
    %90 = vector.extract_strided_slice %83 {offsets = [0, 2, 0, 0], sizes = [2, 8, 8, 128], strides = [1, 1, 1, 1]} : vector<2x10x10x128xf32> to vector<2x8x8x128xf32>
    %91 = vector.extract_strided_slice %83 {offsets = [0, 2, 1, 0], sizes = [2, 8, 8, 128], strides = [1, 1, 1, 1]} : vector<2x10x10x128xf32> to vector<2x8x8x128xf32>
    %92 = vector.extract_strided_slice %83 {offsets = [0, 2, 2, 0], sizes = [2, 8, 8, 128], strides = [1, 1, 1, 1]} : vector<2x10x10x128xf32> to vector<2x8x8x128xf32>
    %93 = tpu.concatenate %84, %85, %86, %87, %88, %89, %90, %91, %92 in 3 : vector<2x8x8x128xf32>, vector<2x8x8x128xf32>, vector<2x8x8x128xf32>, vector<2x8x8x128xf32>, vector<2x8x8x128xf32>, vector<2x8x8x128xf32>, vector<2x8x8x128xf32>, vector<2x8x8x128xf32>, vector<2x8x8x128xf32> -> vector<2x8x8x1152xf32>
    %94 = vector.shape_cast %93 : vector<2x8x8x1152xf32> to vector<128x1152xf32>
    %cst_20 = arith.constant dense<0.000000e+00> : vector<128x128xf32>
    %95 = tpu.matmul %94, %78, %cst_20 {dimension_numbers = #tpu.dot_dimension_numbers<[1], [0], [0], [1], [0, 0, 1, 1], [], []>} : vector<128x1152xf32>, vector<1152x128xf32>, vector<128x128xf32> -> vector<128x128xf32>
    %96 = vector.broadcast %79 : vector<1x128xf32> to vector<128x128xf32>
    %97 = arith.addf %95, %96 : vector<128x128xf32>
    %98 = vector.shape_cast %97 : vector<128x128xf32> to vector<2x8x8x128xf32>
    %c0_21 = arith.constant 0 : index
    %c0_22 = arith.constant 0 : index
    %99 = vector.load %arg8[%c0_21, %c0_22] : memref<1x128xf32, #tpu.memory_space<vmem>>, vector<1x128xf32>
    %c0_23 = arith.constant 0 : index
    %c0_24 = arith.constant 0 : index
    %100 = vector.load %arg9[%c0_23, %c0_24] : memref<1x128xf32, #tpu.memory_space<vmem>>, vector<1x128xf32>
    %cst_25 = arith.constant dense<0.000000e+00> : vector<128xf32>
    %101 = vector.multi_reduction <add>, %98, %cst_25 [0, 1, 2] : vector<2x8x8x128xf32> to vector<128xf32>
    %102 = vector.shape_cast %101 : vector<128xf32> to vector<1x1x1x128xf32>
    %cst_26 = arith.constant 1.280000e+02 : f32
    %103 = vector.broadcast %cst_26 : f32 to vector<1x1x1x128xf32>
    %104 = arith.divf %102, %103 : vector<1x1x1x128xf32>
    %105 = arith.mulf %98, %98 : vector<2x8x8x128xf32>
    %cst_27 = arith.constant dense<0.000000e+00> : vector<128xf32>
    %106 = vector.multi_reduction <add>, %105, %cst_27 [0, 1, 2] : vector<2x8x8x128xf32> to vector<128xf32>
    %107 = vector.shape_cast %106 : vector<128xf32> to vector<1x1x1x128xf32>
    %cst_28 = arith.constant 1.280000e+02 : f32
    %108 = vector.broadcast %cst_28 : f32 to vector<1x1x1x128xf32>
    %109 = arith.divf %107, %108 : vector<1x1x1x128xf32>
    %110 = arith.mulf %104, %104 : vector<1x1x1x128xf32>
    %111 = arith.subf %109, %110 : vector<1x1x1x128xf32>
    %112 = vector.shape_cast %99 : vector<1x128xf32> to vector<1x1x1x128xf32>
    %cst_29 = arith.constant 8.000000e-01 : f32
    %113 = vector.broadcast %cst_29 : f32 to vector<1x1x1x128xf32>
    %114 = arith.addf %111, %113 : vector<1x1x1x128xf32>
    %115 = math.rsqrt %114 : vector<1x1x1x128xf32>
    %116 = arith.mulf %112, %115 : vector<1x1x1x128xf32>
    %117 = vector.shape_cast %100 : vector<1x128xf32> to vector<1x1x1x128xf32>
    %118 = arith.mulf %104, %116 : vector<1x1x1x128xf32>
    %119 = arith.subf %117, %118 : vector<1x1x1x128xf32>
    %120 = vector.broadcast %116 : vector<1x1x1x128xf32> to vector<2x8x8x128xf32>
    %121 = arith.mulf %98, %120 : vector<2x8x8x128xf32>
    %122 = vector.broadcast %119 : vector<1x1x1x128xf32> to vector<2x8x8x128xf32>
    %123 = arith.addf %121, %122 : vector<2x8x8x128xf32>
    %cst_30 = arith.constant 0.000000e+00 : f32
    %124 = vector.broadcast %cst_30 : f32 to vector<2x8x8x128xf32>
    %125 = arith.cmpf oge, %123, %124 : vector<2x8x8x128xf32>
    %cst_31 = arith.constant 2.000000e-01 : f32
    %126 = vector.broadcast %cst_31 : f32 to vector<2x8x8x128xf32>
    %127 = arith.mulf %126, %123 : vector<2x8x8x128xf32>
    %128 = arith.select %125, %123, %127 : vector<2x8x8x128xi1>, vector<2x8x8x128xf32>
    %129 = vector.extract_strided_slice %128 {offsets = [0, 0, 0, 0], sizes = [2, 1, 8, 128], strides = [1, 1, 1, 1]} : vector<2x8x8x128xf32> to vector<2x1x8x128xf32>
    %130 = vector.extract_strided_slice %128 {offsets = [0, 1, 0, 0], sizes = [2, 1, 8, 128], strides = [1, 1, 1, 1]} : vector<2x8x8x128xf32> to vector<2x1x8x128xf32>
    %131 = vector.extract_strided_slice %128 {offsets = [0, 2, 0, 0], sizes = [2, 1, 8, 128], strides = [1, 1, 1, 1]} : vector<2x8x8x128xf32> to vector<2x1x8x128xf32>
    %132 = vector.extract_strided_slice %128 {offsets = [0, 3, 0, 0], sizes = [2, 1, 8, 128], strides = [1, 1, 1, 1]} : vector<2x8x8x128xf32> to vector<2x1x8x128xf32>
    %133 = vector.extract_strided_slice %128 {offsets = [0, 4, 0, 0], sizes = [2, 1, 8, 128], strides = [1, 1, 1, 1]} : vector<2x8x8x128xf32> to vector<2x1x8x128xf32>
    %134 = vector.extract_strided_slice %128 {offsets = [0, 5, 0, 0], sizes = [2, 1, 8, 128], strides = [1, 1, 1, 1]} : vector<2x8x8x128xf32> to vector<2x1x8x128xf32>
    %135 = vector.extract_strided_slice %128 {offsets = [0, 6, 0, 0], sizes = [2, 1, 8, 128], strides = [1, 1, 1, 1]} : vector<2x8x8x128xf32> to vector<2x1x8x128xf32>
    %136 = vector.extract_strided_slice %128 {offsets = [0, 7, 0, 0], sizes = [2, 1, 8, 128], strides = [1, 1, 1, 1]} : vector<2x8x8x128xf32> to vector<2x1x8x128xf32>
    %137 = tpu.concatenate %129, %129, %130, %130, %131, %131, %132, %132, %133, %133, %134, %134, %135, %135, %136, %136 in 1 : vector<2x1x8x128xf32>, vector<2x1x8x128xf32>, vector<2x1x8x128xf32>, vector<2x1x8x128xf32>, vector<2x1x8x128xf32>, vector<2x1x8x128xf32>, vector<2x1x8x128xf32>, vector<2x1x8x128xf32>, vector<2x1x8x128xf32>, vector<2x1x8x128xf32>, vector<2x1x8x128xf32>, vector<2x1x8x128xf32>, vector<2x1x8x128xf32>, vector<2x1x8x128xf32>, vector<2x1x8x128xf32>, vector<2x1x8x128xf32> -> vector<2x16x8x128xf32>
    %138 = vector.extract_strided_slice %137 {offsets = [0, 0, 0, 0], sizes = [2, 16, 1, 128], strides = [1, 1, 1, 1]} : vector<2x16x8x128xf32> to vector<2x16x1x128xf32>
    %139 = vector.extract_strided_slice %137 {offsets = [0, 0, 1, 0], sizes = [2, 16, 1, 128], strides = [1, 1, 1, 1]} : vector<2x16x8x128xf32> to vector<2x16x1x128xf32>
    %140 = vector.extract_strided_slice %137 {offsets = [0, 0, 2, 0], sizes = [2, 16, 1, 128], strides = [1, 1, 1, 1]} : vector<2x16x8x128xf32> to vector<2x16x1x128xf32>
    %141 = vector.extract_strided_slice %137 {offsets = [0, 0, 3, 0], sizes = [2, 16, 1, 128], strides = [1, 1, 1, 1]} : vector<2x16x8x128xf32> to vector<2x16x1x128xf32>
    %142 = vector.extract_strided_slice %137 {offsets = [0, 0, 4, 0], sizes = [2, 16, 1, 128], strides = [1, 1, 1, 1]} : vector<2x16x8x128xf32> to vector<2x16x1x128xf32>
    %143 = vector.extract_strided_slice %137 {offsets = [0, 0, 5, 0], sizes = [2, 16, 1, 128], strides = [1, 1, 1, 1]} : vector<2x16x8x128xf32> to vector<2x16x1x128xf32>
    %144 = vector.extract_strided_slice %137 {offsets = [0, 0, 6, 0], sizes = [2, 16, 1, 128], strides = [1, 1, 1, 1]} : vector<2x16x8x128xf32> to vector<2x16x1x128xf32>
    %145 = vector.extract_strided_slice %137 {offsets = [0, 0, 7, 0], sizes = [2, 16, 1, 128], strides = [1, 1, 1, 1]} : vector<2x16x8x128xf32> to vector<2x16x1x128xf32>
    %146 = tpu.concatenate %138, %138, %139, %139, %140, %140, %141, %141, %142, %142, %143, %143, %144, %144, %145, %145 in 2 : vector<2x16x1x128xf32>, vector<2x16x1x128xf32>, vector<2x16x1x128xf32>, vector<2x16x1x128xf32>, vector<2x16x1x128xf32>, vector<2x16x1x128xf32>, vector<2x16x1x128xf32>, vector<2x16x1x128xf32>, vector<2x16x1x128xf32>, vector<2x16x1x128xf32>, vector<2x16x1x128xf32>, vector<2x16x1x128xf32>, vector<2x16x1x128xf32>, vector<2x16x1x128xf32>, vector<2x16x1x128xf32>, vector<2x16x1x128xf32> -> vector<2x16x16x128xf32>
    %c0_32 = arith.constant 0 : index
    %c0_33 = arith.constant 0 : index
    %147 = vector.load %arg10[%c0_32, %c0_33] : memref<1152x64xf32, #tpu.memory_space<vmem>>, vector<1152x64xf32>
    %c0_34 = arith.constant 0 : index
    %c0_35 = arith.constant 0 : index
    %148 = vector.load %arg11[%c0_34, %c0_35] : memref<1x64xf32, #tpu.memory_space<vmem>>, vector<1x64xf32>
    %cst_36 = arith.constant 0.000000e+00 : f32
    %149 = vector.broadcast %cst_36 : f32 to vector<2x1x16x128xf32>
    %150 = tpu.concatenate %149, %146, %149 in 1 : vector<2x1x16x128xf32>, vector<2x16x16x128xf32>, vector<2x1x16x128xf32> -> vector<2x18x16x128xf32>
    %cst_37 = arith.constant 0.000000e+00 : f32
    %151 = vector.broadcast %cst_37 : f32 to vector<2x18x1x128xf32>
    %152 = tpu.concatenate %151, %150, %151 in 2 : vector<2x18x1x128xf32>, vector<2x18x16x128xf32>, vector<2x18x1x128xf32> -> vector<2x18x18x128xf32>
    %153 = vector.extract_strided_slice %152 {offsets = [0, 0, 0, 0], sizes = [2, 16, 16, 128], strides = [1, 1, 1, 1]} : vector<2x18x18x128xf32> to vector<2x16x16x128xf32>
    %154 = vector.extract_strided_slice %152 {offsets = [0, 0, 1, 0], sizes = [2, 16, 16, 128], strides = [1, 1, 1, 1]} : vector<2x18x18x128xf32> to vector<2x16x16x128xf32>
    %155 = vector.extract_strided_slice %152 {offsets = [0, 0, 2, 0], sizes = [2, 16, 16, 128], strides = [1, 1, 1, 1]} : vector<2x18x18x128xf32> to vector<2x16x16x128xf32>
    %156 = vector.extract_strided_slice %152 {offsets = [0, 1, 0, 0], sizes = [2, 16, 16, 128], strides = [1, 1, 1, 1]} : vector<2x18x18x128xf32> to vector<2x16x16x128xf32>
    %157 = vector.extract_strided_slice %152 {offsets = [0, 1, 1, 0], sizes = [2, 16, 16, 128], strides = [1, 1, 1, 1]} : vector<2x18x18x128xf32> to vector<2x16x16x128xf32>
    %158 = vector.extract_strided_slice %152 {offsets = [0, 1, 2, 0], sizes = [2, 16, 16, 128], strides = [1, 1, 1, 1]} : vector<2x18x18x128xf32> to vector<2x16x16x128xf32>
    %159 = vector.extract_strided_slice %152 {offsets = [0, 2, 0, 0], sizes = [2, 16, 16, 128], strides = [1, 1, 1, 1]} : vector<2x18x18x128xf32> to vector<2x16x16x128xf32>
    %160 = vector.extract_strided_slice %152 {offsets = [0, 2, 1, 0], sizes = [2, 16, 16, 128], strides = [1, 1, 1, 1]} : vector<2x18x18x128xf32> to vector<2x16x16x128xf32>
    %161 = vector.extract_strided_slice %152 {offsets = [0, 2, 2, 0], sizes = [2, 16, 16, 128], strides = [1, 1, 1, 1]} : vector<2x18x18x128xf32> to vector<2x16x16x128xf32>
    %162 = tpu.concatenate %153, %154, %155, %156, %157, %158, %159, %160, %161 in 3 : vector<2x16x16x128xf32>, vector<2x16x16x128xf32>, vector<2x16x16x128xf32>, vector<2x16x16x128xf32>, vector<2x16x16x128xf32>, vector<2x16x16x128xf32>, vector<2x16x16x128xf32>, vector<2x16x16x128xf32>, vector<2x16x16x128xf32> -> vector<2x16x16x1152xf32>
    %163 = vector.shape_cast %162 : vector<2x16x16x1152xf32> to vector<512x1152xf32>
    %cst_38 = arith.constant dense<0.000000e+00> : vector<512x64xf32>
    %164 = tpu.matmul %163, %147, %cst_38 {dimension_numbers = #tpu.dot_dimension_numbers<[1], [0], [0], [1], [0, 0, 1, 1], [], []>} : vector<512x1152xf32>, vector<1152x64xf32>, vector<512x64xf32> -> vector<512x64xf32>
    %165 = vector.broadcast %148 : vector<1x64xf32> to vector<512x64xf32>
    %166 = arith.addf %164, %165 : vector<512x64xf32>
    %167 = vector.shape_cast %166 : vector<512x64xf32> to vector<2x16x16x64xf32>
    %c0_39 = arith.constant 0 : index
    %c0_40 = arith.constant 0 : index
    %168 = vector.load %arg12[%c0_39, %c0_40] : memref<1x64xf32, #tpu.memory_space<vmem>>, vector<1x64xf32>
    %c0_41 = arith.constant 0 : index
    %c0_42 = arith.constant 0 : index
    %169 = vector.load %arg13[%c0_41, %c0_42] : memref<1x64xf32, #tpu.memory_space<vmem>>, vector<1x64xf32>
    %cst_43 = arith.constant dense<0.000000e+00> : vector<64xf32>
    %170 = vector.multi_reduction <add>, %167, %cst_43 [0, 1, 2] : vector<2x16x16x64xf32> to vector<64xf32>
    %171 = vector.shape_cast %170 : vector<64xf32> to vector<1x1x1x64xf32>
    %cst_44 = arith.constant 5.120000e+02 : f32
    %172 = vector.broadcast %cst_44 : f32 to vector<1x1x1x64xf32>
    %173 = arith.divf %171, %172 : vector<1x1x1x64xf32>
    %174 = arith.mulf %167, %167 : vector<2x16x16x64xf32>
    %cst_45 = arith.constant dense<0.000000e+00> : vector<64xf32>
    %175 = vector.multi_reduction <add>, %174, %cst_45 [0, 1, 2] : vector<2x16x16x64xf32> to vector<64xf32>
    %176 = vector.shape_cast %175 : vector<64xf32> to vector<1x1x1x64xf32>
    %cst_46 = arith.constant 5.120000e+02 : f32
    %177 = vector.broadcast %cst_46 : f32 to vector<1x1x1x64xf32>
    %178 = arith.divf %176, %177 : vector<1x1x1x64xf32>
    %179 = arith.mulf %173, %173 : vector<1x1x1x64xf32>
    %180 = arith.subf %178, %179 : vector<1x1x1x64xf32>
    %181 = vector.shape_cast %168 : vector<1x64xf32> to vector<1x1x1x64xf32>
    %cst_47 = arith.constant 8.000000e-01 : f32
    %182 = vector.broadcast %cst_47 : f32 to vector<1x1x1x64xf32>
    %183 = arith.addf %180, %182 : vector<1x1x1x64xf32>
    %184 = math.rsqrt %183 : vector<1x1x1x64xf32>
    %185 = arith.mulf %181, %184 : vector<1x1x1x64xf32>
    %186 = vector.shape_cast %169 : vector<1x64xf32> to vector<1x1x1x64xf32>
    %187 = arith.mulf %173, %185 : vector<1x1x1x64xf32>
    %188 = arith.subf %186, %187 : vector<1x1x1x64xf32>
    %189 = vector.broadcast %185 : vector<1x1x1x64xf32> to vector<2x16x16x64xf32>
    %190 = arith.mulf %167, %189 : vector<2x16x16x64xf32>
    %191 = vector.broadcast %188 : vector<1x1x1x64xf32> to vector<2x16x16x64xf32>
    %192 = arith.addf %190, %191 : vector<2x16x16x64xf32>
    %cst_48 = arith.constant 0.000000e+00 : f32
    %193 = vector.broadcast %cst_48 : f32 to vector<2x16x16x64xf32>
    %194 = arith.cmpf oge, %192, %193 : vector<2x16x16x64xf32>
    %cst_49 = arith.constant 2.000000e-01 : f32
    %195 = vector.broadcast %cst_49 : f32 to vector<2x16x16x64xf32>
    %196 = arith.mulf %195, %192 : vector<2x16x16x64xf32>
    %197 = arith.select %194, %192, %196 : vector<2x16x16x64xi1>, vector<2x16x16x64xf32>
    %cst_50 = arith.constant 0.000000e+00 : f32
    %198 = vector.broadcast %cst_50 : f32 to vector<2x1x16x64xf32>
    %199 = tpu.concatenate %198, %197, %198 in 1 : vector<2x1x16x64xf32>, vector<2x16x16x64xf32>, vector<2x1x16x64xf32> -> vector<2x18x16x64xf32>
    %cst_51 = arith.constant 0.000000e+00 : f32
    %200 = vector.broadcast %cst_51 : f32 to vector<2x18x1x64xf32>
    %201 = tpu.concatenate %200, %199, %200 in 2 : vector<2x18x1x64xf32>, vector<2x18x16x64xf32>, vector<2x18x1x64xf32> -> vector<2x18x18x64xf32>
    %202 = vector.extract_strided_slice %201 {offsets = [0, 0, 0, 0], sizes = [2, 16, 16, 64], strides = [1, 1, 1, 1]} : vector<2x18x18x64xf32> to vector<2x16x16x64xf32>
    %203 = vector.extract_strided_slice %201 {offsets = [0, 0, 1, 0], sizes = [2, 16, 16, 64], strides = [1, 1, 1, 1]} : vector<2x18x18x64xf32> to vector<2x16x16x64xf32>
    %204 = vector.extract_strided_slice %201 {offsets = [0, 0, 2, 0], sizes = [2, 16, 16, 64], strides = [1, 1, 1, 1]} : vector<2x18x18x64xf32> to vector<2x16x16x64xf32>
    %205 = vector.extract_strided_slice %201 {offsets = [0, 1, 0, 0], sizes = [2, 16, 16, 64], strides = [1, 1, 1, 1]} : vector<2x18x18x64xf32> to vector<2x16x16x64xf32>
    %206 = vector.extract_strided_slice %201 {offsets = [0, 1, 1, 0], sizes = [2, 16, 16, 64], strides = [1, 1, 1, 1]} : vector<2x18x18x64xf32> to vector<2x16x16x64xf32>
    %207 = vector.extract_strided_slice %201 {offsets = [0, 1, 2, 0], sizes = [2, 16, 16, 64], strides = [1, 1, 1, 1]} : vector<2x18x18x64xf32> to vector<2x16x16x64xf32>
    %208 = vector.extract_strided_slice %201 {offsets = [0, 2, 0, 0], sizes = [2, 16, 16, 64], strides = [1, 1, 1, 1]} : vector<2x18x18x64xf32> to vector<2x16x16x64xf32>
    %209 = vector.extract_strided_slice %201 {offsets = [0, 2, 1, 0], sizes = [2, 16, 16, 64], strides = [1, 1, 1, 1]} : vector<2x18x18x64xf32> to vector<2x16x16x64xf32>
    %210 = vector.extract_strided_slice %201 {offsets = [0, 2, 2, 0], sizes = [2, 16, 16, 64], strides = [1, 1, 1, 1]} : vector<2x18x18x64xf32> to vector<2x16x16x64xf32>
    %211 = tpu.concatenate %202, %203, %204, %205, %206, %207, %208, %209, %210 in 3 : vector<2x16x16x64xf32>, vector<2x16x16x64xf32>, vector<2x16x16x64xf32>, vector<2x16x16x64xf32>, vector<2x16x16x64xf32>, vector<2x16x16x64xf32>, vector<2x16x16x64xf32>, vector<2x16x16x64xf32>, vector<2x16x16x64xf32> -> vector<2x16x16x576xf32>
    %212 = vector.shape_cast %211 : vector<2x16x16x576xf32> to vector<512x576xf32>
    %c0_52 = arith.constant 0 : index
    %c0_53 = arith.constant 0 : index
    %213 = vector.load %arg14[%c0_52, %c0_53] : memref<3x576xf32, #tpu.memory_space<vmem>>, vector<3x576xf32>
    %c0_54 = arith.constant 0 : index
    %c0_55 = arith.constant 0 : index
    %214 = vector.load %arg15[%c0_54, %c0_55] : memref<3x1xf32, #tpu.memory_space<vmem>>, vector<3x1xf32>
    %cst_56 = arith.constant dense<0.000000e+00> : vector<3x512xf32>
    %215 = tpu.matmul %213, %212, %cst_56 {dimension_numbers = #tpu.dot_dimension_numbers<[1], [1], [0], [0], [0, 0, 1, 0], [], []>} : vector<3x576xf32>, vector<512x576xf32>, vector<3x512xf32> -> vector<3x512xf32>
    %216 = vector.broadcast %214 : vector<3x1xf32> to vector<3x512xf32>
    %217 = arith.addf %215, %216 : vector<3x512xf32>
    %218 = math.tanh %217 : vector<3x512xf32>
    %219 = vector.extract_strided_slice %218 {offsets = [0, 0], sizes = [3, 256], strides = [1, 1]} : vector<3x512xf32> to vector<3x256xf32>
    %c0_57 = arith.constant 0 : index
    %c0_58 = arith.constant 0 : index
    %c0_59 = arith.constant 0 : index
    %220 = vector.load %arg16[%c0_57, %c0_58, %c0_59] : memref<2x3x256xf32, #tpu.memory_space<vmem>>, vector<1x3x256xf32>
    %221 = vector.shape_cast %220 : vector<1x3x256xf32> to vector<3x256xf32>
    %222 = vector.shape_cast %219 : vector<3x256xf32> to vector<1x3x256xf32>
    tpu.vector_store %arg16[%c0_57, %c0_58, %c0_59], %222 {strides = array<i32>} : memref<2x3x256xf32, #tpu.memory_space<vmem>>, vector<1x3x256xf32>,
    %223 = vector.extract_strided_slice %218 {offsets = [0, 256], sizes = [3, 256], strides = [1, 1]} : vector<3x512xf32> to vector<3x256xf32>
    %c1 = arith.constant 1 : index
    %c0_60 = arith.constant 0 : index
    %c0_61 = arith.constant 0 : index
    %224 = vector.load %arg16[%c1, %c0_60, %c0_61] : memref<2x3x256xf32, #tpu.memory_space<vmem>>, vector<1x3x256xf32>
    %225 = vector.shape_cast %224 : vector<1x3x256xf32> to vector<3x256xf32>
    %226 = vector.shape_cast %223 : vector<3x256xf32> to vector<1x3x256xf32>
    tpu.vector_store %arg16[%c1, %c0_60, %c0_61], %226 {strides = array<i32>} : memref<2x3x256xf32, #tpu.memory_space<vmem>>, vector<1x3x256xf32>,
    return
  }
  func.func @transform_0(%arg0: i32) -> (i32, i32) {
    %c0_i32 = arith.constant 0 : i32
    %c0_i32_0 = arith.constant 0 : i32
    %c0_i32_1 = arith.constant 0 : i32
    return %c0_i32, %c0_i32_0 : i32, i32
  }
  func.func @transform_1(%arg0: i32) -> (i32, i32) {
    %c0_i32 = arith.constant 0 : i32
    %c0_i32_0 = arith.constant 0 : i32
    %c0_i32_1 = arith.constant 0 : i32
    return %c0_i32, %c0_i32_0 : i32, i32
  }
  func.func @transform_2(%arg0: i32) -> (i32, i32) {
    %c0_i32 = arith.constant 0 : i32
    %c0_i32_0 = arith.constant 0 : i32
    %c0_i32_1 = arith.constant 0 : i32
    return %c0_i32, %c0_i32_0 : i32, i32
  }
  func.func @transform_3(%arg0: i32) -> (i32, i32) {
    %c0_i32 = arith.constant 0 : i32
    %c0_i32_0 = arith.constant 0 : i32
    %c0_i32_1 = arith.constant 0 : i32
    return %c0_i32, %c0_i32_0 : i32, i32
  }
  func.func @transform_4(%arg0: i32) -> (i32, i32) {
    %c0_i32 = arith.constant 0 : i32
    %c0_i32_0 = arith.constant 0 : i32
    %c0_i32_1 = arith.constant 0 : i32
    return %c0_i32, %c0_i32_0 : i32, i32
  }
  func.func @transform_5(%arg0: i32) -> (i32, i32) {
    %c0_i32 = arith.constant 0 : i32
    %c0_i32_0 = arith.constant 0 : i32
    %c0_i32_1 = arith.constant 0 : i32
    return %c0_i32, %c0_i32_0 : i32, i32
  }
  func.func @transform_6(%arg0: i32) -> (i32, i32) {
    %c0_i32 = arith.constant 0 : i32
    %c0_i32_0 = arith.constant 0 : i32
    %c0_i32_1 = arith.constant 0 : i32
    return %c0_i32, %c0_i32_0 : i32, i32
  }
  func.func @transform_7(%arg0: i32) -> (i32, i32) {
    %c0_i32 = arith.constant 0 : i32
    %c0_i32_0 = arith.constant 0 : i32
    %c0_i32_1 = arith.constant 0 : i32
    return %c0_i32, %c0_i32_0 : i32, i32
  }
  func.func @transform_8(%arg0: i32) -> (i32, i32) {
    %c0_i32 = arith.constant 0 : i32
    %c0_i32_0 = arith.constant 0 : i32
    %c0_i32_1 = arith.constant 0 : i32
    return %c0_i32, %c0_i32_0 : i32, i32
  }
  func.func @transform_9(%arg0: i32) -> (i32, i32) {
    %c0_i32 = arith.constant 0 : i32
    %c0_i32_0 = arith.constant 0 : i32
    %c0_i32_1 = arith.constant 0 : i32
    return %c0_i32, %c0_i32_0 : i32, i32
  }
  func.func @transform_10(%arg0: i32) -> (i32, i32) {
    %c0_i32 = arith.constant 0 : i32
    %c0_i32_0 = arith.constant 0 : i32
    %c0_i32_1 = arith.constant 0 : i32
    return %c0_i32, %c0_i32_0 : i32, i32
  }
  func.func @transform_11(%arg0: i32) -> (i32, i32) {
    %c0_i32 = arith.constant 0 : i32
    %c0_i32_0 = arith.constant 0 : i32
    %c0_i32_1 = arith.constant 0 : i32
    return %c0_i32, %c0_i32_0 : i32, i32
  }
  func.func @transform_12(%arg0: i32) -> (i32, i32) {
    %c0_i32 = arith.constant 0 : i32
    %c0_i32_0 = arith.constant 0 : i32
    %c0_i32_1 = arith.constant 0 : i32
    return %c0_i32, %c0_i32_0 : i32, i32
  }
  func.func @transform_13(%arg0: i32) -> (i32, i32) {
    %c0_i32 = arith.constant 0 : i32
    %c0_i32_0 = arith.constant 0 : i32
    %c0_i32_1 = arith.constant 0 : i32
    return %c0_i32, %c0_i32_0 : i32, i32
  }
  func.func @transform_14(%arg0: i32) -> (i32, i32) {
    %c0_i32 = arith.constant 0 : i32
    %c0_i32_0 = arith.constant 0 : i32
    %c0_i32_1 = arith.constant 0 : i32
    return %c0_i32, %c0_i32_0 : i32, i32
  }
  func.func @transform_15(%arg0: i32) -> (i32, i32, i32) {
    %c0_i32 = arith.constant 0 : i32
    %c0_i32_0 = arith.constant 0 : i32
    %c0_i32_1 = arith.constant 0 : i32
    %c0_i32_2 = arith.constant 0 : i32
    return %c0_i32, %c0_i32_0, %c0_i32_1 : i32, i32, i32
  }
}

</mosaic_0001>

<llo_original>
// kernel: generator_forward.1
$region0: #{generator_forward.1}
  #allocation0 [shape = 'u32[]', space=smem, size = 0x4, offset = 0x4, fixed_abs, tag = 'smem constant byte address 0x4 - core index']
  #allocation1 [shape = 'u32[144,128]{1,0:T(1,128)}', space=vmem, size = 0x12000, scoped, tag = 'internal scratch']
  %s0 = inlined_call_operand.vmem [shape: f32[2,14], index: 0, kind: input, shape index: {}]
  %s1 = inlined_call_operand.vmem [shape: f32[14,2048], index: 1, kind: input, shape index: {}]
  %s2 = inlined_call_operand.vmem [shape: f32[1,2048], index: 2, kind: input, shape index: {}]
  %s3 = inlined_call_operand.vmem [shape: f32[1,128], index: 3, kind: input, shape index: {}]
  %s4 = inlined_call_operand.vmem [shape: f32[1,128], index: 4, kind: input, shape index: {}]
  %s5 = inlined_call_operand.vmem [shape: f32[1152,128], index: 5, kind: input, shape index: {}]
  %s6 = inlined_call_operand.vmem [shape: f32[1,128], index: 6, kind: input, shape index: {}]
  %s7 = inlined_call_operand.vmem [shape: f32[1,128], index: 7, kind: input, shape index: {}]
  %s8 = inlined_call_operand.vmem [shape: f32[1,128], index: 8, kind: input, shape index: {}]
  %s9 = inlined_call_operand.vmem [shape: f32[1152,64], index: 9, kind: input, shape index: {}]
  %s10 = inlined_call_operand.vmem [shape: f32[1,64], index: 10, kind: input, shape index: {}]
  %s11 = inlined_call_operand.vmem [shape: f32[1,64], index: 11, kind: input, shape index: {}]
  %s12 = inlined_call_operand.vmem [shape: f32[1,64], index: 12, kind: input, shape index: {}]
  %s13 = inlined_call_operand.vmem [shape: f32[3,576], index: 13, kind: input, shape index: {}]
  %s14 = inlined_call_operand.vmem [shape: f32[3,1], index: 14, kind: input, shape index: {}]
  %s15 = inlined_call_operand.vmem [shape: f32[2,3,256], index: 15, kind: output, shape index: {}]
  %s16 = sld [smem:[#allocation0]]
  $region70: #{generator_forward.1} parent=0
    _
  %s18 = ssub.s32 1, %s16
  %s19 = scalar_select 0, %s18, %s16
  // Predicated region
  $region2: #{generator_forward.1} parent=0 // pred_check
    _
  $region3: #{generator_forward.1} parent=0 // pred_check_branch
    %21 = sbr.rel (0) target = $region5
  $region4: #{generator_forward.1} parent=0 // pred_region
    _
  $region5: #{generator_forward.1} parent=0 // pred_fallthru
    _
  // Predicated region
  $region6: #{generator_forward.1} parent=0 // pred_check
    _
  $region7: #{generator_forward.1} parent=0 // pred_check_branch
    %23 = sbr.rel (0) target = $region9
  $region8: #{generator_forward.1} parent=0 // pred_region
    _
  $region9: #{generator_forward.1} parent=0 // pred_fallthru
    _
  // Predicated region
  $region10: #{generator_forward.1} parent=0 // pred_check
    _
  $region11: #{generator_forward.1} parent=0 // pred_check_branch
    %25 = sbr.rel (0) target = $region13
  $region12: #{generator_forward.1} parent=0 // pred_region
    _
  $region13: #{generator_forward.1} parent=0 // pred_fallthru
    _
  // Predicated region
  $region14: #{generator_forward.1} parent=0 // pred_check
    _
  $region15: #{generator_forward.1} parent=0 // pred_check_branch
    %27 = sbr.rel (0) target = $region17
  $region16: #{generator_forward.1} parent=0 // pred_region
    _
  $region17: #{generator_forward.1} parent=0 // pred_fallthru
    _
  // Predicated region
  $region18: #{generator_forward.1} parent=0 // pred_check
    _
  $region19: #{generator_forward.1} parent=0 // pred_check_branch
    %29 = sbr.rel (0) target = $region21
  $region20: #{generator_forward.1} parent=0 // pred_region
    _
  $region21: #{generator_forward.1} parent=0 // pred_fallthru
    _
  // Predicated region
  $region22: #{generator_forward.1} parent=0 // pred_check
    _
  $region23: #{generator_forward.1} parent=0 // pred_check_branch
    %31 = sbr.rel (0) target = $region25
  $region24: #{generator_forward.1} parent=0 // pred_region
    _
  $region25: #{generator_forward.1} parent=0 // pred_fallthru
    _
  // Predicated region
  $region26: #{generator_forward.1} parent=0 // pred_check
    _
  $region27: #{generator_forward.1} parent=0 // pred_check_branch
    %33 = sbr.rel (0) target = $region29
  $region28: #{generator_forward.1} parent=0 // pred_region
    _
  $region29: #{generator_forward.1} parent=0 // pred_fallthru
    _
  // Predicated region
  $region30: #{generator_forward.1} parent=0 // pred_check
    _
  $region31: #{generator_forward.1} parent=0 // pred_check_branch
    %35 = sbr.rel (0) target = $region33
  $region32: #{generator_forward.1} parent=0 // pred_region
    _
  $region33: #{generator_forward.1} parent=0 // pred_fallthru
    _
  // Predicated region
  $region34: #{generator_forward.1} parent=0 // pred_check
    _
  $region35: #{generator_forward.1} parent=0 // pred_check_branch
    %37 = sbr.rel (0) target = $region37
  $region36: #{generator_forward.1} parent=0 // pred_region
    _
  $region37: #{generator_forward.1} parent=0 // pred_fallthru
    _
  // Predicated region
  $region38: #{generator_forward.1} parent=0 // pred_check
    _
  $region39: #{generator_forward.1} parent=0 // pred_check_branch
    %39 = sbr.rel (0) target = $region41
  $region40: #{generator_forward.1} parent=0 // pred_region
    _
  $region41: #{generator_forward.1} parent=0 // pred_fallthru
    _
  // Predicated region
  $region42: #{generator_forward.1} parent=0 // pred_check
    _
  $region43: #{generator_forward.1} parent=0 // pred_check_branch
    %41 = sbr.rel (0) target = $region45
  $region44: #{generator_forward.1} parent=0 // pred_region
    _
  $region45: #{generator_forward.1} parent=0 // pred_fallthru
    _
  // Predicated region
  $region46: #{generator_forward.1} parent=0 // pred_check
    _
  $region47: #{generator_forward.1} parent=0 // pred_check_branch
    %43 = sbr.rel (0) target = $region49
  $region48: #{generator_forward.1} parent=0 // pred_region
    _
  $region49: #{generator_forward.1} parent=0 // pred_fallthru
    _
  // Predicated region
  $region50: #{generator_forward.1} parent=0 // pred_check
    _
  $region51: #{generator_forward.1} parent=0 // pred_check_branch
    %45 = sbr.rel (0) target = $region53
  $region52: #{generator_forward.1} parent=0 // pred_region
    _
  $region53: #{generator_forward.1} parent=0 // pred_fallthru
    _
  // Predicated region
  $region54: #{generator_forward.1} parent=0 // pred_check
    _
  $region55: #{generator_forward.1} parent=0 // pred_check_branch
    %47 = sbr.rel (0) target = $region57
  $region56: #{generator_forward.1} parent=0 // pred_region
    _
  $region57: #{generator_forward.1} parent=0 // pred_fallthru
    _
  // Predicated region
  $region58: #{generator_forward.1} parent=0 // pred_check
    _
  $region59: #{generator_forward.1} parent=0 // pred_check_branch
    %49 = sbr.rel (0) target = $region61
  $region60: #{generator_forward.1} parent=0 // pred_region
    _
  $region61: #{generator_forward.1} parent=0 // pred_fallthru
    _
  %v50 = vld [vmem:[%s0] sm:$0x3]
  %v51 = vld [vmem:[%s1] sm:$0xff]
  %v52 = vld [vmem:[%s1 + $0x8] sm:$0xff]
  %v53 = vld [vmem:[%s1 + $0x10] sm:$0xff]
  %v54 = vld [vmem:[%s1 + $0x18] sm:$0xff]
  %v55 = vld [vmem:[%s1 + $0x20] sm:$0xff]
  %v56 = vld [vmem:[%s1 + $0x28] sm:$0xff]
  %v57 = vld [vmem:[%s1 + $0x30] sm:$0xff]
  %v58 = vld [vmem:[%s1 + $0x38] sm:$0xff]
  %v59 = vld [vmem:[%s1 + $0x40] sm:$0xff]
  %v60 = vld [vmem:[%s1 + $0x48] sm:$0xff]
  %v61 = vld [vmem:[%s1 + $0x50] sm:$0xff]
  %v62 = vld [vmem:[%s1 + $0x58] sm:$0xff]
  %v63 = vld [vmem:[%s1 + $0x60] sm:$0xff]
  %v64 = vld [vmem:[%s1 + $0x68] sm:$0xff]
  %v65 = vld [vmem:[%s1 + $0x70] sm:$0xff]
  %v66 = vld [vmem:[%s1 + $0x78] sm:$0xff]
  %v67 = vld [vmem:[%s1 + $0x80] sm:$0x3f]
  %v68 = vld [vmem:[%s1 + $0x88] sm:$0x3f]
  %v69 = vld [vmem:[%s1 + $0x90] sm:$0x3f]
  %v70 = vld [vmem:[%s1 + $0x98] sm:$0x3f]
  %v71 = vld [vmem:[%s1 + $0xa0] sm:$0x3f]
  %v72 = vld [vmem:[%s1 + $0xa8] sm:$0x3f]
  %v73 = vld [vmem:[%s1 + $0xb0] sm:$0x3f]
  %v74 = vld [vmem:[%s1 + $0xb8] sm:$0x3f]
  %v75 = vld [vmem:[%s1 + $0xc0] sm:$0x3f]
  %v76 = vld [vmem:[%s1 + $0xc8] sm:$0x3f]
  %v77 = vld [vmem:[%s1 + $0xd0] sm:$0x3f]
  %v78 = vld [vmem:[%s1 + $0xd8] sm:$0x3f]
  %v79 = vld [vmem:[%s1 + $0xe0] sm:$0x3f]
  %v80 = vld [vmem:[%s1 + $0xe8] sm:$0x3f]
  %v81 = vld [vmem:[%s1 + $0xf0] sm:$0x3f]
  %v82 = vld [vmem:[%s1 + $0xf8] sm:$0x3f]
  %v83 = vld [vmem:[%s2] sm:$0xff]
  %v84 = vld [vmem:[%s2 + $0x8] sm:$0xff]
  %v87 = vlaneseq
  %v88 = vshrl.u32 %v87, 7
  %v89 = vsub.s32 0, %v88
  %v90 = vrot.slane %v83, %v89
  %v91 = vlaneseq
  %v92 = vshrl.u32 %v91, 7
  %v93 = vsub.s32 1, %v92
  %v94 = vrot.slane %v83, %v93
  %v95 = vlaneseq
  %v96 = vshrl.u32 %v95, 7
  %v97 = vsub.s32 2, %v96
  %v98 = vrot.slane %v83, %v97
  %v99 = vlaneseq
  %v100 = vshrl.u32 %v99, 7
  %v101 = vsub.s32 3, %v100
  %v102 = vrot.slane %v83, %v101
  %v103 = vlaneseq
  %v104 = vshrl.u32 %v103, 7
  %v105 = vsub.s32 4, %v104
  %v106 = vrot.slane %v83, %v105
  %v107 = vlaneseq
  %v108 = vshrl.u32 %v107, 7
  %v109 = vsub.s32 5, %v108
  %v110 = vrot.slane %v83, %v109
  %v111 = vlaneseq
  %v112 = vshrl.u32 %v111, 7
  %v113 = vsub.s32 6, %v112
  %v114 = vrot.slane %v83, %v113
  %v115 = vlaneseq
  %v116 = vshrl.u32 %v115, 7
  %v117 = vsub.s32 7, %v116
  %v118 = vrot.slane %v83, %v117
  %v119 = vlaneseq
  %v120 = vshrl.u32 %v119, 7
  %v121 = vsub.s32 0, %v120
  %v122 = vrot.slane %v84, %v121
  %v123 = vlaneseq
  %v124 = vshrl.u32 %v123, 7
  %v125 = vsub.s32 1, %v124
  %v126 = vrot.slane %v84, %v125
  %v127 = vlaneseq
  %v128 = vshrl.u32 %v127, 7
  %v129 = vsub.s32 2, %v128
  %v130 = vrot.slane %v84, %v129
  %v131 = vlaneseq
  %v132 = vshrl.u32 %v131, 7
  %v133 = vsub.s32 3, %v132
  %v134 = vrot.slane %v84, %v133
  %v135 = vlaneseq
  %v136 = vshrl.u32 %v135, 7
  %v137 = vsub.s32 4, %v136
  %v138 = vrot.slane %v84, %v137
  %v139 = vlaneseq
  %v140 = vshrl.u32 %v139, 7
  %v141 = vsub.s32 5, %v140
  %v142 = vrot.slane %v84, %v141
  %v143 = vlaneseq
  %v144 = vshrl.u32 %v143, 7
  %v145 = vsub.s32 6, %v144
  %v146 = vrot.slane %v84, %v145
  %v147 = vlaneseq
  %v148 = vshrl.u32 %v147, 7
  %v149 = vsub.s32 7, %v148
  %v150 = vrot.slane %v84, %v149
  %vm167 = vcmask 113664
  %v169 = vsel %vm167, %v50, 0
  %vm171 = vcmask 1045504
  %v173 = vsel %vm171, %v67, 0
  %v176 = vsel %vm171, %v68, 0
  %v179 = vsel %vm171, %v69, 0
  %v182 = vsel %vm171, %v70, 0
  %v185 = vsel %vm171, %v71, 0
  %v188 = vsel %vm171, %v72, 0
  %v191 = vsel %vm171, %v73, 0
  %v194 = vsel %vm171, %v74, 0
  %v197 = vsel %vm171, %v75, 0
  %v200 = vsel %vm171, %v76, 0
  %v203 = vsel %vm171, %v77, 0
  %v206 = vsel %vm171, %v78, 0
  %v209 = vsel %vm171, %v79, 0
  %v212 = vsel %vm171, %v80, 0
  %v215 = vsel %vm171, %v81, 0
  %v218 = vsel %vm171, %v82, 0
  %220 = vmatprep.subr.mxu0 %v52
  %221 = vmatpush1.msra.mxu0 %v51
  %222 = vmatprep.subr.mxu0 %v176
  %223 = vmatpush1.msra.mxu0 %v173
  %224 = vmatprep.subr.mxu0 0.0
  %225 = vmatpush1.msra.mxu0 0.0
  %226 = vmatprep.subr.mxu0 0.0
  %227 = vmatpush1.msra.mxu0 0.0
  %228 = vmatprep.subr.mxu0 0.0
  %229 = vmatpush1.msra.mxu0 0.0
  %230 = vmatprep.subr.mxu0 0.0
  %231 = vmatpush1.msra.mxu0 0.0
  %232 = vmatprep.subr.mxu0 0.0
  %233 = vmatpush1.msra.mxu0 0.0
  %234 = vmatprep.subr.mxu0 0.0
  %235 = vmatpush1.msra.mxu0 0.0
  %236 = vmatprep.subr.mxu0 0.0
  %237 = vmatpush1.msra.mxu0 0.0
  %238 = vmatprep.subr.mxu0 0.0
  %239 = vmatpush1.msra.mxu0 0.0
  %240 = vmatprep.subr.mxu0 0.0
  %241 = vmatpush1.msra.mxu0 0.0
  %242 = vmatprep.subr.mxu0 0.0
  %243 = vmatpush1.msra.mxu0 0.0
  %244 = vmatprep.subr.mxu0 0.0
  %245 = vmatpush1.msra.mxu0 0.0
  %246 = vmatprep.subr.mxu0 0.0
  %247 = vmatpush1.msra.mxu0 0.0
  %248 = vmatprep.subr.mxu0 0.0
  %249 = vmatpush1.msra.mxu0 0.0
  %250 = vmatprep.subr.mxu0 0.0
  %251 = vmatpush1.msra.mxu0 0.0
  %252 = vmatprep.subr.mxu0 0.0
  %253 = vmatpush1.msra.mxu0 0.0
  %254 = vmatprep.subr.mxu0 0.0
  %255 = vmatpush1.msra.mxu0 0.0
  %256 = vmatprep.subr.mxu0 0.0
  %257 = vmatpush1.msra.mxu0 0.0
  %258 = vmatprep.subr.mxu0 0.0
  %259 = vmatpush1.msra.mxu0 0.0
  %260 = vmatprep.subr.mxu0 0.0
  %261 = vmatpush1.msra.mxu0 0.0
  %262 = vmatprep.subr.mxu0 0.0
  %263 = vmatpush1.msra.mxu0 0.0
  %264 = vmatprep.subr.mxu0 0.0
  %265 = vmatpush1.msra.mxu0 0.0
  %266 = vmatprep.subr.mxu0 0.0
  %267 = vmatpush1.msra.mxu0 0.0
  %268 = vmatprep.subr.mxu0 0.0
  %269 = vmatpush1.msra.mxu0 0.0
  %270 = vmatprep.subr.mxu0 0.0
  %271 = vmatpush1.msra.mxu0 0.0
  %272 = vmatprep.subr.mxu0 0.0
  %273 = vmatpush1.msra.mxu0 0.0
  %274 = vmatprep.subr.mxu0 0.0
  %275 = vmatpush1.msra.mxu0 0.0
  %276 = vmatprep.subr.mxu0 0.0
  %277 = vmatpush1.msra.mxu0 0.0
  %278 = vmatprep.subr.mxu0 0.0
  %279 = vmatpush1.msra.mxu0 0.0
  %280 = vmatprep.subr.mxu0 0.0
  %281 = vmatpush1.msra.mxu0 0.0
  %282 = vmatprep.subr.mxu0 0.0
  %283 = vmatpush1.msra.mxu0 0.0
  %284 = vmatprep.mubr.f32.mxu0 0.0
  %285 = vmatmul.mubr.f32.gmra.mrb[0].mxu0 %v169
  %v286 = vpop.f32.mrb[0].mxu0
  %v287 = vadd.f32 %v90, %v286
  %v288 = vpop.f32.mrb[0].mxu0
  %v289 = vadd.f32 %v94, %v288
  %290 = vdwg.mxu0
  %291 = vmatprep.subr.mxu0 %v54
  %292 = vmatpush1.msra.mxu0 %v53
  %293 = vmatprep.subr.mxu0 %v182
  %294 = vmatpush1.msra.mxu0 %v179
  %295 = vmatprep.subr.mxu0 0.0
  %296 = vmatpush1.msra.mxu0 0.0
  %297 = vmatprep.subr.mxu0 0.0
  %298 = vmatpush1.msra.mxu0 0.0
  %299 = vmatprep.subr.mxu0 0.0
  %300 = vmatpush1.msra.mxu0 0.0
  %301 = vmatprep.subr.mxu0 0.0
  %302 = vmatpush1.msra.mxu0 0.0
  %303 = vmatprep.subr.mxu0 0.0
  %304 = vmatpush1.msra.mxu0 0.0
  %305 = vmatprep.subr.mxu0 0.0
  %306 = vmatpush1.msra.mxu0 0.0
  %307 = vmatprep.subr.mxu0 0.0
  %308 = vmatpush1.msra.mxu0 0.0
  %309 = vmatprep.subr.mxu0 0.0
  %310 = vmatpush1.msra.mxu0 0.0
  %311 = vmatprep.subr.mxu0 0.0
  %312 = vmatpush1.msra.mxu0 0.0
  %313 = vmatprep.subr.mxu0 0.0
  %314 = vmatpush1.msra.mxu0 0.0
  %315 = vmatprep.subr.mxu0 0.0
  %316 = vmatpush1.msra.mxu0 0.0
  %317 = vmatprep.subr.mxu0 0.0
  %318 = vmatpush1.msra.mxu0 0.0
  %319 = vmatprep.subr.mxu0 0.0
  %320 = vmatpush1.msra.mxu0 0.0
  %321 = vmatprep.subr.mxu0 0.0
  %322 = vmatpush1.msra.mxu0 0.0
  %323 = vmatprep.subr.mxu0 0.0
  %324 = vmatpush1.msra.mxu0 0.0
  %325 = vmatprep.subr.mxu0 0.0
  %326 = vmatpush1.msra.mxu0 0.0
  %327 = vmatprep.subr.mxu0 0.0
  %328 = vmatpush1.msra.mxu0 0.0
  %329 = vmatprep.subr.mxu0 0.0
  %330 = vmatpush1.msra.mxu0 0.0
  %331 = vmatprep.subr.mxu0 0.0
  %332 = vmatpush1.msra.mxu0 0.0
  %333 = vmatprep.subr.mxu0 0.0
  %334 = vmatpush1.msra.mxu0 0.0
  %335 = vmatprep.subr.mxu0 0.0
  %336 = vmatpush1.msra.mxu0 0.0
  %337 = vmatprep.subr.mxu0 0.0
  %338 = vmatpush1.msra.mxu0 0.0
  %339 = vmatprep.subr.mxu0 0.0
  %340 = vmatpush1.msra.mxu0 0.0
  %341 = vmatprep.subr.mxu0 0.0
  %342 = vmatpush1.msra.mxu0 0.0
  %343 = vmatprep.subr.mxu0 0.0
  %344 = vmatpush1.msra.mxu0 0.0
  %345 = vmatprep.subr.mxu0 0.0
  %346 = vmatpush1.msra.mxu0 0.0
  %347 = vmatprep.subr.mxu0 0.0
  %348 = vmatpush1.msra.mxu0 0.0
  %349 = vmatprep.subr.mxu0 0.0
  %350 = vmatpush1.msra.mxu0 0.0
  %351 = vmatprep.subr.mxu0 0.0
  %352 = vmatpush1.msra.mxu0 0.0
  %353 = vmatprep.subr.mxu0 0.0
  %354 = vmatpush1.msra.mxu0 0.0
  %355 = vmatprep.mubr.f32.mxu0 0.0
  %356 = vmatmul.mubr.f32.gmra.mrb[0].mxu0 %v169
  %v357 = vpop.f32.mrb[0].mxu0
  %v358 = vadd.f32 %v98, %v357
  %v359 = vpop.f32.mrb[0].mxu0
  %v360 = vadd.f32 %v102, %v359
  %361 = vdwg.mxu0
  %362 = vmatprep.subr.mxu0 %v56
  %363 = vmatpush1.msra.mxu0 %v55
  %364 = vmatprep.subr.mxu0 %v188
  %365 = vmatpush1.msra.mxu0 %v185
  %366 = vmatprep.subr.mxu0 0.0
  %367 = vmatpush1.msra.mxu0 0.0
  %368 = vmatprep.subr.mxu0 0.0
  %369 = vmatpush1.msra.mxu0 0.0
  %370 = vmatprep.subr.mxu0 0.0
  %371 = vmatpush1.msra.mxu0 0.0
  %372 = vmatprep.subr.mxu0 0.0
  %373 = vmatpush1.msra.mxu0 0.0
  %374 = vmatprep.subr.mxu0 0.0
  %375 = vmatpush1.msra.mxu0 0.0
  %376 = vmatprep.subr.mxu0 0.0
  %377 = vmatpush1.msra.mxu0 0.0
  %378 = vmatprep.subr.mxu0 0.0
  %379 = vmatpush1.msra.mxu0 0.0
  %380 = vmatprep.subr.mxu0 0.0
  %381 = vmatpush1.msra.mxu0 0.0
  %382 = vmatprep.subr.mxu0 0.0
  %383 = vmatpush1.msra.mxu0 0.0
  %384 = vmatprep.subr.mxu0 0.0
  %385 = vmatpush1.msra.mxu0 0.0
  %386 = vmatprep.subr.mxu0 0.0
  %387 = vmatpush1.msra.mxu0 0.0
  %388 = vmatprep.subr.mxu0 0.0
  %389 = vmatpush1.msra.mxu0 0.0
  %390 = vmatprep.subr.mxu0 0.0
  %391 = vmatpush1.msra.mxu0 0.0
  %392 = vmatprep.subr.mxu0 0.0
  %393 = vmatpush1.msra.mxu0 0.0
  %394 = vmatprep.subr.mxu0 0.0
  %395 = vmatpush1.msra.mxu0 0.0
  %396 = vmatprep.subr.mxu0 0.0
  %397 = vmatpush1.msra.mxu0 0.0
  %398 = vmatprep.subr.mxu0 0.0
  %399 = vmatpush1.msra.mxu0 0.0
  %400 = vmatprep.subr.mxu0 0.0
  %401 = vmatpush1.msra.mxu0 0.0
  %402 = vmatprep.subr.mxu0 0.0
  %403 = vmatpush1.msra.mxu0 0.0
  %404 = vmatprep.subr.mxu0 0.0
  %405 = vmatpush1.msra.mxu0 0.0
  %406 = vmatprep.subr.mxu0 0.0
  %407 = vmatpush1.msra.mxu0 0.0
  %408 = vmatprep.subr.mxu0 0.0
  %409 = vmatpush1.msra.mxu0 0.0
  %410 = vmatprep.subr.mxu0 0.0
  %411 = vmatpush1.msra.mxu0 0.0
  %412 = vmatprep.subr.mxu0 0.0
  %413 = vmatpush1.msra.mxu0 0.0
  %414 = vmatprep.subr.mxu0 0.0
  %415 = vmatpush1.msra.mxu0 0.0
  %416 = vmatprep.subr.mxu0 0.0
  %417 = vmatpush1.msra.mxu0 0.0
  %418 = vmatprep.subr.mxu0 0.0
  %419 = vmatpush1.msra.mxu0 0.0
  %420 = vmatprep.subr.mxu0 0.0
  %421 = vmatpush1.msra.mxu0 0.0
  %422 = vmatprep.subr.mxu0 0.0
  %423 = vmatpush1.msra.mxu0 0.0
  %424 = vmatprep.subr.mxu0 0.0
  %425 = vmatpush1.msra.mxu0 0.0
  %426 = vmatprep.mubr.f32.mxu0 0.0
  %427 = vmatmul.mubr.f32.gmra.mrb[0].mxu0 %v169
  %v428 = vpop.f32.mrb[0].mxu0
  %v429 = vadd.f32 %v106, %v428
  %v430 = vpop.f32.mrb[0].mxu0
  %v431 = vadd.f32 %v110, %v430
  %432 = vdwg.mxu0
  %433 = vmatprep.subr.mxu0 %v58
  %434 = vmatpush1.msra.mxu0 %v57
  %435 = vmatprep.subr.mxu0 %v194
  %436 = vmatpush1.msra.mxu0 %v191
  %437 = vmatprep.subr.mxu0 0.0
  %438 = vmatpush1.msra.mxu0 0.0
  %439 = vmatprep.subr.mxu0 0.0
  %440 = vmatpush1.msra.mxu0 0.0
  %441 = vmatprep.subr.mxu0 0.0
  %442 = vmatpush1.msra.mxu0 0.0
  %443 = vmatprep.subr.mxu0 0.0
  %444 = vmatpush1.msra.mxu0 0.0
  %445 = vmatprep.subr.mxu0 0.0
  %446 = vmatpush1.msra.mxu0 0.0
  %447 = vmatprep.subr.mxu0 0.0
  %448 = vmatpush1.msra.mxu0 0.0
  %449 = vmatprep.subr.mxu0 0.0
  %450 = vmatpush1.msra.mxu0 0.0
  %451 = vmatprep.subr.mxu0 0.0
  %452 = vmatpush1.msra.mxu0 0.0
  %453 = vmatprep.subr.mxu0 0.0
  %454 = vmatpush1.msra.mxu0 0.0
  %455 = vmatprep.subr.mxu0 0.0
  %456 = vmatpush1.msra.mxu0 0.0
  %457 = vmatprep.subr.mxu0 0.0
  %458 = vmatpush1.msra.mxu0 0.0
  %459 = vmatprep.subr.mxu0 0.0
  %460 = vmatpush1.msra.mxu0 0.0
  %461 = vmatprep.subr.mxu0 0.0
  %462 = vmatpush1.msra.mxu0 0.0
  %463 = vmatprep.subr.mxu0 0.0
  %464 = vmatpush1.msra.mxu0 0.0
  %465 = vmatprep.subr.mxu0 0.0
  %466 = vmatpush1.msra.mxu0 0.0
  %467 = vmatprep.subr.mxu0 0.0
  %468 = vmatpush1.msra.mxu0 0.0
  %469 = vmatprep.subr.mxu0 0.0
  %470 = vmatpush1.msra.mxu0 0.0
  %471 = vmatprep.subr.mxu0 0.0
  %472 = vmatpush1.msra.mxu0 0.0
  %473 = vmatprep.subr.mxu0 0.0
  %474 = vmatpush1.msra.mxu0 0.0
  %475 = vmatprep.subr.mxu0 0.0
  %476 = vmatpush1.msra.mxu0 0.0
  %477 = vmatprep.subr.mxu0 0.0
  %478 = vmatpush1.msra.mxu0 0.0
  %479 = vmatprep.subr.mxu0 0.0
  %480 = vmatpush1.msra.mxu0 0.0
  %481 = vmatprep.subr.mxu0 0.0
  %482 = vmatpush1.msra.mxu0 0.0
  %483 = vmatprep.subr.mxu0 0.0
  %484 = vmatpush1.msra.mxu0 0.0
  %485 = vmatprep.subr.mxu0 0.0
  %486 = vmatpush1.msra.mxu0 0.0
  %487 = vmatprep.subr.mxu0 0.0
  %488 = vmatpush1.msra.mxu0 0.0
  %489 = vmatprep.subr.mxu0 0.0
  %490 = vmatpush1.msra.mxu0 0.0
  %491 = vmatprep.subr.mxu0 0.0
  %492 = vmatpush1.msra.mxu0 0.0
  %493 = vmatprep.subr.mxu0 0.0
  %494 = vmatpush1.msra.mxu0 0.0
  %495 = vmatprep.subr.mxu0 0.0
  %496 = vmatpush1.msra.mxu0 0.0
  %497 = vmatprep.mubr.f32.mxu0 0.0
  %498 = vmatmul.mubr.f32.gmra.mrb[0].mxu0 %v169
  %v499 = vpop.f32.mrb[0].mxu0
  %v500 = vadd.f32 %v114, %v499
  %v501 = vpop.f32.mrb[0].mxu0
  %v502 = vadd.f32 %v118, %v501
  %503 = vdwg.mxu0
  %504 = vmatprep.subr.mxu0 %v60
  %505 = vmatpush1.msra.mxu0 %v59
  %506 = vmatprep.subr.mxu0 %v200
  %507 = vmatpush1.msra.mxu0 %v197
  %508 = vmatprep.subr.mxu0 0.0
  %509 = vmatpush1.msra.mxu0 0.0
  %510 = vmatprep.subr.mxu0 0.0
  %511 = vmatpush1.msra.mxu0 0.0
  %512 = vmatprep.subr.mxu0 0.0
  %513 = vmatpush1.msra.mxu0 0.0
  %514 = vmatprep.subr.mxu0 0.0
  %515 = vmatpush1.msra.mxu0 0.0
  %516 = vmatprep.subr.mxu0 0.0
  %517 = vmatpush1.msra.mxu0 0.0
  %518 = vmatprep.subr.mxu0 0.0
  %519 = vmatpush1.msra.mxu0 0.0
  %520 = vmatprep.subr.mxu0 0.0
  %521 = vmatpush1.msra.mxu0 0.0
  %522 = vmatprep.subr.mxu0 0.0
  %523 = vmatpush1.msra.mxu0 0.0
  %524 = vmatprep.subr.mxu0 0.0
  %525 = vmatpush1.msra.mxu0 0.0
  %526 = vmatprep.subr.mxu0 0.0
  %527 = vmatpush1.msra.mxu0 0.0
  %528 = vmatprep.subr.mxu0 0.0
  %529 = vmatpush1.msra.mxu0 0.0
  %530 = vmatprep.subr.mxu0 0.0
  %531 = vmatpush1.msra.mxu0 0.0
  %532 = vmatprep.subr.mxu0 0.0
  %533 = vmatpush1.msra.mxu0 0.0
  %534 = vmatprep.subr.mxu0 0.0
  %535 = vmatpush1.msra.mxu0 0.0
  %536 = vmatprep.subr.mxu0 0.0
  %537 = vmatpush1.msra.mxu0 0.0
  %538 = vmatprep.subr.mxu0 0.0
  %539 = vmatpush1.msra.mxu0 0.0
  %540 = vmatprep.subr.mxu0 0.0
  %541 = vmatpush1.msra.mxu0 0.0
  %542 = vmatprep.subr.mxu0 0.0
  %543 = vmatpush1.msra.mxu0 0.0
  %544 = vmatprep.subr.mxu0 0.0
  %545 = vmatpush1.msra.mxu0 0.0
  %546 = vmatprep.subr.mxu0 0.0
  %547 = vmatpush1.msra.mxu0 0.0
  %548 = vmatprep.subr.mxu0 0.0
  %549 = vmatpush1.msra.mxu0 0.0
  %550 = vmatprep.subr.mxu0 0.0
  %551 = vmatpush1.msra.mxu0 0.0
  %552 = vmatprep.subr.mxu0 0.0
  %553 = vmatpush1.msra.mxu0 0.0
  %554 = vmatprep.subr.mxu0 0.0
  %555 = vmatpush1.msra.mxu0 0.0
  %556 = vmatprep.subr.mxu0 0.0
  %557 = vmatpush1.msra.mxu0 0.0
  %558 = vmatprep.subr.mxu0 0.0
  %559 = vmatpush1.msra.mxu0 0.0
  %560 = vmatprep.subr.mxu0 0.0
  %561 = vmatpush1.msra.mxu0 0.0
  %562 = vmatprep.subr.mxu0 0.0
  %563 = vmatpush1.msra.mxu0 0.0
  %564 = vmatprep.subr.mxu0 0.0
  %565 = vmatpush1.msra.mxu0 0.0
  %566 = vmatprep.subr.mxu0 0.0
  %567 = vmatpush1.msra.mxu0 0.0
  %568 = vmatprep.mubr.f32.mxu0 0.0
  %569 = vmatmul.mubr.f32.gmra.mrb[0].mxu0 %v169
  %v570 = vpop.f32.mrb[0].mxu0
  %v571 = vadd.f32 %v122, %v570
  %v572 = vpop.f32.mrb[0].mxu0
  %v573 = vadd.f32 %v126, %v572
  %574 = vdwg.mxu0
  %575 = vmatprep.subr.mxu0 %v62
  %576 = vmatpush1.msra.mxu0 %v61
  %577 = vmatprep.subr.mxu0 %v206
  %578 = vmatpush1.msra.mxu0 %v203
  %579 = vmatprep.subr.mxu0 0.0
  %580 = vmatpush1.msra.mxu0 0.0
  %581 = vmatprep.subr.mxu0 0.0
  %582 = vmatpush1.msra.mxu0 0.0
  %583 = vmatprep.subr.mxu0 0.0
  %584 = vmatpush1.msra.mxu0 0.0
  %585 = vmatprep.subr.mxu0 0.0
  %586 = vmatpush1.msra.mxu0 0.0
  %587 = vmatprep.subr.mxu0 0.0
  %588 = vmatpush1.msra.mxu0 0.0
  %589 = vmatprep.subr.mxu0 0.0
  %590 = vmatpush1.msra.mxu0 0.0
  %591 = vmatprep.subr.mxu0 0.0
  %592 = vmatpush1.msra.mxu0 0.0
  %593 = vmatprep.subr.mxu0 0.0
  %594 = vmatpush1.msra.mxu0 0.0
  %595 = vmatprep.subr.mxu0 0.0
  %596 = vmatpush1.msra.mxu0 0.0
  %597 = vmatprep.subr.mxu0 0.0
  %598 = vmatpush1.msra.mxu0 0.0
  %599 = vmatprep.subr.mxu0 0.0
  %600 = vmatpush1.msra.mxu0 0.0
  %601 = vmatprep.subr.mxu0 0.0
  %602 = vmatpush1.msra.mxu0 0.0
  %603 = vmatprep.subr.mxu0 0.0
  %604 = vmatpush1.msra.mxu0 0.0
  %605 = vmatprep.subr.mxu0 0.0
  %606 = vmatpush1.msra.mxu0 0.0
  %607 = vmatprep.subr.mxu0 0.0
  %608 = vmatpush1.msra.mxu0 0.0
  %609 = vmatprep.subr.mxu0 0.0
  %610 = vmatpush1.msra.mxu0 0.0
  %611 = vmatprep.subr.mxu0 0.0
  %612 = vmatpush1.msra.mxu0 0.0
  %613 = vmatprep.subr.mxu0 0.0
  %614 = vmatpush1.msra.mxu0 0.0
  %615 = vmatprep.subr.mxu0 0.0
  %616 = vmatpush1.msra.mxu0 0.0
  %617 = vmatprep.subr.mxu0 0.0
  %618 = vmatpush1.msra.mxu0 0.0
  %619 = vmatprep.subr.mxu0 0.0
  %620 = vmatpush1.msra.mxu0 0.0
  %621 = vmatprep.subr.mxu0 0.0
  %622 = vmatpush1.msra.mxu0 0.0
  %623 = vmatprep.subr.mxu0 0.0
  %624 = vmatpush1.msra.mxu0 0.0
  %625 = vmatprep.subr.mxu0 0.0
  %626 = vmatpush1.msra.mxu0 0.0
  %627 = vmatprep.subr.mxu0 0.0
  %628 = vmatpush1.msra.mxu0 0.0
  %629 = vmatprep.subr.mxu0 0.0
  %630 = vmatpush1.msra.mxu0 0.0
  %631 = vmatprep.subr.mxu0 0.0
  %632 = vmatpush1.msra.mxu0 0.0
  %633 = vmatprep.subr.mxu0 0.0
  %634 = vmatpush1.msra.mxu0 0.0
  %635 = vmatprep.subr.mxu0 0.0
  %636 = vmatpush1.msra.mxu0 0.0
  %637 = vmatprep.subr.mxu0 0.0
  %638 = vmatpush1.msra.mxu0 0.0
  %639 = vmatprep.mubr.f32.mxu0 0.0
  %640 = vmatmul.mubr.f32.gmra.mrb[0].mxu0 %v169
  %v641 = vpop.f32.mrb[0].mxu0
  %v642 = vadd.f32 %v130, %v641
  %v643 = vpop.f32.mrb[0].mxu0
  %v644 = vadd.f32 %v134, %v643
  %645 = vdwg.mxu0
  %646 = vmatprep.subr.mxu0 %v64
  %647 = vmatpush1.msra.mxu0 %v63
  %648 = vmatprep.subr.mxu0 %v212
  %649 = vmatpush1.msra.mxu0 %v209
  %650 = vmatprep.subr.mxu0 0.0
  %651 = vmatpush1.msra.mxu0 0.0
  %652 = vmatprep.subr.mxu0 0.0
  %653 = vmatpush1.msra.mxu0 0.0
  %654 = vmatprep.subr.mxu0 0.0
  %655 = vmatpush1.msra.mxu0 0.0
  %656 = vmatprep.subr.mxu0 0.0
  %657 = vmatpush1.msra.mxu0 0.0
  %658 = vmatprep.subr.mxu0 0.0
  %659 = vmatpush1.msra.mxu0 0.0
  %660 = vmatprep.subr.mxu0 0.0
  %661 = vmatpush1.msra.mxu0 0.0
  %662 = vmatprep.subr.mxu0 0.0
  %663 = vmatpush1.msra.mxu0 0.0
  %664 = vmatprep.subr.mxu0 0.0
  %665 = vmatpush1.msra.mxu0 0.0
  %666 = vmatprep.subr.mxu0 0.0
  %667 = vmatpush1.msra.mxu0 0.0
  %668 = vmatprep.subr.mxu0 0.0
  %669 = vmatpush1.msra.mxu0 0.0
  %670 = vmatprep.subr.mxu0 0.0
  %671 = vmatpush1.msra.mxu0 0.0
  %672 = vmatprep.subr.mxu0 0.0
  %673 = vmatpush1.msra.mxu0 0.0
  %674 = vmatprep.subr.mxu0 0.0
  %675 = vmatpush1.msra.mxu0 0.0
  %676 = vmatprep.subr.mxu0 0.0
  %677 = vmatpush1.msra.mxu0 0.0
  %678 = vmatprep.subr.mxu0 0.0
  %679 = vmatpush1.msra.mxu0 0.0
  %680 = vmatprep.subr.mxu0 0.0
  %681 = vmatpush1.msra.mxu0 0.0
  %682 = vmatprep.subr.mxu0 0.0
  %683 = vmatpush1.msra.mxu0 0.0
  %684 = vmatprep.subr.mxu0 0.0
  %685 = vmatpush1.msra.mxu0 0.0
  %686 = vmatprep.subr.mxu0 0.0
  %687 = vmatpush1.msra.mxu0 0.0
  %688 = vmatprep.subr.mxu0 0.0
  %689 = vmatpush1.msra.mxu0 0.0
  %690 = vmatprep.subr.mxu0 0.0
  %691 = vmatpush1.msra.mxu0 0.0
  %692 = vmatprep.subr.mxu0 0.0
  %693 = vmatpush1.msra.mxu0 0.0
  %694 = vmatprep.subr.mxu0 0.0
  %695 = vmatpush1.msra.mxu0 0.0
  %696 = vmatprep.subr.mxu0 0.0
  %697 = vmatpush1.msra.mxu0 0.0
  %698 = vmatprep.subr.mxu0 0.0
  %699 = vmatpush1.msra.mxu0 0.0
  %700 = vmatprep.subr.mxu0 0.0
  %701 = vmatpush1.msra.mxu0 0.0
  %702 = vmatprep.subr.mxu0 0.0
  %703 = vmatpush1.msra.mxu0 0.0
  %704 = vmatprep.subr.mxu0 0.0
  %705 = vmatpush1.msra.mxu0 0.0
  %706 = vmatprep.subr.mxu0 0.0
  %707 = vmatpush1.msra.mxu0 0.0
  %708 = vmatprep.subr.mxu0 0.0
  %709 = vmatpush1.msra.mxu0 0.0
  %710 = vmatprep.mubr.f32.mxu0 0.0
  %711 = vmatmul.mubr.f32.gmra.mrb[0].mxu0 %v169
  %v712 = vpop.f32.mrb[0].mxu0
  %v713 = vadd.f32 %v138, %v712
  %v714 = vpop.f32.mrb[0].mxu0
  %v715 = vadd.f32 %v142, %v714
  %716 = vdwg.mxu0
  %717 = vmatprep.subr.mxu0 %v66
  %718 = vmatpush1.msra.mxu0 %v65
  %719 = vmatprep.subr.mxu0 %v218
  %720 = vmatpush1.msra.mxu0 %v215
  %721 = vmatprep.subr.mxu0 0.0
  %722 = vmatpush1.msra.mxu0 0.0
  %723 = vmatprep.subr.mxu0 0.0
  %724 = vmatpush1.msra.mxu0 0.0
  %725 = vmatprep.subr.mxu0 0.0
  %726 = vmatpush1.msra.mxu0 0.0
  %727 = vmatprep.subr.mxu0 0.0
  %728 = vmatpush1.msra.mxu0 0.0
  %729 = vmatprep.subr.mxu0 0.0
  %730 = vmatpush1.msra.mxu0 0.0
  %731 = vmatprep.subr.mxu0 0.0
  %732 = vmatpush1.msra.mxu0 0.0
  %733 = vmatprep.subr.mxu0 0.0
  %734 = vmatpush1.msra.mxu0 0.0
  %735 = vmatprep.subr.mxu0 0.0
  %736 = vmatpush1.msra.mxu0 0.0
  %737 = vmatprep.subr.mxu0 0.0
  %738 = vmatpush1.msra.mxu0 0.0
  %739 = vmatprep.subr.mxu0 0.0
  %740 = vmatpush1.msra.mxu0 0.0
  %741 = vmatprep.subr.mxu0 0.0
  %742 = vmatpush1.msra.mxu0 0.0
  %743 = vmatprep.subr.mxu0 0.0
  %744 = vmatpush1.msra.mxu0 0.0
  %745 = vmatprep.subr.mxu0 0.0
  %746 = vmatpush1.msra.mxu0 0.0
  %747 = vmatprep.subr.mxu0 0.0
  %748 = vmatpush1.msra.mxu0 0.0
  %749 = vmatprep.subr.mxu0 0.0
  %750 = vmatpush1.msra.mxu0 0.0
  %751 = vmatprep.subr.mxu0 0.0
  %752 = vmatpush1.msra.mxu0 0.0
  %753 = vmatprep.subr.mxu0 0.0
  %754 = vmatpush1.msra.mxu0 0.0
  %755 = vmatprep.subr.mxu0 0.0
  %756 = vmatpush1.msra.mxu0 0.0
  %757 = vmatprep.subr.mxu0 0.0
  %758 = vmatpush1.msra.mxu0 0.0
  %759 = vmatprep.subr.mxu0 0.0
  %760 = vmatpush1.msra.mxu0 0.0
  %761 = vmatprep.subr.mxu0 0.0
  %762 = vmatpush1.msra.mxu0 0.0
  %763 = vmatprep.subr.mxu0 0.0
  %764 = vmatpush1.msra.mxu0 0.0
  %765 = vmatprep.subr.mxu0 0.0
  %766 = vmatpush1.msra.mxu0 0.0
  %767 = vmatprep.subr.mxu0 0.0
  %768 = vmatpush1.msra.mxu0 0.0
  %769 = vmatprep.subr.mxu0 0.0
  %770 = vmatpush1.msra.mxu0 0.0
  %771 = vmatprep.subr.mxu0 0.0
  %772 = vmatpush1.msra.mxu0 0.0
  %773 = vmatprep.subr.mxu0 0.0
  %774 = vmatpush1.msra.mxu0 0.0
  %775 = vmatprep.subr.mxu0 0.0
  %776 = vmatpush1.msra.mxu0 0.0
  %777 = vmatprep.subr.mxu0 0.0
  %778 = vmatpush1.msra.mxu0 0.0
  %779 = vmatprep.subr.mxu0 0.0
  %780 = vmatpush1.msra.mxu0 0.0
  %781 = vmatprep.mubr.f32.mxu0 0.0
  %782 = vmatmul.mubr.f32.gmra.mrb[0].mxu0 %v169
  %v783 = vpop.f32.mrb[0].mxu0
  %v784 = vadd.f32 %v146, %v783
  %v785 = vpop.f32.mrb[0].mxu0
  %v786 = vadd.f32 %v150, %v785
  %787 = vdwg.mxu0
  %v790 = vunpack.c.l.s4 1966171168
  %v791 = vunpack.c.0.s8 %v790
  %v792 = vlaneseq
  %v793 = vshrl.u32 %v792, 7
  %v794 = vsub.s32 %v791, %v793
  %v795 = vrot.slane %v287, %v794
  %v796 = vcombine.high %v795, %v795
  %v798 = vunpack.c.l.s4 1966171168
  %v799 = vunpack.c.0.s8 %v798
  %v800 = vlaneseq
  %v801 = vshrl.u32 %v800, 7
  %v802 = vsub.s32 %v799, %v801
  %v803 = vrot.slane %v795, %v802
  %v805 = vunpack.c.l.s4 1966171168
  %v806 = vunpack.c.0.s8 %v805
  %v807 = vlaneseq
  %v808 = vshrl.u32 %v807, 7
  %v809 = vsub.s32 %v806, %v808
  %v810 = vrot.slane %v796, %v809
  %v815 = vunpack.c.l.s4 1966171168
  %v816 = vunpack.c.0.s8 %v815
  %v817 = vlaneseq
  %v818 = vshrl.u32 %v817, 7
  %v819 = vsub.s32 %v816, %v818
  %v820 = vrot.slane %v289, %v819
  %v821 = vcombine.high %v820, %v820
  %v823 = vunpack.c.l.s4 1966171168
  %v824 = vunpack.c.0.s8 %v823
  %v825 = vlaneseq
  %v826 = vshrl.u32 %v825, 7
  %v827 = vsub.s32 %v824, %v826
  %v828 = vrot.slane %v820, %v827
  %v830 = vunpack.c.l.s4 1966171168
  %v831 = vunpack.c.0.s8 %v830
  %v832 = vlaneseq
  %v833 = vshrl.u32 %v832, 7
  %v834 = vsub.s32 %v831, %v833
  %v835 = vrot.slane %v821, %v834
  %v838 = vunpack.c.l.s4 1966171168
  %v839 = vunpack.c.0.s8 %v838
  %v840 = vlaneseq
  %v841 = vshrl.u32 %v840, 7
  %v842 = vsub.s32 %v839, %v841
  %v843 = vrot.slane %v358, %v842
  %v844 = vcombine.high %v843, %v843
  %v846 = vunpack.c.l.s4 1966171168
  %v847 = vunpack.c.0.s8 %v846
  %v848 = vlaneseq
  %v849 = vshrl.u32 %v848, 7
  %v850 = vsub.s32 %v847, %v849
  %v851 = vrot.slane %v843, %v850
  %v853 = vunpack.c.l.s4 1966171168
  %v854 = vunpack.c.0.s8 %v853
  %v855 = vlaneseq
  %v856 = vshrl.u32 %v855, 7
  %v857 = vsub.s32 %v854, %v856
  %v858 = vrot.slane %v844, %v857
  %v861 = vunpack.c.l.s4 1966171168
  %v862 = vunpack.c.0.s8 %v861
  %v863 = vlaneseq
  %v864 = vshrl.u32 %v863, 7
  %v865 = vsub.s32 %v862, %v864
  %v866 = vrot.slane %v360, %v865
  %v867 = vcombine.high %v866, %v866
  %v869 = vunpack.c.l.s4 1966171168
  %v870 = vunpack.c.0.s8 %v869
  %v871 = vlaneseq
  %v872 = vshrl.u32 %v871, 7
  %v873 = vsub.s32 %v870, %v872
  %v874 = vrot.slane %v866, %v873
  %v876 = vunpack.c.l.s4 1966171168
  %v877 = vunpack.c.0.s8 %v876
  %v878 = vlaneseq
  %v879 = vshrl.u32 %v878, 7
  %v880 = vsub.s32 %v877, %v879
  %v881 = vrot.slane %v867, %v880
  %v882 = vlaneseq
  %v883 = vshrl.u32 %v882, 7
  %v884 = vsub.s32 0, %v883
  %v885 = vrot.slane %v828, %v884
  %v886 = vlaneseq
  %v887 = vshrl.u32 %v886, 7
  %v888 = vsub.s32 0, %v887
  %v889 = vrot.slane %v835, %v888
  %v892 = vlaneseq
  %v893 = vshrl.u32 %v892, 7
  %v894 = vsub.s32 0, %v893
  %v895 = vrot.slane %v851, %v894
  %v896 = vlaneseq
  %v897 = vshrl.u32 %v896, 7
  %v898 = vsub.s32 0, %v897
  %v899 = vrot.slane %v858, %v898
  %v902 = vlaneseq
  %v903 = vshrl.u32 %v902, 7
  %v904 = vsub.s32 0, %v903
  %v905 = vrot.slane %v874, %v904
  %v906 = vlaneseq
  %v907 = vshrl.u32 %v906, 7
  %v908 = vsub.s32 0, %v907
  %v909 = vrot.slane %v881, %v908
  %vm912 = vcmask 1040384
  %v913 = vsel %vm912, %v803, %v885
  %v914 = vsel %vm912, %v810, %v889
  %vm915 = vcmask 1041408
  %v916 = vsel %vm915, %v913, %v895
  %v917 = vsel %vm915, %v914, %v899
  %vm918 = vcmask 1042432
  %v919 = vsel %vm918, %v916, %v905
  %v920 = vsel %vm918, %v917, %v909
  %v923 = vunpack.c.l.s4 1966171168
  %v924 = vunpack.c.0.s8 %v923
  %v925 = vlaneseq
  %v926 = vshrl.u32 %v925, 7
  %v927 = vsub.s32 %v924, %v926
  %v928 = vrot.slane %v429, %v927
  %v929 = vcombine.high %v928, %v928
  %v931 = vunpack.c.l.s4 1966171168
  %v932 = vunpack.c.0.s8 %v931
  %v933 = vlaneseq
  %v934 = vshrl.u32 %v933, 7
  %v935 = vsub.s32 %v932, %v934
  %v936 = vrot.slane %v928, %v935
  %v938 = vunpack.c.l.s4 1966171168
  %v939 = vunpack.c.0.s8 %v938
  %v940 = vlaneseq
  %v941 = vshrl.u32 %v940, 7
  %v942 = vsub.s32 %v939, %v941
  %v943 = vrot.slane %v929, %v942
  %v948 = vunpack.c.l.s4 1966171168
  %v949 = vunpack.c.0.s8 %v948
  %v950 = vlaneseq
  %v951 = vshrl.u32 %v950, 7
  %v952 = vsub.s32 %v949, %v951
  %v953 = vrot.slane %v431, %v952
  %v954 = vcombine.high %v953, %v953
  %v956 = vunpack.c.l.s4 1966171168
  %v957 = vunpack.c.0.s8 %v956
  %v958 = vlaneseq
  %v959 = vshrl.u32 %v958, 7
  %v960 = vsub.s32 %v957, %v959
  %v961 = vrot.slane %v953, %v960
  %v963 = vunpack.c.l.s4 1966171168
  %v964 = vunpack.c.0.s8 %v963
  %v965 = vlaneseq
  %v966 = vshrl.u32 %v965, 7
  %v967 = vsub.s32 %v964, %v966
  %v968 = vrot.slane %v954, %v967
  %v971 = vunpack.c.l.s4 1966171168
  %v972 = vunpack.c.0.s8 %v971
  %v973 = vlaneseq
  %v974 = vshrl.u32 %v973, 7
  %v975 = vsub.s32 %v972, %v974
  %v976 = vrot.slane %v500, %v975
  %v977 = vcombine.high %v976, %v976
  %v979 = vunpack.c.l.s4 1966171168
  %v980 = vunpack.c.0.s8 %v979
  %v981 = vlaneseq
  %v982 = vshrl.u32 %v981, 7
  %v983 = vsub.s32 %v980, %v982
  %v984 = vrot.slane %v976, %v983
  %v986 = vunpack.c.l.s4 1966171168
  %v987 = vunpack.c.0.s8 %v986
  %v988 = vlaneseq
  %v989 = vshrl.u32 %v988, 7
  %v990 = vsub.s32 %v987, %v989
  %v991 = vrot.slane %v977, %v990
  %v994 = vunpack.c.l.s4 1966171168
  %v995 = vunpack.c.0.s8 %v994
  %v996 = vlaneseq
  %v997 = vshrl.u32 %v996, 7
  %v998 = vsub.s32 %v995, %v997
  %v999 = vrot.slane %v502, %v998
  %v1000 = vcombine.high %v999, %v999
  %v1002 = vunpack.c.l.s4 1966171168
  %v1003 = vunpack.c.0.s8 %v1002
  %v1004 = vlaneseq
  %v1005 = vshrl.u32 %v1004, 7
  %v1006 = vsub.s32 %v1003, %v1005
  %v1007 = vrot.slane %v999, %v1006
  %v1009 = vunpack.c.l.s4 1966171168
  %v1010 = vunpack.c.0.s8 %v1009
  %v1011 = vlaneseq
  %v1012 = vshrl.u32 %v1011, 7
  %v1013 = vsub.s32 %v1010, %v1012
  %v1014 = vrot.slane %v1000, %v1013
  %v1015 = vlaneseq
  %v1016 = vshrl.u32 %v1015, 7
  %v1017 = vsub.s32 0, %v1016
  %v1018 = vrot.slane %v961, %v1017
  %v1019 = vlaneseq
  %v1020 = vshrl.u32 %v1019, 7
  %v1021 = vsub.s32 0, %v1020
  %v1022 = vrot.slane %v968, %v1021
  %v1025 = vlaneseq
  %v1026 = vshrl.u32 %v1025, 7
  %v1027 = vsub.s32 0, %v1026
  %v1028 = vrot.slane %v984, %v1027
  %v1029 = vlaneseq
  %v1030 = vshrl.u32 %v1029, 7
  %v1031 = vsub.s32 0, %v1030
  %v1032 = vrot.slane %v991, %v1031
  %v1035 = vlaneseq
  %v1036 = vshrl.u32 %v1035, 7
  %v1037 = vsub.s32 0, %v1036
  %v1038 = vrot.slane %v1007, %v1037
  %v1039 = vlaneseq
  %v1040 = vshrl.u32 %v1039, 7
  %v1041 = vsub.s32 0, %v1040
  %v1042 = vrot.slane %v1014, %v1041
  %v1045 = vsel %vm912, %v936, %v1018
  %v1046 = vsel %vm912, %v943, %v1022
  %v1047 = vsel %vm915, %v1045, %v1028
  %v1048 = vsel %vm915, %v1046, %v1032
  %v1049 = vsel %vm918, %v1047, %v1038
  %v1050 = vsel %vm918, %v1048, %v1042
  %v1053 = vunpack.c.l.s4 1966171168
  %v1054 = vunpack.c.0.s8 %v1053
  %v1055 = vlaneseq
  %v1056 = vshrl.u32 %v1055, 7
  %v1057 = vsub.s32 %v1054, %v1056
  %v1058 = vrot.slane %v571, %v1057
  %v1059 = vcombine.high %v1058, %v1058
  %v1061 = vunpack.c.l.s4 1966171168
  %v1062 = vunpack.c.0.s8 %v1061
  %v1063 = vlaneseq
  %v1064 = vshrl.u32 %v1063, 7
  %v1065 = vsub.s32 %v1062, %v1064
  %v1066 = vrot.slane %v1058, %v1065
  %v1068 = vunpack.c.l.s4 1966171168
  %v1069 = vunpack.c.0.s8 %v1068
  %v1070 = vlaneseq
  %v1071 = vshrl.u32 %v1070, 7
  %v1072 = vsub.s32 %v1069, %v1071
  %v1073 = vrot.slane %v1059, %v1072
  %v1078 = vunpack.c.l.s4 1966171168
  %v1079 = vunpack.c.0.s8 %v1078
  %v1080 = vlaneseq
  %v1081 = vshrl.u32 %v1080, 7
  %v1082 = vsub.s32 %v1079, %v1081
  %v1083 = vrot.slane %v573, %v1082
  %v1084 = vcombine.high %v1083, %v1083
  %v1086 = vunpack.c.l.s4 1966171168
  %v1087 = vunpack.c.0.s8 %v1086
  %v1088 = vlaneseq
  %v1089 = vshrl.u32 %v1088, 7
  %v1090 = vsub.s32 %v1087, %v1089
  %v1091 = vrot.slane %v1083, %v1090
  %v1093 = vunpack.c.l.s4 1966171168
  %v1094 = vunpack.c.0.s8 %v1093
  %v1095 = vlaneseq
  %v1096 = vshrl.u32 %v1095, 7
  %v1097 = vsub.s32 %v1094, %v1096
  %v1098 = vrot.slane %v1084, %v1097
  %v1101 = vunpack.c.l.s4 1966171168
  %v1102 = vunpack.c.0.s8 %v1101
  %v1103 = vlaneseq
  %v1104 = vshrl.u32 %v1103, 7
  %v1105 = vsub.s32 %v1102, %v1104
  %v1106 = vrot.slane %v642, %v1105
  %v1107 = vcombine.high %v1106, %v1106
  %v1109 = vunpack.c.l.s4 1966171168
  %v1110 = vunpack.c.0.s8 %v1109
  %v1111 = vlaneseq
  %v1112 = vshrl.u32 %v1111, 7
  %v1113 = vsub.s32 %v1110, %v1112
  %v1114 = vrot.slane %v1106, %v1113
  %v1116 = vunpack.c.l.s4 1966171168
  %v1117 = vunpack.c.0.s8 %v1116
  %v1118 = vlaneseq
  %v1119 = vshrl.u32 %v1118, 7
  %v1120 = vsub.s32 %v1117, %v1119
  %v1121 = vrot.slane %v1107, %v1120
  %v1124 = vunpack.c.l.s4 1966171168
  %v1125 = vunpack.c.0.s8 %v1124
  %v1126 = vlaneseq
  %v1127 = vshrl.u32 %v1126, 7
  %v1128 = vsub.s32 %v1125, %v1127
  %v1129 = vrot.slane %v644, %v1128
  %v1130 = vcombine.high %v1129, %v1129
  %v1132 = vunpack.c.l.s4 1966171168
  %v1133 = vunpack.c.0.s8 %v1132
  %v1134 = vlaneseq
  %v1135 = vshrl.u32 %v1134, 7
  %v1136 = vsub.s32 %v1133, %v1135
  %v1137 = vrot.slane %v1129, %v1136
  %v1139 = vunpack.c.l.s4 1966171168
  %v1140 = vunpack.c.0.s8 %v1139
  %v1141 = vlaneseq
  %v1142 = vshrl.u32 %v1141, 7
  %v1143 = vsub.s32 %v1140, %v1142
  %v1144 = vrot.slane %v1130, %v1143
  %v1145 = vlaneseq
  %v1146 = vshrl.u32 %v1145, 7
  %v1147 = vsub.s32 0, %v1146
  %v1148 = vrot.slane %v1091, %v1147
  %v1149 = vlaneseq
  %v1150 = vshrl.u32 %v1149, 7
  %v1151 = vsub.s32 0, %v1150
  %v1152 = vrot.slane %v1098, %v1151
  %v1155 = vlaneseq
  %v1156 = vshrl.u32 %v1155, 7
  %v1157 = vsub.s32 0, %v1156
  %v1158 = vrot.slane %v1114, %v1157
  %v1159 = vlaneseq
  %v1160 = vshrl.u32 %v1159, 7
  %v1161 = vsub.s32 0, %v1160
  %v1162 = vrot.slane %v1121, %v1161
  %v1165 = vlaneseq
  %v1166 = vshrl.u32 %v1165, 7
  %v1167 = vsub.s32 0, %v1166
  %v1168 = vrot.slane %v1137, %v1167
  %v1169 = vlaneseq
  %v1170 = vshrl.u32 %v1169, 7
  %v1171 = vsub.s32 0, %v1170
  %v1172 = vrot.slane %v1144, %v1171
  %v1175 = vsel %vm912, %v1066, %v1148
  %v1176 = vsel %vm912, %v1073, %v1152
  %v1177 = vsel %vm915, %v1175, %v1158
  %v1178 = vsel %vm915, %v1176, %v1162
  %v1179 = vsel %vm918, %v1177, %v1168
  %v1180 = vsel %vm918, %v1178, %v1172
  %v1183 = vunpack.c.l.s4 1966171168
  %v1184 = vunpack.c.0.s8 %v1183
  %v1185 = vlaneseq
  %v1186 = vshrl.u32 %v1185, 7
  %v1187 = vsub.s32 %v1184, %v1186
  %v1188 = vrot.slane %v713, %v1187
  %v1189 = vcombine.high %v1188, %v1188
  %v1191 = vunpack.c.l.s4 1966171168
  %v1192 = vunpack.c.0.s8 %v1191
  %v1193 = vlaneseq
  %v1194 = vshrl.u32 %v1193, 7
  %v1195 = vsub.s32 %v1192, %v1194
  %v1196 = vrot.slane %v1188, %v1195
  %v1198 = vunpack.c.l.s4 1966171168
  %v1199 = vunpack.c.0.s8 %v1198
  %v1200 = vlaneseq
  %v1201 = vshrl.u32 %v1200, 7
  %v1202 = vsub.s32 %v1199, %v1201
  %v1203 = vrot.slane %v1189, %v1202
  %v1208 = vunpack.c.l.s4 1966171168
  %v1209 = vunpack.c.0.s8 %v1208
  %v1210 = vlaneseq
  %v1211 = vshrl.u32 %v1210, 7
  %v1212 = vsub.s32 %v1209, %v1211
  %v1213 = vrot.slane %v715, %v1212
  %v1214 = vcombine.high %v1213, %v1213
  %v1216 = vunpack.c.l.s4 1966171168
  %v1217 = vunpack.c.0.s8 %v1216
  %v1218 = vlaneseq
  %v1219 = vshrl.u32 %v1218, 7
  %v1220 = vsub.s32 %v1217, %v1219
  %v1221 = vrot.slane %v1213, %v1220
  %v1223 = vunpack.c.l.s4 1966171168
  %v1224 = vunpack.c.0.s8 %v1223
  %v1225 = vlaneseq
  %v1226 = vshrl.u32 %v1225, 7
  %v1227 = vsub.s32 %v1224, %v1226
  %v1228 = vrot.slane %v1214, %v1227
  %v1231 = vunpack.c.l.s4 1966171168
  %v1232 = vunpack.c.0.s8 %v1231
  %v1233 = vlaneseq
  %v1234 = vshrl.u32 %v1233, 7
  %v1235 = vsub.s32 %v1232, %v1234
  %v1236 = vrot.slane %v784, %v1235
  %v1237 = vcombine.high %v1236, %v1236
  %v1239 = vunpack.c.l.s4 1966171168
  %v1240 = vunpack.c.0.s8 %v1239
  %v1241 = vlaneseq
  %v1242 = vshrl.u32 %v1241, 7
  %v1243 = vsub.s32 %v1240, %v1242
  %v1244 = vrot.slane %v1236, %v1243
  %v1246 = vunpack.c.l.s4 1966171168
  %v1247 = vunpack.c.0.s8 %v1246
  %v1248 = vlaneseq
  %v1249 = vshrl.u32 %v1248, 7
  %v1250 = vsub.s32 %v1247, %v1249
  %v1251 = vrot.slane %v1237, %v1250
  %v1254 = vunpack.c.l.s4 1966171168
  %v1255 = vunpack.c.0.s8 %v1254
  %v1256 = vlaneseq
  %v1257 = vshrl.u32 %v1256, 7
  %v1258 = vsub.s32 %v1255, %v1257
  %v1259 = vrot.slane %v786, %v1258
  %v1260 = vcombine.high %v1259, %v1259
  %v1262 = vunpack.c.l.s4 1966171168
  %v1263 = vunpack.c.0.s8 %v1262
  %v1264 = vlaneseq
  %v1265 = vshrl.u32 %v1264, 7
  %v1266 = vsub.s32 %v1263, %v1265
  %v1267 = vrot.slane %v1259, %v1266
  %v1269 = vunpack.c.l.s4 1966171168
  %v1270 = vunpack.c.0.s8 %v1269
  %v1271 = vlaneseq
  %v1272 = vshrl.u32 %v1271, 7
  %v1273 = vsub.s32 %v1270, %v1272
  %v1274 = vrot.slane %v1260, %v1273
  %v1275 = vlaneseq
  %v1276 = vshrl.u32 %v1275, 7
  %v1277 = vsub.s32 0, %v1276
  %v1278 = vrot.slane %v1221, %v1277
  %v1279 = vlaneseq
  %v1280 = vshrl.u32 %v1279, 7
  %v1281 = vsub.s32 0, %v1280
  %v1282 = vrot.slane %v1228, %v1281
  %v1285 = vlaneseq
  %v1286 = vshrl.u32 %v1285, 7
  %v1287 = vsub.s32 0, %v1286
  %v1288 = vrot.slane %v1244, %v1287
  %v1289 = vlaneseq
  %v1290 = vshrl.u32 %v1289, 7
  %v1291 = vsub.s32 0, %v1290
  %v1292 = vrot.slane %v1251, %v1291
  %v1295 = vlaneseq
  %v1296 = vshrl.u32 %v1295, 7
  %v1297 = vsub.s32 0, %v1296
  %v1298 = vrot.slane %v1267, %v1297
  %v1299 = vlaneseq
  %v1300 = vshrl.u32 %v1299, 7
  %v1301 = vsub.s32 0, %v1300
  %v1302 = vrot.slane %v1274, %v1301
  %v1305 = vsel %vm912, %v1196, %v1278
  %v1306 = vsel %vm912, %v1203, %v1282
  %v1307 = vsel %vm915, %v1305, %v1288
  %v1308 = vsel %vm915, %v1306, %v1292
  %v1309 = vsel %vm918, %v1307, %v1298
  %v1310 = vsel %vm918, %v1308, %v1302
  %v1311 = vld [vmem:[%s3] sm:$0x1]
  %v1312 = vld [vmem:[%s4] sm:$0x1]
  %vm1313 = vcmask 1043456
  %v1314 = vsel %vm1313, %v919, 0.0
  %v1315 = vsel %vm1313, %v1049, 0.0
  %v1316 = vadd.f32 %v1314, %v1315
  %v1317 = vsel %vm1313, %v1179, 0.0
  %v1318 = vadd.f32 %v1316, %v1317
  %v1319 = vsel %vm1313, %v1309, 0.0
  %v1320 = vadd.f32 %v1318, %v1319
  %v1321 = vsel %vm1313, %v920, 0.0
  %v1322 = vadd.f32 %v1320, %v1321
  %v1323 = vsel %vm1313, %v1050, 0.0
  %v1324 = vadd.f32 %v1322, %v1323
  %v1325 = vsel %vm1313, %v1180, 0.0
  %v1326 = vadd.f32 %v1324, %v1325
  %v1327 = vsel %vm1313, %v1310, 0.0
  %v1328 = vadd.f32 %v1326, %v1327
  %v1329 = vrot.slane %v1328, 4
  %v1330 = vadd.f32 %v1328, %v1329
  %v1331 = vrot.slane %v1330, 2
  %v1332 = vadd.f32 %v1330, %v1331
  %v1333 = vrot.slane %v1332, 1
  %v1334 = vadd.f32 %v1332, %v1333
  %v1335 = vrcp.pop 32.0
  %v1336 = vmul.f32 %v1334, %v1335
  %v1337 = vmul.f32 %v919, %v919
  %v1338 = vmul.f32 %v1049, %v1049
  %v1339 = vmul.f32 %v1179, %v1179
  %v1340 = vmul.f32 %v1309, %v1309
  %v1341 = vmul.f32 %v920, %v920
  %v1342 = vmul.f32 %v1050, %v1050
  %v1343 = vmul.f32 %v1180, %v1180
  %v1344 = vmul.f32 %v1310, %v1310
  %v1345 = vsel %vm1313, %v1337, 0.0
  %v1346 = vsel %vm1313, %v1338, 0.0
  %v1347 = vadd.f32 %v1345, %v1346
  %v1348 = vsel %vm1313, %v1339, 0.0
  %v1349 = vadd.f32 %v1347, %v1348
  %v1350 = vsel %vm1313, %v1340, 0.0
  %v1351 = vadd.f32 %v1349, %v1350
  %v1352 = vsel %vm1313, %v1341, 0.0
  %v1353 = vadd.f32 %v1351, %v1352
  %v1354 = vsel %vm1313, %v1342, 0.0
  %v1355 = vadd.f32 %v1353, %v1354
  %v1356 = vsel %vm1313, %v1343, 0.0
  %v1357 = vadd.f32 %v1355, %v1356
  %v1358 = vsel %vm1313, %v1344, 0.0
  %v1359 = vadd.f32 %v1357, %v1358
  %v1360 = vrot.slane %v1359, 4
  %v1361 = vadd.f32 %v1359, %v1360
  %v1362 = vrot.slane %v1361, 2
  %v1363 = vadd.f32 %v1361, %v1362
  %v1364 = vrot.slane %v1363, 1
  %v1365 = vadd.f32 %v1363, %v1364
  %v1366 = vmul.f32 %v1365, %v1335
  %v1367 = vmul.f32 %v1336, %v1336
  %v1368 = vsub.f32 %v1366, %v1367
  %v1369 = vadd.f32 %v1368, 1e-05
  %v1370 = vrsqrt.pop %v1369
  %v1371 = vmul.f32 %v1311, %v1370
  %v1372 = vmul.f32 %v1336, %v1371
  %v1373 = vsub.f32 %v1312, %v1372
  %v1375 = vlaneseq
  %v1376 = vshrl.u32 %v1375, 7
  %v1377 = vsub.s32 0, %v1376
  %v1378 = vrot.slane %v1371, %v1377
  %v1380 = vmul.f32 %v919, %v1378
  %v1381 = vmul.f32 %v1049, %v1378
  %v1382 = vmul.f32 %v1179, %v1378
  %v1383 = vmul.f32 %v1309, %v1378
  %v1384 = vmul.f32 %v920, %v1378
  %v1385 = vmul.f32 %v1050, %v1378
  %v1386 = vmul.f32 %v1180, %v1378
  %v1387 = vmul.f32 %v1310, %v1378
  %v1389 = vlaneseq
  %v1390 = vshrl.u32 %v1389, 7
  %v1391 = vsub.s32 0, %v1390
  %v1392 = vrot.slane %v1373, %v1391
  %v1394 = vadd.f32 %v1380, %v1392
  %v1395 = vadd.f32 %v1381, %v1392
  %v1396 = vadd.f32 %v1382, %v1392
  %v1397 = vadd.f32 %v1383, %v1392
  %v1398 = vadd.f32 %v1384, %v1392
  %v1399 = vadd.f32 %v1385, %v1392
  %v1400 = vadd.f32 %v1386, %v1392
  %v1401 = vadd.f32 %v1387, %v1392
  %v1410 = vrot.slane %v1394, 7
  %v1411 = vrot.slane %v1395, 7
  %v1412 = vrot.slane %v1396, 7
  %v1413 = vrot.slane %v1397, 7
  %v1414 = vrot.slane %v1398, 7
  %v1415 = vrot.slane %v1399, 7
  %v1416 = vrot.slane %v1400, 7
  %v1417 = vrot.slane %v1401, 7
  %v1426 = vrot.slane %v1394, 6
  %v1427 = vrot.slane %v1395, 6
  %v1428 = vrot.slane %v1396, 6
  %v1429 = vrot.slane %v1397, 6
  %v1430 = vrot.slane %v1398, 6
  %v1431 = vrot.slane %v1399, 6
  %v1432 = vrot.slane %v1400, 6
  %v1433 = vrot.slane %v1401, 6
  %v1442 = vrot.slane %v1394, 5
  %v1443 = vrot.slane %v1395, 5
  %v1444 = vrot.slane %v1396, 5
  %v1445 = vrot.slane %v1397, 5
  %v1446 = vrot.slane %v1398, 5
  %v1447 = vrot.slane %v1399, 5
  %v1448 = vrot.slane %v1400, 5
  %v1449 = vrot.slane %v1401, 5
  %v1458 = vrot.slane %v1394, 4
  %v1459 = vrot.slane %v1395, 4
  %v1460 = vrot.slane %v1396, 4
  %v1461 = vrot.slane %v1397, 4
  %v1462 = vrot.slane %v1398, 4
  %v1463 = vrot.slane %v1399, 4
  %v1464 = vrot.slane %v1400, 4
  %v1465 = vrot.slane %v1401, 4
  %v1474 = vsel %vm912, %v1394, %v1410
  %v1475 = vsel %vm912, %v1395, %v1411
  %v1476 = vsel %vm912, %v1396, %v1412
  %v1477 = vsel %vm912, %v1397, %v1413
  %v1478 = vsel %vm912, %v1398, %v1414
  %v1479 = vsel %vm912, %v1399, %v1415
  %v1480 = vsel %vm912, %v1400, %v1416
  %v1481 = vsel %vm912, %v1401, %v1417
  %v1482 = vsel %vm915, %v1474, %v1410
  %v1483 = vsel %vm915, %v1475, %v1411
  %v1484 = vsel %vm915, %v1476, %v1412
  %v1485 = vsel %vm915, %v1477, %v1413
  %v1486 = vsel %vm915, %v1478, %v1414
  %v1487 = vsel %vm915, %v1479, %v1415
  %v1488 = vsel %vm915, %v1480, %v1416
  %v1489 = vsel %vm915, %v1481, %v1417
  %v1490 = vsel %vm918, %v1482, %v1426
  %v1491 = vsel %vm918, %v1483, %v1427
  %v1492 = vsel %vm918, %v1484, %v1428
  %v1493 = vsel %vm918, %v1485, %v1429
  %v1494 = vsel %vm918, %v1486, %v1430
  %v1495 = vsel %vm918, %v1487, %v1431
  %v1496 = vsel %vm918, %v1488, %v1432
  %v1497 = vsel %vm918, %v1489, %v1433
  %v1498 = vsel %vm1313, %v1490, %v1426
  %v1499 = vsel %vm1313, %v1491, %v1427
  %v1500 = vsel %vm1313, %v1492, %v1428
  %v1501 = vsel %vm1313, %v1493, %v1429
  %v1502 = vsel %vm1313, %v1494, %v1430
  %v1503 = vsel %vm1313, %v1495, %v1431
  %v1504 = vsel %vm1313, %v1496, %v1432
  %v1505 = vsel %vm1313, %v1497, %v1433
  %vm1506 = vcmask 1044480
  %v1507 = vsel %vm1506, %v1498, %v1442
  %v1508 = vsel %vm1506, %v1499, %v1443
  %v1509 = vsel %vm1506, %v1500, %v1444
  %v1510 = vsel %vm1506, %v1501, %v1445
  %v1511 = vsel %vm1506, %v1502, %v1446
  %v1512 = vsel %vm1506, %v1503, %v1447
  %v1513 = vsel %vm1506, %v1504, %v1448
  %v1514 = vsel %vm1506, %v1505, %v1449
  %v1515 = vsel %vm171, %v1507, %v1442
  %v1516 = vsel %vm171, %v1508, %v1443
  %v1517 = vsel %vm171, %v1509, %v1444
  %v1518 = vsel %vm171, %v1510, %v1445
  %v1519 = vsel %vm171, %v1511, %v1446
  %v1520 = vsel %vm171, %v1512, %v1447
  %v1521 = vsel %vm171, %v1513, %v1448
  %v1522 = vsel %vm171, %v1514, %v1449
  %vm1523 = vcmask 1046528
  %v1524 = vsel %vm1523, %v1515, %v1458
  %v1525 = vsel %vm1523, %v1516, %v1459
  %v1526 = vsel %vm1523, %v1517, %v1460
  %v1527 = vsel %vm1523, %v1518, %v1461
  %v1528 = vsel %vm1523, %v1519, %v1462
  %v1529 = vsel %vm1523, %v1520, %v1463
  %v1530 = vsel %vm1523, %v1521, %v1464
  %v1531 = vsel %vm1523, %v1522, %v1465
  %v1532 = vld [vmem:[%s5] sm:$0xff]
  %v1533 = vld [vmem:[%s5 + $0x8] sm:$0xff]
  %v1534 = vld [vmem:[%s5 + $0x10] sm:$0xff]
  %v1535 = vld [vmem:[%s5 + $0x18] sm:$0xff]
  %v1536 = vld [vmem:[%s5 + $0x20] sm:$0xff]
  %v1537 = vld [vmem:[%s5 + $0x28] sm:$0xff]
  %v1538 = vld [vmem:[%s5 + $0x30] sm:$0xff]
  %v1539 = vld [vmem:[%s5 + $0x38] sm:$0xff]
  %v1540 = vld [vmem:[%s5 + $0x40] sm:$0xff]
  %v1541 = vld [vmem:[%s5 + $0x48] sm:$0xff]
  %v1542 = vld [vmem:[%s5 + $0x50] sm:$0xff]
  %v1543 = vld [vmem:[%s5 + $0x58] sm:$0xff]
  %v1544 = vld [vmem:[%s5 + $0x60] sm:$0xff]
  %v1545 = vld [vmem:[%s5 + $0x68] sm:$0xff]
  %v1546 = vld [vmem:[%s5 + $0x70] sm:$0xff]
  %v1547 = vld [vmem:[%s5 + $0x78] sm:$0xff]
  %v1548 = vld [vmem:[%s5 + $0x80] sm:$0xff]
  %v1549 = vld [vmem:[%s5 + $0x88] sm:$0xff]
  %v1550 = vld [vmem:[%s5 + $0x90] sm:$0xff]
  %v1551 = vld [vmem:[%s5 + $0x98] sm:$0xff]
  %v1552 = vld [vmem:[%s5 + $0xa0] sm:$0xff]
  %v1553 = vld [vmem:[%s5 + $0xa8] sm:$0xff]
  %v1554 = vld [vmem:[%s5 + $0xb0] sm:$0xff]
  %v1555 = vld [vmem:[%s5 + $0xb8] sm:$0xff]
  %v1556 = vld [vmem:[%s5 + $0xc0] sm:$0xff]
  %v1557 = vld [vmem:[%s5 + $0xc8] sm:$0xff]
  %v1558 = vld [vmem:[%s5 + $0xd0] sm:$0xff]
  %v1559 = vld [vmem:[%s5 + $0xd8] sm:$0xff]
  %v1560 = vld [vmem:[%s5 + $0xe0] sm:$0xff]
  %v1561 = vld [vmem:[%s5 + $0xe8] sm:$0xff]
  %v1562 = vld [vmem:[%s5 + $0xf0] sm:$0xff]
  %v1563 = vld [vmem:[%s5 + $0xf8] sm:$0xff]
  %v1564 = vld [vmem:[%s5 + $0x100] sm:$0xff]
  %v1565 = vld [vmem:[%s5 + $0x108] sm:$0xff]
  %v1566 = vld [vmem:[%s5 + $0x110] sm:$0xff]
  %v1567 = vld [vmem:[%s5 + $0x118] sm:$0xff]
  %v1568 = vld [vmem:[%s5 + $0x120] sm:$0xff]
  %v1569 = vld [vmem:[%s5 + $0x128] sm:$0xff]
  %v1570 = vld [vmem:[%s5 + $0x130] sm:$0xff]
  %v1571 = vld [vmem:[%s5 + $0x138] sm:$0xff]
  %v1572 = vld [vmem:[%s5 + $0x140] sm:$0xff]
  %v1573 = vld [vmem:[%s5 + $0x148] sm:$0xff]
  %v1574 = vld [vmem:[%s5 + $0x150] sm:$0xff]
  %v1575 = vld [vmem:[%s5 + $0x158] sm:$0xff]
  %v1576 = vld [vmem:[%s5 + $0x160] sm:$0xff]
  %v1577 = vld [vmem:[%s5 + $0x168] sm:$0xff]
  %v1578 = vld [vmem:[%s5 + $0x170] sm:$0xff]
  %v1579 = vld [vmem:[%s5 + $0x178] sm:$0xff]
  %v1580 = vld [vmem:[%s5 + $0x180] sm:$0xff]
  %v1581 = vld [vmem:[%s5 + $0x188] sm:$0xff]
  %v1582 = vld [vmem:[%s5 + $0x190] sm:$0xff]
  %v1583 = vld [vmem:[%s5 + $0x198] sm:$0xff]
  %v1584 = vld [vmem:[%s5 + $0x1a0] sm:$0xff]
  %v1585 = vld [vmem:[%s5 + $0x1a8] sm:$0xff]
  %v1586 = vld [vmem:[%s5 + $0x1b0] sm:$0xff]
  %v1587 = vld [vmem:[%s5 + $0x1b8] sm:$0xff]
  %v1588 = vld [vmem:[%s5 + $0x1c0] sm:$0xff]
  %v1589 = vld [vmem:[%s5 + $0x1c8] sm:$0xff]
  %v1590 = vld [vmem:[%s5 + $0x1d0] sm:$0xff]
  %v1591 = vld [vmem:[%s5 + $0x1d8] sm:$0xff]
  %v1592 = vld [vmem:[%s5 + $0x1e0] sm:$0xff]
  %v1593 = vld [vmem:[%s5 + $0x1e8] sm:$0xff]
  %v1594 = vld [vmem:[%s5 + $0x1f0] sm:$0xff]
  %v1595 = vld [vmem:[%s5 + $0x1f8] sm:$0xff]
  %v1596 = vld [vmem:[%s5 + $0x200] sm:$0xff]
  %v1597 = vld [vmem:[%s5 + $0x208] sm:$0xff]
  %v1598 = vld [vmem:[%s5 + $0x210] sm:$0xff]
  %v1599 = vld [vmem:[%s5 + $0x218] sm:$0xff]
  %v1600 = vld [vmem:[%s5 + $0x220] sm:$0xff]
  %v1601 = vld [vmem:[%s5 + $0x228] sm:$0xff]
  %v1602 = vld [vmem:[%s5 + $0x230] sm:$0xff]
  %v1603 = vld [vmem:[%s5 + $0x238] sm:$0xff]
  %v1604 = vld [vmem:[%s5 + $0x240] sm:$0xff]
  %v1605 = vld [vmem:[%s5 + $0x248] sm:$0xff]
  %v1606 = vld [vmem:[%s5 + $0x250] sm:$0xff]
  %v1607 = vld [vmem:[%s5 + $0x258] sm:$0xff]
  %v1608 = vld [vmem:[%s5 + $0x260] sm:$0xff]
  %v1609 = vld [vmem:[%s5 + $0x268] sm:$0xff]
  %v1610 = vld [vmem:[%s5 + $0x270] sm:$0xff]
  %v1611 = vld [vmem:[%s5 + $0x278] sm:$0xff]
  %v1612 = vld [vmem:[%s5 + $0x280] sm:$0xff]
  %v1613 = vld [vmem:[%s5 + $0x288] sm:$0xff]
  %v1614 = vld [vmem:[%s5 + $0x290] sm:$0xff]
  %v1615 = vld [vmem:[%s5 + $0x298] sm:$0xff]
  %v1616 = vld [vmem:[%s5 + $0x2a0] sm:$0xff]
  %v1617 = vld [vmem:[%s5 + $0x2a8] sm:$0xff]
  %v1618 = vld [vmem:[%s5 + $0x2b0] sm:$0xff]
  %v1619 = vld [vmem:[%s5 + $0x2b8] sm:$0xff]
  %v1620 = vld [vmem:[%s5 + $0x2c0] sm:$0xff]
  %v1621 = vld [vmem:[%s5 + $0x2c8] sm:$0xff]
  %v1622 = vld [vmem:[%s5 + $0x2d0] sm:$0xff]
  %v1623 = vld [vmem:[%s5 + $0x2d8] sm:$0xff]
  %v1624 = vld [vmem:[%s5 + $0x2e0] sm:$0xff]
  %v1625 = vld [vmem:[%s5 + $0x2e8] sm:$0xff]
  %v1626 = vld [vmem:[%s5 + $0x2f0] sm:$0xff]
  %v1627 = vld [vmem:[%s5 + $0x2f8] sm:$0xff]
  %v1628 = vld [vmem:[%s5 + $0x300] sm:$0xff]
  %v1629 = vld [vmem:[%s5 + $0x308] sm:$0xff]
  %v1630 = vld [vmem:[%s5 + $0x310] sm:$0xff]
  %v1631 = vld [vmem:[%s5 + $0x318] sm:$0xff]
  %v1632 = vld [vmem:[%s5 + $0x320] sm:$0xff]
  %v1633 = vld [vmem:[%s5 + $0x328] sm:$0xff]
  %v1634 = vld [vmem:[%s5 + $0x330] sm:$0xff]
  %v1635 = vld [vmem:[%s5 + $0x338] sm:$0xff]
  %v1636 = vld [vmem:[%s5 + $0x340] sm:$0xff]
  %v1637 = vld [vmem:[%s5 + $0x348] sm:$0xff]
  %v1638 = vld [vmem:[%s5 + $0x350] sm:$0xff]
  %v1639 = vld [vmem:[%s5 + $0x358] sm:$0xff]
  %v1640 = vld [vmem:[%s5 + $0x360] sm:$0xff]
  %v1641 = vld [vmem:[%s5 + $0x368] sm:$0xff]
  %v1642 = vld [vmem:[%s5 + $0x370] sm:$0xff]
  %v1643 = vld [vmem:[%s5 + $0x378] sm:$0xff]
  %v1644 = vld [vmem:[%s5 + $0x380] sm:$0xff]
  %v1645 = vld [vmem:[%s5 + $0x388] sm:$0xff]
  %v1646 = vld [vmem:[%s5 + $0x390] sm:$0xff]
  %v1647 = vld [vmem:[%s5 + $0x398] sm:$0xff]
  %v1648 = vld [vmem:[%s5 + $0x3a0] sm:$0xff]
  %v1649 = vld [vmem:[%s5 + $0x3a8] sm:$0xff]
  %v1650 = vld [vmem:[%s5 + $0x3b0] sm:$0xff]
  %v1651 = vld [vmem:[%s5 + $0x3b8] sm:$0xff]
  %v1652 = vld [vmem:[%s5 + $0x3c0] sm:$0xff]
  %v1653 = vld [vmem:[%s5 + $0x3c8] sm:$0xff]
  %v1654 = vld [vmem:[%s5 + $0x3d0] sm:$0xff]
  %v1655 = vld [vmem:[%s5 + $0x3d8] sm:$0xff]
  %v1656 = vld [vmem:[%s5 + $0x3e0] sm:$0xff]
  %v1657 = vld [vmem:[%s5 + $0x3e8] sm:$0xff]
  %v1658 = vld [vmem:[%s5 + $0x3f0] sm:$0xff]
  %v1659 = vld [vmem:[%s5 + $0x3f8] sm:$0xff]
  %v1660 = vld [vmem:[%s5 + $0x400] sm:$0xff]
  %v1661 = vld [vmem:[%s5 + $0x408] sm:$0xff]
  %v1662 = vld [vmem:[%s5 + $0x410] sm:$0xff]
  %v1663 = vld [vmem:[%s5 + $0x418] sm:$0xff]
  %v1664 = vld [vmem:[%s5 + $0x420] sm:$0xff]
  %v1665 = vld [vmem:[%s5 + $0x428] sm:$0xff]
  %v1666 = vld [vmem:[%s5 + $0x430] sm:$0xff]
  %v1667 = vld [vmem:[%s5 + $0x438] sm:$0xff]
  %v1668 = vld [vmem:[%s5 + $0x440] sm:$0xff]
  %v1669 = vld [vmem:[%s5 + $0x448] sm:$0xff]
  %v1670 = vld [vmem:[%s5 + $0x450] sm:$0xff]
  %v1671 = vld [vmem:[%s5 + $0x458] sm:$0xff]
  %v1672 = vld [vmem:[%s5 + $0x460] sm:$0xff]
  %v1673 = vld [vmem:[%s5 + $0x468] sm:$0xff]
  %v1674 = vld [vmem:[%s5 + $0x470] sm:$0xff]
  %v1675 = vld [vmem:[%s5 + $0x478] sm:$0xff]
  %v1676 = vld [vmem:[%s6] sm:$0x1]
  %v1686 = vrot.slane 0.0, 7
  %v1687 = vrot.slane %v1524, 7
  %v1688 = vrot.slane %v1525, 7
  %v1689 = vrot.slane %v1526, 7
  %v1690 = vrot.slane %v1527, 7
  %v1691 = vrot.slane %v1528, 7
  %v1692 = vrot.slane %v1529, 7
  %v1693 = vrot.slane %v1530, 7
  %v1694 = vrot.slane %v1531, 7
  %v1704 = vsel %vm912, 0.0, %v1686
  %v1705 = vsel %vm912, 0.0, %v1687
  %v1706 = vsel %vm912, 0.0, %v1688
  %v1707 = vsel %vm912, 0.0, %v1689
  %v1708 = vsel %vm912, 0.0, %v1690
  %v1709 = vsel %vm912, 0.0, %v1691
  %v1710 = vsel %vm912, 0.0, %v1692
  %v1711 = vsel %vm912, 0.0, %v1693
  %v1712 = vsel %vm912, 0.0, %v1694
  %v1713 = vsel %vm912, %v1686, 0.0
  %v1714 = vsel %vm912, %v1687, 0.0
  %v1715 = vsel %vm912, %v1688, 0.0
  %v1716 = vsel %vm912, %v1689, 0.0
  %v1717 = vsel %vm912, %v1690, 0.0
  %v1718 = vsel %vm912, %v1691, 0.0
  %v1719 = vsel %vm912, %v1692, 0.0
  %v1720 = vsel %vm912, %v1693, 0.0
  %v1721 = vsel %vm912, %v1694, 0.0
  %v1740 = vrot.slane %v1704, 1
  %v1741 = vrot.slane %v1713, 1
  %v1742 = vsel %vm1523, %v1740, %v1741
  %v1743 = vrot.slane %v1705, 1
  %v1744 = vrot.slane %v1714, 1
  %v1745 = vsel %vm1523, %v1743, %v1744
  %v1746 = vrot.slane %v1706, 1
  %v1747 = vrot.slane %v1715, 1
  %v1748 = vsel %vm1523, %v1746, %v1747
  %v1749 = vrot.slane %v1707, 1
  %v1750 = vrot.slane %v1716, 1
  %v1751 = vsel %vm1523, %v1749, %v1750
  %v1752 = vrot.slane %v1708, 1
  %v1753 = vrot.slane %v1717, 1
  %v1754 = vsel %vm1523, %v1752, %v1753
  %v1755 = vrot.slane %v1709, 1
  %v1756 = vrot.slane %v1718, 1
  %v1757 = vsel %vm1523, %v1755, %v1756
  %v1758 = vrot.slane %v1710, 1
  %v1759 = vrot.slane %v1719, 1
  %v1760 = vsel %vm1523, %v1758, %v1759
  %v1761 = vrot.slane %v1711, 1
  %v1762 = vrot.slane %v1720, 1
  %v1763 = vsel %vm1523, %v1761, %v1762
  %v1764 = vrot.slane %v1712, 1
  %v1765 = vrot.slane %v1721, 1
  %v1766 = vsel %vm1523, %v1764, %v1765
  %v1776 = vrot.slane %v1704, 2
  %v1777 = vrot.slane %v1713, 2
  %v1778 = vsel %vm171, %v1776, %v1777
  %v1779 = vrot.slane %v1705, 2
  %v1780 = vrot.slane %v1714, 2
  %v1781 = vsel %vm171, %v1779, %v1780
  %v1782 = vrot.slane %v1706, 2
  %v1783 = vrot.slane %v1715, 2
  %v1784 = vsel %vm171, %v1782, %v1783
  %v1785 = vrot.slane %v1707, 2
  %v1786 = vrot.slane %v1716, 2
  %v1787 = vsel %vm171, %v1785, %v1786
  %v1788 = vrot.slane %v1708, 2
  %v1789 = vrot.slane %v1717, 2
  %v1790 = vsel %vm171, %v1788, %v1789
  %v1791 = vrot.slane %v1709, 2
  %v1792 = vrot.slane %v1718, 2
  %v1793 = vsel %vm171, %v1791, %v1792
  %v1794 = vrot.slane %v1710, 2
  %v1795 = vrot.slane %v1719, 2
  %v1796 = vsel %vm171, %v1794, %v1795
  %v1797 = vrot.slane %v1711, 2
  %v1798 = vrot.slane %v1720, 2
  %v1799 = vsel %vm171, %v1797, %v1798
  %v1800 = vrot.slane %v1712, 2
  %v1801 = vrot.slane %v1721, 2
  %v1802 = vsel %vm171, %v1800, %v1801
  %v1813 = vlaneseq
  %v1814 = vshrl.u32 %v1813, 7
  %v1815 = vsub.s32 0, %v1814
  %v1816 = vrot.slane %v1676, %v1815
  %1818 = vmatprep.subr.mxu0 0.0
  %1819 = vmatpush1.msra.mxu0 %v1532
  %1820 = vmatprep.subr.mxu0 0.0
  %1821 = vmatpush1.msra.mxu0 %v1533
  %1822 = vmatprep.subr.mxu0 0.0
  %1823 = vmatpush1.msra.mxu0 %v1534
  %1824 = vmatprep.subr.mxu0 0.0
  %1825 = vmatpush1.msra.mxu0 %v1535
  %1826 = vmatprep.subr.mxu0 0.0
  %1827 = vmatpush1.msra.mxu0 %v1536
  %1828 = vmatprep.subr.mxu0 0.0
  %1829 = vmatpush1.msra.mxu0 %v1537
  %1830 = vmatprep.subr.mxu0 0.0
  %1831 = vmatpush1.msra.mxu0 %v1538
  %1832 = vmatprep.subr.mxu0 0.0
  %1833 = vmatpush1.msra.mxu0 %v1539
  %1834 = vmatprep.subr.mxu0 0.0
  %1835 = vmatpush1.msra.mxu0 %v1540
  %1836 = vmatprep.subr.mxu0 0.0
  %1837 = vmatpush1.msra.mxu0 %v1541
  %1838 = vmatprep.subr.mxu0 0.0
  %1839 = vmatpush1.msra.mxu0 %v1542
  %1840 = vmatprep.subr.mxu0 0.0
  %1841 = vmatpush1.msra.mxu0 %v1543
  %1842 = vmatprep.subr.mxu0 0.0
  %1843 = vmatpush1.msra.mxu0 %v1544
  %1844 = vmatprep.subr.mxu0 0.0
  %1845 = vmatpush1.msra.mxu0 %v1545
  %1846 = vmatprep.subr.mxu0 0.0
  %1847 = vmatpush1.msra.mxu0 %v1546
  %1848 = vmatprep.subr.mxu0 0.0
  %1849 = vmatpush1.msra.mxu0 %v1547
  %1850 = vmatprep.subr.mxu0 0.0
  %1851 = vmatpush1.msra.mxu0 %v1548
  %1852 = vmatprep.subr.mxu0 0.0
  %1853 = vmatpush1.msra.mxu0 %v1549
  %1854 = vmatprep.subr.mxu0 0.0
  %1855 = vmatpush1.msra.mxu0 %v1550
  %1856 = vmatprep.subr.mxu0 0.0
  %1857 = vmatpush1.msra.mxu0 %v1551
  %1858 = vmatprep.subr.mxu0 0.0
  %1859 = vmatpush1.msra.mxu0 %v1552
  %1860 = vmatprep.subr.mxu0 0.0
  %1861 = vmatpush1.msra.mxu0 %v1553
  %1862 = vmatprep.subr.mxu0 0.0
  %1863 = vmatpush1.msra.mxu0 %v1554
  %1864 = vmatprep.subr.mxu0 0.0
  %1865 = vmatpush1.msra.mxu0 %v1555
  %1866 = vmatprep.subr.mxu0 0.0
  %1867 = vmatpush1.msra.mxu0 %v1556
  %1868 = vmatprep.subr.mxu0 0.0
  %1869 = vmatpush1.msra.mxu0 %v1557
  %1870 = vmatprep.subr.mxu0 0.0
  %1871 = vmatpush1.msra.mxu0 %v1558
  %1872 = vmatprep.subr.mxu0 0.0
  %1873 = vmatpush1.msra.mxu0 %v1559
  %1874 = vmatprep.subr.mxu0 0.0
  %1875 = vmatpush1.msra.mxu0 %v1560
  %1876 = vmatprep.subr.mxu0 0.0
  %1877 = vmatpush1.msra.mxu0 %v1561
  %1878 = vmatprep.subr.mxu0 0.0
  %1879 = vmatpush1.msra.mxu0 %v1562
  %1880 = vmatprep.subr.mxu0 0.0
  %1881 = vmatpush1.msra.mxu0 %v1563
  %1882 = vmatprep.mubr.f32.mxu0 %v1742
  %1883 = vmatmul.mubr.f32.gmra.mrb[0].mxu0 %v1704
  %v1884 = vpop.f32.mrb[0].mxu0
  %v1885 = vadd.f32 %v1816, %v1884
  %v1886 = vpop.f32.mrb[0].mxu0
  %1887 = vmatprep.mubr.f32.mxu0 %v1745
  %1888 = vmatmul.mubr.f32.gmra.mrb[0].mxu0 %v1705
  %v1889 = vpop.f32.mrb[0].mxu0
  %v1890 = vadd.f32 %v1816, %v1889
  %v1891 = vpop.f32.mrb[0].mxu0
  %1892 = vmatprep.mubr.f32.mxu0 %v1745
  %1893 = vmatmul.mubr.f32.gmra.mrb[0].mxu0 %v1705
  %v1894 = vpop.f32.mrb[0].mxu0
  %v1895 = vadd.f32 %v1816, %v1894
  %v1896 = vpop.f32.mrb[0].mxu0
  %1897 = vmatprep.mubr.f32.mxu0 %v1748
  %1898 = vmatmul.mubr.f32.gmra.mrb[0].mxu0 %v1706
  %v1899 = vpop.f32.mrb[0].mxu0
  %v1900 = vadd.f32 %v1816, %v1899
  %v1901 = vpop.f32.mrb[0].mxu0
  %1902 = vmatprep.mubr.f32.mxu0 %v1748
  %1903 = vmatmul.mubr.f32.gmra.mrb[0].mxu0 %v1706
  %v1904 = vpop.f32.mrb[0].mxu0
  %v1905 = vadd.f32 %v1816, %v1904
  %v1906 = vpop.f32.mrb[0].mxu0
  %1907 = vmatprep.mubr.f32.mxu0 %v1751
  %1908 = vmatmul.mubr.f32.gmra.mrb[0].mxu0 %v1707
  %v1909 = vpop.f32.mrb[0].mxu0
  %v1910 = vadd.f32 %v1816, %v1909
  %v1911 = vpop.f32.mrb[0].mxu0
  %1912 = vmatprep.mubr.f32.mxu0 %v1751
  %1913 = vmatmul.mubr.f32.gmra.mrb[0].mxu0 %v1707
  %v1914 = vpop.f32.mrb[0].mxu0
  %v1915 = vadd.f32 %v1816, %v1914
  %v1916 = vpop.f32.mrb[0].mxu0
  %1917 = vmatprep.mubr.f32.mxu0 %v1754
  %1918 = vmatmul.mubr.f32.gmra.mrb[0].mxu0 %v1708
  %v1919 = vpop.f32.mrb[0].mxu0
  %v1920 = vadd.f32 %v1816, %v1919
  %v1921 = vpop.f32.mrb[0].mxu0
  %1922 = vmatprep.mubr.f32.mxu0 %v1742
  %1923 = vmatmul.mubr.f32.gmra.mrb[0].mxu0 %v1704
  %v1924 = vpop.f32.mrb[0].mxu0
  %v1925 = vadd.f32 %v1816, %v1924
  %v1926 = vpop.f32.mrb[0].mxu0
  %1927 = vmatprep.mubr.f32.mxu0 %v1757
  %1928 = vmatmul.mubr.f32.gmra.mrb[0].mxu0 %v1709
  %v1929 = vpop.f32.mrb[0].mxu0
  %v1930 = vadd.f32 %v1816, %v1929
  %v1931 = vpop.f32.mrb[0].mxu0
  %1932 = vmatprep.mubr.f32.mxu0 %v1757
  %1933 = vmatmul.mubr.f32.gmra.mrb[0].mxu0 %v1709
  %v1934 = vpop.f32.mrb[0].mxu0
  %v1935 = vadd.f32 %v1816, %v1934
  %v1936 = vpop.f32.mrb[0].mxu0
  %1937 = vmatprep.mubr.f32.mxu0 %v1760
  %1938 = vmatmul.mubr.f32.gmra.mrb[0].mxu0 %v1710
  %v1939 = vpop.f32.mrb[0].mxu0
  %v1940 = vadd.f32 %v1816, %v1939
  %v1941 = vpop.f32.mrb[0].mxu0
  %1942 = vmatprep.mubr.f32.mxu0 %v1760
  %1943 = vmatmul.mubr.f32.gmra.mrb[0].mxu0 %v1710
  %v1944 = vpop.f32.mrb[0].mxu0
  %v1945 = vadd.f32 %v1816, %v1944
  %v1946 = vpop.f32.mrb[0].mxu0
  %1947 = vmatprep.mubr.f32.mxu0 %v1763
  %1948 = vmatmul.mubr.f32.gmra.mrb[0].mxu0 %v1711
  %v1949 = vpop.f32.mrb[0].mxu0
  %v1950 = vadd.f32 %v1816, %v1949
  %v1951 = vpop.f32.mrb[0].mxu0
  %1952 = vmatprep.mubr.f32.mxu0 %v1763
  %1953 = vmatmul.mubr.f32.gmra.mrb[0].mxu0 %v1711
  %v1954 = vpop.f32.mrb[0].mxu0
  %v1955 = vadd.f32 %v1816, %v1954
  %v1956 = vpop.f32.mrb[0].mxu0
  %1957 = vmatprep.mubr.f32.mxu0 %v1766
  %1958 = vmatmul.mubr.f32.gmra.mrb[0].mxu0 %v1712
  %v1959 = vpop.f32.mrb[0].mxu0
  %v1960 = vadd.f32 %v1816, %v1959
  %v1961 = vpop.f32.mrb[0].mxu0
  %1962 = vdwg.mxu0
  %1963 = vmatprep.subr.mxu0 0.0
  %1964 = vmatpush1.msra.mxu0 %v1564
  %1965 = vmatprep.subr.mxu0 0.0
  %1966 = vmatpush1.msra.mxu0 %v1565
  %1967 = vmatprep.subr.mxu0 0.0
  %1968 = vmatpush1.msra.mxu0 %v1566
  %1969 = vmatprep.subr.mxu0 0.0
  %1970 = vmatpush1.msra.mxu0 %v1567
  %1971 = vmatprep.subr.mxu0 0.0
  %1972 = vmatpush1.msra.mxu0 %v1568
  %1973 = vmatprep.subr.mxu0 0.0
  %1974 = vmatpush1.msra.mxu0 %v1569
  %1975 = vmatprep.subr.mxu0 0.0
  %1976 = vmatpush1.msra.mxu0 %v1570
  %1977 = vmatprep.subr.mxu0 0.0
  %1978 = vmatpush1.msra.mxu0 %v1571
  %1979 = vmatprep.subr.mxu0 0.0
  %1980 = vmatpush1.msra.mxu0 %v1572
  %1981 = vmatprep.subr.mxu0 0.0
  %1982 = vmatpush1.msra.mxu0 %v1573
  %1983 = vmatprep.subr.mxu0 0.0
  %1984 = vmatpush1.msra.mxu0 %v1574
  %1985 = vmatprep.subr.mxu0 0.0
  %1986 = vmatpush1.msra.mxu0 %v1575
  %1987 = vmatprep.subr.mxu0 0.0
  %1988 = vmatpush1.msra.mxu0 %v1576
  %1989 = vmatprep.subr.mxu0 0.0
  %1990 = vmatpush1.msra.mxu0 %v1577
  %1991 = vmatprep.subr.mxu0 0.0
  %1992 = vmatpush1.msra.mxu0 %v1578
  %1993 = vmatprep.subr.mxu0 0.0
  %1994 = vmatpush1.msra.mxu0 %v1579
  %1995 = vmatprep.subr.mxu0 0.0
  %1996 = vmatpush1.msra.mxu0 %v1580
  %1997 = vmatprep.subr.mxu0 0.0
  %1998 = vmatpush1.msra.mxu0 %v1581
  %1999 = vmatprep.subr.mxu0 0.0
  %2000 = vmatpush1.msra.mxu0 %v1582
  %2001 = vmatprep.subr.mxu0 0.0
  %2002 = vmatpush1.msra.mxu0 %v1583
  %2003 = vmatprep.subr.mxu0 0.0
  %2004 = vmatpush1.msra.mxu0 %v1584
  %2005 = vmatprep.subr.mxu0 0.0
  %2006 = vmatpush1.msra.mxu0 %v1585
  %2007 = vmatprep.subr.mxu0 0.0
  %2008 = vmatpush1.msra.mxu0 %v1586
  %2009 = vmatprep.subr.mxu0 0.0
  %2010 = vmatpush1.msra.mxu0 %v1587
  %2011 = vmatprep.subr.mxu0 0.0
  %2012 = vmatpush1.msra.mxu0 %v1588
  %2013 = vmatprep.subr.mxu0 0.0
  %2014 = vmatpush1.msra.mxu0 %v1589
  %2015 = vmatprep.subr.mxu0 0.0
  %2016 = vmatpush1.msra.mxu0 %v1590
  %2017 = vmatprep.subr.mxu0 0.0
  %2018 = vmatpush1.msra.mxu0 %v1591
  %2019 = vmatprep.subr.mxu0 0.0
  %2020 = vmatpush1.msra.mxu0 %v1592
  %2021 = vmatprep.subr.mxu0 0.0
  %2022 = vmatpush1.msra.mxu0 %v1593
  %2023 = vmatprep.subr.mxu0 0.0
  %2024 = vmatpush1.msra.mxu0 %v1594
  %2025 = vmatprep.subr.mxu0 0.0
  %2026 = vmatpush1.msra.mxu0 %v1595
  %2027 = vmatprep.mubr.f32.mxu0 %v1705
  %2028 = vmatmul.mubr.f32.gmra.mrb[0].mxu0 %v1778
  %v2029 = vpop.f32.mrb[0].mxu0
  %v2030 = vadd.f32 %v1885, %v2029
  %v2031 = vpop.f32.mrb[0].mxu0
  %2032 = vmatprep.mubr.f32.mxu0 %v1705
  %2033 = vmatmul.mubr.f32.gmra.mrb[0].mxu0 %v1781
  %v2034 = vpop.f32.mrb[0].mxu0
  %v2035 = vadd.f32 %v1890, %v2034
  %v2036 = vpop.f32.mrb[0].mxu0
  %2037 = vmatprep.mubr.f32.mxu0 %v1706
  %2038 = vmatmul.mubr.f32.gmra.mrb[0].mxu0 %v1781
  %v2039 = vpop.f32.mrb[0].mxu0
  %v2040 = vadd.f32 %v1895, %v2039
  %v2041 = vpop.f32.mrb[0].mxu0
  %2042 = vmatprep.mubr.f32.mxu0 %v1706
  %2043 = vmatmul.mubr.f32.gmra.mrb[0].mxu0 %v1784
  %v2044 = vpop.f32.mrb[0].mxu0
  %v2045 = vadd.f32 %v1900, %v2044
  %v2046 = vpop.f32.mrb[0].mxu0
  %2047 = vmatprep.mubr.f32.mxu0 %v1707
  %2048 = vmatmul.mubr.f32.gmra.mrb[0].mxu0 %v1784
  %v2049 = vpop.f32.mrb[0].mxu0
  %v2050 = vadd.f32 %v1905, %v2049
  %v2051 = vpop.f32.mrb[0].mxu0
  %2052 = vmatprep.mubr.f32.mxu0 %v1707
  %2053 = vmatmul.mubr.f32.gmra.mrb[0].mxu0 %v1787
  %v2054 = vpop.f32.mrb[0].mxu0
  %v2055 = vadd.f32 %v1910, %v2054
  %v2056 = vpop.f32.mrb[0].mxu0
  %2057 = vmatprep.mubr.f32.mxu0 %v1708
  %2058 = vmatmul.mubr.f32.gmra.mrb[0].mxu0 %v1787
  %v2059 = vpop.f32.mrb[0].mxu0
  %v2060 = vadd.f32 %v1915, %v2059
  %v2061 = vpop.f32.mrb[0].mxu0
  %2062 = vmatprep.mubr.f32.mxu0 %v1708
  %2063 = vmatmul.mubr.f32.gmra.mrb[0].mxu0 %v1790
  %v2064 = vpop.f32.mrb[0].mxu0
  %v2065 = vadd.f32 %v1920, %v2064
  %v2066 = vpop.f32.mrb[0].mxu0
  %2067 = vmatprep.mubr.f32.mxu0 %v1709
  %2068 = vmatmul.mubr.f32.gmra.mrb[0].mxu0 %v1778
  %v2069 = vpop.f32.mrb[0].mxu0
  %v2070 = vadd.f32 %v1925, %v2069
  %v2071 = vpop.f32.mrb[0].mxu0
  %2072 = vmatprep.mubr.f32.mxu0 %v1709
  %2073 = vmatmul.mubr.f32.gmra.mrb[0].mxu0 %v1793
  %v2074 = vpop.f32.mrb[0].mxu0
  %v2075 = vadd.f32 %v1930, %v2074
  %v2076 = vpop.f32.mrb[0].mxu0
  %2077 = vmatprep.mubr.f32.mxu0 %v1710
  %2078 = vmatmul.mubr.f32.gmra.mrb[0].mxu0 %v1793
  %v2079 = vpop.f32.mrb[0].mxu0
  %v2080 = vadd.f32 %v1935, %v2079
  %v2081 = vpop.f32.mrb[0].mxu0
  %2082 = vmatprep.mubr.f32.mxu0 %v1710
  %2083 = vmatmul.mubr.f32.gmra.mrb[0].mxu0 %v1796
  %v2084 = vpop.f32.mrb[0].mxu0
  %v2085 = vadd.f32 %v1940, %v2084
  %v2086 = vpop.f32.mrb[0].mxu0
  %2087 = vmatprep.mubr.f32.mxu0 %v1711
  %2088 = vmatmul.mubr.f32.gmra.mrb[0].mxu0 %v1796
  %v2089 = vpop.f32.mrb[0].mxu0
  %v2090 = vadd.f32 %v1945, %v2089
  %v2091 = vpop.f32.mrb[0].mxu0
  %2092 = vmatprep.mubr.f32.mxu0 %v1711
  %2093 = vmatmul.mubr.f32.gmra.mrb[0].mxu0 %v1799
  %v2094 = vpop.f32.mrb[0].mxu0
  %v2095 = vadd.f32 %v1950, %v2094
  %v2096 = vpop.f32.mrb[0].mxu0
  %2097 = vmatprep.mubr.f32.mxu0 %v1712
  %2098 = vmatmul.mubr.f32.gmra.mrb[0].mxu0 %v1799
  %v2099 = vpop.f32.mrb[0].mxu0
  %v2100 = vadd.f32 %v1955, %v2099
  %v2101 = vpop.f32.mrb[0].mxu0
  %2102 = vmatprep.mubr.f32.mxu0 %v1712
  %2103 = vmatmul.mubr.f32.gmra.mrb[0].mxu0 %v1802
  %v2104 = vpop.f32.mrb[0].mxu0
  %v2105 = vadd.f32 %v1960, %v2104
  %v2106 = vpop.f32.mrb[0].mxu0
  %2107 = vdwg.mxu0
  %2108 = vmatprep.subr.mxu0 0.0
  %2109 = vmatpush1.msra.mxu0 %v1596
  %2110 = vmatprep.subr.mxu0 0.0
  %2111 = vmatpush1.msra.mxu0 %v1597
  %2112 = vmatprep.subr.mxu0 0.0
  %2113 = vmatpush1.msra.mxu0 %v1598
  %2114 = vmatprep.subr.mxu0 0.0
  %2115 = vmatpush1.msra.mxu0 %v1599
  %2116 = vmatprep.subr.mxu0 0.0
  %2117 = vmatpush1.msra.mxu0 %v1600
  %2118 = vmatprep.subr.mxu0 0.0
  %2119 = vmatpush1.msra.mxu0 %v1601
  %2120 = vmatprep.subr.mxu0 0.0
  %2121 = vmatpush1.msra.mxu0 %v1602
  %2122 = vmatprep.subr.mxu0 0.0
  %2123 = vmatpush1.msra.mxu0 %v1603
  %2124 = vmatprep.subr.mxu0 0.0
  %2125 = vmatpush1.msra.mxu0 %v1604
  %2126 = vmatprep.subr.mxu0 0.0
  %2127 = vmatpush1.msra.mxu0 %v1605
  %2128 = vmatprep.subr.mxu0 0.0
  %2129 = vmatpush1.msra.mxu0 %v1606
  %2130 = vmatprep.subr.mxu0 0.0
  %2131 = vmatpush1.msra.mxu0 %v1607
  %2132 = vmatprep.subr.mxu0 0.0
  %2133 = vmatpush1.msra.mxu0 %v1608
  %2134 = vmatprep.subr.mxu0 0.0
  %2135 = vmatpush1.msra.mxu0 %v1609
  %2136 = vmatprep.subr.mxu0 0.0
  %2137 = vmatpush1.msra.mxu0 %v1610
  %2138 = vmatprep.subr.mxu0 0.0
  %2139 = vmatpush1.msra.mxu0 %v1611
  %2140 = vmatprep.subr.mxu0 0.0
  %2141 = vmatpush1.msra.mxu0 %v1612
  %2142 = vmatprep.subr.mxu0 0.0
  %2143 = vmatpush1.msra.mxu0 %v1613
  %2144 = vmatprep.subr.mxu0 0.0
  %2145 = vmatpush1.msra.mxu0 %v1614
  %2146 = vmatprep.subr.mxu0 0.0
  %2147 = vmatpush1.msra.mxu0 %v1615
  %2148 = vmatprep.subr.mxu0 0.0
  %2149 = vmatpush1.msra.mxu0 %v1616
  %2150 = vmatprep.subr.mxu0 0.0
  %2151 = vmatpush1.msra.mxu0 %v1617
  %2152 = vmatprep.subr.mxu0 0.0
  %2153 = vmatpush1.msra.mxu0 %v1618
  %2154 = vmatprep.subr.mxu0 0.0
  %2155 = vmatpush1.msra.mxu0 %v1619
  %2156 = vmatprep.subr.mxu0 0.0
  %2157 = vmatpush1.msra.mxu0 %v1620
  %2158 = vmatprep.subr.mxu0 0.0
  %2159 = vmatpush1.msra.mxu0 %v1621
  %2160 = vmatprep.subr.mxu0 0.0
  %2161 = vmatpush1.msra.mxu0 %v1622
  %2162 = vmatprep.subr.mxu0 0.0
  %2163 = vmatpush1.msra.mxu0 %v1623
  %2164 = vmatprep.subr.mxu0 0.0
  %2165 = vmatpush1.msra.mxu0 %v1624
  %2166 = vmatprep.subr.mxu0 0.0
  %2167 = vmatpush1.msra.mxu0 %v1625
  %2168 = vmatprep.subr.mxu0 0.0
  %2169 = vmatpush1.msra.mxu0 %v1626
  %2170 = vmatprep.subr.mxu0 0.0
  %2171 = vmatpush1.msra.mxu0 %v1627
  %2172 = vmatprep.mubr.f32.mxu0 %v1781
  %2173 = vmatmul.mubr.f32.gmra.mrb[0].mxu0 %v1745
  %v2174 = vpop.f32.mrb[0].mxu0
  %v2175 = vadd.f32 %v2030, %v2174
  %v2176 = vpop.f32.mrb[0].mxu0
  %2177 = vmatprep.mubr.f32.mxu0 %v1781
  %2178 = vmatmul.mubr.f32.gmra.mrb[0].mxu0 %v1745
  %v2179 = vpop.f32.mrb[0].mxu0
  %v2180 = vadd.f32 %v2035, %v2179
  %v2181 = vpop.f32.mrb[0].mxu0
  %2182 = vmatprep.mubr.f32.mxu0 %v1784
  %2183 = vmatmul.mubr.f32.gmra.mrb[0].mxu0 %v1748
  %v2184 = vpop.f32.mrb[0].mxu0
  %v2185 = vadd.f32 %v2040, %v2184
  %v2186 = vpop.f32.mrb[0].mxu0
  %2187 = vmatprep.mubr.f32.mxu0 %v1784
  %2188 = vmatmul.mubr.f32.gmra.mrb[0].mxu0 %v1748
  %v2189 = vpop.f32.mrb[0].mxu0
  %v2190 = vadd.f32 %v2045, %v2189
  %v2191 = vpop.f32.mrb[0].mxu0
  %2192 = vmatprep.mubr.f32.mxu0 %v1787
  %2193 = vmatmul.mubr.f32.gmra.mrb[0].mxu0 %v1751
  %v2194 = vpop.f32.mrb[0].mxu0
  %v2195 = vadd.f32 %v2050, %v2194
  %v2196 = vpop.f32.mrb[0].mxu0
  %2197 = vmatprep.mubr.f32.mxu0 %v1787
  %2198 = vmatmul.mubr.f32.gmra.mrb[0].mxu0 %v1751
  %v2199 = vpop.f32.mrb[0].mxu0
  %v2200 = vadd.f32 %v2055, %v2199
  %v2201 = vpop.f32.mrb[0].mxu0
  %2202 = vmatprep.mubr.f32.mxu0 %v1790
  %2203 = vmatmul.mubr.f32.gmra.mrb[0].mxu0 %v1754
  %v2204 = vpop.f32.mrb[0].mxu0
  %v2205 = vadd.f32 %v2060, %v2204
  %v2206 = vpop.f32.mrb[0].mxu0
  %2207 = vmatprep.mubr.f32.mxu0 %v1790
  %2208 = vmatmul.mubr.f32.gmra.mrb[0].mxu0 %v1754
  %v2209 = vpop.f32.mrb[0].mxu0
  %v2210 = vadd.f32 %v2065, %v2209
  %v2211 = vpop.f32.mrb[0].mxu0
  %2212 = vmatprep.mubr.f32.mxu0 %v1793
  %2213 = vmatmul.mubr.f32.gmra.mrb[0].mxu0 %v1757
  %v2214 = vpop.f32.mrb[0].mxu0
  %v2215 = vadd.f32 %v2070, %v2214
  %v2216 = vpop.f32.mrb[0].mxu0
  %2217 = vmatprep.mubr.f32.mxu0 %v1793
  %2218 = vmatmul.mubr.f32.gmra.mrb[0].mxu0 %v1757
  %v2219 = vpop.f32.mrb[0].mxu0
  %v2220 = vadd.f32 %v2075, %v2219
  %v2221 = vpop.f32.mrb[0].mxu0
  %2222 = vmatprep.mubr.f32.mxu0 %v1796
  %2223 = vmatmul.mubr.f32.gmra.mrb[0].mxu0 %v1760
  %v2224 = vpop.f32.mrb[0].mxu0
  %v2225 = vadd.f32 %v2080, %v2224
  %v2226 = vpop.f32.mrb[0].mxu0
  %2227 = vmatprep.mubr.f32.mxu0 %v1796
  %2228 = vmatmul.mubr.f32.gmra.mrb[0].mxu0 %v1760
  %v2229 = vpop.f32.mrb[0].mxu0
  %v2230 = vadd.f32 %v2085, %v2229
  %v2231 = vpop.f32.mrb[0].mxu0
  %2232 = vmatprep.mubr.f32.mxu0 %v1799
  %2233 = vmatmul.mubr.f32.gmra.mrb[0].mxu0 %v1763
  %v2234 = vpop.f32.mrb[0].mxu0
  %v2235 = vadd.f32 %v2090, %v2234
  %v2236 = vpop.f32.mrb[0].mxu0
  %2237 = vmatprep.mubr.f32.mxu0 %v1799
  %2238 = vmatmul.mubr.f32.gmra.mrb[0].mxu0 %v1763
  %v2239 = vpop.f32.mrb[0].mxu0
  %v2240 = vadd.f32 %v2095, %v2239
  %v2241 = vpop.f32.mrb[0].mxu0
  %2242 = vmatprep.mubr.f32.mxu0 %v1802
  %2243 = vmatmul.mubr.f32.gmra.mrb[0].mxu0 %v1766
  %v2244 = vpop.f32.mrb[0].mxu0
  %v2245 = vadd.f32 %v2100, %v2244
  %v2246 = vpop.f32.mrb[0].mxu0
  %2247 = vmatprep.mubr.f32.mxu0 %v1802
  %2248 = vmatmul.mubr.f32.gmra.mrb[0].mxu0 %v1766
  %v2249 = vpop.f32.mrb[0].mxu0
  %v2250 = vadd.f32 %v2105, %v2249
  %v2251 = vpop.f32.mrb[0].mxu0
  %2252 = vdwg.mxu0
  %2253 = vmatprep.subr.mxu0 0.0
  %2254 = vmatpush1.msra.mxu0 %v1628
  %2255 = vmatprep.subr.mxu0 0.0
  %2256 = vmatpush1.msra.mxu0 %v1629
  %2257 = vmatprep.subr.mxu0 0.0
  %2258 = vmatpush1.msra.mxu0 %v1630
  %2259 = vmatprep.subr.mxu0 0.0
  %2260 = vmatpush1.msra.mxu0 %v1631
  %2261 = vmatprep.subr.mxu0 0.0
  %2262 = vmatpush1.msra.mxu0 %v1632
  %2263 = vmatprep.subr.mxu0 0.0
  %2264 = vmatpush1.msra.mxu0 %v1633
  %2265 = vmatprep.subr.mxu0 0.0
  %2266 = vmatpush1.msra.mxu0 %v1634
  %2267 = vmatprep.subr.mxu0 0.0
  %2268 = vmatpush1.msra.mxu0 %v1635
  %2269 = vmatprep.subr.mxu0 0.0
  %2270 = vmatpush1.msra.mxu0 %v1636
  %2271 = vmatprep.subr.mxu0 0.0
  %2272 = vmatpush1.msra.mxu0 %v1637
  %2273 = vmatprep.subr.mxu0 0.0
  %2274 = vmatpush1.msra.mxu0 %v1638
  %2275 = vmatprep.subr.mxu0 0.0
  %2276 = vmatpush1.msra.mxu0 %v1639
  %2277 = vmatprep.subr.mxu0 0.0
  %2278 = vmatpush1.msra.mxu0 %v1640
  %2279 = vmatprep.subr.mxu0 0.0
  %2280 = vmatpush1.msra.mxu0 %v1641
  %2281 = vmatprep.subr.mxu0 0.0
  %2282 = vmatpush1.msra.mxu0 %v1642
  %2283 = vmatprep.subr.mxu0 0.0
  %2284 = vmatpush1.msra.mxu0 %v1643
  %2285 = vmatprep.subr.mxu0 0.0
  %2286 = vmatpush1.msra.mxu0 %v1644
  %2287 = vmatprep.subr.mxu0 0.0
  %2288 = vmatpush1.msra.mxu0 %v1645
  %2289 = vmatprep.subr.mxu0 0.0
  %2290 = vmatpush1.msra.mxu0 %v1646
  %2291 = vmatprep.subr.mxu0 0.0
  %2292 = vmatpush1.msra.mxu0 %v1647
  %2293 = vmatprep.subr.mxu0 0.0
  %2294 = vmatpush1.msra.mxu0 %v1648
  %2295 = vmatprep.subr.mxu0 0.0
  %2296 = vmatpush1.msra.mxu0 %v1649
  %2297 = vmatprep.subr.mxu0 0.0
  %2298 = vmatpush1.msra.mxu0 %v1650
  %2299 = vmatprep.subr.mxu0 0.0
  %2300 = vmatpush1.msra.mxu0 %v1651
  %2301 = vmatprep.subr.mxu0 0.0
  %2302 = vmatpush1.msra.mxu0 %v1652
  %2303 = vmatprep.subr.mxu0 0.0
  %2304 = vmatpush1.msra.mxu0 %v1653
  %2305 = vmatprep.subr.mxu0 0.0
  %2306 = vmatpush1.msra.mxu0 %v1654
  %2307 = vmatprep.subr.mxu0 0.0
  %2308 = vmatpush1.msra.mxu0 %v1655
  %2309 = vmatprep.subr.mxu0 0.0
  %2310 = vmatpush1.msra.mxu0 %v1656
  %2311 = vmatprep.subr.mxu0 0.0
  %2312 = vmatpush1.msra.mxu0 %v1657
  %2313 = vmatprep.subr.mxu0 0.0
  %2314 = vmatpush1.msra.mxu0 %v1658
  %2315 = vmatprep.subr.mxu0 0.0
  %2316 = vmatpush1.msra.mxu0 %v1659
  %2317 = vmatprep.mubr.f32.mxu0 %v1745
  %2318 = vmatmul.mubr.f32.gmra.mrb[0].mxu0 %v1705
  %v2319 = vpop.f32.mrb[0].mxu0
  %v2320 = vadd.f32 %v2175, %v2319
  %v2321 = vpop.f32.mrb[0].mxu0
  %2322 = vmatprep.mubr.f32.mxu0 %v1748
  %2323 = vmatmul.mubr.f32.gmra.mrb[0].mxu0 %v1706
  %v2324 = vpop.f32.mrb[0].mxu0
  %v2325 = vadd.f32 %v2180, %v2324
  %v2326 = vpop.f32.mrb[0].mxu0
  %2327 = vmatprep.mubr.f32.mxu0 %v1748
  %2328 = vmatmul.mubr.f32.gmra.mrb[0].mxu0 %v1706
  %v2329 = vpop.f32.mrb[0].mxu0
  %v2330 = vadd.f32 %v2185, %v2329
  %v2331 = vpop.f32.mrb[0].mxu0
  %2332 = vmatprep.mubr.f32.mxu0 %v1751
  %2333 = vmatmul.mubr.f32.gmra.mrb[0].mxu0 %v1707
  %v2334 = vpop.f32.mrb[0].mxu0
  %v2335 = vadd.f32 %v2190, %v2334
  %v2336 = vpop.f32.mrb[0].mxu0
  %2337 = vmatprep.mubr.f32.mxu0 %v1751
  %2338 = vmatmul.mubr.f32.gmra.mrb[0].mxu0 %v1707
  %v2339 = vpop.f32.mrb[0].mxu0
  %v2340 = vadd.f32 %v2195, %v2339
  %v2341 = vpop.f32.mrb[0].mxu0
  %2342 = vmatprep.mubr.f32.mxu0 %v1754
  %2343 = vmatmul.mubr.f32.gmra.mrb[0].mxu0 %v1708
  %v2344 = vpop.f32.mrb[0].mxu0
  %v2345 = vadd.f32 %v2200, %v2344
  %v2346 = vpop.f32.mrb[0].mxu0
  %2347 = vmatprep.mubr.f32.mxu0 %v1754
  %2348 = vmatmul.mubr.f32.gmra.mrb[0].mxu0 %v1708
  %v2349 = vpop.f32.mrb[0].mxu0
  %v2350 = vadd.f32 %v2205, %v2349
  %v2351 = vpop.f32.mrb[0].mxu0
  %2352 = vmatprep.mubr.f32.mxu0 %v1742
  %2353 = vmatmul.mubr.f32.gmra.mrb[0].mxu0 %v1704
  %v2354 = vpop.f32.mrb[0].mxu0
  %v2355 = vadd.f32 %v2210, %v2354
  %v2356 = vpop.f32.mrb[0].mxu0
  %2357 = vmatprep.mubr.f32.mxu0 %v1757
  %2358 = vmatmul.mubr.f32.gmra.mrb[0].mxu0 %v1709
  %v2359 = vpop.f32.mrb[0].mxu0
  %v2360 = vadd.f32 %v2215, %v2359
  %v2361 = vpop.f32.mrb[0].mxu0
  %2362 = vmatprep.mubr.f32.mxu0 %v1760
  %2363 = vmatmul.mubr.f32.gmra.mrb[0].mxu0 %v1710
  %v2364 = vpop.f32.mrb[0].mxu0
  %v2365 = vadd.f32 %v2220, %v2364
  %v2366 = vpop.f32.mrb[0].mxu0
  %2367 = vmatprep.mubr.f32.mxu0 %v1760
  %2368 = vmatmul.mubr.f32.gmra.mrb[0].mxu0 %v1710
  %v2369 = vpop.f32.mrb[0].mxu0
  %v2370 = vadd.f32 %v2225, %v2369
  %v2371 = vpop.f32.mrb[0].mxu0
  %2372 = vmatprep.mubr.f32.mxu0 %v1763
  %2373 = vmatmul.mubr.f32.gmra.mrb[0].mxu0 %v1711
  %v2374 = vpop.f32.mrb[0].mxu0
  %v2375 = vadd.f32 %v2230, %v2374
  %v2376 = vpop.f32.mrb[0].mxu0
  %2377 = vmatprep.mubr.f32.mxu0 %v1763
  %2378 = vmatmul.mubr.f32.gmra.mrb[0].mxu0 %v1711
  %v2379 = vpop.f32.mrb[0].mxu0
  %v2380 = vadd.f32 %v2235, %v2379
  %v2381 = vpop.f32.mrb[0].mxu0
  %2382 = vmatprep.mubr.f32.mxu0 %v1766
  %2383 = vmatmul.mubr.f32.gmra.mrb[0].mxu0 %v1712
  %v2384 = vpop.f32.mrb[0].mxu0
  %v2385 = vadd.f32 %v2240, %v2384
  %v2386 = vpop.f32.mrb[0].mxu0
  %2387 = vmatprep.mubr.f32.mxu0 %v1766
  %2388 = vmatmul.mubr.f32.gmra.mrb[0].mxu0 %v1712
  %v2389 = vpop.f32.mrb[0].mxu0
  %v2390 = vadd.f32 %v2245, %v2389
  %v2391 = vpop.f32.mrb[0].mxu0
  %2392 = vmatprep.mubr.f32.mxu0 %v1742
  %2393 = vmatmul.mubr.f32.gmra.mrb[0].mxu0 %v1704
  %v2394 = vpop.f32.mrb[0].mxu0
  %v2395 = vadd.f32 %v2250, %v2394
  %v2396 = vpop.f32.mrb[0].mxu0
  %2397 = vdwg.mxu0
  %2398 = vmatprep.subr.mxu0 0.0
  %2399 = vmatpush1.msra.mxu0 %v1660
  %2400 = vmatprep.subr.mxu0 0.0
  %2401 = vmatpush1.msra.mxu0 %v1661
  %2402 = vmatprep.subr.mxu0 0.0
  %2403 = vmatpush1.msra.mxu0 %v1662
  %2404 = vmatprep.subr.mxu0 0.0
  %2405 = vmatpush1.msra.mxu0 %v1663
  %2406 = vmatprep.subr.mxu0 0.0
  %2407 = vmatpush1.msra.mxu0 %v1664
  %2408 = vmatprep.subr.mxu0 0.0
  %2409 = vmatpush1.msra.mxu0 %v1665
  %2410 = vmatprep.subr.mxu0 0.0
  %2411 = vmatpush1.msra.mxu0 %v1666
  %2412 = vmatprep.subr.mxu0 0.0
  %2413 = vmatpush1.msra.mxu0 %v1667
  %2414 = vmatprep.subr.mxu0 0.0
  %2415 = vmatpush1.msra.mxu0 %v1668
  %2416 = vmatprep.subr.mxu0 0.0
  %2417 = vmatpush1.msra.mxu0 %v1669
  %2418 = vmatprep.subr.mxu0 0.0
  %2419 = vmatpush1.msra.mxu0 %v1670
  %2420 = vmatprep.subr.mxu0 0.0
  %2421 = vmatpush1.msra.mxu0 %v1671
  %2422 = vmatprep.subr.mxu0 0.0
  %2423 = vmatpush1.msra.mxu0 %v1672
  %2424 = vmatprep.subr.mxu0 0.0
  %2425 = vmatpush1.msra.mxu0 %v1673
  %2426 = vmatprep.subr.mxu0 0.0
  %2427 = vmatpush1.msra.mxu0 %v1674
  %2428 = vmatprep.subr.mxu0 0.0
  %2429 = vmatpush1.msra.mxu0 %v1675
  %2430 = vmatprep.subr.mxu0 0.0
  %2431 = vmatpush1.msra.mxu0 0.0
  %2432 = vmatprep.subr.mxu0 0.0
  %2433 = vmatpush1.msra.mxu0 0.0
  %2434 = vmatprep.subr.mxu0 0.0
  %2435 = vmatpush1.msra.mxu0 0.0
  %2436 = vmatprep.subr.mxu0 0.0
  %2437 = vmatpush1.msra.mxu0 0.0
  %2438 = vmatprep.subr.mxu0 0.0
  %2439 = vmatpush1.msra.mxu0 0.0
  %2440 = vmatprep.subr.mxu0 0.0
  %2441 = vmatpush1.msra.mxu0 0.0
  %2442 = vmatprep.subr.mxu0 0.0
  %2443 = vmatpush1.msra.mxu0 0.0
  %2444 = vmatprep.subr.mxu0 0.0
  %2445 = vmatpush1.msra.mxu0 0.0
  %2446 = vmatprep.subr.mxu0 0.0
  %2447 = vmatpush1.msra.mxu0 0.0
  %2448 = vmatprep.subr.mxu0 0.0
  %2449 = vmatpush1.msra.mxu0 0.0
  %2450 = vmatprep.subr.mxu0 0.0
  %2451 = vmatpush1.msra.mxu0 0.0
  %2452 = vmatprep.subr.mxu0 0.0
  %2453 = vmatpush1.msra.mxu0 0.0
  %2454 = vmatprep.subr.mxu0 0.0
  %2455 = vmatpush1.msra.mxu0 0.0
  %2456 = vmatprep.subr.mxu0 0.0
  %2457 = vmatpush1.msra.mxu0 0.0
  %2458 = vmatprep.subr.mxu0 0.0
  %2459 = vmatpush1.msra.mxu0 0.0
  %2460 = vmatprep.subr.mxu0 0.0
  %2461 = vmatpush1.msra.mxu0 0.0
  %2462 = vmatprep.mubr.f32.mxu0 0.0
  %2463 = vmatmul.mubr.f32.gmra.mrb[0].mxu0 %v1781
  %v2464 = vpop.f32.mrb[0].mxu0
  %v2465 = vadd.f32 %v2320, %v2464
  %v2466 = vpop.f32.mrb[0].mxu0
  %2467 = vmatprep.mubr.f32.mxu0 0.0
  %2468 = vmatmul.mubr.f32.gmra.mrb[0].mxu0 %v1784
  %v2469 = vpop.f32.mrb[0].mxu0
  %v2470 = vadd.f32 %v2325, %v2469
  %v2471 = vpop.f32.mrb[0].mxu0
  %2472 = vmatprep.mubr.f32.mxu0 0.0
  %2473 = vmatmul.mubr.f32.gmra.mrb[0].mxu0 %v1784
  %v2474 = vpop.f32.mrb[0].mxu0
  %v2475 = vadd.f32 %v2330, %v2474
  %v2476 = vpop.f32.mrb[0].mxu0
  %2477 = vmatprep.mubr.f32.mxu0 0.0
  %2478 = vmatmul.mubr.f32.gmra.mrb[0].mxu0 %v1787
  %v2479 = vpop.f32.mrb[0].mxu0
  %v2480 = vadd.f32 %v2335, %v2479
  %v2481 = vpop.f32.mrb[0].mxu0
  %2482 = vmatprep.mubr.f32.mxu0 0.0
  %2483 = vmatmul.mubr.f32.gmra.mrb[0].mxu0 %v1787
  %v2484 = vpop.f32.mrb[0].mxu0
  %v2485 = vadd.f32 %v2340, %v2484
  %v2486 = vpop.f32.mrb[0].mxu0
  %2487 = vmatprep.mubr.f32.mxu0 0.0
  %2488 = vmatmul.mubr.f32.gmra.mrb[0].mxu0 %v1790
  %v2489 = vpop.f32.mrb[0].mxu0
  %v2490 = vadd.f32 %v2345, %v2489
  %v2491 = vpop.f32.mrb[0].mxu0
  %2492 = vmatprep.mubr.f32.mxu0 0.0
  %2493 = vmatmul.mubr.f32.gmra.mrb[0].mxu0 %v1790
  %v2494 = vpop.f32.mrb[0].mxu0
  %v2495 = vadd.f32 %v2350, %v2494
  %v2496 = vpop.f32.mrb[0].mxu0
  %2497 = vmatprep.mubr.f32.mxu0 0.0
  %2498 = vmatmul.mubr.f32.gmra.mrb[0].mxu0 %v1778
  %v2499 = vpop.f32.mrb[0].mxu0
  %v2500 = vadd.f32 %v2355, %v2499
  %v2501 = vpop.f32.mrb[0].mxu0
  %2502 = vmatprep.mubr.f32.mxu0 0.0
  %2503 = vmatmul.mubr.f32.gmra.mrb[0].mxu0 %v1793
  %v2504 = vpop.f32.mrb[0].mxu0
  %v2505 = vadd.f32 %v2360, %v2504
  %v2506 = vpop.f32.mrb[0].mxu0
  %2507 = vmatprep.mubr.f32.mxu0 0.0
  %2508 = vmatmul.mubr.f32.gmra.mrb[0].mxu0 %v1796
  %v2509 = vpop.f32.mrb[0].mxu0
  %v2510 = vadd.f32 %v2365, %v2509
  %v2511 = vpop.f32.mrb[0].mxu0
  %2512 = vmatprep.mubr.f32.mxu0 0.0
  %2513 = vmatmul.mubr.f32.gmra.mrb[0].mxu0 %v1796
  %v2514 = vpop.f32.mrb[0].mxu0
  %v2515 = vadd.f32 %v2370, %v2514
  %v2516 = vpop.f32.mrb[0].mxu0
  %2517 = vmatprep.mubr.f32.mxu0 0.0
  %2518 = vmatmul.mubr.f32.gmra.mrb[0].mxu0 %v1799
  %v2519 = vpop.f32.mrb[0].mxu0
  %v2520 = vadd.f32 %v2375, %v2519
  %v2521 = vpop.f32.mrb[0].mxu0
  %2522 = vmatprep.mubr.f32.mxu0 0.0
  %2523 = vmatmul.mubr.f32.gmra.mrb[0].mxu0 %v1799
  %v2524 = vpop.f32.mrb[0].mxu0
  %v2525 = vadd.f32 %v2380, %v2524
  %v2526 = vpop.f32.mrb[0].mxu0
  %2527 = vmatprep.mubr.f32.mxu0 0.0
  %2528 = vmatmul.mubr.f32.gmra.mrb[0].mxu0 %v1802
  %v2529 = vpop.f32.mrb[0].mxu0
  %v2530 = vadd.f32 %v2385, %v2529
  %v2531 = vpop.f32.mrb[0].mxu0
  %2532 = vmatprep.mubr.f32.mxu0 0.0
  %2533 = vmatmul.mubr.f32.gmra.mrb[0].mxu0 %v1802
  %v2534 = vpop.f32.mrb[0].mxu0
  %v2535 = vadd.f32 %v2390, %v2534
  %v2536 = vpop.f32.mrb[0].mxu0
  %2537 = vmatprep.mubr.f32.mxu0 0.0
  %2538 = vmatmul.mubr.f32.gmra.mrb[0].mxu0 %v1778
  %v2539 = vpop.f32.mrb[0].mxu0
  %v2540 = vadd.f32 %v2395, %v2539
  %v2541 = vpop.f32.mrb[0].mxu0
  %2542 = vdwg.mxu0
  %v2543 = vld [vmem:[%s7] sm:$0x1]
  %v2544 = vld [vmem:[%s8] sm:$0x1]
  %v2545 = vadd.f32 %v2465, %v2470
  %v2546 = vadd.f32 %v2545, %v2475
  %v2547 = vadd.f32 %v2546, %v2480
  %v2548 = vadd.f32 %v2547, %v2485
  %v2549 = vadd.f32 %v2548, %v2490
  %v2550 = vadd.f32 %v2549, %v2495
  %v2551 = vadd.f32 %v2550, %v2500
  %v2552 = vadd.f32 %v2551, %v2505
  %v2553 = vadd.f32 %v2552, %v2510
  %v2554 = vadd.f32 %v2553, %v2515
  %v2555 = vadd.f32 %v2554, %v2520
  %v2556 = vadd.f32 %v2555, %v2525
  %v2557 = vadd.f32 %v2556, %v2530
  %v2558 = vadd.f32 %v2557, %v2535
  %v2559 = vadd.f32 %v2558, %v2540
  %v2560 = vrot.slane %v2559, 4
  %v2561 = vadd.f32 %v2559, %v2560
  %v2562 = vrot.slane %v2561, 2
  %v2563 = vadd.f32 %v2561, %v2562
  %v2564 = vrot.slane %v2563, 1
  %v2565 = vadd.f32 %v2563, %v2564
  %v2566 = vrcp.pop 128.0
  %v2567 = vmul.f32 %v2565, %v2566
  %v2568 = vmul.f32 %v2465, %v2465
  %v2569 = vmul.f32 %v2470, %v2470
  %v2570 = vmul.f32 %v2475, %v2475
  %v2571 = vmul.f32 %v2480, %v2480
  %v2572 = vmul.f32 %v2485, %v2485
  %v2573 = vmul.f32 %v2490, %v2490
  %v2574 = vmul.f32 %v2495, %v2495
  %v2575 = vmul.f32 %v2500, %v2500
  %v2576 = vmul.f32 %v2505, %v2505
  %v2577 = vmul.f32 %v2510, %v2510
  %v2578 = vmul.f32 %v2515, %v2515
  %v2579 = vmul.f32 %v2520, %v2520
  %v2580 = vmul.f32 %v2525, %v2525
  %v2581 = vmul.f32 %v2530, %v2530
  %v2582 = vmul.f32 %v2535, %v2535
  %v2583 = vmul.f32 %v2540, %v2540
  %v2584 = vadd.f32 %v2568, %v2569
  %v2585 = vadd.f32 %v2584, %v2570
  %v2586 = vadd.f32 %v2585, %v2571
  %v2587 = vadd.f32 %v2586, %v2572
  %v2588 = vadd.f32 %v2587, %v2573
  %v2589 = vadd.f32 %v2588, %v2574
  %v2590 = vadd.f32 %v2589, %v2575
  %v2591 = vadd.f32 %v2590, %v2576
  %v2592 = vadd.f32 %v2591, %v2577
  %v2593 = vadd.f32 %v2592, %v2578
  %v2594 = vadd.f32 %v2593, %v2579
  %v2595 = vadd.f32 %v2594, %v2580
  %v2596 = vadd.f32 %v2595, %v2581
  %v2597 = vadd.f32 %v2596, %v2582
  %v2598 = vadd.f32 %v2597, %v2583
  %v2599 = vrot.slane %v2598, 4
  %v2600 = vadd.f32 %v2598, %v2599
  %v2601 = vrot.slane %v2600, 2
  %v2602 = vadd.f32 %v2600, %v2601
  %v2603 = vrot.slane %v2602, 1
  %v2604 = vadd.f32 %v2602, %v2603
  %v2605 = vmul.f32 %v2604, %v2566
  %v2606 = vmul.f32 %v2567, %v2567
  %v2607 = vsub.f32 %v2605, %v2606
  %v2608 = vadd.f32 %v2607, 0.8
  %v2609 = vrsqrt.pop %v2608
  %v2610 = vmul.f32 %v2543, %v2609
  %v2611 = vmul.f32 %v2567, %v2610
  %v2612 = vsub.f32 %v2544, %v2611
  %v2614 = vlaneseq
  %v2615 = vshrl.u32 %v2614, 7
  %v2616 = vsub.s32 0, %v2615
  %v2617 = vrot.slane %v2610, %v2616
  %v2619 = vmul.f32 %v2465, %v2617
  %v2620 = vmul.f32 %v2470, %v2617
  %v2621 = vmul.f32 %v2475, %v2617
  %v2622 = vmul.f32 %v2480, %v2617
  %v2623 = vmul.f32 %v2485, %v2617
  %v2624 = vmul.f32 %v2490, %v2617
  %v2625 = vmul.f32 %v2495, %v2617
  %v2626 = vmul.f32 %v2500, %v2617
  %v2627 = vmul.f32 %v2505, %v2617
  %v2628 = vmul.f32 %v2510, %v2617
  %v2629 = vmul.f32 %v2515, %v2617
  %v2630 = vmul.f32 %v2520, %v2617
  %v2631 = vmul.f32 %v2525, %v2617
  %v2632 = vmul.f32 %v2530, %v2617
  %v2633 = vmul.f32 %v2535, %v2617
  %v2634 = vmul.f32 %v2540, %v2617
  %v2636 = vlaneseq
  %v2637 = vshrl.u32 %v2636, 7
  %v2638 = vsub.s32 0, %v2637
  %v2639 = vrot.slane %v2612, %v2638
  %v2641 = vadd.f32 %v2619, %v2639
  %v2642 = vadd.f32 %v2620, %v2639
  %v2643 = vadd.f32 %v2621, %v2639
  %v2644 = vadd.f32 %v2622, %v2639
  %v2645 = vadd.f32 %v2623, %v2639
  %v2646 = vadd.f32 %v2624, %v2639
  %v2647 = vadd.f32 %v2625, %v2639
  %v2648 = vadd.f32 %v2626, %v2639
  %v2649 = vadd.f32 %v2627, %v2639
  %v2650 = vadd.f32 %v2628, %v2639
  %v2651 = vadd.f32 %v2629, %v2639
  %v2652 = vadd.f32 %v2630, %v2639
  %v2653 = vadd.f32 %v2631, %v2639
  %v2654 = vadd.f32 %v2632, %v2639
  %v2655 = vadd.f32 %v2633, %v2639
  %v2656 = vadd.f32 %v2634, %v2639
  %vm2657 = vcmp.ge.f32.partialorder %v2641, 0.0
  %vm2658 = vcmp.ge.f32.partialorder %v2642, 0.0
  %vm2659 = vcmp.ge.f32.partialorder %v2643, 0.0
  %vm2660 = vcmp.ge.f32.partialorder %v2644, 0.0
  %vm2661 = vcmp.ge.f32.partialorder %v2645, 0.0
  %vm2662 = vcmp.ge.f32.partialorder %v2646, 0.0
  %vm2663 = vcmp.ge.f32.partialorder %v2647, 0.0
  %vm2664 = vcmp.ge.f32.partialorder %v2648, 0.0
  %vm2665 = vcmp.ge.f32.partialorder %v2649, 0.0
  %vm2666 = vcmp.ge.f32.partialorder %v2650, 0.0
  %vm2667 = vcmp.ge.f32.partialorder %v2651, 0.0
  %vm2668 = vcmp.ge.f32.partialorder %v2652, 0.0
  %vm2669 = vcmp.ge.f32.partialorder %v2653, 0.0
  %vm2670 = vcmp.ge.f32.partialorder %v2654, 0.0
  %vm2671 = vcmp.ge.f32.partialorder %v2655, 0.0
  %vm2672 = vcmp.ge.f32.partialorder %v2656, 0.0
  %v2673 = vmul.f32 %v2641, 0.2
  %v2674 = vmul.f32 %v2642, 0.2
  %v2675 = vmul.f32 %v2643, 0.2
  %v2676 = vmul.f32 %v2644, 0.2
  %v2677 = vmul.f32 %v2645, 0.2
  %v2678 = vmul.f32 %v2646, 0.2
  %v2679 = vmul.f32 %v2647, 0.2
  %v2680 = vmul.f32 %v2648, 0.2
  %v2681 = vmul.f32 %v2649, 0.2
  %v2682 = vmul.f32 %v2650, 0.2
  %v2683 = vmul.f32 %v2651, 0.2
  %v2684 = vmul.f32 %v2652, 0.2
  %v2685 = vmul.f32 %v2653, 0.2
  %v2686 = vmul.f32 %v2654, 0.2
  %v2687 = vmul.f32 %v2655, 0.2
  %v2688 = vmul.f32 %v2656, 0.2
  %v2689 = vsel %vm2657, %v2641, %v2673
  %v2690 = vsel %vm2658, %v2642, %v2674
  %v2691 = vsel %vm2659, %v2643, %v2675
  %v2692 = vsel %vm2660, %v2644, %v2676
  %v2693 = vsel %vm2661, %v2645, %v2677
  %v2694 = vsel %vm2662, %v2646, %v2678
  %v2695 = vsel %vm2663, %v2647, %v2679
  %v2696 = vsel %vm2664, %v2648, %v2680
  %v2697 = vsel %vm2665, %v2649, %v2681
  %v2698 = vsel %vm2666, %v2650, %v2682
  %v2699 = vsel %vm2667, %v2651, %v2683
  %v2700 = vsel %vm2668, %v2652, %v2684
  %v2701 = vsel %vm2669, %v2653, %v2685
  %v2702 = vsel %vm2670, %v2654, %v2686
  %v2703 = vsel %vm2671, %v2655, %v2687
  %v2704 = vsel %vm2672, %v2656, %v2688
  %v2721 = vrot.slane %v2689, 7
  %v2722 = vrot.slane %v2690, 7
  %v2723 = vrot.slane %v2691, 7
  %v2724 = vrot.slane %v2692, 7
  %v2725 = vrot.slane %v2693, 7
  %v2726 = vrot.slane %v2694, 7
  %v2727 = vrot.slane %v2695, 7
  %v2728 = vrot.slane %v2696, 7
  %v2729 = vrot.slane %v2697, 7
  %v2730 = vrot.slane %v2698, 7
  %v2731 = vrot.slane %v2699, 7
  %v2732 = vrot.slane %v2700, 7
  %v2733 = vrot.slane %v2701, 7
  %v2734 = vrot.slane %v2702, 7
  %v2735 = vrot.slane %v2703, 7
  %v2736 = vrot.slane %v2704, 7
  %v2753 = vrot.slane %v2689, 6
  %v2754 = vrot.slane %v2690, 6
  %v2755 = vrot.slane %v2691, 6
  %v2756 = vrot.slane %v2692, 6
  %v2757 = vrot.slane %v2693, 6
  %v2758 = vrot.slane %v2694, 6
  %v2759 = vrot.slane %v2695, 6
  %v2760 = vrot.slane %v2696, 6
  %v2761 = vrot.slane %v2697, 6
  %v2762 = vrot.slane %v2698, 6
  %v2763 = vrot.slane %v2699, 6
  %v2764 = vrot.slane %v2700, 6
  %v2765 = vrot.slane %v2701, 6
  %v2766 = vrot.slane %v2702, 6
  %v2767 = vrot.slane %v2703, 6
  %v2768 = vrot.slane %v2704, 6
  %v2785 = vrot.slane %v2689, 5
  %v2786 = vrot.slane %v2690, 5
  %v2787 = vrot.slane %v2691, 5
  %v2788 = vrot.slane %v2692, 5
  %v2789 = vrot.slane %v2693, 5
  %v2790 = vrot.slane %v2694, 5
  %v2791 = vrot.slane %v2695, 5
  %v2792 = vrot.slane %v2696, 5
  %v2793 = vrot.slane %v2697, 5
  %v2794 = vrot.slane %v2698, 5
  %v2795 = vrot.slane %v2699, 5
  %v2796 = vrot.slane %v2700, 5
  %v2797 = vrot.slane %v2701, 5
  %v2798 = vrot.slane %v2702, 5
  %v2799 = vrot.slane %v2703, 5
  %v2800 = vrot.slane %v2704, 5
  %v2817 = vrot.slane %v2689, 4
  %v2818 = vrot.slane %v2690, 4
  %v2819 = vrot.slane %v2691, 4
  %v2820 = vrot.slane %v2692, 4
  %v2821 = vrot.slane %v2693, 4
  %v2822 = vrot.slane %v2694, 4
  %v2823 = vrot.slane %v2695, 4
  %v2824 = vrot.slane %v2696, 4
  %v2825 = vrot.slane %v2697, 4
  %v2826 = vrot.slane %v2698, 4
  %v2827 = vrot.slane %v2699, 4
  %v2828 = vrot.slane %v2700, 4
  %v2829 = vrot.slane %v2701, 4
  %v2830 = vrot.slane %v2702, 4
  %v2831 = vrot.slane %v2703, 4
  %v2832 = vrot.slane %v2704, 4
  %v2849 = vrot.slane %v2689, 3
  %v2850 = vrot.slane %v2690, 3
  %v2851 = vrot.slane %v2691, 3
  %v2852 = vrot.slane %v2692, 3
  %v2853 = vrot.slane %v2693, 3
  %v2854 = vrot.slane %v2694, 3
  %v2855 = vrot.slane %v2695, 3
  %v2856 = vrot.slane %v2696, 3
  %v2857 = vrot.slane %v2697, 3
  %v2858 = vrot.slane %v2698, 3
  %v2859 = vrot.slane %v2699, 3
  %v2860 = vrot.slane %v2700, 3
  %v2861 = vrot.slane %v2701, 3
  %v2862 = vrot.slane %v2702, 3
  %v2863 = vrot.slane %v2703, 3
  %v2864 = vrot.slane %v2704, 3
  %v2881 = vrot.slane %v2689, 2
  %v2882 = vrot.slane %v2690, 2
  %v2883 = vrot.slane %v2691, 2
  %v2884 = vrot.slane %v2692, 2
  %v2885 = vrot.slane %v2693, 2
  %v2886 = vrot.slane %v2694, 2
  %v2887 = vrot.slane %v2695, 2
  %v2888 = vrot.slane %v2696, 2
  %v2889 = vrot.slane %v2697, 2
  %v2890 = vrot.slane %v2698, 2
  %v2891 = vrot.slane %v2699, 2
  %v2892 = vrot.slane %v2700, 2
  %v2893 = vrot.slane %v2701, 2
  %v2894 = vrot.slane %v2702, 2
  %v2895 = vrot.slane %v2703, 2
  %v2896 = vrot.slane %v2704, 2
  %v2913 = vrot.slane %v2689, 1
  %v2914 = vrot.slane %v2690, 1
  %v2915 = vrot.slane %v2691, 1
  %v2916 = vrot.slane %v2692, 1
  %v2917 = vrot.slane %v2693, 1
  %v2918 = vrot.slane %v2694, 1
  %v2919 = vrot.slane %v2695, 1
  %v2920 = vrot.slane %v2696, 1
  %v2921 = vrot.slane %v2697, 1
  %v2922 = vrot.slane %v2698, 1
  %v2923 = vrot.slane %v2699, 1
  %v2924 = vrot.slane %v2700, 1
  %v2925 = vrot.slane %v2701, 1
  %v2926 = vrot.slane %v2702, 1
  %v2927 = vrot.slane %v2703, 1
  %v2928 = vrot.slane %v2704, 1
  %v2945 = vsel %vm912, %v2689, %v2721
  %v2946 = vsel %vm912, %v2690, %v2722
  %v2947 = vsel %vm912, %v2691, %v2723
  %v2948 = vsel %vm912, %v2692, %v2724
  %v2949 = vsel %vm912, %v2693, %v2725
  %v2950 = vsel %vm912, %v2694, %v2726
  %v2951 = vsel %vm912, %v2695, %v2727
  %v2952 = vsel %vm912, %v2696, %v2728
  %v2953 = vsel %vm912, %v2697, %v2729
  %v2954 = vsel %vm912, %v2698, %v2730
  %v2955 = vsel %vm912, %v2699, %v2731
  %v2956 = vsel %vm912, %v2700, %v2732
  %v2957 = vsel %vm912, %v2701, %v2733
  %v2958 = vsel %vm912, %v2702, %v2734
  %v2959 = vsel %vm912, %v2703, %v2735
  %v2960 = vsel %vm912, %v2704, %v2736
  %v2961 = vsel %vm915, %v2945, %v2721
  %v2962 = vsel %vm915, %v2946, %v2722
  %v2963 = vsel %vm915, %v2947, %v2723
  %v2964 = vsel %vm915, %v2948, %v2724
  %v2965 = vsel %vm915, %v2949, %v2725
  %v2966 = vsel %vm915, %v2950, %v2726
  %v2967 = vsel %vm915, %v2951, %v2727
  %v2968 = vsel %vm915, %v2952, %v2728
  %v2969 = vsel %vm915, %v2953, %v2729
  %v2970 = vsel %vm915, %v2954, %v2730
  %v2971 = vsel %vm915, %v2955, %v2731
  %v2972 = vsel %vm915, %v2956, %v2732
  %v2973 = vsel %vm915, %v2957, %v2733
  %v2974 = vsel %vm915, %v2958, %v2734
  %v2975 = vsel %vm915, %v2959, %v2735
  %v2976 = vsel %vm915, %v2960, %v2736
  %v2977 = vsel %vm918, %v2961, %v2753
  %v2978 = vsel %vm918, %v2962, %v2754
  %v2979 = vsel %vm918, %v2963, %v2755
  %v2980 = vsel %vm918, %v2964, %v2756
  %v2981 = vsel %vm918, %v2965, %v2757
  %v2982 = vsel %vm918, %v2966, %v2758
  %v2983 = vsel %vm918, %v2967, %v2759
  %v2984 = vsel %vm918, %v2968, %v2760
  %v2985 = vsel %vm918, %v2969, %v2761
  %v2986 = vsel %vm918, %v2970, %v2762
  %v2987 = vsel %vm918, %v2971, %v2763
  %v2988 = vsel %vm918, %v2972, %v2764
  %v2989 = vsel %vm918, %v2973, %v2765
  %v2990 = vsel %vm918, %v2974, %v2766
  %v2991 = vsel %vm918, %v2975, %v2767
  %v2992 = vsel %vm918, %v2976, %v2768
  %v2993 = vsel %vm1313, %v2977, %v2753
  %v2994 = vsel %vm1313, %v2978, %v2754
  %v2995 = vsel %vm1313, %v2979, %v2755
  %v2996 = vsel %vm1313, %v2980, %v2756
  %v2997 = vsel %vm1313, %v2981, %v2757
  %v2998 = vsel %vm1313, %v2982, %v2758
  %v2999 = vsel %vm1313, %v2983, %v2759
  %v3000 = vsel %vm1313, %v2984, %v2760
  %v3001 = vsel %vm1313, %v2985, %v2761
  %v3002 = vsel %vm1313, %v2986, %v2762
  %v3003 = vsel %vm1313, %v2987, %v2763
  %v3004 = vsel %vm1313, %v2988, %v2764
  %v3005 = vsel %vm1313, %v2989, %v2765
  %v3006 = vsel %vm1313, %v2990, %v2766
  %v3007 = vsel %vm1313, %v2991, %v2767
  %v3008 = vsel %vm1313, %v2992, %v2768
  %v3009 = vsel %vm1506, %v2993, %v2785
  %v3010 = vsel %vm1506, %v2994, %v2786
  %v3011 = vsel %vm1506, %v2995, %v2787
  %v3012 = vsel %vm1506, %v2996, %v2788
  %v3013 = vsel %vm1506, %v2997, %v2789
  %v3014 = vsel %vm1506, %v2998, %v2790
  %v3015 = vsel %vm1506, %v2999, %v2791
  %v3016 = vsel %vm1506, %v3000, %v2792
  %v3017 = vsel %vm1506, %v3001, %v2793
  %v3018 = vsel %vm1506, %v3002, %v2794
  %v3019 = vsel %vm1506, %v3003, %v2795
  %v3020 = vsel %vm1506, %v3004, %v2796
  %v3021 = vsel %vm1506, %v3005, %v2797
  %v3022 = vsel %vm1506, %v3006, %v2798
  %v3023 = vsel %vm1506, %v3007, %v2799
  %v3024 = vsel %vm1506, %v3008, %v2800
  %v3025 = vsel %vm171, %v3009, %v2785
  %v3026 = vsel %vm171, %v3010, %v2786
  %v3027 = vsel %vm171, %v3011, %v2787
  %v3028 = vsel %vm171, %v3012, %v2788
  %v3029 = vsel %vm171, %v3013, %v2789
  %v3030 = vsel %vm171, %v3014, %v2790
  %v3031 = vsel %vm171, %v3015, %v2791
  %v3032 = vsel %vm171, %v3016, %v2792
  %v3033 = vsel %vm171, %v3017, %v2793
  %v3034 = vsel %vm171, %v3018, %v2794
  %v3035 = vsel %vm171, %v3019, %v2795
  %v3036 = vsel %vm171, %v3020, %v2796
  %v3037 = vsel %vm171, %v3021, %v2797
  %v3038 = vsel %vm171, %v3022, %v2798
  %v3039 = vsel %vm171, %v3023, %v2799
  %v3040 = vsel %vm171, %v3024, %v2800
  %v3041 = vsel %vm1523, %v3025, %v2817
  %v3042 = vsel %vm1523, %v3026, %v2818
  %v3043 = vsel %vm1523, %v3027, %v2819
  %v3044 = vsel %vm1523, %v3028, %v2820
  %v3045 = vsel %vm1523, %v3029, %v2821
  %v3046 = vsel %vm1523, %v3030, %v2822
  %v3047 = vsel %vm1523, %v3031, %v2823
  %v3048 = vsel %vm1523, %v3032, %v2824
  %v3049 = vsel %vm1523, %v3033, %v2825
  %v3050 = vsel %vm1523, %v3034, %v2826
  %v3051 = vsel %vm1523, %v3035, %v2827
  %v3052 = vsel %vm1523, %v3036, %v2828
  %v3053 = vsel %vm1523, %v3037, %v2829
  %v3054 = vsel %vm1523, %v3038, %v2830
  %v3055 = vsel %vm1523, %v3039, %v2831
  %v3056 = vsel %vm1523, %v3040, %v2832
  %v3057 = vsel %vm912, %v2817, %v2849
  %v3058 = vsel %vm912, %v2818, %v2850
  %v3059 = vsel %vm912, %v2819, %v2851
  %v3060 = vsel %vm912, %v2820, %v2852
  %v3061 = vsel %vm912, %v2821, %v2853
  %v3062 = vsel %vm912, %v2822, %v2854
  %v3063 = vsel %vm912, %v2823, %v2855
  %v3064 = vsel %vm912, %v2824, %v2856
  %v3065 = vsel %vm912, %v2825, %v2857
  %v3066 = vsel %vm912, %v2826, %v2858
  %v3067 = vsel %vm912, %v2827, %v2859
  %v3068 = vsel %vm912, %v2828, %v2860
  %v3069 = vsel %vm912, %v2829, %v2861
  %v3070 = vsel %vm912, %v2830, %v2862
  %v3071 = vsel %vm912, %v2831, %v2863
  %v3072 = vsel %vm912, %v2832, %v2864
  %v3073 = vsel %vm915, %v3057, %v2849
  %v3074 = vsel %vm915, %v3058, %v2850
  %v3075 = vsel %vm915, %v3059, %v2851
  %v3076 = vsel %vm915, %v3060, %v2852
  %v3077 = vsel %vm915, %v3061, %v2853
  %v3078 = vsel %vm915, %v3062, %v2854
  %v3079 = vsel %vm915, %v3063, %v2855
  %v3080 = vsel %vm915, %v3064, %v2856
  %v3081 = vsel %vm915, %v3065, %v2857
  %v3082 = vsel %vm915, %v3066, %v2858
  %v3083 = vsel %vm915, %v3067, %v2859
  %v3084 = vsel %vm915, %v3068, %v2860
  %v3085 = vsel %vm915, %v3069, %v2861
  %v3086 = vsel %vm915, %v3070, %v2862
  %v3087 = vsel %vm915, %v3071, %v2863
  %v3088 = vsel %vm915, %v3072, %v2864
  %v3089 = vsel %vm918, %v3073, %v2881
  %v3090 = vsel %vm918, %v3074, %v2882
  %v3091 = vsel %vm918, %v3075, %v2883
  %v3092 = vsel %vm918, %v3076, %v2884
  %v3093 = vsel %vm918, %v3077, %v2885
  %v3094 = vsel %vm918, %v3078, %v2886
  %v3095 = vsel %vm918, %v3079, %v2887
  %v3096 = vsel %vm918, %v3080, %v2888
  %v3097 = vsel %vm918, %v3081, %v2889
  %v3098 = vsel %vm918, %v3082, %v2890
  %v3099 = vsel %vm918, %v3083, %v2891
  %v3100 = vsel %vm918, %v3084, %v2892
  %v3101 = vsel %vm918, %v3085, %v2893
  %v3102 = vsel %vm918, %v3086, %v2894
  %v3103 = vsel %vm918, %v3087, %v2895
  %v3104 = vsel %vm918, %v3088, %v2896
  %v3105 = vsel %vm1313, %v3089, %v2881
  %v3106 = vsel %vm1313, %v3090, %v2882
  %v3107 = vsel %vm1313, %v3091, %v2883
  %v3108 = vsel %vm1313, %v3092, %v2884
  %v3109 = vsel %vm1313, %v3093, %v2885
  %v3110 = vsel %vm1313, %v3094, %v2886
  %v3111 = vsel %vm1313, %v3095, %v2887
  %v3112 = vsel %vm1313, %v3096, %v2888
  %v3113 = vsel %vm1313, %v3097, %v2889
  %v3114 = vsel %vm1313, %v3098, %v2890
  %v3115 = vsel %vm1313, %v3099, %v2891
  %v3116 = vsel %vm1313, %v3100, %v2892
  %v3117 = vsel %vm1313, %v3101, %v2893
  %v3118 = vsel %vm1313, %v3102, %v2894
  %v3119 = vsel %vm1313, %v3103, %v2895
  %v3120 = vsel %vm1313, %v3104, %v2896
  %v3121 = vsel %vm1506, %v3105, %v2913
  %v3122 = vsel %vm1506, %v3106, %v2914
  %v3123 = vsel %vm1506, %v3107, %v2915
  %v3124 = vsel %vm1506, %v3108, %v2916
  %v3125 = vsel %vm1506, %v3109, %v2917
  %v3126 = vsel %vm1506, %v3110, %v2918
  %v3127 = vsel %vm1506, %v3111, %v2919
  %v3128 = vsel %vm1506, %v3112, %v2920
  %v3129 = vsel %vm1506, %v3113, %v2921
  %v3130 = vsel %vm1506, %v3114, %v2922
  %v3131 = vsel %vm1506, %v3115, %v2923
  %v3132 = vsel %vm1506, %v3116, %v2924
  %v3133 = vsel %vm1506, %v3117, %v2925
  %v3134 = vsel %vm1506, %v3118, %v2926
  %v3135 = vsel %vm1506, %v3119, %v2927
  %v3136 = vsel %vm1506, %v3120, %v2928
  %v3137 = vsel %vm171, %v3121, %v2913
  %v3138 = vsel %vm171, %v3122, %v2914
  %v3139 = vsel %vm171, %v3123, %v2915
  %v3140 = vsel %vm171, %v3124, %v2916
  %v3141 = vsel %vm171, %v3125, %v2917
  %v3142 = vsel %vm171, %v3126, %v2918
  %v3143 = vsel %vm171, %v3127, %v2919
  %v3144 = vsel %vm171, %v3128, %v2920
  %v3145 = vsel %vm171, %v3129, %v2921
  %v3146 = vsel %vm171, %v3130, %v2922
  %v3147 = vsel %vm171, %v3131, %v2923
  %v3148 = vsel %vm171, %v3132, %v2924
  %v3149 = vsel %vm171, %v3133, %v2925
  %v3150 = vsel %vm171, %v3134, %v2926
  %v3151 = vsel %vm171, %v3135, %v2927
  %v3152 = vsel %vm171, %v3136, %v2928
  %v3153 = vsel %vm1523, %v3137, %v2689
  %v3154 = vsel %vm1523, %v3138, %v2690
  %v3155 = vsel %vm1523, %v3139, %v2691
  %v3156 = vsel %vm1523, %v3140, %v2692
  %v3157 = vsel %vm1523, %v3141, %v2693
  %v3158 = vsel %vm1523, %v3142, %v2694
  %v3159 = vsel %vm1523, %v3143, %v2695
  %v3160 = vsel %vm1523, %v3144, %v2696
  %v3161 = vsel %vm1523, %v3145, %v2697
  %v3162 = vsel %vm1523, %v3146, %v2698
  %v3163 = vsel %vm1523, %v3147, %v2699
  %v3164 = vsel %vm1523, %v3148, %v2700
  %v3165 = vsel %vm1523, %v3149, %v2701
  %v3166 = vsel %vm1523, %v3150, %v2702
  %v3167 = vsel %vm1523, %v3151, %v2703
  %v3168 = vsel %vm1523, %v3152, %v2704
  %v3169 = vld [vmem:[%s9] sm:$0xff]
  %v3170 = vld [vmem:[%s9 + $0x8] sm:$0xff]
  %v3171 = vld [vmem:[%s9 + $0x10] sm:$0xff]
  %v3172 = vld [vmem:[%s9 + $0x18] sm:$0xff]
  %v3173 = vld [vmem:[%s9 + $0x20] sm:$0xff]
  %v3174 = vld [vmem:[%s9 + $0x28] sm:$0xff]
  %v3175 = vld [vmem:[%s9 + $0x30] sm:$0xff]
  %v3176 = vld [vmem:[%s9 + $0x38] sm:$0xff]
  %v3177 = vld [vmem:[%s9 + $0x40] sm:$0xff]
  %v3178 = vld [vmem:[%s9 + $0x48] sm:$0xff]
  %v3179 = vld [vmem:[%s9 + $0x50] sm:$0xff]
  %v3180 = vld [vmem:[%s9 + $0x58] sm:$0xff]
  %v3181 = vld [vmem:[%s9 + $0x60] sm:$0xff]
  %v3182 = vld [vmem:[%s9 + $0x68] sm:$0xff]
  %v3183 = vld [vmem:[%s9 + $0x70] sm:$0xff]
  %v3184 = vld [vmem:[%s9 + $0x78] sm:$0xff]
  %v3185 = vld [vmem:[%s9 + $0x80] sm:$0xff]
  %v3186 = vld [vmem:[%s9 + $0x88] sm:$0xff]
  %v3187 = vld [vmem:[%s9 + $0x90] sm:$0xff]
  %v3188 = vld [vmem:[%s9 + $0x98] sm:$0xff]
  %v3189 = vld [vmem:[%s9 + $0xa0] sm:$0xff]
  %v3190 = vld [vmem:[%s9 + $0xa8] sm:$0xff]
  %v3191 = vld [vmem:[%s9 + $0xb0] sm:$0xff]
  %v3192 = vld [vmem:[%s9 + $0xb8] sm:$0xff]
  %v3193 = vld [vmem:[%s9 + $0xc0] sm:$0xff]
  %v3194 = vld [vmem:[%s9 + $0xc8] sm:$0xff]
  %v3195 = vld [vmem:[%s9 + $0xd0] sm:$0xff]
  %v3196 = vld [vmem:[%s9 + $0xd8] sm:$0xff]
  %v3197 = vld [vmem:[%s9 + $0xe0] sm:$0xff]
  %v3198 = vld [vmem:[%s9 + $0xe8] sm:$0xff]
  %v3199 = vld [vmem:[%s9 + $0xf0] sm:$0xff]
  %v3200 = vld [vmem:[%s9 + $0xf8] sm:$0xff]
  %v3201 = vld [vmem:[%s9 + $0x100] sm:$0xff]
  %v3202 = vld [vmem:[%s9 + $0x108] sm:$0xff]
  %v3203 = vld [vmem:[%s9 + $0x110] sm:$0xff]
  %v3204 = vld [vmem:[%s9 + $0x118] sm:$0xff]
  %v3205 = vld [vmem:[%s9 + $0x120] sm:$0xff]
  %v3206 = vld [vmem:[%s9 + $0x128] sm:$0xff]
  %v3207 = vld [vmem:[%s9 + $0x130] sm:$0xff]
  %v3208 = vld [vmem:[%s9 + $0x138] sm:$0xff]
  %v3209 = vld [vmem:[%s9 + $0x140] sm:$0xff]
  %v3210 = vld [vmem:[%s9 + $0x148] sm:$0xff]
  %v3211 = vld [vmem:[%s9 + $0x150] sm:$0xff]
  %v3212 = vld [vmem:[%s9 + $0x158] sm:$0xff]
  %v3213 = vld [vmem:[%s9 + $0x160] sm:$0xff]
  %v3214 = vld [vmem:[%s9 + $0x168] sm:$0xff]
  %v3215 = vld [vmem:[%s9 + $0x170] sm:$0xff]
  %v3216 = vld [vmem:[%s9 + $0x178] sm:$0xff]
  %v3217 = vld [vmem:[%s9 + $0x180] sm:$0xff]
  %v3218 = vld [vmem:[%s9 + $0x188] sm:$0xff]
  %v3219 = vld [vmem:[%s9 + $0x190] sm:$0xff]
  %v3220 = vld [vmem:[%s9 + $0x198] sm:$0xff]
  %v3221 = vld [vmem:[%s9 + $0x1a0] sm:$0xff]
  %v3222 = vld [vmem:[%s9 + $0x1a8] sm:$0xff]
  %v3223 = vld [vmem:[%s9 + $0x1b0] sm:$0xff]
  %v3224 = vld [vmem:[%s9 + $0x1b8] sm:$0xff]
  %v3225 = vld [vmem:[%s9 + $0x1c0] sm:$0xff]
  %v3226 = vld [vmem:[%s9 + $0x1c8] sm:$0xff]
  %v3227 = vld [vmem:[%s9 + $0x1d0] sm:$0xff]
  %v3228 = vld [vmem:[%s9 + $0x1d8] sm:$0xff]
  %v3229 = vld [vmem:[%s9 + $0x1e0] sm:$0xff]
  %v3230 = vld [vmem:[%s9 + $0x1e8] sm:$0xff]
  %v3231 = vld [vmem:[%s9 + $0x1f0] sm:$0xff]
  %v3232 = vld [vmem:[%s9 + $0x1f8] sm:$0xff]
  %v3233 = vld [vmem:[%s9 + $0x200] sm:$0xff]
  %v3234 = vld [vmem:[%s9 + $0x208] sm:$0xff]
  %v3235 = vld [vmem:[%s9 + $0x210] sm:$0xff]
  %v3236 = vld [vmem:[%s9 + $0x218] sm:$0xff]
  %v3237 = vld [vmem:[%s9 + $0x220] sm:$0xff]
  %v3238 = vld [vmem:[%s9 + $0x228] sm:$0xff]
  %v3239 = vld [vmem:[%s9 + $0x230] sm:$0xff]
  %v3240 = vld [vmem:[%s9 + $0x238] sm:$0xff]
  %v3241 = vld [vmem:[%s9 + $0x240] sm:$0xff]
  %v3242 = vld [vmem:[%s9 + $0x248] sm:$0xff]
  %v3243 = vld [vmem:[%s9 + $0x250] sm:$0xff]
  %v3244 = vld [vmem:[%s9 + $0x258] sm:$0xff]
  %v3245 = vld [vmem:[%s9 + $0x260] sm:$0xff]
  %v3246 = vld [vmem:[%s9 + $0x268] sm:$0xff]
  %v3247 = vld [vmem:[%s9 + $0x270] sm:$0xff]
  %v3248 = vld [vmem:[%s9 + $0x278] sm:$0xff]
  %v3249 = vld [vmem:[%s9 + $0x280] sm:$0xff]
  %v3250 = vld [vmem:[%s9 + $0x288] sm:$0xff]
  %v3251 = vld [vmem:[%s9 + $0x290] sm:$0xff]
  %v3252 = vld [vmem:[%s9 + $0x298] sm:$0xff]
  %v3253 = vld [vmem:[%s9 + $0x2a0] sm:$0xff]
  %v3254 = vld [vmem:[%s9 + $0x2a8] sm:$0xff]
  %v3255 = vld [vmem:[%s9 + $0x2b0] sm:$0xff]
  %v3256 = vld [vmem:[%s9 + $0x2b8] sm:$0xff]
  %v3257 = vld [vmem:[%s9 + $0x2c0] sm:$0xff]
  %v3258 = vld [vmem:[%s9 + $0x2c8] sm:$0xff]
  %v3259 = vld [vmem:[%s9 + $0x2d0] sm:$0xff]
  %v3260 = vld [vmem:[%s9 + $0x2d8] sm:$0xff]
  %v3261 = vld [vmem:[%s9 + $0x2e0] sm:$0xff]
  %v3262 = vld [vmem:[%s9 + $0x2e8] sm:$0xff]
  %v3263 = vld [vmem:[%s9 + $0x2f0] sm:$0xff]
  %v3264 = vld [vmem:[%s9 + $0x2f8] sm:$0xff]
  %v3265 = vld [vmem:[%s9 + $0x300] sm:$0xff]
  %v3266 = vld [vmem:[%s9 + $0x308] sm:$0xff]
  %v3267 = vld [vmem:[%s9 + $0x310] sm:$0xff]
  %v3268 = vld [vmem:[%s9 + $0x318] sm:$0xff]
  %v3269 = vld [vmem:[%s9 + $0x320] sm:$0xff]
  %v3270 = vld [vmem:[%s9 + $0x328] sm:$0xff]
  %v3271 = vld [vmem:[%s9 + $0x330] sm:$0xff]
  %v3272 = vld [vmem:[%s9 + $0x338] sm:$0xff]
  %v3273 = vld [vmem:[%s9 + $0x340] sm:$0xff]
  %v3274 = vld [vmem:[%s9 + $0x348] sm:$0xff]
  %v3275 = vld [vmem:[%s9 + $0x350] sm:$0xff]
  %v3276 = vld [vmem:[%s9 + $0x358] sm:$0xff]
  %v3277 = vld [vmem:[%s9 + $0x360] sm:$0xff]
  %v3278 = vld [vmem:[%s9 + $0x368] sm:$0xff]
  %v3279 = vld [vmem:[%s9 + $0x370] sm:$0xff]
  %v3280 = vld [vmem:[%s9 + $0x378] sm:$0xff]
  %v3281 = vld [vmem:[%s9 + $0x380] sm:$0xff]
  %v3282 = vld [vmem:[%s9 + $0x388] sm:$0xff]
  %v3283 = vld [vmem:[%s9 + $0x390] sm:$0xff]
  %v3284 = vld [vmem:[%s9 + $0x398] sm:$0xff]
  %v3285 = vld [vmem:[%s9 + $0x3a0] sm:$0xff]
  %v3286 = vld [vmem:[%s9 + $0x3a8] sm:$0xff]
  %v3287 = vld [vmem:[%s9 + $0x3b0] sm:$0xff]
  %v3288 = vld [vmem:[%s9 + $0x3b8] sm:$0xff]
  %v3289 = vld [vmem:[%s9 + $0x3c0] sm:$0xff]
  %v3290 = vld [vmem:[%s9 + $0x3c8] sm:$0xff]
  %v3291 = vld [vmem:[%s9 + $0x3d0] sm:$0xff]
  %v3292 = vld [vmem:[%s9 + $0x3d8] sm:$0xff]
  %v3293 = vld [vmem:[%s9 + $0x3e0] sm:$0xff]
  %v3294 = vld [vmem:[%s9 + $0x3e8] sm:$0xff]
  %v3295 = vld [vmem:[%s9 + $0x3f0] sm:$0xff]
  %v3296 = vld [vmem:[%s9 + $0x3f8] sm:$0xff]
  %v3297 = vld [vmem:[%s9 + $0x400] sm:$0xff]
  %v3298 = vld [vmem:[%s9 + $0x408] sm:$0xff]
  %v3299 = vld [vmem:[%s9 + $0x410] sm:$0xff]
  %v3300 = vld [vmem:[%s9 + $0x418] sm:$0xff]
  %v3301 = vld [vmem:[%s9 + $0x420] sm:$0xff]
  %v3302 = vld [vmem:[%s9 + $0x428] sm:$0xff]
  %v3303 = vld [vmem:[%s9 + $0x430] sm:$0xff]
  %v3304 = vld [vmem:[%s9 + $0x438] sm:$0xff]
  %v3305 = vld [vmem:[%s9 + $0x440] sm:$0xff]
  %v3306 = vld [vmem:[%s9 + $0x448] sm:$0xff]
  %v3307 = vld [vmem:[%s9 + $0x450] sm:$0xff]
  %v3308 = vld [vmem:[%s9 + $0x458] sm:$0xff]
  %v3309 = vld [vmem:[%s9 + $0x460] sm:$0xff]
  %v3310 = vld [vmem:[%s9 + $0x468] sm:$0xff]
  %v3311 = vld [vmem:[%s9 + $0x470] sm:$0xff]
  %v3312 = vld [vmem:[%s9 + $0x478] sm:$0xff]
  %v3313 = vld [vmem:[%s10] sm:$0x1]
  %v3346 = vsel %vm912, %v1686, %v1686
  %v3347 = vrot.slane %v3041, 7
  %v3348 = vrot.slane %v3153, 7
  %v3349 = vsel %vm912, %v3347, %v3348
  %v3350 = vrot.slane %v3042, 7
  %v3351 = vrot.slane %v3154, 7
  %v3352 = vsel %vm912, %v3350, %v3351
  %v3353 = vrot.slane %v3043, 7
  %v3354 = vrot.slane %v3155, 7
  %v3355 = vsel %vm912, %v3353, %v3354
  %v3356 = vrot.slane %v3044, 7
  %v3357 = vrot.slane %v3156, 7
  %v3358 = vsel %vm912, %v3356, %v3357
  %v3359 = vrot.slane %v3045, 7
  %v3360 = vrot.slane %v3157, 7
  %v3361 = vsel %vm912, %v3359, %v3360
  %v3362 = vrot.slane %v3046, 7
  %v3363 = vrot.slane %v3158, 7
  %v3364 = vsel %vm912, %v3362, %v3363
  %v3365 = vrot.slane %v3047, 7
  %v3366 = vrot.slane %v3159, 7
  %v3367 = vsel %vm912, %v3365, %v3366
  %v3368 = vrot.slane %v3048, 7
  %v3369 = vrot.slane %v3160, 7
  %v3370 = vsel %vm912, %v3368, %v3369
  %v3371 = vrot.slane %v3049, 7
  %v3372 = vrot.slane %v3161, 7
  %v3373 = vsel %vm912, %v3371, %v3372
  %v3374 = vrot.slane %v3050, 7
  %v3375 = vrot.slane %v3162, 7
  %v3376 = vsel %vm912, %v3374, %v3375
  %v3377 = vrot.slane %v3051, 7
  %v3378 = vrot.slane %v3163, 7
  %v3379 = vsel %vm912, %v3377, %v3378
  %v3380 = vrot.slane %v3052, 7
  %v3381 = vrot.slane %v3164, 7
  %v3382 = vsel %vm912, %v3380, %v3381
  %v3383 = vrot.slane %v3053, 7
  %v3384 = vrot.slane %v3165, 7
  %v3385 = vsel %vm912, %v3383, %v3384
  %v3386 = vrot.slane %v3054, 7
  %v3387 = vrot.slane %v3166, 7
  %v3388 = vsel %vm912, %v3386, %v3387
  %v3389 = vrot.slane %v3055, 7
  %v3390 = vrot.slane %v3167, 7
  %v3391 = vsel %vm912, %v3389, %v3390
  %v3392 = vrot.slane %v3056, 7
  %v3393 = vrot.slane %v3168, 7
  %v3394 = vsel %vm912, %v3392, %v3393
  %v3444 = vsel %vm912, 0.0, %v3347
  %v3445 = vsel %vm912, 0.0, %v3350
  %v3446 = vsel %vm912, 0.0, %v3353
  %v3447 = vsel %vm912, 0.0, %v3356
  %v3448 = vsel %vm912, 0.0, %v3359
  %v3449 = vsel %vm912, 0.0, %v3362
  %v3450 = vsel %vm912, 0.0, %v3365
  %v3451 = vsel %vm912, 0.0, %v3368
  %v3452 = vsel %vm912, 0.0, %v3371
  %v3453 = vsel %vm912, 0.0, %v3374
  %v3454 = vsel %vm912, 0.0, %v3377
  %v3455 = vsel %vm912, 0.0, %v3380
  %v3456 = vsel %vm912, 0.0, %v3383
  %v3457 = vsel %vm912, 0.0, %v3386
  %v3458 = vsel %vm912, 0.0, %v3389
  %v3459 = vsel %vm912, 0.0, %v3392
  %v3460 = vsel %vm912, %v3348, 0.0
  %v3461 = vsel %vm912, %v3351, 0.0
  %v3462 = vsel %vm912, %v3354, 0.0
  %v3463 = vsel %vm912, %v3357, 0.0
  %v3464 = vsel %vm912, %v3360, 0.0
  %v3465 = vsel %vm912, %v3363, 0.0
  %v3466 = vsel %vm912, %v3366, 0.0
  %v3467 = vsel %vm912, %v3369, 0.0
  %v3468 = vsel %vm912, %v3372, 0.0
  %v3469 = vsel %vm912, %v3375, 0.0
  %v3470 = vsel %vm912, %v3378, 0.0
  %v3471 = vsel %vm912, %v3381, 0.0
  %v3472 = vsel %vm912, %v3384, 0.0
  %v3473 = vsel %vm912, %v3387, 0.0
  %v3474 = vsel %vm912, %v3390, 0.0
  %v3475 = vsel %vm912, %v3393, 0.0
  %v3508 = vrot.slane %v3346, 1
  %v3509 = vsel %vm1523, %v1740, %v3508
  %v3510 = vsel %vm1523, %v3508, %v1741
  %v3511 = vrot.slane %v3444, 1
  %v3512 = vrot.slane %v3349, 1
  %v3513 = vsel %vm1523, %v3511, %v3512
  %v3514 = vrot.slane %v3460, 1
  %v3515 = vsel %vm1523, %v3512, %v3514
  %v3516 = vrot.slane %v3445, 1
  %v3517 = vrot.slane %v3352, 1
  %v3518 = vsel %vm1523, %v3516, %v3517
  %v3519 = vrot.slane %v3461, 1
  %v3520 = vsel %vm1523, %v3517, %v3519
  %v3521 = vrot.slane %v3446, 1
  %v3522 = vrot.slane %v3355, 1
  %v3523 = vsel %vm1523, %v3521, %v3522
  %v3524 = vrot.slane %v3462, 1
  %v3525 = vsel %vm1523, %v3522, %v3524
  %v3526 = vrot.slane %v3447, 1
  %v3527 = vrot.slane %v3358, 1
  %v3528 = vsel %vm1523, %v3526, %v3527
  %v3529 = vrot.slane %v3463, 1
  %v3530 = vsel %vm1523, %v3527, %v3529
  %v3531 = vrot.slane %v3448, 1
  %v3532 = vrot.slane %v3361, 1
  %v3533 = vsel %vm1523, %v3531, %v3532
  %v3534 = vrot.slane %v3464, 1
  %v3535 = vsel %vm1523, %v3532, %v3534
  %v3536 = vrot.slane %v3449, 1
  %v3537 = vrot.slane %v3364, 1
  %v3538 = vsel %vm1523, %v3536, %v3537
  %v3539 = vrot.slane %v3465, 1
  %v3540 = vsel %vm1523, %v3537, %v3539
  %v3541 = vrot.slane %v3450, 1
  %v3542 = vrot.slane %v3367, 1
  %v3543 = vsel %vm1523, %v3541, %v3542
  %v3544 = vrot.slane %v3466, 1
  %v3545 = vsel %vm1523, %v3542, %v3544
  %v3546 = vrot.slane %v3451, 1
  %v3547 = vrot.slane %v3370, 1
  %v3548 = vsel %vm1523, %v3546, %v3547
  %v3549 = vrot.slane %v3467, 1
  %v3550 = vsel %vm1523, %v3547, %v3549
  %v3551 = vrot.slane %v3452, 1
  %v3552 = vrot.slane %v3373, 1
  %v3553 = vsel %vm1523, %v3551, %v3552
  %v3554 = vrot.slane %v3468, 1
  %v3555 = vsel %vm1523, %v3552, %v3554
  %v3556 = vrot.slane %v3453, 1
  %v3557 = vrot.slane %v3376, 1
  %v3558 = vsel %vm1523, %v3556, %v3557
  %v3559 = vrot.slane %v3469, 1
  %v3560 = vsel %vm1523, %v3557, %v3559
  %v3561 = vrot.slane %v3454, 1
  %v3562 = vrot.slane %v3379, 1
  %v3563 = vsel %vm1523, %v3561, %v3562
  %v3564 = vrot.slane %v3470, 1
  %v3565 = vsel %vm1523, %v3562, %v3564
  %v3566 = vrot.slane %v3455, 1
  %v3567 = vrot.slane %v3382, 1
  %v3568 = vsel %vm1523, %v3566, %v3567
  %v3569 = vrot.slane %v3471, 1
  %v3570 = vsel %vm1523, %v3567, %v3569
  %v3571 = vrot.slane %v3456, 1
  %v3572 = vrot.slane %v3385, 1
  %v3573 = vsel %vm1523, %v3571, %v3572
  %v3574 = vrot.slane %v3472, 1
  %v3575 = vsel %vm1523, %v3572, %v3574
  %v3576 = vrot.slane %v3457, 1
  %v3577 = vrot.slane %v3388, 1
  %v3578 = vsel %vm1523, %v3576, %v3577
  %v3579 = vrot.slane %v3473, 1
  %v3580 = vsel %vm1523, %v3577, %v3579
  %v3581 = vrot.slane %v3458, 1
  %v3582 = vrot.slane %v3391, 1
  %v3583 = vsel %vm1523, %v3581, %v3582
  %v3584 = vrot.slane %v3474, 1
  %v3585 = vsel %vm1523, %v3582, %v3584
  %v3586 = vrot.slane %v3459, 1
  %v3587 = vrot.slane %v3394, 1
  %v3588 = vsel %vm1523, %v3586, %v3587
  %v3589 = vrot.slane %v3475, 1
  %v3590 = vsel %vm1523, %v3587, %v3589
  %v3625 = vrot.slane %v3346, 2
  %v3626 = vsel %vm171, %v1776, %v3625
  %v3627 = vsel %vm171, %v3625, %v1777
  %v3628 = vrot.slane %v3444, 2
  %v3629 = vrot.slane %v3349, 2
  %v3630 = vsel %vm171, %v3628, %v3629
  %v3631 = vrot.slane %v3460, 2
  %v3632 = vsel %vm171, %v3629, %v3631
  %v3633 = vrot.slane %v3445, 2
  %v3634 = vrot.slane %v3352, 2
  %v3635 = vsel %vm171, %v3633, %v3634
  %v3636 = vrot.slane %v3461, 2
  %v3637 = vsel %vm171, %v3634, %v3636
  %v3638 = vrot.slane %v3446, 2
  %v3639 = vrot.slane %v3355, 2
  %v3640 = vsel %vm171, %v3638, %v3639
  %v3641 = vrot.slane %v3462, 2
  %v3642 = vsel %vm171, %v3639, %v3641
  %v3643 = vrot.slane %v3447, 2
  %v3644 = vrot.slane %v3358, 2
  %v3645 = vsel %vm171, %v3643, %v3644
  %v3646 = vrot.slane %v3463, 2
  %v3647 = vsel %vm171, %v3644, %v3646
  %v3648 = vrot.slane %v3448, 2
  %v3649 = vrot.slane %v3361, 2
  %v3650 = vsel %vm171, %v3648, %v3649
  %v3651 = vrot.slane %v3464, 2
  %v3652 = vsel %vm171, %v3649, %v3651
  %v3653 = vrot.slane %v3449, 2
  %v3654 = vrot.slane %v3364, 2
  %v3655 = vsel %vm171, %v3653, %v3654
  %v3656 = vrot.slane %v3465, 2
  %v3657 = vsel %vm171, %v3654, %v3656
  %v3658 = vrot.slane %v3450, 2
  %v3659 = vrot.slane %v3367, 2
  %v3660 = vsel %vm171, %v3658, %v3659
  %v3661 = vrot.slane %v3466, 2
  %v3662 = vsel %vm171, %v3659, %v3661
  %v3663 = vrot.slane %v3451, 2
  %v3664 = vrot.slane %v3370, 2
  %v3665 = vsel %vm171, %v3663, %v3664
  %v3666 = vrot.slane %v3467, 2
  %v3667 = vsel %vm171, %v3664, %v3666
  %v3668 = vrot.slane %v3452, 2
  %v3669 = vrot.slane %v3373, 2
  %v3670 = vsel %vm171, %v3668, %v3669
  %v3671 = vrot.slane %v3468, 2
  %v3672 = vsel %vm171, %v3669, %v3671
  %v3673 = vrot.slane %v3453, 2
  %v3674 = vrot.slane %v3376, 2
  %v3675 = vsel %vm171, %v3673, %v3674
  %v3676 = vrot.slane %v3469, 2
  %v3677 = vsel %vm171, %v3674, %v3676
  %v3678 = vrot.slane %v3454, 2
  %v3679 = vrot.slane %v3379, 2
  %v3680 = vsel %vm171, %v3678, %v3679
  %v3681 = vrot.slane %v3470, 2
  %v3682 = vsel %vm171, %v3679, %v3681
  %v3683 = vrot.slane %v3455, 2
  %v3684 = vrot.slane %v3382, 2
  %v3685 = vsel %vm171, %v3683, %v3684
  %v3686 = vrot.slane %v3471, 2
  %v3687 = vsel %vm171, %v3684, %v3686
  %v3688 = vrot.slane %v3456, 2
  %v3689 = vrot.slane %v3385, 2
  %v3690 = vsel %vm171, %v3688, %v3689
  %v3691 = vrot.slane %v3472, 2
  %v3692 = vsel %vm171, %v3689, %v3691
  %v3693 = vrot.slane %v3457, 2
  %v3694 = vrot.slane %v3388, 2
  %v3695 = vsel %vm171, %v3693, %v3694
  %v3696 = vrot.slane %v3473, 2
  %v3697 = vsel %vm171, %v3694, %v3696
  %v3698 = vrot.slane %v3458, 2
  %v3699 = vrot.slane %v3391, 2
  %v3700 = vsel %vm171, %v3698, %v3699
  %v3701 = vrot.slane %v3474, 2
  %v3702 = vsel %vm171, %v3699, %v3701
  %v3703 = vrot.slane %v3459, 2
  %v3704 = vrot.slane %v3394, 2
  %v3705 = vsel %vm171, %v3703, %v3704
  %v3706 = vrot.slane %v3475, 2
  %v3707 = vsel %vm171, %v3704, %v3706
  %v3743 = vlaneseq
  %v3744 = vshrl.u32 %v3743, 7
  %v3745 = vsub.s32 0, %v3744
  %v3746 = vrot.slane %v3313, %v3745
  %3748 = vmatprep.subr.mxu0 0.0
  %3749 = vmatpush1.msra.mxu0 %v3169
  %3750 = vmatprep.subr.mxu0 0.0
  %3751 = vmatpush1.msra.mxu0 %v3170
  %3752 = vmatprep.subr.mxu0 0.0
  %3753 = vmatpush1.msra.mxu0 %v3171
  %3754 = vmatprep.subr.mxu0 0.0
  %3755 = vmatpush1.msra.mxu0 %v3172
  %3756 = vmatprep.subr.mxu0 0.0
  %3757 = vmatpush1.msra.mxu0 %v3173
  %3758 = vmatprep.subr.mxu0 0.0
  %3759 = vmatpush1.msra.mxu0 %v3174
  %3760 = vmatprep.subr.mxu0 0.0
  %3761 = vmatpush1.msra.mxu0 %v3175
  %3762 = vmatprep.subr.mxu0 0.0
  %3763 = vmatpush1.msra.mxu0 %v3176
  %3764 = vmatprep.subr.mxu0 0.0
  %3765 = vmatpush1.msra.mxu0 %v3177
  %3766 = vmatprep.subr.mxu0 0.0
  %3767 = vmatpush1.msra.mxu0 %v3178
  %3768 = vmatprep.subr.mxu0 0.0
  %3769 = vmatpush1.msra.mxu0 %v3179
  %3770 = vmatprep.subr.mxu0 0.0
  %3771 = vmatpush1.msra.mxu0 %v3180
  %3772 = vmatprep.subr.mxu0 0.0
  %3773 = vmatpush1.msra.mxu0 %v3181
  %3774 = vmatprep.subr.mxu0 0.0
  %3775 = vmatpush1.msra.mxu0 %v3182
  %3776 = vmatprep.subr.mxu0 0.0
  %3777 = vmatpush1.msra.mxu0 %v3183
  %3778 = vmatprep.subr.mxu0 0.0
  %3779 = vmatpush1.msra.mxu0 %v3184
  %3780 = vmatprep.subr.mxu0 0.0
  %3781 = vmatpush1.msra.mxu0 %v3185
  %3782 = vmatprep.subr.mxu0 0.0
  %3783 = vmatpush1.msra.mxu0 %v3186
  %3784 = vmatprep.subr.mxu0 0.0
  %3785 = vmatpush1.msra.mxu0 %v3187
  %3786 = vmatprep.subr.mxu0 0.0
  %3787 = vmatpush1.msra.mxu0 %v3188
  %3788 = vmatprep.subr.mxu0 0.0
  %3789 = vmatpush1.msra.mxu0 %v3189
  %3790 = vmatprep.subr.mxu0 0.0
  %3791 = vmatpush1.msra.mxu0 %v3190
  %3792 = vmatprep.subr.mxu0 0.0
  %3793 = vmatpush1.msra.mxu0 %v3191
  %3794 = vmatprep.subr.mxu0 0.0
  %3795 = vmatpush1.msra.mxu0 %v3192
  %3796 = vmatprep.subr.mxu0 0.0
  %3797 = vmatpush1.msra.mxu0 %v3193
  %3798 = vmatprep.subr.mxu0 0.0
  %3799 = vmatpush1.msra.mxu0 %v3194
  %3800 = vmatprep.subr.mxu0 0.0
  %3801 = vmatpush1.msra.mxu0 %v3195
  %3802 = vmatprep.subr.mxu0 0.0
  %3803 = vmatpush1.msra.mxu0 %v3196
  %3804 = vmatprep.subr.mxu0 0.0
  %3805 = vmatpush1.msra.mxu0 %v3197
  %3806 = vmatprep.subr.mxu0 0.0
  %3807 = vmatpush1.msra.mxu0 %v3198
  %3808 = vmatprep.subr.mxu0 0.0
  %3809 = vmatpush1.msra.mxu0 %v3199
  %3810 = vmatprep.subr.mxu0 0.0
  %3811 = vmatpush1.msra.mxu0 %v3200
  %3812 = vmatprep.mubr.f32.mxu0 %v3509
  %3813 = vmatmul.mubr.f32.gmra.mrb[0].mxu0 %v1704
  %v3814 = vpop.f32.mrb[0].mxu0
  %v3815 = vadd.f32 %v3746, %v3814
  %v3816 = vpop.f32.mrb[0].mxu0
  %3817 = vmatprep.mubr.f32.mxu0 %v3510
  %3818 = vmatmul.mubr.f32.gmra.mrb[0].mxu0 %v3346
  %v3819 = vpop.f32.mrb[0].mxu0
  %v3820 = vadd.f32 %v3746, %v3819
  %v3821 = vpop.f32.mrb[0].mxu0
  %3822 = vmatprep.mubr.f32.mxu0 %v3513
  %3823 = vmatmul.mubr.f32.gmra.mrb[0].mxu0 %v3444
  %v3824 = vpop.f32.mrb[0].mxu0
  %v3825 = vadd.f32 %v3746, %v3824
  %v3826 = vpop.f32.mrb[0].mxu0
  %3827 = vmatprep.mubr.f32.mxu0 %v3515
  %3828 = vmatmul.mubr.f32.gmra.mrb[0].mxu0 %v3349
  %v3829 = vpop.f32.mrb[0].mxu0
  %v3830 = vadd.f32 %v3746, %v3829
  %v3831 = vpop.f32.mrb[0].mxu0
  %3832 = vmatprep.mubr.f32.mxu0 %v3513
  %3833 = vmatmul.mubr.f32.gmra.mrb[0].mxu0 %v3444
  %v3834 = vpop.f32.mrb[0].mxu0
  %v3835 = vadd.f32 %v3746, %v3834
  %v3836 = vpop.f32.mrb[0].mxu0
  %3837 = vmatprep.mubr.f32.mxu0 %v3515
  %3838 = vmatmul.mubr.f32.gmra.mrb[0].mxu0 %v3349
  %v3839 = vpop.f32.mrb[0].mxu0
  %v3840 = vadd.f32 %v3746, %v3839
  %v3841 = vpop.f32.mrb[0].mxu0
  %3842 = vmatprep.mubr.f32.mxu0 %v3518
  %3843 = vmatmul.mubr.f32.gmra.mrb[0].mxu0 %v3445
  %v3844 = vpop.f32.mrb[0].mxu0
  %v3845 = vadd.f32 %v3746, %v3844
  %v3846 = vpop.f32.mrb[0].mxu0
  %3847 = vmatprep.mubr.f32.mxu0 %v3520
  %3848 = vmatmul.mubr.f32.gmra.mrb[0].mxu0 %v3352
  %v3849 = vpop.f32.mrb[0].mxu0
  %v3850 = vadd.f32 %v3746, %v3849
  %v3851 = vpop.f32.mrb[0].mxu0
  %3852 = vmatprep.mubr.f32.mxu0 %v3518
  %3853 = vmatmul.mubr.f32.gmra.mrb[0].mxu0 %v3445
  %v3854 = vpop.f32.mrb[0].mxu0
  %v3855 = vadd.f32 %v3746, %v3854
  %v3856 = vpop.f32.mrb[0].mxu0
  %3857 = vmatprep.mubr.f32.mxu0 %v3520
  %3858 = vmatmul.mubr.f32.gmra.mrb[0].mxu0 %v3352
  %v3859 = vpop.f32.mrb[0].mxu0
  %v3860 = vadd.f32 %v3746, %v3859
  %v3861 = vpop.f32.mrb[0].mxu0
  %3862 = vmatprep.mubr.f32.mxu0 %v3523
  %3863 = vmatmul.mubr.f32.gmra.mrb[0].mxu0 %v3446
  %v3864 = vpop.f32.mrb[0].mxu0
  %v3865 = vadd.f32 %v3746, %v3864
  %v3866 = vpop.f32.mrb[0].mxu0
  %3867 = vmatprep.mubr.f32.mxu0 %v3525
  %3868 = vmatmul.mubr.f32.gmra.mrb[0].mxu0 %v3355
  %v3869 = vpop.f32.mrb[0].mxu0
  %v3870 = vadd.f32 %v3746, %v3869
  %v3871 = vpop.f32.mrb[0].mxu0
  %3872 = vmatprep.mubr.f32.mxu0 %v3523
  %3873 = vmatmul.mubr.f32.gmra.mrb[0].mxu0 %v3446
  %v3874 = vpop.f32.mrb[0].mxu0
  %v3875 = vadd.f32 %v3746, %v3874
  %v3876 = vpop.f32.mrb[0].mxu0
  %3877 = vmatprep.mubr.f32.mxu0 %v3525
  %3878 = vmatmul.mubr.f32.gmra.mrb[0].mxu0 %v3355
  %v3879 = vpop.f32.mrb[0].mxu0
  %v3880 = vadd.f32 %v3746, %v3879
  %v3881 = vpop.f32.mrb[0].mxu0
  %3882 = vmatprep.mubr.f32.mxu0 %v3528
  %3883 = vmatmul.mubr.f32.gmra.mrb[0].mxu0 %v3447
  %v3884 = vpop.f32.mrb[0].mxu0
  %v3885 = vadd.f32 %v3746, %v3884
  %v3886 = vpop.f32.mrb[0].mxu0
  %3887 = vmatprep.mubr.f32.mxu0 %v3530
  %3888 = vmatmul.mubr.f32.gmra.mrb[0].mxu0 %v3358
  %v3889 = vpop.f32.mrb[0].mxu0
  %v3890 = vadd.f32 %v3746, %v3889
  %v3891 = vpop.f32.mrb[0].mxu0
  %3892 = vmatprep.mubr.f32.mxu0 %v3528
  %3893 = vmatmul.mubr.f32.gmra.mrb[0].mxu0 %v3447
  %v3894 = vpop.f32.mrb[0].mxu0
  %v3895 = vadd.f32 %v3746, %v3894
  %v3896 = vpop.f32.mrb[0].mxu0
  %3897 = vmatprep.mubr.f32.mxu0 %v3530
  %3898 = vmatmul.mubr.f32.gmra.mrb[0].mxu0 %v3358
  %v3899 = vpop.f32.mrb[0].mxu0
  %v3900 = vadd.f32 %v3746, %v3899
  %v3901 = vpop.f32.mrb[0].mxu0
  %3902 = vmatprep.mubr.f32.mxu0 %v3533
  %3903 = vmatmul.mubr.f32.gmra.mrb[0].mxu0 %v3448
  %v3904 = vpop.f32.mrb[0].mxu0
  %v3905 = vadd.f32 %v3746, %v3904
  %v3906 = vpop.f32.mrb[0].mxu0
  %3907 = vmatprep.mubr.f32.mxu0 %v3535
  %3908 = vmatmul.mubr.f32.gmra.mrb[0].mxu0 %v3361
  %v3909 = vpop.f32.mrb[0].mxu0
  %v3910 = vadd.f32 %v3746, %v3909
  %v3911 = vpop.f32.mrb[0].mxu0
  %3912 = vmatprep.mubr.f32.mxu0 %v3533
  %3913 = vmatmul.mubr.f32.gmra.mrb[0].mxu0 %v3448
  %v3914 = vpop.f32.mrb[0].mxu0
  %v3915 = vadd.f32 %v3746, %v3914
  %v3916 = vpop.f32.mrb[0].mxu0
  %3917 = vmatprep.mubr.f32.mxu0 %v3535
  %3918 = vmatmul.mubr.f32.gmra.mrb[0].mxu0 %v3361
  %v3919 = vpop.f32.mrb[0].mxu0
  %v3920 = vadd.f32 %v3746, %v3919
  %v3921 = vpop.f32.mrb[0].mxu0
  %3922 = vmatprep.mubr.f32.mxu0 %v3538
  %3923 = vmatmul.mubr.f32.gmra.mrb[0].mxu0 %v3449
  %v3924 = vpop.f32.mrb[0].mxu0
  %v3925 = vadd.f32 %v3746, %v3924
  %v3926 = vpop.f32.mrb[0].mxu0
  %3927 = vmatprep.mubr.f32.mxu0 %v3540
  %3928 = vmatmul.mubr.f32.gmra.mrb[0].mxu0 %v3364
  %v3929 = vpop.f32.mrb[0].mxu0
  %v3930 = vadd.f32 %v3746, %v3929
  %v3931 = vpop.f32.mrb[0].mxu0
  %3932 = vmatprep.mubr.f32.mxu0 %v3538
  %3933 = vmatmul.mubr.f32.gmra.mrb[0].mxu0 %v3449
  %v3934 = vpop.f32.mrb[0].mxu0
  %v3935 = vadd.f32 %v3746, %v3934
  %v3936 = vpop.f32.mrb[0].mxu0
  %3937 = vmatprep.mubr.f32.mxu0 %v3540
  %3938 = vmatmul.mubr.f32.gmra.mrb[0].mxu0 %v3364
  %v3939 = vpop.f32.mrb[0].mxu0
  %v3940 = vadd.f32 %v3746, %v3939
  %v3941 = vpop.f32.mrb[0].mxu0
  %3942 = vmatprep.mubr.f32.mxu0 %v3543
  %3943 = vmatmul.mubr.f32.gmra.mrb[0].mxu0 %v3450
  %v3944 = vpop.f32.mrb[0].mxu0
  %v3945 = vadd.f32 %v3746, %v3944
  %v3946 = vpop.f32.mrb[0].mxu0
  %3947 = vmatprep.mubr.f32.mxu0 %v3545
  %3948 = vmatmul.mubr.f32.gmra.mrb[0].mxu0 %v3367
  %v3949 = vpop.f32.mrb[0].mxu0
  %v3950 = vadd.f32 %v3746, %v3949
  %v3951 = vpop.f32.mrb[0].mxu0
  %3952 = vmatprep.mubr.f32.mxu0 %v3543
  %3953 = vmatmul.mubr.f32.gmra.mrb[0].mxu0 %v3450
  %v3954 = vpop.f32.mrb[0].mxu0
  %v3955 = vadd.f32 %v3746, %v3954
  %v3956 = vpop.f32.mrb[0].mxu0
  %3957 = vmatprep.mubr.f32.mxu0 %v3545
  %3958 = vmatmul.mubr.f32.gmra.mrb[0].mxu0 %v3367
  %v3959 = vpop.f32.mrb[0].mxu0
  %v3960 = vadd.f32 %v3746, %v3959
  %v3961 = vpop.f32.mrb[0].mxu0
  %3962 = vmatprep.mubr.f32.mxu0 %v3548
  %3963 = vmatmul.mubr.f32.gmra.mrb[0].mxu0 %v3451
  %v3964 = vpop.f32.mrb[0].mxu0
  %v3965 = vadd.f32 %v3746, %v3964
  %v3966 = vpop.f32.mrb[0].mxu0
  %3967 = vmatprep.mubr.f32.mxu0 %v3550
  %3968 = vmatmul.mubr.f32.gmra.mrb[0].mxu0 %v3370
  %v3969 = vpop.f32.mrb[0].mxu0
  %v3970 = vadd.f32 %v3746, %v3969
  %v3971 = vpop.f32.mrb[0].mxu0
  %3972 = vmatprep.mubr.f32.mxu0 %v3509
  %3973 = vmatmul.mubr.f32.gmra.mrb[0].mxu0 %v1704
  %v3974 = vpop.f32.mrb[0].mxu0
  %v3975 = vadd.f32 %v3746, %v3974
  %v3976 = vpop.f32.mrb[0].mxu0
  %3977 = vmatprep.mubr.f32.mxu0 %v3510
  %3978 = vmatmul.mubr.f32.gmra.mrb[0].mxu0 %v3346
  %v3979 = vpop.f32.mrb[0].mxu0
  %v3980 = vadd.f32 %v3746, %v3979
  %v3981 = vpop.f32.mrb[0].mxu0
  %3982 = vmatprep.mubr.f32.mxu0 %v3553
  %3983 = vmatmul.mubr.f32.gmra.mrb[0].mxu0 %v3452
  %v3984 = vpop.f32.mrb[0].mxu0
  %v3985 = vadd.f32 %v3746, %v3984
  %v3986 = vpop.f32.mrb[0].mxu0
  %3987 = vmatprep.mubr.f32.mxu0 %v3555
  %3988 = vmatmul.mubr.f32.gmra.mrb[0].mxu0 %v3373
  %v3989 = vpop.f32.mrb[0].mxu0
  %v3990 = vadd.f32 %v3746, %v3989
  %v3991 = vpop.f32.mrb[0].mxu0
  %3992 = vmatprep.mubr.f32.mxu0 %v3553
  %3993 = vmatmul.mubr.f32.gmra.mrb[0].mxu0 %v3452
  %v3994 = vpop.f32.mrb[0].mxu0
  %v3995 = vadd.f32 %v3746, %v3994
  %v3996 = vpop.f32.mrb[0].mxu0
  %3997 = vmatprep.mubr.f32.mxu0 %v3555
  %3998 = vmatmul.mubr.f32.gmra.mrb[0].mxu0 %v3373
  %v3999 = vpop.f32.mrb[0].mxu0
  %v4000 = vadd.f32 %v3746, %v3999
  %v4001 = vpop.f32.mrb[0].mxu0
  %4002 = vmatprep.mubr.f32.mxu0 %v3558
  %4003 = vmatmul.mubr.f32.gmra.mrb[0].mxu0 %v3453
  %v4004 = vpop.f32.mrb[0].mxu0
  %v4005 = vadd.f32 %v3746, %v4004
  %v4006 = vpop.f32.mrb[0].mxu0
  %4007 = vmatprep.mubr.f32.mxu0 %v3560
  %4008 = vmatmul.mubr.f32.gmra.mrb[0].mxu0 %v3376
  %v4009 = vpop.f32.mrb[0].mxu0
  %v4010 = vadd.f32 %v3746, %v4009
  %v4011 = vpop.f32.mrb[0].mxu0
  %4012 = vmatprep.mubr.f32.mxu0 %v3558
  %4013 = vmatmul.mubr.f32.gmra.mrb[0].mxu0 %v3453
  %v4014 = vpop.f32.mrb[0].mxu0
  %v4015 = vadd.f32 %v3746, %v4014
  %v4016 = vpop.f32.mrb[0].mxu0
  %4017 = vmatprep.mubr.f32.mxu0 %v3560
  %4018 = vmatmul.mubr.f32.gmra.mrb[0].mxu0 %v3376
  %v4019 = vpop.f32.mrb[0].mxu0
  %v4020 = vadd.f32 %v3746, %v4019
  %v4021 = vpop.f32.mrb[0].mxu0
  %4022 = vmatprep.mubr.f32.mxu0 %v3563
  %4023 = vmatmul.mubr.f32.gmra.mrb[0].mxu0 %v3454
  %v4024 = vpop.f32.mrb[0].mxu0
  %v4025 = vadd.f32 %v3746, %v4024
  %v4026 = vpop.f32.mrb[0].mxu0
  %4027 = vmatprep.mubr.f32.mxu0 %v3565
  %4028 = vmatmul.mubr.f32.gmra.mrb[0].mxu0 %v3379
  %v4029 = vpop.f32.mrb[0].mxu0
  %v4030 = vadd.f32 %v3746, %v4029
  %v4031 = vpop.f32.mrb[0].mxu0
  %4032 = vmatprep.mubr.f32.mxu0 %v3563
  %4033 = vmatmul.mubr.f32.gmra.mrb[0].mxu0 %v3454
  %v4034 = vpop.f32.mrb[0].mxu0
  %v4035 = vadd.f32 %v3746, %v4034
  %v4036 = vpop.f32.mrb[0].mxu0
  %4037 = vmatprep.mubr.f32.mxu0 %v3565
  %4038 = vmatmul.mubr.f32.gmra.mrb[0].mxu0 %v3379
  %v4039 = vpop.f32.mrb[0].mxu0
  %v4040 = vadd.f32 %v3746, %v4039
  %v4041 = vpop.f32.mrb[0].mxu0
  %4042 = vmatprep.mubr.f32.mxu0 %v3568
  %4043 = vmatmul.mubr.f32.gmra.mrb[0].mxu0 %v3455
  %v4044 = vpop.f32.mrb[0].mxu0
  %v4045 = vadd.f32 %v3746, %v4044
  %v4046 = vpop.f32.mrb[0].mxu0
  %4047 = vmatprep.mubr.f32.mxu0 %v3570
  %4048 = vmatmul.mubr.f32.gmra.mrb[0].mxu0 %v3382
  %v4049 = vpop.f32.mrb[0].mxu0
  %v4050 = vadd.f32 %v3746, %v4049
  %v4051 = vpop.f32.mrb[0].mxu0
  %4052 = vmatprep.mubr.f32.mxu0 %v3568
  %4053 = vmatmul.mubr.f32.gmra.mrb[0].mxu0 %v3455
  %v4054 = vpop.f32.mrb[0].mxu0
  %v4055 = vadd.f32 %v3746, %v4054
  %v4056 = vpop.f32.mrb[0].mxu0
  %4057 = vmatprep.mubr.f32.mxu0 %v3570
  %4058 = vmatmul.mubr.f32.gmra.mrb[0].mxu0 %v3382
  %v4059 = vpop.f32.mrb[0].mxu0
  %v4060 = vadd.f32 %v3746, %v4059
  %v4061 = vpop.f32.mrb[0].mxu0
  %4062 = vmatprep.mubr.f32.mxu0 %v3573
  %4063 = vmatmul.mubr.f32.gmra.mrb[0].mxu0 %v3456
  %v4064 = vpop.f32.mrb[0].mxu0
  %v4065 = vadd.f32 %v3746, %v4064
  %v4066 = vpop.f32.mrb[0].mxu0
  %4067 = vmatprep.mubr.f32.mxu0 %v3575
  %4068 = vmatmul.mubr.f32.gmra.mrb[0].mxu0 %v3385
  %v4069 = vpop.f32.mrb[0].mxu0
  %v4070 = vadd.f32 %v3746, %v4069
  %v4071 = vpop.f32.mrb[0].mxu0
  %4072 = vmatprep.mubr.f32.mxu0 %v3573
  %4073 = vmatmul.mubr.f32.gmra.mrb[0].mxu0 %v3456
  %v4074 = vpop.f32.mrb[0].mxu0
  %v4075 = vadd.f32 %v3746, %v4074
  %v4076 = vpop.f32.mrb[0].mxu0
  %4077 = vmatprep.mubr.f32.mxu0 %v3575
  %4078 = vmatmul.mubr.f32.gmra.mrb[0].mxu0 %v3385
  %v4079 = vpop.f32.mrb[0].mxu0
  %v4080 = vadd.f32 %v3746, %v4079
  %v4081 = vpop.f32.mrb[0].mxu0
  %4082 = vmatprep.mubr.f32.mxu0 %v3578
  %4083 = vmatmul.mubr.f32.gmra.mrb[0].mxu0 %v3457
  %v4084 = vpop.f32.mrb[0].mxu0
  %v4085 = vadd.f32 %v3746, %v4084
  %v4086 = vpop.f32.mrb[0].mxu0
  %4087 = vmatprep.mubr.f32.mxu0 %v3580
  %4088 = vmatmul.mubr.f32.gmra.mrb[0].mxu0 %v3388
  %v4089 = vpop.f32.mrb[0].mxu0
  %v4090 = vadd.f32 %v3746, %v4089
  %v4091 = vpop.f32.mrb[0].mxu0
  %4092 = vmatprep.mubr.f32.mxu0 %v3578
  %4093 = vmatmul.mubr.f32.gmra.mrb[0].mxu0 %v3457
  %v4094 = vpop.f32.mrb[0].mxu0
  %v4095 = vadd.f32 %v3746, %v4094
  %v4096 = vpop.f32.mrb[0].mxu0
  %4097 = vmatprep.mubr.f32.mxu0 %v3580
  %4098 = vmatmul.mubr.f32.gmra.mrb[0].mxu0 %v3388
  %v4099 = vpop.f32.mrb[0].mxu0
  %v4100 = vadd.f32 %v3746, %v4099
  %v4101 = vpop.f32.mrb[0].mxu0
  %4102 = vmatprep.mubr.f32.mxu0 %v3583
  %4103 = vmatmul.mubr.f32.gmra.mrb[0].mxu0 %v3458
  %v4104 = vpop.f32.mrb[0].mxu0
  %v4105 = vadd.f32 %v3746, %v4104
  %v4106 = vpop.f32.mrb[0].mxu0
  %4107 = vmatprep.mubr.f32.mxu0 %v3585
  %4108 = vmatmul.mubr.f32.gmra.mrb[0].mxu0 %v3391
  %v4109 = vpop.f32.mrb[0].mxu0
  %v4110 = vadd.f32 %v3746, %v4109
  %v4111 = vpop.f32.mrb[0].mxu0
  %4112 = vmatprep.mubr.f32.mxu0 %v3583
  %4113 = vmatmul.mubr.f32.gmra.mrb[0].mxu0 %v3458
  %v4114 = vpop.f32.mrb[0].mxu0
  %v4115 = vadd.f32 %v3746, %v4114
  %v4116 = vpop.f32.mrb[0].mxu0
  %4117 = vmatprep.mubr.f32.mxu0 %v3585
  %4118 = vmatmul.mubr.f32.gmra.mrb[0].mxu0 %v3391
  %v4119 = vpop.f32.mrb[0].mxu0
  %v4120 = vadd.f32 %v3746, %v4119
  %v4121 = vpop.f32.mrb[0].mxu0
  %4122 = vmatprep.mubr.f32.mxu0 %v3588
  %4123 = vmatmul.mubr.f32.gmra.mrb[0].mxu0 %v3459
  %v4124 = vpop.f32.mrb[0].mxu0
  %v4125 = vadd.f32 %v3746, %v4124
  %v4126 = vpop.f32.mrb[0].mxu0
  %4127 = vmatprep.mubr.f32.mxu0 %v3590
  %4128 = vmatmul.mubr.f32.gmra.mrb[0].mxu0 %v3394
  %v4129 = vpop.f32.mrb[0].mxu0
  %v4130 = vadd.f32 %v3746, %v4129
  %v4131 = vpop.f32.mrb[0].mxu0
  %4132 = vdwg.mxu0
  %4133 = vmatprep.subr.mxu0 0.0
  %4134 = vmatpush1.msra.mxu0 %v3201
  %4135 = vmatprep.subr.mxu0 0.0
  %4136 = vmatpush1.msra.mxu0 %v3202
  %4137 = vmatprep.subr.mxu0 0.0
  %4138 = vmatpush1.msra.mxu0 %v3203
  %4139 = vmatprep.subr.mxu0 0.0
  %4140 = vmatpush1.msra.mxu0 %v3204
  %4141 = vmatprep.subr.mxu0 0.0
  %4142 = vmatpush1.msra.mxu0 %v3205
  %4143 = vmatprep.subr.mxu0 0.0
  %4144 = vmatpush1.msra.mxu0 %v3206
  %4145 = vmatprep.subr.mxu0 0.0
  %4146 = vmatpush1.msra.mxu0 %v3207
  %4147 = vmatprep.subr.mxu0 0.0
  %4148 = vmatpush1.msra.mxu0 %v3208
  %4149 = vmatprep.subr.mxu0 0.0
  %4150 = vmatpush1.msra.mxu0 %v3209
  %4151 = vmatprep.subr.mxu0 0.0
  %4152 = vmatpush1.msra.mxu0 %v3210
  %4153 = vmatprep.subr.mxu0 0.0
  %4154 = vmatpush1.msra.mxu0 %v3211
  %4155 = vmatprep.subr.mxu0 0.0
  %4156 = vmatpush1.msra.mxu0 %v3212
  %4157 = vmatprep.subr.mxu0 0.0
  %4158 = vmatpush1.msra.mxu0 %v3213
  %4159 = vmatprep.subr.mxu0 0.0
  %4160 = vmatpush1.msra.mxu0 %v3214
  %4161 = vmatprep.subr.mxu0 0.0
  %4162 = vmatpush1.msra.mxu0 %v3215
  %4163 = vmatprep.subr.mxu0 0.0
  %4164 = vmatpush1.msra.mxu0 %v3216
  %4165 = vmatprep.subr.mxu0 0.0
  %4166 = vmatpush1.msra.mxu0 %v3217
  %4167 = vmatprep.subr.mxu0 0.0
  %4168 = vmatpush1.msra.mxu0 %v3218
  %4169 = vmatprep.subr.mxu0 0.0
  %4170 = vmatpush1.msra.mxu0 %v3219
  %4171 = vmatprep.subr.mxu0 0.0
  %4172 = vmatpush1.msra.mxu0 %v3220
  %4173 = vmatprep.subr.mxu0 0.0
  %4174 = vmatpush1.msra.mxu0 %v3221
  %4175 = vmatprep.subr.mxu0 0.0
  %4176 = vmatpush1.msra.mxu0 %v3222
  %4177 = vmatprep.subr.mxu0 0.0
  %4178 = vmatpush1.msra.mxu0 %v3223
  %4179 = vmatprep.subr.mxu0 0.0
  %4180 = vmatpush1.msra.mxu0 %v3224
  %4181 = vmatprep.subr.mxu0 0.0
  %4182 = vmatpush1.msra.mxu0 %v3225
  %4183 = vmatprep.subr.mxu0 0.0
  %4184 = vmatpush1.msra.mxu0 %v3226
  %4185 = vmatprep.subr.mxu0 0.0
  %4186 = vmatpush1.msra.mxu0 %v3227
  %4187 = vmatprep.subr.mxu0 0.0
  %4188 = vmatpush1.msra.mxu0 %v3228
  %4189 = vmatprep.subr.mxu0 0.0
  %4190 = vmatpush1.msra.mxu0 %v3229
  %4191 = vmatprep.subr.mxu0 0.0
  %4192 = vmatpush1.msra.mxu0 %v3230
  %4193 = vmatprep.subr.mxu0 0.0
  %4194 = vmatpush1.msra.mxu0 %v3231
  %4195 = vmatprep.subr.mxu0 0.0
  %4196 = vmatpush1.msra.mxu0 %v3232
  %4197 = vmatprep.mubr.f32.mxu0 %v3444
  %4198 = vmatmul.mubr.f32.gmra.mrb[0].mxu0 %v3626
  %v4199 = vpop.f32.mrb[0].mxu0
  %v4200 = vadd.f32 %v3815, %v4199
  %v4201 = vpop.f32.mrb[0].mxu0
  %4202 = vmatprep.mubr.f32.mxu0 %v3349
  %4203 = vmatmul.mubr.f32.gmra.mrb[0].mxu0 %v3627
  %v4204 = vpop.f32.mrb[0].mxu0
  %v4205 = vadd.f32 %v3820, %v4204
  %v4206 = vpop.f32.mrb[0].mxu0
  %4207 = vmatprep.mubr.f32.mxu0 %v3444
  %4208 = vmatmul.mubr.f32.gmra.mrb[0].mxu0 %v3630
  %v4209 = vpop.f32.mrb[0].mxu0
  %v4210 = vadd.f32 %v3825, %v4209
  %v4211 = vpop.f32.mrb[0].mxu0
  %4212 = vmatprep.mubr.f32.mxu0 %v3349
  %4213 = vmatmul.mubr.f32.gmra.mrb[0].mxu0 %v3632
  %v4214 = vpop.f32.mrb[0].mxu0
  %v4215 = vadd.f32 %v3830, %v4214
  %v4216 = vpop.f32.mrb[0].mxu0
  %4217 = vmatprep.mubr.f32.mxu0 %v3445
  %4218 = vmatmul.mubr.f32.gmra.mrb[0].mxu0 %v3630
  %v4219 = vpop.f32.mrb[0].mxu0
  %v4220 = vadd.f32 %v3835, %v4219
  %v4221 = vpop.f32.mrb[0].mxu0
  %4222 = vmatprep.mubr.f32.mxu0 %v3352
  %4223 = vmatmul.mubr.f32.gmra.mrb[0].mxu0 %v3632
  %v4224 = vpop.f32.mrb[0].mxu0
  %v4225 = vadd.f32 %v3840, %v4224
  %v4226 = vpop.f32.mrb[0].mxu0
  %4227 = vmatprep.mubr.f32.mxu0 %v3445
  %4228 = vmatmul.mubr.f32.gmra.mrb[0].mxu0 %v3635
  %v4229 = vpop.f32.mrb[0].mxu0
  %v4230 = vadd.f32 %v3845, %v4229
  %v4231 = vpop.f32.mrb[0].mxu0
  %4232 = vmatprep.mubr.f32.mxu0 %v3352
  %4233 = vmatmul.mubr.f32.gmra.mrb[0].mxu0 %v3637
  %v4234 = vpop.f32.mrb[0].mxu0
  %v4235 = vadd.f32 %v3850, %v4234
  %v4236 = vpop.f32.mrb[0].mxu0
  %4237 = vmatprep.mubr.f32.mxu0 %v3446
  %4238 = vmatmul.mubr.f32.gmra.mrb[0].mxu0 %v3635
  %v4239 = vpop.f32.mrb[0].mxu0
  %v4240 = vadd.f32 %v3855, %v4239
  %v4241 = vpop.f32.mrb[0].mxu0
  %4242 = vmatprep.mubr.f32.mxu0 %v3355
  %4243 = vmatmul.mubr.f32.gmra.mrb[0].mxu0 %v3637
  %v4244 = vpop.f32.mrb[0].mxu0
  %v4245 = vadd.f32 %v3860, %v4244
  %v4246 = vpop.f32.mrb[0].mxu0
  %4247 = vmatprep.mubr.f32.mxu0 %v3446
  %4248 = vmatmul.mubr.f32.gmra.mrb[0].mxu0 %v3640
  %v4249 = vpop.f32.mrb[0].mxu0
  %v4250 = vadd.f32 %v3865, %v4249
  %v4251 = vpop.f32.mrb[0].mxu0
  %4252 = vmatprep.mubr.f32.mxu0 %v3355
  %4253 = vmatmul.mubr.f32.gmra.mrb[0].mxu0 %v3642
  %v4254 = vpop.f32.mrb[0].mxu0
  %v4255 = vadd.f32 %v3870, %v4254
  %v4256 = vpop.f32.mrb[0].mxu0
  %4257 = vmatprep.mubr.f32.mxu0 %v3447
  %4258 = vmatmul.mubr.f32.gmra.mrb[0].mxu0 %v3640
  %v4259 = vpop.f32.mrb[0].mxu0
  %v4260 = vadd.f32 %v3875, %v4259
  %v4261 = vpop.f32.mrb[0].mxu0
  %4262 = vmatprep.mubr.f32.mxu0 %v3358
  %4263 = vmatmul.mubr.f32.gmra.mrb[0].mxu0 %v3642
  %v4264 = vpop.f32.mrb[0].mxu0
  %v4265 = vadd.f32 %v3880, %v4264
  %v4266 = vpop.f32.mrb[0].mxu0
  %4267 = vmatprep.mubr.f32.mxu0 %v3447
  %4268 = vmatmul.mubr.f32.gmra.mrb[0].mxu0 %v3645
  %v4269 = vpop.f32.mrb[0].mxu0
  %v4270 = vadd.f32 %v3885, %v4269
  %v4271 = vpop.f32.mrb[0].mxu0
  %4272 = vmatprep.mubr.f32.mxu0 %v3358
  %4273 = vmatmul.mubr.f32.gmra.mrb[0].mxu0 %v3647
  %v4274 = vpop.f32.mrb[0].mxu0
  %v4275 = vadd.f32 %v3890, %v4274
  %v4276 = vpop.f32.mrb[0].mxu0
  %4277 = vmatprep.mubr.f32.mxu0 %v3448
  %4278 = vmatmul.mubr.f32.gmra.mrb[0].mxu0 %v3645
  %v4279 = vpop.f32.mrb[0].mxu0
  %v4280 = vadd.f32 %v3895, %v4279
  %v4281 = vpop.f32.mrb[0].mxu0
  %4282 = vmatprep.mubr.f32.mxu0 %v3361
  %4283 = vmatmul.mubr.f32.gmra.mrb[0].mxu0 %v3647
  %v4284 = vpop.f32.mrb[0].mxu0
  %v4285 = vadd.f32 %v3900, %v4284
  %v4286 = vpop.f32.mrb[0].mxu0
  %4287 = vmatprep.mubr.f32.mxu0 %v3448
  %4288 = vmatmul.mubr.f32.gmra.mrb[0].mxu0 %v3650
  %v4289 = vpop.f32.mrb[0].mxu0
  %v4290 = vadd.f32 %v3905, %v4289
  %v4291 = vpop.f32.mrb[0].mxu0
  %4292 = vmatprep.mubr.f32.mxu0 %v3361
  %4293 = vmatmul.mubr.f32.gmra.mrb[0].mxu0 %v3652
  %v4294 = vpop.f32.mrb[0].mxu0
  %v4295 = vadd.f32 %v3910, %v4294
  %v4296 = vpop.f32.mrb[0].mxu0
  %4297 = vmatprep.mubr.f32.mxu0 %v3449
  %4298 = vmatmul.mubr.f32.gmra.mrb[0].mxu0 %v3650
  %v4299 = vpop.f32.mrb[0].mxu0
  %v4300 = vadd.f32 %v3915, %v4299
  %v4301 = vpop.f32.mrb[0].mxu0
  %4302 = vmatprep.mubr.f32.mxu0 %v3364
  %4303 = vmatmul.mubr.f32.gmra.mrb[0].mxu0 %v3652
  %v4304 = vpop.f32.mrb[0].mxu0
  %v4305 = vadd.f32 %v3920, %v4304
  %v4306 = vpop.f32.mrb[0].mxu0
  %4307 = vmatprep.mubr.f32.mxu0 %v3449
  %4308 = vmatmul.mubr.f32.gmra.mrb[0].mxu0 %v3655
  %v4309 = vpop.f32.mrb[0].mxu0
  %v4310 = vadd.f32 %v3925, %v4309
  %v4311 = vpop.f32.mrb[0].mxu0
  %4312 = vmatprep.mubr.f32.mxu0 %v3364
  %4313 = vmatmul.mubr.f32.gmra.mrb[0].mxu0 %v3657
  %v4314 = vpop.f32.mrb[0].mxu0
  %v4315 = vadd.f32 %v3930, %v4314
  %v4316 = vpop.f32.mrb[0].mxu0
  %4317 = vmatprep.mubr.f32.mxu0 %v3450
  %4318 = vmatmul.mubr.f32.gmra.mrb[0].mxu0 %v3655
  %v4319 = vpop.f32.mrb[0].mxu0
  %v4320 = vadd.f32 %v3935, %v4319
  %v4321 = vpop.f32.mrb[0].mxu0
  %4322 = vmatprep.mubr.f32.mxu0 %v3367
  %4323 = vmatmul.mubr.f32.gmra.mrb[0].mxu0 %v3657
  %v4324 = vpop.f32.mrb[0].mxu0
  %v4325 = vadd.f32 %v3940, %v4324
  %v4326 = vpop.f32.mrb[0].mxu0
  %4327 = vmatprep.mubr.f32.mxu0 %v3450
  %4328 = vmatmul.mubr.f32.gmra.mrb[0].mxu0 %v3660
  %v4329 = vpop.f32.mrb[0].mxu0
  %v4330 = vadd.f32 %v3945, %v4329
  %v4331 = vpop.f32.mrb[0].mxu0
  %4332 = vmatprep.mubr.f32.mxu0 %v3367
  %4333 = vmatmul.mubr.f32.gmra.mrb[0].mxu0 %v3662
  %v4334 = vpop.f32.mrb[0].mxu0
  %v4335 = vadd.f32 %v3950, %v4334
  %v4336 = vpop.f32.mrb[0].mxu0
  %4337 = vmatprep.mubr.f32.mxu0 %v3451
  %4338 = vmatmul.mubr.f32.gmra.mrb[0].mxu0 %v3660
  %v4339 = vpop.f32.mrb[0].mxu0
  %v4340 = vadd.f32 %v3955, %v4339
  %v4341 = vpop.f32.mrb[0].mxu0
  %4342 = vmatprep.mubr.f32.mxu0 %v3370
  %4343 = vmatmul.mubr.f32.gmra.mrb[0].mxu0 %v3662
  %v4344 = vpop.f32.mrb[0].mxu0
  %v4345 = vadd.f32 %v3960, %v4344
  %v4346 = vpop.f32.mrb[0].mxu0
  %4347 = vmatprep.mubr.f32.mxu0 %v3451
  %4348 = vmatmul.mubr.f32.gmra.mrb[0].mxu0 %v3665
  %v4349 = vpop.f32.mrb[0].mxu0
  %v4350 = vadd.f32 %v3965, %v4349
  %v4351 = vpop.f32.mrb[0].mxu0
  %4352 = vmatprep.mubr.f32.mxu0 %v3370
  %4353 = vmatmul.mubr.f32.gmra.mrb[0].mxu0 %v3667
  %v4354 = vpop.f32.mrb[0].mxu0
  %v4355 = vadd.f32 %v3970, %v4354
  %v4356 = vpop.f32.mrb[0].mxu0
  %4357 = vmatprep.mubr.f32.mxu0 %v3452
  %4358 = vmatmul.mubr.f32.gmra.mrb[0].mxu0 %v3626
  %v4359 = vpop.f32.mrb[0].mxu0
  %v4360 = vadd.f32 %v3975, %v4359
  %v4361 = vpop.f32.mrb[0].mxu0
  %4362 = vmatprep.mubr.f32.mxu0 %v3373
  %4363 = vmatmul.mubr.f32.gmra.mrb[0].mxu0 %v3627
  %v4364 = vpop.f32.mrb[0].mxu0
  %v4365 = vadd.f32 %v3980, %v4364
  %v4366 = vpop.f32.mrb[0].mxu0
  %4367 = vmatprep.mubr.f32.mxu0 %v3452
  %4368 = vmatmul.mubr.f32.gmra.mrb[0].mxu0 %v3670
  %v4369 = vpop.f32.mrb[0].mxu0
  %v4370 = vadd.f32 %v3985, %v4369
  %v4371 = vpop.f32.mrb[0].mxu0
  %4372 = vmatprep.mubr.f32.mxu0 %v3373
  %4373 = vmatmul.mubr.f32.gmra.mrb[0].mxu0 %v3672
  %v4374 = vpop.f32.mrb[0].mxu0
  %v4375 = vadd.f32 %v3990, %v4374
  %v4376 = vpop.f32.mrb[0].mxu0
  %4377 = vmatprep.mubr.f32.mxu0 %v3453
  %4378 = vmatmul.mubr.f32.gmra.mrb[0].mxu0 %v3670
  %v4379 = vpop.f32.mrb[0].mxu0
  %v4380 = vadd.f32 %v3995, %v4379
  %v4381 = vpop.f32.mrb[0].mxu0
  %4382 = vmatprep.mubr.f32.mxu0 %v3376
  %4383 = vmatmul.mubr.f32.gmra.mrb[0].mxu0 %v3672
  %v4384 = vpop.f32.mrb[0].mxu0
  %v4385 = vadd.f32 %v4000, %v4384
  %v4386 = vpop.f32.mrb[0].mxu0
  %4387 = vmatprep.mubr.f32.mxu0 %v3453
  %4388 = vmatmul.mubr.f32.gmra.mrb[0].mxu0 %v3675
  %v4389 = vpop.f32.mrb[0].mxu0
  %v4390 = vadd.f32 %v4005, %v4389
  %v4391 = vpop.f32.mrb[0].mxu0
  %4392 = vmatprep.mubr.f32.mxu0 %v3376
  %4393 = vmatmul.mubr.f32.gmra.mrb[0].mxu0 %v3677
  %v4394 = vpop.f32.mrb[0].mxu0
  %v4395 = vadd.f32 %v4010, %v4394
  %v4396 = vpop.f32.mrb[0].mxu0
  %4397 = vmatprep.mubr.f32.mxu0 %v3454
  %4398 = vmatmul.mubr.f32.gmra.mrb[0].mxu0 %v3675
  %v4399 = vpop.f32.mrb[0].mxu0
  %v4400 = vadd.f32 %v4015, %v4399
  %v4401 = vpop.f32.mrb[0].mxu0
  %4402 = vmatprep.mubr.f32.mxu0 %v3379
  %4403 = vmatmul.mubr.f32.gmra.mrb[0].mxu0 %v3677
  %v4404 = vpop.f32.mrb[0].mxu0
  %v4405 = vadd.f32 %v4020, %v4404
  %v4406 = vpop.f32.mrb[0].mxu0
  %4407 = vmatprep.mubr.f32.mxu0 %v3454
  %4408 = vmatmul.mubr.f32.gmra.mrb[0].mxu0 %v3680
  %v4409 = vpop.f32.mrb[0].mxu0
  %v4410 = vadd.f32 %v4025, %v4409
  %v4411 = vpop.f32.mrb[0].mxu0
  %4412 = vmatprep.mubr.f32.mxu0 %v3379
  %4413 = vmatmul.mubr.f32.gmra.mrb[0].mxu0 %v3682
  %v4414 = vpop.f32.mrb[0].mxu0
  %v4415 = vadd.f32 %v4030, %v4414
  %v4416 = vpop.f32.mrb[0].mxu0
  %4417 = vmatprep.mubr.f32.mxu0 %v3455
  %4418 = vmatmul.mubr.f32.gmra.mrb[0].mxu0 %v3680
  %v4419 = vpop.f32.mrb[0].mxu0
  %v4420 = vadd.f32 %v4035, %v4419
  %v4421 = vpop.f32.mrb[0].mxu0
  %4422 = vmatprep.mubr.f32.mxu0 %v3382
  %4423 = vmatmul.mubr.f32.gmra.mrb[0].mxu0 %v3682
  %v4424 = vpop.f32.mrb[0].mxu0
  %v4425 = vadd.f32 %v4040, %v4424
  %v4426 = vpop.f32.mrb[0].mxu0
  %4427 = vmatprep.mubr.f32.mxu0 %v3455
  %4428 = vmatmul.mubr.f32.gmra.mrb[0].mxu0 %v3685
  %v4429 = vpop.f32.mrb[0].mxu0
  %v4430 = vadd.f32 %v4045, %v4429
  %v4431 = vpop.f32.mrb[0].mxu0
  %4432 = vmatprep.mubr.f32.mxu0 %v3382
  %4433 = vmatmul.mubr.f32.gmra.mrb[0].mxu0 %v3687
  %v4434 = vpop.f32.mrb[0].mxu0
  %v4435 = vadd.f32 %v4050, %v4434
  %v4436 = vpop.f32.mrb[0].mxu0
  %4437 = vmatprep.mubr.f32.mxu0 %v3456
  %4438 = vmatmul.mubr.f32.gmra.mrb[0].mxu0 %v3685
  %v4439 = vpop.f32.mrb[0].mxu0
  %v4440 = vadd.f32 %v4055, %v4439
  %v4441 = vpop.f32.mrb[0].mxu0
  %4442 = vmatprep.mubr.f32.mxu0 %v3385
  %4443 = vmatmul.mubr.f32.gmra.mrb[0].mxu0 %v3687
  %v4444 = vpop.f32.mrb[0].mxu0
  %v4445 = vadd.f32 %v4060, %v4444
  %v4446 = vpop.f32.mrb[0].mxu0
  %4447 = vmatprep.mubr.f32.mxu0 %v3456
  %4448 = vmatmul.mubr.f32.gmra.mrb[0].mxu0 %v3690
  %v4449 = vpop.f32.mrb[0].mxu0
  %v4450 = vadd.f32 %v4065, %v4449
  %v4451 = vpop.f32.mrb[0].mxu0
  %4452 = vmatprep.mubr.f32.mxu0 %v3385
  %4453 = vmatmul.mubr.f32.gmra.mrb[0].mxu0 %v3692
  %v4454 = vpop.f32.mrb[0].mxu0
  %v4455 = vadd.f32 %v4070, %v4454
  %v4456 = vpop.f32.mrb[0].mxu0
  %4457 = vmatprep.mubr.f32.mxu0 %v3457
  %4458 = vmatmul.mubr.f32.gmra.mrb[0].mxu0 %v3690
  %v4459 = vpop.f32.mrb[0].mxu0
  %v4460 = vadd.f32 %v4075, %v4459
  %v4461 = vpop.f32.mrb[0].mxu0
  %4462 = vmatprep.mubr.f32.mxu0 %v3388
  %4463 = vmatmul.mubr.f32.gmra.mrb[0].mxu0 %v3692
  %v4464 = vpop.f32.mrb[0].mxu0
  %v4465 = vadd.f32 %v4080, %v4464
  %v4466 = vpop.f32.mrb[0].mxu0
  %4467 = vmatprep.mubr.f32.mxu0 %v3457
  %4468 = vmatmul.mubr.f32.gmra.mrb[0].mxu0 %v3695
  %v4469 = vpop.f32.mrb[0].mxu0
  %v4470 = vadd.f32 %v4085, %v4469
  %v4471 = vpop.f32.mrb[0].mxu0
  %4472 = vmatprep.mubr.f32.mxu0 %v3388
  %4473 = vmatmul.mubr.f32.gmra.mrb[0].mxu0 %v3697
  %v4474 = vpop.f32.mrb[0].mxu0
  %v4475 = vadd.f32 %v4090, %v4474
  %v4476 = vpop.f32.mrb[0].mxu0
  %4477 = vmatprep.mubr.f32.mxu0 %v3458
  %4478 = vmatmul.mubr.f32.gmra.mrb[0].mxu0 %v3695
  %v4479 = vpop.f32.mrb[0].mxu0
  %v4480 = vadd.f32 %v4095, %v4479
  %v4481 = vpop.f32.mrb[0].mxu0
  %4482 = vmatprep.mubr.f32.mxu0 %v3391
  %4483 = vmatmul.mubr.f32.gmra.mrb[0].mxu0 %v3697
  %v4484 = vpop.f32.mrb[0].mxu0
  %v4485 = vadd.f32 %v4100, %v4484
  %v4486 = vpop.f32.mrb[0].mxu0
  %4487 = vmatprep.mubr.f32.mxu0 %v3458
  %4488 = vmatmul.mubr.f32.gmra.mrb[0].mxu0 %v3700
  %v4489 = vpop.f32.mrb[0].mxu0
  %v4490 = vadd.f32 %v4105, %v4489
  %v4491 = vpop.f32.mrb[0].mxu0
  %4492 = vmatprep.mubr.f32.mxu0 %v3391
  %4493 = vmatmul.mubr.f32.gmra.mrb[0].mxu0 %v3702
  %v4494 = vpop.f32.mrb[0].mxu0
  %v4495 = vadd.f32 %v4110, %v4494
  %v4496 = vpop.f32.mrb[0].mxu0
  %4497 = vmatprep.mubr.f32.mxu0 %v3459
  %4498 = vmatmul.mubr.f32.gmra.mrb[0].mxu0 %v3700
  %v4499 = vpop.f32.mrb[0].mxu0
  %v4500 = vadd.f32 %v4115, %v4499
  %v4501 = vpop.f32.mrb[0].mxu0
  %4502 = vmatprep.mubr.f32.mxu0 %v3394
  %4503 = vmatmul.mubr.f32.gmra.mrb[0].mxu0 %v3702
  %v4504 = vpop.f32.mrb[0].mxu0
  %v4505 = vadd.f32 %v4120, %v4504
  %v4506 = vpop.f32.mrb[0].mxu0
  %4507 = vmatprep.mubr.f32.mxu0 %v3459
  %4508 = vmatmul.mubr.f32.gmra.mrb[0].mxu0 %v3705
  %v4509 = vpop.f32.mrb[0].mxu0
  %v4510 = vadd.f32 %v4125, %v4509
  %v4511 = vpop.f32.mrb[0].mxu0
  %4512 = vmatprep.mubr.f32.mxu0 %v3394
  %4513 = vmatmul.mubr.f32.gmra.mrb[0].mxu0 %v3707
  %v4514 = vpop.f32.mrb[0].mxu0
  %v4515 = vadd.f32 %v4130, %v4514
  %v4516 = vpop.f32.mrb[0].mxu0
  %4517 = vdwg.mxu0
  %4518 = vmatprep.subr.mxu0 0.0
  %4519 = vmatpush1.msra.mxu0 %v3233
  %4520 = vmatprep.subr.mxu0 0.0
  %4521 = vmatpush1.msra.mxu0 %v3234
  %4522 = vmatprep.subr.mxu0 0.0
  %4523 = vmatpush1.msra.mxu0 %v3235
  %4524 = vmatprep.subr.mxu0 0.0
  %4525 = vmatpush1.msra.mxu0 %v3236
  %4526 = vmatprep.subr.mxu0 0.0
  %4527 = vmatpush1.msra.mxu0 %v3237
  %4528 = vmatprep.subr.mxu0 0.0
  %4529 = vmatpush1.msra.mxu0 %v3238
  %4530 = vmatprep.subr.mxu0 0.0
  %4531 = vmatpush1.msra.mxu0 %v3239
  %4532 = vmatprep.subr.mxu0 0.0
  %4533 = vmatpush1.msra.mxu0 %v3240
  %4534 = vmatprep.subr.mxu0 0.0
  %4535 = vmatpush1.msra.mxu0 %v3241
  %4536 = vmatprep.subr.mxu0 0.0
  %4537 = vmatpush1.msra.mxu0 %v3242
  %4538 = vmatprep.subr.mxu0 0.0
  %4539 = vmatpush1.msra.mxu0 %v3243
  %4540 = vmatprep.subr.mxu0 0.0
  %4541 = vmatpush1.msra.mxu0 %v3244
  %4542 = vmatprep.subr.mxu0 0.0
  %4543 = vmatpush1.msra.mxu0 %v3245
  %4544 = vmatprep.subr.mxu0 0.0
  %4545 = vmatpush1.msra.mxu0 %v3246
  %4546 = vmatprep.subr.mxu0 0.0
  %4547 = vmatpush1.msra.mxu0 %v3247
  %4548 = vmatprep.subr.mxu0 0.0
  %4549 = vmatpush1.msra.mxu0 %v3248
  %4550 = vmatprep.subr.mxu0 0.0
  %4551 = vmatpush1.msra.mxu0 %v3249
  %4552 = vmatprep.subr.mxu0 0.0
  %4553 = vmatpush1.msra.mxu0 %v3250
  %4554 = vmatprep.subr.mxu0 0.0
  %4555 = vmatpush1.msra.mxu0 %v3251
  %4556 = vmatprep.subr.mxu0 0.0
  %4557 = vmatpush1.msra.mxu0 %v3252
  %4558 = vmatprep.subr.mxu0 0.0
  %4559 = vmatpush1.msra.mxu0 %v3253
  %4560 = vmatprep.subr.mxu0 0.0
  %4561 = vmatpush1.msra.mxu0 %v3254
  %4562 = vmatprep.subr.mxu0 0.0
  %4563 = vmatpush1.msra.mxu0 %v3255
  %4564 = vmatprep.subr.mxu0 0.0
  %4565 = vmatpush1.msra.mxu0 %v3256
  %4566 = vmatprep.subr.mxu0 0.0
  %4567 = vmatpush1.msra.mxu0 %v3257
  %4568 = vmatprep.subr.mxu0 0.0
  %4569 = vmatpush1.msra.mxu0 %v3258
  %4570 = vmatprep.subr.mxu0 0.0
  %4571 = vmatpush1.msra.mxu0 %v3259
  %4572 = vmatprep.subr.mxu0 0.0
  %4573 = vmatpush1.msra.mxu0 %v3260
  %4574 = vmatprep.subr.mxu0 0.0
  %4575 = vmatpush1.msra.mxu0 %v3261
  %4576 = vmatprep.subr.mxu0 0.0
  %4577 = vmatpush1.msra.mxu0 %v3262
  %4578 = vmatprep.subr.mxu0 0.0
  %4579 = vmatpush1.msra.mxu0 %v3263
  %4580 = vmatprep.subr.mxu0 0.0
  %4581 = vmatpush1.msra.mxu0 %v3264
  %4582 = vmatprep.mubr.f32.mxu0 %v3630
  %4583 = vmatmul.mubr.f32.gmra.mrb[0].mxu0 %v3513
  %v4584 = vpop.f32.mrb[0].mxu0
  %v4585 = vadd.f32 %v4200, %v4584
  %v4586 = vpop.f32.mrb[0].mxu0
  %4587 = vmatprep.mubr.f32.mxu0 %v3632
  %4588 = vmatmul.mubr.f32.gmra.mrb[0].mxu0 %v3515
  %v4589 = vpop.f32.mrb[0].mxu0
  %v4590 = vadd.f32 %v4205, %v4589
  %v4591 = vpop.f32.mrb[0].mxu0
  %4592 = vmatprep.mubr.f32.mxu0 %v3630
  %4593 = vmatmul.mubr.f32.gmra.mrb[0].mxu0 %v3513
  %v4594 = vpop.f32.mrb[0].mxu0
  %v4595 = vadd.f32 %v4210, %v4594
  %v4596 = vpop.f32.mrb[0].mxu0
  %4597 = vmatprep.mubr.f32.mxu0 %v3632
  %4598 = vmatmul.mubr.f32.gmra.mrb[0].mxu0 %v3515
  %v4599 = vpop.f32.mrb[0].mxu0
  %v4600 = vadd.f32 %v4215, %v4599
  %v4601 = vpop.f32.mrb[0].mxu0
  %4602 = vmatprep.mubr.f32.mxu0 %v3635
  %4603 = vmatmul.mubr.f32.gmra.mrb[0].mxu0 %v3518
  %v4604 = vpop.f32.mrb[0].mxu0
  %v4605 = vadd.f32 %v4220, %v4604
  %v4606 = vpop.f32.mrb[0].mxu0
  %4607 = vmatprep.mubr.f32.mxu0 %v3637
  %4608 = vmatmul.mubr.f32.gmra.mrb[0].mxu0 %v3520
  %v4609 = vpop.f32.mrb[0].mxu0
  %v4610 = vadd.f32 %v4225, %v4609
  %v4611 = vpop.f32.mrb[0].mxu0
  %4612 = vmatprep.mubr.f32.mxu0 %v3635
  %4613 = vmatmul.mubr.f32.gmra.mrb[0].mxu0 %v3518
  %v4614 = vpop.f32.mrb[0].mxu0
  %v4615 = vadd.f32 %v4230, %v4614
  %v4616 = vpop.f32.mrb[0].mxu0
  %4617 = vmatprep.mubr.f32.mxu0 %v3637
  %4618 = vmatmul.mubr.f32.gmra.mrb[0].mxu0 %v3520
  %v4619 = vpop.f32.mrb[0].mxu0
  %v4620 = vadd.f32 %v4235, %v4619
  %v4621 = vpop.f32.mrb[0].mxu0
  %4622 = vmatprep.mubr.f32.mxu0 %v3640
  %4623 = vmatmul.mubr.f32.gmra.mrb[0].mxu0 %v3523
  %v4624 = vpop.f32.mrb[0].mxu0
  %v4625 = vadd.f32 %v4240, %v4624
  %v4626 = vpop.f32.mrb[0].mxu0
  %4627 = vmatprep.mubr.f32.mxu0 %v3642
  %4628 = vmatmul.mubr.f32.gmra.mrb[0].mxu0 %v3525
  %v4629 = vpop.f32.mrb[0].mxu0
  %v4630 = vadd.f32 %v4245, %v4629
  %v4631 = vpop.f32.mrb[0].mxu0
  %4632 = vmatprep.mubr.f32.mxu0 %v3640
  %4633 = vmatmul.mubr.f32.gmra.mrb[0].mxu0 %v3523
  %v4634 = vpop.f32.mrb[0].mxu0
  %v4635 = vadd.f32 %v4250, %v4634
  %v4636 = vpop.f32.mrb[0].mxu0
  %4637 = vmatprep.mubr.f32.mxu0 %v3642
  %4638 = vmatmul.mubr.f32.gmra.mrb[0].mxu0 %v3525
  %v4639 = vpop.f32.mrb[0].mxu0
  %v4640 = vadd.f32 %v4255, %v4639
  %v4641 = vpop.f32.mrb[0].mxu0
  %4642 = vmatprep.mubr.f32.mxu0 %v3645
  %4643 = vmatmul.mubr.f32.gmra.mrb[0].mxu0 %v3528
  %v4644 = vpop.f32.mrb[0].mxu0
  %v4645 = vadd.f32 %v4260, %v4644
  %v4646 = vpop.f32.mrb[0].mxu0
  %4647 = vmatprep.mubr.f32.mxu0 %v3647
  %4648 = vmatmul.mubr.f32.gmra.mrb[0].mxu0 %v3530
  %v4649 = vpop.f32.mrb[0].mxu0
  %v4650 = vadd.f32 %v4265, %v4649
  %v4651 = vpop.f32.mrb[0].mxu0
  %4652 = vmatprep.mubr.f32.mxu0 %v3645
  %4653 = vmatmul.mubr.f32.gmra.mrb[0].mxu0 %v3528
  %v4654 = vpop.f32.mrb[0].mxu0
  %v4655 = vadd.f32 %v4270, %v4654
  %v4656 = vpop.f32.mrb[0].mxu0
  %4657 = vmatprep.mubr.f32.mxu0 %v3647
  %4658 = vmatmul.mubr.f32.gmra.mrb[0].mxu0 %v3530
  %v4659 = vpop.f32.mrb[0].mxu0
  %v4660 = vadd.f32 %v4275, %v4659
  %v4661 = vpop.f32.mrb[0].mxu0
  %4662 = vmatprep.mubr.f32.mxu0 %v3650
  %4663 = vmatmul.mubr.f32.gmra.mrb[0].mxu0 %v3533
  %v4664 = vpop.f32.mrb[0].mxu0
  %v4665 = vadd.f32 %v4280, %v4664
  %v4666 = vpop.f32.mrb[0].mxu0
  %4667 = vmatprep.mubr.f32.mxu0 %v3652
  %4668 = vmatmul.mubr.f32.gmra.mrb[0].mxu0 %v3535
  %v4669 = vpop.f32.mrb[0].mxu0
  %v4670 = vadd.f32 %v4285, %v4669
  %v4671 = vpop.f32.mrb[0].mxu0
  %4672 = vmatprep.mubr.f32.mxu0 %v3650
  %4673 = vmatmul.mubr.f32.gmra.mrb[0].mxu0 %v3533
  %v4674 = vpop.f32.mrb[0].mxu0
  %v4675 = vadd.f32 %v4290, %v4674
  %v4676 = vpop.f32.mrb[0].mxu0
  %4677 = vmatprep.mubr.f32.mxu0 %v3652
  %4678 = vmatmul.mubr.f32.gmra.mrb[0].mxu0 %v3535
  %v4679 = vpop.f32.mrb[0].mxu0
  %v4680 = vadd.f32 %v4295, %v4679
  %v4681 = vpop.f32.mrb[0].mxu0
  %4682 = vmatprep.mubr.f32.mxu0 %v3655
  %4683 = vmatmul.mubr.f32.gmra.mrb[0].mxu0 %v3538
  %v4684 = vpop.f32.mrb[0].mxu0
  %v4685 = vadd.f32 %v4300, %v4684
  %v4686 = vpop.f32.mrb[0].mxu0
  %4687 = vmatprep.mubr.f32.mxu0 %v3657
  %4688 = vmatmul.mubr.f32.gmra.mrb[0].mxu0 %v3540
  %v4689 = vpop.f32.mrb[0].mxu0
  %v4690 = vadd.f32 %v4305, %v4689
  %v4691 = vpop.f32.mrb[0].mxu0
  %4692 = vmatprep.mubr.f32.mxu0 %v3655
  %4693 = vmatmul.mubr.f32.gmra.mrb[0].mxu0 %v3538
  %v4694 = vpop.f32.mrb[0].mxu0
  %v4695 = vadd.f32 %v4310, %v4694
  %v4696 = vpop.f32.mrb[0].mxu0
  %4697 = vmatprep.mubr.f32.mxu0 %v3657
  %4698 = vmatmul.mubr.f32.gmra.mrb[0].mxu0 %v3540
  %v4699 = vpop.f32.mrb[0].mxu0
  %v4700 = vadd.f32 %v4315, %v4699
  %v4701 = vpop.f32.mrb[0].mxu0
  %4702 = vmatprep.mubr.f32.mxu0 %v3660
  %4703 = vmatmul.mubr.f32.gmra.mrb[0].mxu0 %v3543
  %v4704 = vpop.f32.mrb[0].mxu0
  %v4705 = vadd.f32 %v4320, %v4704
  %v4706 = vpop.f32.mrb[0].mxu0
  %4707 = vmatprep.mubr.f32.mxu0 %v3662
  %4708 = vmatmul.mubr.f32.gmra.mrb[0].mxu0 %v3545
  %v4709 = vpop.f32.mrb[0].mxu0
  %v4710 = vadd.f32 %v4325, %v4709
  %v4711 = vpop.f32.mrb[0].mxu0
  %4712 = vmatprep.mubr.f32.mxu0 %v3660
  %4713 = vmatmul.mubr.f32.gmra.mrb[0].mxu0 %v3543
  %v4714 = vpop.f32.mrb[0].mxu0
  %v4715 = vadd.f32 %v4330, %v4714
  %v4716 = vpop.f32.mrb[0].mxu0
  %4717 = vmatprep.mubr.f32.mxu0 %v3662
  %4718 = vmatmul.mubr.f32.gmra.mrb[0].mxu0 %v3545
  %v4719 = vpop.f32.mrb[0].mxu0
  %v4720 = vadd.f32 %v4335, %v4719
  %v4721 = vpop.f32.mrb[0].mxu0
  %4722 = vmatprep.mubr.f32.mxu0 %v3665
  %4723 = vmatmul.mubr.f32.gmra.mrb[0].mxu0 %v3548
  %v4724 = vpop.f32.mrb[0].mxu0
  %v4725 = vadd.f32 %v4340, %v4724
  %v4726 = vpop.f32.mrb[0].mxu0
  %4727 = vmatprep.mubr.f32.mxu0 %v3667
  %4728 = vmatmul.mubr.f32.gmra.mrb[0].mxu0 %v3550
  %v4729 = vpop.f32.mrb[0].mxu0
  %v4730 = vadd.f32 %v4345, %v4729
  %v4731 = vpop.f32.mrb[0].mxu0
  %4732 = vmatprep.mubr.f32.mxu0 %v3665
  %4733 = vmatmul.mubr.f32.gmra.mrb[0].mxu0 %v3548
  %v4734 = vpop.f32.mrb[0].mxu0
  %v4735 = vadd.f32 %v4350, %v4734
  %v4736 = vpop.f32.mrb[0].mxu0
  %4737 = vmatprep.mubr.f32.mxu0 %v3667
  %4738 = vmatmul.mubr.f32.gmra.mrb[0].mxu0 %v3550
  %v4739 = vpop.f32.mrb[0].mxu0
  %v4740 = vadd.f32 %v4355, %v4739
  %v4741 = vpop.f32.mrb[0].mxu0
  %4742 = vmatprep.mubr.f32.mxu0 %v3670
  %4743 = vmatmul.mubr.f32.gmra.mrb[0].mxu0 %v3553
  %v4744 = vpop.f32.mrb[0].mxu0
  %v4745 = vadd.f32 %v4360, %v4744
  %v4746 = vpop.f32.mrb[0].mxu0
  %4747 = vmatprep.mubr.f32.mxu0 %v3672
  %4748 = vmatmul.mubr.f32.gmra.mrb[0].mxu0 %v3555
  %v4749 = vpop.f32.mrb[0].mxu0
  %v4750 = vadd.f32 %v4365, %v4749
  %v4751 = vpop.f32.mrb[0].mxu0
  %4752 = vmatprep.mubr.f32.mxu0 %v3670
  %4753 = vmatmul.mubr.f32.gmra.mrb[0].mxu0 %v3553
  %v4754 = vpop.f32.mrb[0].mxu0
  %v4755 = vadd.f32 %v4370, %v4754
  %v4756 = vpop.f32.mrb[0].mxu0
  %4757 = vmatprep.mubr.f32.mxu0 %v3672
  %4758 = vmatmul.mubr.f32.gmra.mrb[0].mxu0 %v3555
  %v4759 = vpop.f32.mrb[0].mxu0
  %v4760 = vadd.f32 %v4375, %v4759
  %v4761 = vpop.f32.mrb[0].mxu0
  %4762 = vmatprep.mubr.f32.mxu0 %v3675
  %4763 = vmatmul.mubr.f32.gmra.mrb[0].mxu0 %v3558
  %v4764 = vpop.f32.mrb[0].mxu0
  %v4765 = vadd.f32 %v4380, %v4764
  %v4766 = vpop.f32.mrb[0].mxu0
  %4767 = vmatprep.mubr.f32.mxu0 %v3677
  %4768 = vmatmul.mubr.f32.gmra.mrb[0].mxu0 %v3560
  %v4769 = vpop.f32.mrb[0].mxu0
  %v4770 = vadd.f32 %v4385, %v4769
  %v4771 = vpop.f32.mrb[0].mxu0
  %4772 = vmatprep.mubr.f32.mxu0 %v3675
  %4773 = vmatmul.mubr.f32.gmra.mrb[0].mxu0 %v3558
  %v4774 = vpop.f32.mrb[0].mxu0
  %v4775 = vadd.f32 %v4390, %v4774
  %v4776 = vpop.f32.mrb[0].mxu0
  %4777 = vmatprep.mubr.f32.mxu0 %v3677
  %4778 = vmatmul.mubr.f32.gmra.mrb[0].mxu0 %v3560
  %v4779 = vpop.f32.mrb[0].mxu0
  %v4780 = vadd.f32 %v4395, %v4779
  %v4781 = vpop.f32.mrb[0].mxu0
  %4782 = vmatprep.mubr.f32.mxu0 %v3680
  %4783 = vmatmul.mubr.f32.gmra.mrb[0].mxu0 %v3563
  %v4784 = vpop.f32.mrb[0].mxu0
  %v4785 = vadd.f32 %v4400, %v4784
  %v4786 = vpop.f32.mrb[0].mxu0
  %4787 = vmatprep.mubr.f32.mxu0 %v3682
  %4788 = vmatmul.mubr.f32.gmra.mrb[0].mxu0 %v3565
  %v4789 = vpop.f32.mrb[0].mxu0
  %v4790 = vadd.f32 %v4405, %v4789
  %v4791 = vpop.f32.mrb[0].mxu0
  %4792 = vmatprep.mubr.f32.mxu0 %v3680
  %4793 = vmatmul.mubr.f32.gmra.mrb[0].mxu0 %v3563
  %v4794 = vpop.f32.mrb[0].mxu0
  %v4795 = vadd.f32 %v4410, %v4794
  %v4796 = vpop.f32.mrb[0].mxu0
  %4797 = vmatprep.mubr.f32.mxu0 %v3682
  %4798 = vmatmul.mubr.f32.gmra.mrb[0].mxu0 %v3565
  %v4799 = vpop.f32.mrb[0].mxu0
  %v4800 = vadd.f32 %v4415, %v4799
  %v4801 = vpop.f32.mrb[0].mxu0
  %4802 = vmatprep.mubr.f32.mxu0 %v3685
  %4803 = vmatmul.mubr.f32.gmra.mrb[0].mxu0 %v3568
  %v4804 = vpop.f32.mrb[0].mxu0
  %v4805 = vadd.f32 %v4420, %v4804
  %v4806 = vpop.f32.mrb[0].mxu0
  %4807 = vmatprep.mubr.f32.mxu0 %v3687
  %4808 = vmatmul.mubr.f32.gmra.mrb[0].mxu0 %v3570
  %v4809 = vpop.f32.mrb[0].mxu0
  %v4810 = vadd.f32 %v4425, %v4809
  %v4811 = vpop.f32.mrb[0].mxu0
  %4812 = vmatprep.mubr.f32.mxu0 %v3685
  %4813 = vmatmul.mubr.f32.gmra.mrb[0].mxu0 %v3568
  %v4814 = vpop.f32.mrb[0].mxu0
  %v4815 = vadd.f32 %v4430, %v4814
  %v4816 = vpop.f32.mrb[0].mxu0
  %4817 = vmatprep.mubr.f32.mxu0 %v3687
  %4818 = vmatmul.mubr.f32.gmra.mrb[0].mxu0 %v3570
  %v4819 = vpop.f32.mrb[0].mxu0
  %v4820 = vadd.f32 %v4435, %v4819
  %v4821 = vpop.f32.mrb[0].mxu0
  %4822 = vmatprep.mubr.f32.mxu0 %v3690
  %4823 = vmatmul.mubr.f32.gmra.mrb[0].mxu0 %v3573
  %v4824 = vpop.f32.mrb[0].mxu0
  %v4825 = vadd.f32 %v4440, %v4824
  %v4826 = vpop.f32.mrb[0].mxu0
  %4827 = vmatprep.mubr.f32.mxu0 %v3692
  %4828 = vmatmul.mubr.f32.gmra.mrb[0].mxu0 %v3575
  %v4829 = vpop.f32.mrb[0].mxu0
  %v4830 = vadd.f32 %v4445, %v4829
  %v4831 = vpop.f32.mrb[0].mxu0
  %4832 = vmatprep.mubr.f32.mxu0 %v3690
  %4833 = vmatmul.mubr.f32.gmra.mrb[0].mxu0 %v3573
  %v4834 = vpop.f32.mrb[0].mxu0
  %v4835 = vadd.f32 %v4450, %v4834
  %v4836 = vpop.f32.mrb[0].mxu0
  %4837 = vmatprep.mubr.f32.mxu0 %v3692
  %4838 = vmatmul.mubr.f32.gmra.mrb[0].mxu0 %v3575
  %v4839 = vpop.f32.mrb[0].mxu0
  %v4840 = vadd.f32 %v4455, %v4839
  %v4841 = vpop.f32.mrb[0].mxu0
  %4842 = vmatprep.mubr.f32.mxu0 %v3695
  %4843 = vmatmul.mubr.f32.gmra.mrb[0].mxu0 %v3578
  %v4844 = vpop.f32.mrb[0].mxu0
  %v4845 = vadd.f32 %v4460, %v4844
  %v4846 = vpop.f32.mrb[0].mxu0
  %4847 = vmatprep.mubr.f32.mxu0 %v3697
  %4848 = vmatmul.mubr.f32.gmra.mrb[0].mxu0 %v3580
  %v4849 = vpop.f32.mrb[0].mxu0
  %v4850 = vadd.f32 %v4465, %v4849
  %v4851 = vpop.f32.mrb[0].mxu0
  %4852 = vmatprep.mubr.f32.mxu0 %v3695
  %4853 = vmatmul.mubr.f32.gmra.mrb[0].mxu0 %v3578
  %v4854 = vpop.f32.mrb[0].mxu0
  %v4855 = vadd.f32 %v4470, %v4854
  %v4856 = vpop.f32.mrb[0].mxu0
  %4857 = vmatprep.mubr.f32.mxu0 %v3697
  %4858 = vmatmul.mubr.f32.gmra.mrb[0].mxu0 %v3580
  %v4859 = vpop.f32.mrb[0].mxu0
  %v4860 = vadd.f32 %v4475, %v4859
  %v4861 = vpop.f32.mrb[0].mxu0
  %4862 = vmatprep.mubr.f32.mxu0 %v3700
  %4863 = vmatmul.mubr.f32.gmra.mrb[0].mxu0 %v3583
  %v4864 = vpop.f32.mrb[0].mxu0
  %v4865 = vadd.f32 %v4480, %v4864
  %v4866 = vpop.f32.mrb[0].mxu0
  %4867 = vmatprep.mubr.f32.mxu0 %v3702
  %4868 = vmatmul.mubr.f32.gmra.mrb[0].mxu0 %v3585
  %v4869 = vpop.f32.mrb[0].mxu0
  %v4870 = vadd.f32 %v4485, %v4869
  %v4871 = vpop.f32.mrb[0].mxu0
  %4872 = vmatprep.mubr.f32.mxu0 %v3700
  %4873 = vmatmul.mubr.f32.gmra.mrb[0].mxu0 %v3583
  %v4874 = vpop.f32.mrb[0].mxu0
  %v4875 = vadd.f32 %v4490, %v4874
  %v4876 = vpop.f32.mrb[0].mxu0
  %4877 = vmatprep.mubr.f32.mxu0 %v3702
  %4878 = vmatmul.mubr.f32.gmra.mrb[0].mxu0 %v3585
  %v4879 = vpop.f32.mrb[0].mxu0
  %v4880 = vadd.f32 %v4495, %v4879
  %v4881 = vpop.f32.mrb[0].mxu0
  %4882 = vmatprep.mubr.f32.mxu0 %v3705
  %4883 = vmatmul.mubr.f32.gmra.mrb[0].mxu0 %v3588
  %v4884 = vpop.f32.mrb[0].mxu0
  %v4885 = vadd.f32 %v4500, %v4884
  %v4886 = vpop.f32.mrb[0].mxu0
  %4887 = vmatprep.mubr.f32.mxu0 %v3707
  %4888 = vmatmul.mubr.f32.gmra.mrb[0].mxu0 %v3590
  %v4889 = vpop.f32.mrb[0].mxu0
  %v4890 = vadd.f32 %v4505, %v4889
  %v4891 = vpop.f32.mrb[0].mxu0
  %4892 = vmatprep.mubr.f32.mxu0 %v3705
  %4893 = vmatmul.mubr.f32.gmra.mrb[0].mxu0 %v3588
  %v4894 = vpop.f32.mrb[0].mxu0
  %v4895 = vadd.f32 %v4510, %v4894
  %v4896 = vpop.f32.mrb[0].mxu0
  %4897 = vmatprep.mubr.f32.mxu0 %v3707
  %4898 = vmatmul.mubr.f32.gmra.mrb[0].mxu0 %v3590
  %v4899 = vpop.f32.mrb[0].mxu0
  %v4900 = vadd.f32 %v4515, %v4899
  %v4901 = vpop.f32.mrb[0].mxu0
  %4902 = vdwg.mxu0
  %4903 = vmatprep.subr.mxu0 0.0
  %4904 = vmatpush1.msra.mxu0 %v3265
  %4905 = vmatprep.subr.mxu0 0.0
  %4906 = vmatpush1.msra.mxu0 %v3266
  %4907 = vmatprep.subr.mxu0 0.0
  %4908 = vmatpush1.msra.mxu0 %v3267
  %4909 = vmatprep.subr.mxu0 0.0
  %4910 = vmatpush1.msra.mxu0 %v3268
  %4911 = vmatprep.subr.mxu0 0.0
  %4912 = vmatpush1.msra.mxu0 %v3269
  %4913 = vmatprep.subr.mxu0 0.0
  %4914 = vmatpush1.msra.mxu0 %v3270
  %4915 = vmatprep.subr.mxu0 0.0
  %4916 = vmatpush1.msra.mxu0 %v3271
  %4917 = vmatprep.subr.mxu0 0.0
  %4918 = vmatpush1.msra.mxu0 %v3272
  %4919 = vmatprep.subr.mxu0 0.0
  %4920 = vmatpush1.msra.mxu0 %v3273
  %4921 = vmatprep.subr.mxu0 0.0
  %4922 = vmatpush1.msra.mxu0 %v3274
  %4923 = vmatprep.subr.mxu0 0.0
  %4924 = vmatpush1.msra.mxu0 %v3275
  %4925 = vmatprep.subr.mxu0 0.0
  %4926 = vmatpush1.msra.mxu0 %v3276
  %4927 = vmatprep.subr.mxu0 0.0
  %4928 = vmatpush1.msra.mxu0 %v3277
  %4929 = vmatprep.subr.mxu0 0.0
  %4930 = vmatpush1.msra.mxu0 %v3278
  %4931 = vmatprep.subr.mxu0 0.0
  %4932 = vmatpush1.msra.mxu0 %v3279
  %4933 = vmatprep.subr.mxu0 0.0
  %4934 = vmatpush1.msra.mxu0 %v3280
  %4935 = vmatprep.subr.mxu0 0.0
  %4936 = vmatpush1.msra.mxu0 %v3281
  %4937 = vmatprep.subr.mxu0 0.0
  %4938 = vmatpush1.msra.mxu0 %v3282
  %4939 = vmatprep.subr.mxu0 0.0
  %4940 = vmatpush1.msra.mxu0 %v3283
  %4941 = vmatprep.subr.mxu0 0.0
  %4942 = vmatpush1.msra.mxu0 %v3284
  %4943 = vmatprep.subr.mxu0 0.0
  %4944 = vmatpush1.msra.mxu0 %v3285
  %4945 = vmatprep.subr.mxu0 0.0
  %4946 = vmatpush1.msra.mxu0 %v3286
  %4947 = vmatprep.subr.mxu0 0.0
  %4948 = vmatpush1.msra.mxu0 %v3287
  %4949 = vmatprep.subr.mxu0 0.0
  %4950 = vmatpush1.msra.mxu0 %v3288
  %4951 = vmatprep.subr.mxu0 0.0
  %4952 = vmatpush1.msra.mxu0 %v3289
  %4953 = vmatprep.subr.mxu0 0.0
  %4954 = vmatpush1.msra.mxu0 %v3290
  %4955 = vmatprep.subr.mxu0 0.0
  %4956 = vmatpush1.msra.mxu0 %v3291
  %4957 = vmatprep.subr.mxu0 0.0
  %4958 = vmatpush1.msra.mxu0 %v3292
  %4959 = vmatprep.subr.mxu0 0.0
  %4960 = vmatpush1.msra.mxu0 %v3293
  %4961 = vmatprep.subr.mxu0 0.0
  %4962 = vmatpush1.msra.mxu0 %v3294
  %4963 = vmatprep.subr.mxu0 0.0
  %4964 = vmatpush1.msra.mxu0 %v3295
  %4965 = vmatprep.subr.mxu0 0.0
  %4966 = vmatpush1.msra.mxu0 %v3296
  %4967 = vmatprep.mubr.f32.mxu0 %v3513
  %4968 = vmatmul.mubr.f32.gmra.mrb[0].mxu0 %v3444
  %v4969 = vpop.f32.mrb[0].mxu0
  %v4970 = vadd.f32 %v4585, %v4969
  %v4971 = vpop.f32.mrb[0].mxu0
  %4972 = vmatprep.mubr.f32.mxu0 %v3515
  %4973 = vmatmul.mubr.f32.gmra.mrb[0].mxu0 %v3349
  %v4974 = vpop.f32.mrb[0].mxu0
  %v4975 = vadd.f32 %v4590, %v4974
  %v4976 = vpop.f32.mrb[0].mxu0
  %4977 = vmatprep.mubr.f32.mxu0 %v3518
  %4978 = vmatmul.mubr.f32.gmra.mrb[0].mxu0 %v3445
  %v4979 = vpop.f32.mrb[0].mxu0
  %v4980 = vadd.f32 %v4595, %v4979
  %v4981 = vpop.f32.mrb[0].mxu0
  %4982 = vmatprep.mubr.f32.mxu0 %v3520
  %4983 = vmatmul.mubr.f32.gmra.mrb[0].mxu0 %v3352
  %v4984 = vpop.f32.mrb[0].mxu0
  %v4985 = vadd.f32 %v4600, %v4984
  %v4986 = vpop.f32.mrb[0].mxu0
  %4987 = vmatprep.mubr.f32.mxu0 %v3518
  %4988 = vmatmul.mubr.f32.gmra.mrb[0].mxu0 %v3445
  %v4989 = vpop.f32.mrb[0].mxu0
  %v4990 = vadd.f32 %v4605, %v4989
  %v4991 = vpop.f32.mrb[0].mxu0
  %4992 = vmatprep.mubr.f32.mxu0 %v3520
  %4993 = vmatmul.mubr.f32.gmra.mrb[0].mxu0 %v3352
  %v4994 = vpop.f32.mrb[0].mxu0
  %v4995 = vadd.f32 %v4610, %v4994
  %v4996 = vpop.f32.mrb[0].mxu0
  %4997 = vmatprep.mubr.f32.mxu0 %v3523
  %4998 = vmatmul.mubr.f32.gmra.mrb[0].mxu0 %v3446
  %v4999 = vpop.f32.mrb[0].mxu0
  %v5000 = vadd.f32 %v4615, %v4999
  %v5001 = vpop.f32.mrb[0].mxu0
  %5002 = vmatprep.mubr.f32.mxu0 %v3525
  %5003 = vmatmul.mubr.f32.gmra.mrb[0].mxu0 %v3355
  %v5004 = vpop.f32.mrb[0].mxu0
  %v5005 = vadd.f32 %v4620, %v5004
  %v5006 = vpop.f32.mrb[0].mxu0
  %5007 = vmatprep.mubr.f32.mxu0 %v3523
  %5008 = vmatmul.mubr.f32.gmra.mrb[0].mxu0 %v3446
  %v5009 = vpop.f32.mrb[0].mxu0
  %v5010 = vadd.f32 %v4625, %v5009
  %v5011 = vpop.f32.mrb[0].mxu0
  %5012 = vmatprep.mubr.f32.mxu0 %v3525
  %5013 = vmatmul.mubr.f32.gmra.mrb[0].mxu0 %v3355
  %v5014 = vpop.f32.mrb[0].mxu0
  %v5015 = vadd.f32 %v4630, %v5014
  %v5016 = vpop.f32.mrb[0].mxu0
  %5017 = vmatprep.mubr.f32.mxu0 %v3528
  %5018 = vmatmul.mubr.f32.gmra.mrb[0].mxu0 %v3447
  %v5019 = vpop.f32.mrb[0].mxu0
  %v5020 = vadd.f32 %v4635, %v5019
  %v5021 = vpop.f32.mrb[0].mxu0
  %5022 = vmatprep.mubr.f32.mxu0 %v3530
  %5023 = vmatmul.mubr.f32.gmra.mrb[0].mxu0 %v3358
  %v5024 = vpop.f32.mrb[0].mxu0
  %v5025 = vadd.f32 %v4640, %v5024
  %v5026 = vpop.f32.mrb[0].mxu0
  %5027 = vmatprep.mubr.f32.mxu0 %v3528
  %5028 = vmatmul.mubr.f32.gmra.mrb[0].mxu0 %v3447
  %v5029 = vpop.f32.mrb[0].mxu0
  %v5030 = vadd.f32 %v4645, %v5029
  %v5031 = vpop.f32.mrb[0].mxu0
  %5032 = vmatprep.mubr.f32.mxu0 %v3530
  %5033 = vmatmul.mubr.f32.gmra.mrb[0].mxu0 %v3358
  %v5034 = vpop.f32.mrb[0].mxu0
  %v5035 = vadd.f32 %v4650, %v5034
  %v5036 = vpop.f32.mrb[0].mxu0
  %5037 = vmatprep.mubr.f32.mxu0 %v3533
  %5038 = vmatmul.mubr.f32.gmra.mrb[0].mxu0 %v3448
  %v5039 = vpop.f32.mrb[0].mxu0
  %v5040 = vadd.f32 %v4655, %v5039
  %v5041 = vpop.f32.mrb[0].mxu0
  %5042 = vmatprep.mubr.f32.mxu0 %v3535
  %5043 = vmatmul.mubr.f32.gmra.mrb[0].mxu0 %v3361
  %v5044 = vpop.f32.mrb[0].mxu0
  %v5045 = vadd.f32 %v4660, %v5044
  %v5046 = vpop.f32.mrb[0].mxu0
  %5047 = vmatprep.mubr.f32.mxu0 %v3533
  %5048 = vmatmul.mubr.f32.gmra.mrb[0].mxu0 %v3448
  %v5049 = vpop.f32.mrb[0].mxu0
  %v5050 = vadd.f32 %v4665, %v5049
  %v5051 = vpop.f32.mrb[0].mxu0
  %5052 = vmatprep.mubr.f32.mxu0 %v3535
  %5053 = vmatmul.mubr.f32.gmra.mrb[0].mxu0 %v3361
  %v5054 = vpop.f32.mrb[0].mxu0
  %v5055 = vadd.f32 %v4670, %v5054
  %v5056 = vpop.f32.mrb[0].mxu0
  %5057 = vmatprep.mubr.f32.mxu0 %v3538
  %5058 = vmatmul.mubr.f32.gmra.mrb[0].mxu0 %v3449
  %v5059 = vpop.f32.mrb[0].mxu0
  %v5060 = vadd.f32 %v4675, %v5059
  %v5061 = vpop.f32.mrb[0].mxu0
  %5062 = vmatprep.mubr.f32.mxu0 %v3540
  %5063 = vmatmul.mubr.f32.gmra.mrb[0].mxu0 %v3364
  %v5064 = vpop.f32.mrb[0].mxu0
  %v5065 = vadd.f32 %v4680, %v5064
  %v5066 = vpop.f32.mrb[0].mxu0
  %5067 = vmatprep.mubr.f32.mxu0 %v3538
  %5068 = vmatmul.mubr.f32.gmra.mrb[0].mxu0 %v3449
  %v5069 = vpop.f32.mrb[0].mxu0
  %v5070 = vadd.f32 %v4685, %v5069
  %v5071 = vpop.f32.mrb[0].mxu0
  %5072 = vmatprep.mubr.f32.mxu0 %v3540
  %5073 = vmatmul.mubr.f32.gmra.mrb[0].mxu0 %v3364
  %v5074 = vpop.f32.mrb[0].mxu0
  %v5075 = vadd.f32 %v4690, %v5074
  %v5076 = vpop.f32.mrb[0].mxu0
  %5077 = vmatprep.mubr.f32.mxu0 %v3543
  %5078 = vmatmul.mubr.f32.gmra.mrb[0].mxu0 %v3450
  %v5079 = vpop.f32.mrb[0].mxu0
  %v5080 = vadd.f32 %v4695, %v5079
  %v5081 = vpop.f32.mrb[0].mxu0
  %5082 = vmatprep.mubr.f32.mxu0 %v3545
  %5083 = vmatmul.mubr.f32.gmra.mrb[0].mxu0 %v3367
  %v5084 = vpop.f32.mrb[0].mxu0
  %v5085 = vadd.f32 %v4700, %v5084
  %v5086 = vpop.f32.mrb[0].mxu0
  %5087 = vmatprep.mubr.f32.mxu0 %v3543
  %5088 = vmatmul.mubr.f32.gmra.mrb[0].mxu0 %v3450
  %v5089 = vpop.f32.mrb[0].mxu0
  %v5090 = vadd.f32 %v4705, %v5089
  %v5091 = vpop.f32.mrb[0].mxu0
  %5092 = vmatprep.mubr.f32.mxu0 %v3545
  %5093 = vmatmul.mubr.f32.gmra.mrb[0].mxu0 %v3367
  %v5094 = vpop.f32.mrb[0].mxu0
  %v5095 = vadd.f32 %v4710, %v5094
  %v5096 = vpop.f32.mrb[0].mxu0
  %5097 = vmatprep.mubr.f32.mxu0 %v3548
  %5098 = vmatmul.mubr.f32.gmra.mrb[0].mxu0 %v3451
  %v5099 = vpop.f32.mrb[0].mxu0
  %v5100 = vadd.f32 %v4715, %v5099
  %v5101 = vpop.f32.mrb[0].mxu0
  %5102 = vmatprep.mubr.f32.mxu0 %v3550
  %5103 = vmatmul.mubr.f32.gmra.mrb[0].mxu0 %v3370
  %v5104 = vpop.f32.mrb[0].mxu0
  %v5105 = vadd.f32 %v4720, %v5104
  %v5106 = vpop.f32.mrb[0].mxu0
  %5107 = vmatprep.mubr.f32.mxu0 %v3548
  %5108 = vmatmul.mubr.f32.gmra.mrb[0].mxu0 %v3451
  %v5109 = vpop.f32.mrb[0].mxu0
  %v5110 = vadd.f32 %v4725, %v5109
  %v5111 = vpop.f32.mrb[0].mxu0
  %5112 = vmatprep.mubr.f32.mxu0 %v3550
  %5113 = vmatmul.mubr.f32.gmra.mrb[0].mxu0 %v3370
  %v5114 = vpop.f32.mrb[0].mxu0
  %v5115 = vadd.f32 %v4730, %v5114
  %v5116 = vpop.f32.mrb[0].mxu0
  %5117 = vmatprep.mubr.f32.mxu0 %v3509
  %5118 = vmatmul.mubr.f32.gmra.mrb[0].mxu0 %v1704
  %v5119 = vpop.f32.mrb[0].mxu0
  %v5120 = vadd.f32 %v4735, %v5119
  %v5121 = vpop.f32.mrb[0].mxu0
  %5122 = vmatprep.mubr.f32.mxu0 %v3510
  %5123 = vmatmul.mubr.f32.gmra.mrb[0].mxu0 %v3346
  %v5124 = vpop.f32.mrb[0].mxu0
  %v5125 = vadd.f32 %v4740, %v5124
  %v5126 = vpop.f32.mrb[0].mxu0
  %5127 = vmatprep.mubr.f32.mxu0 %v3553
  %5128 = vmatmul.mubr.f32.gmra.mrb[0].mxu0 %v3452
  %v5129 = vpop.f32.mrb[0].mxu0
  %v5130 = vadd.f32 %v4745, %v5129
  %v5131 = vpop.f32.mrb[0].mxu0
  %5132 = vmatprep.mubr.f32.mxu0 %v3555
  %5133 = vmatmul.mubr.f32.gmra.mrb[0].mxu0 %v3373
  %v5134 = vpop.f32.mrb[0].mxu0
  %v5135 = vadd.f32 %v4750, %v5134
  %v5136 = vpop.f32.mrb[0].mxu0
  %5137 = vmatprep.mubr.f32.mxu0 %v3558
  %5138 = vmatmul.mubr.f32.gmra.mrb[0].mxu0 %v3453
  %v5139 = vpop.f32.mrb[0].mxu0
  %v5140 = vadd.f32 %v4755, %v5139
  %v5141 = vpop.f32.mrb[0].mxu0
  %5142 = vmatprep.mubr.f32.mxu0 %v3560
  %5143 = vmatmul.mubr.f32.gmra.mrb[0].mxu0 %v3376
  %v5144 = vpop.f32.mrb[0].mxu0
  %v5145 = vadd.f32 %v4760, %v5144
  %v5146 = vpop.f32.mrb[0].mxu0
  %5147 = vmatprep.mubr.f32.mxu0 %v3558
  %5148 = vmatmul.mubr.f32.gmra.mrb[0].mxu0 %v3453
  %v5149 = vpop.f32.mrb[0].mxu0
  %v5150 = vadd.f32 %v4765, %v5149
  %v5151 = vpop.f32.mrb[0].mxu0
  %5152 = vmatprep.mubr.f32.mxu0 %v3560
  %5153 = vmatmul.mubr.f32.gmra.mrb[0].mxu0 %v3376
  %v5154 = vpop.f32.mrb[0].mxu0
  %v5155 = vadd.f32 %v4770, %v5154
  %v5156 = vpop.f32.mrb[0].mxu0
  %5157 = vmatprep.mubr.f32.mxu0 %v3563
  %5158 = vmatmul.mubr.f32.gmra.mrb[0].mxu0 %v3454
  %v5159 = vpop.f32.mrb[0].mxu0
  %v5160 = vadd.f32 %v4775, %v5159
  %v5161 = vpop.f32.mrb[0].mxu0
  %5162 = vmatprep.mubr.f32.mxu0 %v3565
  %5163 = vmatmul.mubr.f32.gmra.mrb[0].mxu0 %v3379
  %v5164 = vpop.f32.mrb[0].mxu0
  %v5165 = vadd.f32 %v4780, %v5164
  %v5166 = vpop.f32.mrb[0].mxu0
  %5167 = vmatprep.mubr.f32.mxu0 %v3563
  %5168 = vmatmul.mubr.f32.gmra.mrb[0].mxu0 %v3454
  %v5169 = vpop.f32.mrb[0].mxu0
  %v5170 = vadd.f32 %v4785, %v5169
  %v5171 = vpop.f32.mrb[0].mxu0
  %5172 = vmatprep.mubr.f32.mxu0 %v3565
  %5173 = vmatmul.mubr.f32.gmra.mrb[0].mxu0 %v3379
  %v5174 = vpop.f32.mrb[0].mxu0
  %v5175 = vadd.f32 %v4790, %v5174
  %v5176 = vpop.f32.mrb[0].mxu0
  %5177 = vmatprep.mubr.f32.mxu0 %v3568
  %5178 = vmatmul.mubr.f32.gmra.mrb[0].mxu0 %v3455
  %v5179 = vpop.f32.mrb[0].mxu0
  %v5180 = vadd.f32 %v4795, %v5179
  %v5181 = vpop.f32.mrb[0].mxu0
  %5182 = vmatprep.mubr.f32.mxu0 %v3570
  %5183 = vmatmul.mubr.f32.gmra.mrb[0].mxu0 %v3382
  %v5184 = vpop.f32.mrb[0].mxu0
  %v5185 = vadd.f32 %v4800, %v5184
  %v5186 = vpop.f32.mrb[0].mxu0
  %5187 = vmatprep.mubr.f32.mxu0 %v3568
  %5188 = vmatmul.mubr.f32.gmra.mrb[0].mxu0 %v3455
  %v5189 = vpop.f32.mrb[0].mxu0
  %v5190 = vadd.f32 %v4805, %v5189
  %v5191 = vpop.f32.mrb[0].mxu0
  %5192 = vmatprep.mubr.f32.mxu0 %v3570
  %5193 = vmatmul.mubr.f32.gmra.mrb[0].mxu0 %v3382
  %v5194 = vpop.f32.mrb[0].mxu0
  %v5195 = vadd.f32 %v4810, %v5194
  %v5196 = vpop.f32.mrb[0].mxu0
  %5197 = vmatprep.mubr.f32.mxu0 %v3573
  %5198 = vmatmul.mubr.f32.gmra.mrb[0].mxu0 %v3456
  %v5199 = vpop.f32.mrb[0].mxu0
  %v5200 = vadd.f32 %v4815, %v5199
  %v5201 = vpop.f32.mrb[0].mxu0
  %5202 = vmatprep.mubr.f32.mxu0 %v3575
  %5203 = vmatmul.mubr.f32.gmra.mrb[0].mxu0 %v3385
  %v5204 = vpop.f32.mrb[0].mxu0
  %v5205 = vadd.f32 %v4820, %v5204
  %v5206 = vpop.f32.mrb[0].mxu0
  %5207 = vmatprep.mubr.f32.mxu0 %v3573
  %5208 = vmatmul.mubr.f32.gmra.mrb[0].mxu0 %v3456
  %v5209 = vpop.f32.mrb[0].mxu0
  %v5210 = vadd.f32 %v4825, %v5209
  %v5211 = vpop.f32.mrb[0].mxu0
  %5212 = vmatprep.mubr.f32.mxu0 %v3575
  %5213 = vmatmul.mubr.f32.gmra.mrb[0].mxu0 %v3385
  %v5214 = vpop.f32.mrb[0].mxu0
  %v5215 = vadd.f32 %v4830, %v5214
  %v5216 = vpop.f32.mrb[0].mxu0
  %5217 = vmatprep.mubr.f32.mxu0 %v3578
  %5218 = vmatmul.mubr.f32.gmra.mrb[0].mxu0 %v3457
  %v5219 = vpop.f32.mrb[0].mxu0
  %v5220 = vadd.f32 %v4835, %v5219
  %v5221 = vpop.f32.mrb[0].mxu0
  %5222 = vmatprep.mubr.f32.mxu0 %v3580
  %5223 = vmatmul.mubr.f32.gmra.mrb[0].mxu0 %v3388
  %v5224 = vpop.f32.mrb[0].mxu0
  %v5225 = vadd.f32 %v4840, %v5224
  %v5226 = vpop.f32.mrb[0].mxu0
  %5227 = vmatprep.mubr.f32.mxu0 %v3578
  %5228 = vmatmul.mubr.f32.gmra.mrb[0].mxu0 %v3457
  %v5229 = vpop.f32.mrb[0].mxu0
  %v5230 = vadd.f32 %v4845, %v5229
  %v5231 = vpop.f32.mrb[0].mxu0
  %5232 = vmatprep.mubr.f32.mxu0 %v3580
  %5233 = vmatmul.mubr.f32.gmra.mrb[0].mxu0 %v3388
  %v5234 = vpop.f32.mrb[0].mxu0
  %v5235 = vadd.f32 %v4850, %v5234
  %v5236 = vpop.f32.mrb[0].mxu0
  %5237 = vmatprep.mubr.f32.mxu0 %v3583
  %5238 = vmatmul.mubr.f32.gmra.mrb[0].mxu0 %v3458
  %v5239 = vpop.f32.mrb[0].mxu0
  %v5240 = vadd.f32 %v4855, %v5239
  %v5241 = vpop.f32.mrb[0].mxu0
  %5242 = vmatprep.mubr.f32.mxu0 %v3585
  %5243 = vmatmul.mubr.f32.gmra.mrb[0].mxu0 %v3391
  %v5244 = vpop.f32.mrb[0].mxu0
  %v5245 = vadd.f32 %v4860, %v5244
  %v5246 = vpop.f32.mrb[0].mxu0
  %5247 = vmatprep.mubr.f32.mxu0 %v3583
  %5248 = vmatmul.mubr.f32.gmra.mrb[0].mxu0 %v3458
  %v5249 = vpop.f32.mrb[0].mxu0
  %v5250 = vadd.f32 %v4865, %v5249
  %v5251 = vpop.f32.mrb[0].mxu0
  %5252 = vmatprep.mubr.f32.mxu0 %v3585
  %5253 = vmatmul.mubr.f32.gmra.mrb[0].mxu0 %v3391
  %v5254 = vpop.f32.mrb[0].mxu0
  %v5255 = vadd.f32 %v4870, %v5254
  %v5256 = vpop.f32.mrb[0].mxu0
  %5257 = vmatprep.mubr.f32.mxu0 %v3588
  %5258 = vmatmul.mubr.f32.gmra.mrb[0].mxu0 %v3459
  %v5259 = vpop.f32.mrb[0].mxu0
  %v5260 = vadd.f32 %v4875, %v5259
  %v5261 = vpop.f32.mrb[0].mxu0
  %5262 = vmatprep.mubr.f32.mxu0 %v3590
  %5263 = vmatmul.mubr.f32.gmra.mrb[0].mxu0 %v3394
  %v5264 = vpop.f32.mrb[0].mxu0
  %v5265 = vadd.f32 %v4880, %v5264
  %v5266 = vpop.f32.mrb[0].mxu0
  %5267 = vmatprep.mubr.f32.mxu0 %v3588
  %5268 = vmatmul.mubr.f32.gmra.mrb[0].mxu0 %v3459
  %v5269 = vpop.f32.mrb[0].mxu0
  %v5270 = vadd.f32 %v4885, %v5269
  %v5271 = vpop.f32.mrb[0].mxu0
  %5272 = vmatprep.mubr.f32.mxu0 %v3590
  %5273 = vmatmul.mubr.f32.gmra.mrb[0].mxu0 %v3394
  %v5274 = vpop.f32.mrb[0].mxu0
  %v5275 = vadd.f32 %v4890, %v5274
  %v5276 = vpop.f32.mrb[0].mxu0
  %5277 = vmatprep.mubr.f32.mxu0 %v3509
  %5278 = vmatmul.mubr.f32.gmra.mrb[0].mxu0 %v1704
  %v5279 = vpop.f32.mrb[0].mxu0
  %v5280 = vadd.f32 %v4895, %v5279
  %v5281 = vpop.f32.mrb[0].mxu0
  %5282 = vmatprep.mubr.f32.mxu0 %v3510
  %5283 = vmatmul.mubr.f32.gmra.mrb[0].mxu0 %v3346
  %v5284 = vpop.f32.mrb[0].mxu0
  %v5285 = vadd.f32 %v4900, %v5284
  %v5286 = vpop.f32.mrb[0].mxu0
  %5287 = vdwg.mxu0
  %5288 = vmatprep.subr.mxu0 0.0
  %5289 = vmatpush1.msra.mxu0 %v3297
  %5290 = vmatprep.subr.mxu0 0.0
  %5291 = vmatpush1.msra.mxu0 %v3298
  %5292 = vmatprep.subr.mxu0 0.0
  %5293 = vmatpush1.msra.mxu0 %v3299
  %5294 = vmatprep.subr.mxu0 0.0
  %5295 = vmatpush1.msra.mxu0 %v3300
  %5296 = vmatprep.subr.mxu0 0.0
  %5297 = vmatpush1.msra.mxu0 %v3301
  %5298 = vmatprep.subr.mxu0 0.0
  %5299 = vmatpush1.msra.mxu0 %v3302
  %5300 = vmatprep.subr.mxu0 0.0
  %5301 = vmatpush1.msra.mxu0 %v3303
  %5302 = vmatprep.subr.mxu0 0.0
  %5303 = vmatpush1.msra.mxu0 %v3304
  %5304 = vmatprep.subr.mxu0 0.0
  %5305 = vmatpush1.msra.mxu0 %v3305
  %5306 = vmatprep.subr.mxu0 0.0
  %5307 = vmatpush1.msra.mxu0 %v3306
  %5308 = vmatprep.subr.mxu0 0.0
  %5309 = vmatpush1.msra.mxu0 %v3307
  %5310 = vmatprep.subr.mxu0 0.0
  %5311 = vmatpush1.msra.mxu0 %v3308
  %5312 = vmatprep.subr.mxu0 0.0
  %5313 = vmatpush1.msra.mxu0 %v3309
  %5314 = vmatprep.subr.mxu0 0.0
  %5315 = vmatpush1.msra.mxu0 %v3310
  %5316 = vmatprep.subr.mxu0 0.0
  %5317 = vmatpush1.msra.mxu0 %v3311
  %5318 = vmatprep.subr.mxu0 0.0
  %5319 = vmatpush1.msra.mxu0 %v3312
  %5320 = vmatprep.subr.mxu0 0.0
  %5321 = vmatpush1.msra.mxu0 0.0
  %5322 = vmatprep.subr.mxu0 0.0
  %5323 = vmatpush1.msra.mxu0 0.0
  %5324 = vmatprep.subr.mxu0 0.0
  %5325 = vmatpush1.msra.mxu0 0.0
  %5326 = vmatprep.subr.mxu0 0.0
  %5327 = vmatpush1.msra.mxu0 0.0
  %5328 = vmatprep.subr.mxu0 0.0
  %5329 = vmatpush1.msra.mxu0 0.0
  %5330 = vmatprep.subr.mxu0 0.0
  %5331 = vmatpush1.msra.mxu0 0.0
  %5332 = vmatprep.subr.mxu0 0.0
  %5333 = vmatpush1.msra.mxu0 0.0
  %5334 = vmatprep.subr.mxu0 0.0
  %5335 = vmatpush1.msra.mxu0 0.0
  %5336 = vmatprep.subr.mxu0 0.0
  %5337 = vmatpush1.msra.mxu0 0.0
  %5338 = vmatprep.subr.mxu0 0.0
  %5339 = vmatpush1.msra.mxu0 0.0
  %5340 = vmatprep.subr.mxu0 0.0
  %5341 = vmatpush1.msra.mxu0 0.0
  %5342 = vmatprep.subr.mxu0 0.0
  %5343 = vmatpush1.msra.mxu0 0.0
  %5344 = vmatprep.subr.mxu0 0.0
  %5345 = vmatpush1.msra.mxu0 0.0
  %5346 = vmatprep.subr.mxu0 0.0
  %5347 = vmatpush1.msra.mxu0 0.0
  %5348 = vmatprep.subr.mxu0 0.0
  %5349 = vmatpush1.msra.mxu0 0.0
  %5350 = vmatprep.subr.mxu0 0.0
  %5351 = vmatpush1.msra.mxu0 0.0
  %5352 = vmatprep.mubr.f32.mxu0 0.0
  %5353 = vmatmul.mubr.f32.gmra.mrb[0].mxu0 %v3630
  %v5354 = vpop.f32.mrb[0].mxu0
  %v5355 = vadd.f32 %v4970, %v5354
  %v5356 = vpop.f32.mrb[0].mxu0
  %5357 = vmatprep.mubr.f32.mxu0 0.0
  %5358 = vmatmul.mubr.f32.gmra.mrb[0].mxu0 %v3632
  %v5359 = vpop.f32.mrb[0].mxu0
  %v5360 = vadd.f32 %v4975, %v5359
  %v5361 = vpop.f32.mrb[0].mxu0
  %5362 = vmatprep.mubr.f32.mxu0 0.0
  %5363 = vmatmul.mubr.f32.gmra.mrb[0].mxu0 %v3635
  %v5364 = vpop.f32.mrb[0].mxu0
  %v5365 = vadd.f32 %v4980, %v5364
  %v5366 = vpop.f32.mrb[0].mxu0
  %5367 = vmatprep.mubr.f32.mxu0 0.0
  %5368 = vmatmul.mubr.f32.gmra.mrb[0].mxu0 %v3637
  %v5369 = vpop.f32.mrb[0].mxu0
  %v5370 = vadd.f32 %v4985, %v5369
  %v5371 = vpop.f32.mrb[0].mxu0
  %5372 = vmatprep.mubr.f32.mxu0 0.0
  %5373 = vmatmul.mubr.f32.gmra.mrb[0].mxu0 %v3635
  %v5374 = vpop.f32.mrb[0].mxu0
  %v5375 = vadd.f32 %v4990, %v5374
  %v5376 = vpop.f32.mrb[0].mxu0
  %5377 = vmatprep.mubr.f32.mxu0 0.0
  %5378 = vmatmul.mubr.f32.gmra.mrb[0].mxu0 %v3637
  %v5379 = vpop.f32.mrb[0].mxu0
  %v5380 = vadd.f32 %v4995, %v5379
  %v5381 = vpop.f32.mrb[0].mxu0
  %5382 = vmatprep.mubr.f32.mxu0 0.0
  %5383 = vmatmul.mubr.f32.gmra.mrb[0].mxu0 %v3640
  %v5384 = vpop.f32.mrb[0].mxu0
  %v5385 = vadd.f32 %v5000, %v5384
  %v5386 = vpop.f32.mrb[0].mxu0
  %5387 = vmatprep.mubr.f32.mxu0 0.0
  %5388 = vmatmul.mubr.f32.gmra.mrb[0].mxu0 %v3642
  %v5389 = vpop.f32.mrb[0].mxu0
  %v5390 = vadd.f32 %v5005, %v5389
  %v5391 = vpop.f32.mrb[0].mxu0
  %5392 = vmatprep.mubr.f32.mxu0 0.0
  %5393 = vmatmul.mubr.f32.gmra.mrb[0].mxu0 %v3640
  %v5394 = vpop.f32.mrb[0].mxu0
  %v5395 = vadd.f32 %v5010, %v5394
  %v5396 = vpop.f32.mrb[0].mxu0
  %5397 = vmatprep.mubr.f32.mxu0 0.0
  %5398 = vmatmul.mubr.f32.gmra.mrb[0].mxu0 %v3642
  %v5399 = vpop.f32.mrb[0].mxu0
  %v5400 = vadd.f32 %v5015, %v5399
  %v5401 = vpop.f32.mrb[0].mxu0
  %5402 = vmatprep.mubr.f32.mxu0 0.0
  %5403 = vmatmul.mubr.f32.gmra.mrb[0].mxu0 %v3645
  %v5404 = vpop.f32.mrb[0].mxu0
  %v5405 = vadd.f32 %v5020, %v5404
  %v5406 = vpop.f32.mrb[0].mxu0
  %5407 = vmatprep.mubr.f32.mxu0 0.0
  %5408 = vmatmul.mubr.f32.gmra.mrb[0].mxu0 %v3647
  %v5409 = vpop.f32.mrb[0].mxu0
  %v5410 = vadd.f32 %v5025, %v5409
  %v5411 = vpop.f32.mrb[0].mxu0
  %5412 = vmatprep.mubr.f32.mxu0 0.0
  %5413 = vmatmul.mubr.f32.gmra.mrb[0].mxu0 %v3645
  %v5414 = vpop.f32.mrb[0].mxu0
  %v5415 = vadd.f32 %v5030, %v5414
  %v5416 = vpop.f32.mrb[0].mxu0
  %5417 = vmatprep.mubr.f32.mxu0 0.0
  %5418 = vmatmul.mubr.f32.gmra.mrb[0].mxu0 %v3647
  %v5419 = vpop.f32.mrb[0].mxu0
  %v5420 = vadd.f32 %v5035, %v5419
  %v5421 = vpop.f32.mrb[0].mxu0
  %5422 = vmatprep.mubr.f32.mxu0 0.0
  %5423 = vmatmul.mubr.f32.gmra.mrb[0].mxu0 %v3650
  %v5424 = vpop.f32.mrb[0].mxu0
  %v5425 = vadd.f32 %v5040, %v5424
  %v5426 = vpop.f32.mrb[0].mxu0
  %5427 = vmatprep.mubr.f32.mxu0 0.0
  %5428 = vmatmul.mubr.f32.gmra.mrb[0].mxu0 %v3652
  %v5429 = vpop.f32.mrb[0].mxu0
  %v5430 = vadd.f32 %v5045, %v5429
  %v5431 = vpop.f32.mrb[0].mxu0
  %5432 = vmatprep.mubr.f32.mxu0 0.0
  %5433 = vmatmul.mubr.f32.gmra.mrb[0].mxu0 %v3650
  %v5434 = vpop.f32.mrb[0].mxu0
  %v5435 = vadd.f32 %v5050, %v5434
  %v5436 = vpop.f32.mrb[0].mxu0
  %5437 = vmatprep.mubr.f32.mxu0 0.0
  %5438 = vmatmul.mubr.f32.gmra.mrb[0].mxu0 %v3652
  %v5439 = vpop.f32.mrb[0].mxu0
  %v5440 = vadd.f32 %v5055, %v5439
  %v5441 = vpop.f32.mrb[0].mxu0
  %5442 = vmatprep.mubr.f32.mxu0 0.0
  %5443 = vmatmul.mubr.f32.gmra.mrb[0].mxu0 %v3655
  %v5444 = vpop.f32.mrb[0].mxu0
  %v5445 = vadd.f32 %v5060, %v5444
  %v5446 = vpop.f32.mrb[0].mxu0
  %5447 = vmatprep.mubr.f32.mxu0 0.0
  %5448 = vmatmul.mubr.f32.gmra.mrb[0].mxu0 %v3657
  %v5449 = vpop.f32.mrb[0].mxu0
  %v5450 = vadd.f32 %v5065, %v5449
  %v5451 = vpop.f32.mrb[0].mxu0
  %5452 = vmatprep.mubr.f32.mxu0 0.0
  %5453 = vmatmul.mubr.f32.gmra.mrb[0].mxu0 %v3655
  %v5454 = vpop.f32.mrb[0].mxu0
  %v5455 = vadd.f32 %v5070, %v5454
  %v5456 = vpop.f32.mrb[0].mxu0
  %5457 = vmatprep.mubr.f32.mxu0 0.0
  %5458 = vmatmul.mubr.f32.gmra.mrb[0].mxu0 %v3657
  %v5459 = vpop.f32.mrb[0].mxu0
  %v5460 = vadd.f32 %v5075, %v5459
  %v5461 = vpop.f32.mrb[0].mxu0
  %5462 = vmatprep.mubr.f32.mxu0 0.0
  %5463 = vmatmul.mubr.f32.gmra.mrb[0].mxu0 %v3660
  %v5464 = vpop.f32.mrb[0].mxu0
  %v5465 = vadd.f32 %v5080, %v5464
  %v5466 = vpop.f32.mrb[0].mxu0
  %5467 = vmatprep.mubr.f32.mxu0 0.0
  %5468 = vmatmul.mubr.f32.gmra.mrb[0].mxu0 %v3662
  %v5469 = vpop.f32.mrb[0].mxu0
  %v5470 = vadd.f32 %v5085, %v5469
  %v5471 = vpop.f32.mrb[0].mxu0
  %5472 = vmatprep.mubr.f32.mxu0 0.0
  %5473 = vmatmul.mubr.f32.gmra.mrb[0].mxu0 %v3660
  %v5474 = vpop.f32.mrb[0].mxu0
  %v5475 = vadd.f32 %v5090, %v5474
  %v5476 = vpop.f32.mrb[0].mxu0
  %5477 = vmatprep.mubr.f32.mxu0 0.0
  %5478 = vmatmul.mubr.f32.gmra.mrb[0].mxu0 %v3662
  %v5479 = vpop.f32.mrb[0].mxu0
  %v5480 = vadd.f32 %v5095, %v5479
  %v5481 = vpop.f32.mrb[0].mxu0
  %5482 = vmatprep.mubr.f32.mxu0 0.0
  %5483 = vmatmul.mubr.f32.gmra.mrb[0].mxu0 %v3665
  %v5484 = vpop.f32.mrb[0].mxu0
  %v5485 = vadd.f32 %v5100, %v5484
  %v5486 = vpop.f32.mrb[0].mxu0
  %5487 = vmatprep.mubr.f32.mxu0 0.0
  %5488 = vmatmul.mubr.f32.gmra.mrb[0].mxu0 %v3667
  %v5489 = vpop.f32.mrb[0].mxu0
  %v5490 = vadd.f32 %v5105, %v5489
  %v5491 = vpop.f32.mrb[0].mxu0
  %5492 = vmatprep.mubr.f32.mxu0 0.0
  %5493 = vmatmul.mubr.f32.gmra.mrb[0].mxu0 %v3665
  %v5494 = vpop.f32.mrb[0].mxu0
  %v5495 = vadd.f32 %v5110, %v5494
  %v5496 = vpop.f32.mrb[0].mxu0
  %5497 = vmatprep.mubr.f32.mxu0 0.0
  %5498 = vmatmul.mubr.f32.gmra.mrb[0].mxu0 %v3667
  %v5499 = vpop.f32.mrb[0].mxu0
  %v5500 = vadd.f32 %v5115, %v5499
  %v5501 = vpop.f32.mrb[0].mxu0
  %5502 = vmatprep.mubr.f32.mxu0 0.0
  %5503 = vmatmul.mubr.f32.gmra.mrb[0].mxu0 %v3626
  %v5504 = vpop.f32.mrb[0].mxu0
  %v5505 = vadd.f32 %v5120, %v5504
  %v5506 = vpop.f32.mrb[0].mxu0
  %5507 = vmatprep.mubr.f32.mxu0 0.0
  %5508 = vmatmul.mubr.f32.gmra.mrb[0].mxu0 %v3627
  %v5509 = vpop.f32.mrb[0].mxu0
  %v5510 = vadd.f32 %v5125, %v5509
  %v5511 = vpop.f32.mrb[0].mxu0
  %5512 = vmatprep.mubr.f32.mxu0 0.0
  %5513 = vmatmul.mubr.f32.gmra.mrb[0].mxu0 %v3670
  %v5514 = vpop.f32.mrb[0].mxu0
  %v5515 = vadd.f32 %v5130, %v5514
  %v5516 = vpop.f32.mrb[0].mxu0
  %5517 = vmatprep.mubr.f32.mxu0 0.0
  %5518 = vmatmul.mubr.f32.gmra.mrb[0].mxu0 %v3672
  %v5519 = vpop.f32.mrb[0].mxu0
  %v5520 = vadd.f32 %v5135, %v5519
  %v5521 = vpop.f32.mrb[0].mxu0
  %5522 = vmatprep.mubr.f32.mxu0 0.0
  %5523 = vmatmul.mubr.f32.gmra.mrb[0].mxu0 %v3675
  %v5524 = vpop.f32.mrb[0].mxu0
  %v5525 = vadd.f32 %v5140, %v5524
  %v5526 = vpop.f32.mrb[0].mxu0
  %5527 = vmatprep.mubr.f32.mxu0 0.0
  %5528 = vmatmul.mubr.f32.gmra.mrb[0].mxu0 %v3677
  %v5529 = vpop.f32.mrb[0].mxu0
  %v5530 = vadd.f32 %v5145, %v5529
  %v5531 = vpop.f32.mrb[0].mxu0
  %5532 = vmatprep.mubr.f32.mxu0 0.0
  %5533 = vmatmul.mubr.f32.gmra.mrb[0].mxu0 %v3675
  %v5534 = vpop.f32.mrb[0].mxu0
  %v5535 = vadd.f32 %v5150, %v5534
  %v5536 = vpop.f32.mrb[0].mxu0
  %5537 = vmatprep.mubr.f32.mxu0 0.0
  %5538 = vmatmul.mubr.f32.gmra.mrb[0].mxu0 %v3677
  %v5539 = vpop.f32.mrb[0].mxu0
  %v5540 = vadd.f32 %v5155, %v5539
  %v5541 = vpop.f32.mrb[0].mxu0
  %5542 = vmatprep.mubr.f32.mxu0 0.0
  %5543 = vmatmul.mubr.f32.gmra.mrb[0].mxu0 %v3680
  %v5544 = vpop.f32.mrb[0].mxu0
  %v5545 = vadd.f32 %v5160, %v5544
  %v5546 = vpop.f32.mrb[0].mxu0
  %5547 = vmatprep.mubr.f32.mxu0 0.0
  %5548 = vmatmul.mubr.f32.gmra.mrb[0].mxu0 %v3682
  %v5549 = vpop.f32.mrb[0].mxu0
  %v5550 = vadd.f32 %v5165, %v5549
  %v5551 = vpop.f32.mrb[0].mxu0
  %5552 = vmatprep.mubr.f32.mxu0 0.0
  %5553 = vmatmul.mubr.f32.gmra.mrb[0].mxu0 %v3680
  %v5554 = vpop.f32.mrb[0].mxu0
  %v5555 = vadd.f32 %v5170, %v5554
  %v5556 = vpop.f32.mrb[0].mxu0
  %5557 = vmatprep.mubr.f32.mxu0 0.0
  %5558 = vmatmul.mubr.f32.gmra.mrb[0].mxu0 %v3682
  %v5559 = vpop.f32.mrb[0].mxu0
  %v5560 = vadd.f32 %v5175, %v5559
  %v5561 = vpop.f32.mrb[0].mxu0
  %5562 = vmatprep.mubr.f32.mxu0 0.0
  %5563 = vmatmul.mubr.f32.gmra.mrb[0].mxu0 %v3685
  %v5564 = vpop.f32.mrb[0].mxu0
  %v5565 = vadd.f32 %v5180, %v5564
  %v5566 = vpop.f32.mrb[0].mxu0
  %5567 = vmatprep.mubr.f32.mxu0 0.0
  %5568 = vmatmul.mubr.f32.gmra.mrb[0].mxu0 %v3687
  %v5569 = vpop.f32.mrb[0].mxu0
  %v5570 = vadd.f32 %v5185, %v5569
  %v5571 = vpop.f32.mrb[0].mxu0
  %5572 = vmatprep.mubr.f32.mxu0 0.0
  %5573 = vmatmul.mubr.f32.gmra.mrb[0].mxu0 %v3685
  %v5574 = vpop.f32.mrb[0].mxu0
  %v5575 = vadd.f32 %v5190, %v5574
  %v5576 = vpop.f32.mrb[0].mxu0
  %5577 = vmatprep.mubr.f32.mxu0 0.0
  %5578 = vmatmul.mubr.f32.gmra.mrb[0].mxu0 %v3687
  %v5579 = vpop.f32.mrb[0].mxu0
  %v5580 = vadd.f32 %v5195, %v5579
  %v5581 = vpop.f32.mrb[0].mxu0
  %5582 = vmatprep.mubr.f32.mxu0 0.0
  %5583 = vmatmul.mubr.f32.gmra.mrb[0].mxu0 %v3690
  %v5584 = vpop.f32.mrb[0].mxu0
  %v5585 = vadd.f32 %v5200, %v5584
  %v5586 = vpop.f32.mrb[0].mxu0
  %5587 = vmatprep.mubr.f32.mxu0 0.0
  %5588 = vmatmul.mubr.f32.gmra.mrb[0].mxu0 %v3692
  %v5589 = vpop.f32.mrb[0].mxu0
  %v5590 = vadd.f32 %v5205, %v5589
  %v5591 = vpop.f32.mrb[0].mxu0
  %5592 = vmatprep.mubr.f32.mxu0 0.0
  %5593 = vmatmul.mubr.f32.gmra.mrb[0].mxu0 %v3690
  %v5594 = vpop.f32.mrb[0].mxu0
  %v5595 = vadd.f32 %v5210, %v5594
  %v5596 = vpop.f32.mrb[0].mxu0
  %5597 = vmatprep.mubr.f32.mxu0 0.0
  %5598 = vmatmul.mubr.f32.gmra.mrb[0].mxu0 %v3692
  %v5599 = vpop.f32.mrb[0].mxu0
  %v5600 = vadd.f32 %v5215, %v5599
  %v5601 = vpop.f32.mrb[0].mxu0
  %5602 = vmatprep.mubr.f32.mxu0 0.0
  %5603 = vmatmul.mubr.f32.gmra.mrb[0].mxu0 %v3695
  %v5604 = vpop.f32.mrb[0].mxu0
  %v5605 = vadd.f32 %v5220, %v5604
  %v5606 = vpop.f32.mrb[0].mxu0
  %5607 = vmatprep.mubr.f32.mxu0 0.0
  %5608 = vmatmul.mubr.f32.gmra.mrb[0].mxu0 %v3697
  %v5609 = vpop.f32.mrb[0].mxu0
  %v5610 = vadd.f32 %v5225, %v5609
  %v5611 = vpop.f32.mrb[0].mxu0
  %5612 = vmatprep.mubr.f32.mxu0 0.0
  %5613 = vmatmul.mubr.f32.gmra.mrb[0].mxu0 %v3695
  %v5614 = vpop.f32.mrb[0].mxu0
  %v5615 = vadd.f32 %v5230, %v5614
  %v5616 = vpop.f32.mrb[0].mxu0
  %5617 = vmatprep.mubr.f32.mxu0 0.0
  %5618 = vmatmul.mubr.f32.gmra.mrb[0].mxu0 %v3697
  %v5619 = vpop.f32.mrb[0].mxu0
  %v5620 = vadd.f32 %v5235, %v5619
  %v5621 = vpop.f32.mrb[0].mxu0
  %5622 = vmatprep.mubr.f32.mxu0 0.0
  %5623 = vmatmul.mubr.f32.gmra.mrb[0].mxu0 %v3700
  %v5624 = vpop.f32.mrb[0].mxu0
  %v5625 = vadd.f32 %v5240, %v5624
  %v5626 = vpop.f32.mrb[0].mxu0
  %5627 = vmatprep.mubr.f32.mxu0 0.0
  %5628 = vmatmul.mubr.f32.gmra.mrb[0].mxu0 %v3702
  %v5629 = vpop.f32.mrb[0].mxu0
  %v5630 = vadd.f32 %v5245, %v5629
  %v5631 = vpop.f32.mrb[0].mxu0
  %5632 = vmatprep.mubr.f32.mxu0 0.0
  %5633 = vmatmul.mubr.f32.gmra.mrb[0].mxu0 %v3700
  %v5634 = vpop.f32.mrb[0].mxu0
  %v5635 = vadd.f32 %v5250, %v5634
  %v5636 = vpop.f32.mrb[0].mxu0
  %5637 = vmatprep.mubr.f32.mxu0 0.0
  %5638 = vmatmul.mubr.f32.gmra.mrb[0].mxu0 %v3702
  %v5639 = vpop.f32.mrb[0].mxu0
  %v5640 = vadd.f32 %v5255, %v5639
  %v5641 = vpop.f32.mrb[0].mxu0
  %5642 = vmatprep.mubr.f32.mxu0 0.0
  %5643 = vmatmul.mubr.f32.gmra.mrb[0].mxu0 %v3705
  %v5644 = vpop.f32.mrb[0].mxu0
  %v5645 = vadd.f32 %v5260, %v5644
  %v5646 = vpop.f32.mrb[0].mxu0
  %5647 = vmatprep.mubr.f32.mxu0 0.0
  %5648 = vmatmul.mubr.f32.gmra.mrb[0].mxu0 %v3707
  %v5649 = vpop.f32.mrb[0].mxu0
  %v5650 = vadd.f32 %v5265, %v5649
  %v5651 = vpop.f32.mrb[0].mxu0
  %5652 = vmatprep.mubr.f32.mxu0 0.0
  %5653 = vmatmul.mubr.f32.gmra.mrb[0].mxu0 %v3705
  %v5654 = vpop.f32.mrb[0].mxu0
  %v5655 = vadd.f32 %v5270, %v5654
  %v5656 = vpop.f32.mrb[0].mxu0
  %5657 = vmatprep.mubr.f32.mxu0 0.0
  %5658 = vmatmul.mubr.f32.gmra.mrb[0].mxu0 %v3707
  %v5659 = vpop.f32.mrb[0].mxu0
  %v5660 = vadd.f32 %v5275, %v5659
  %v5661 = vpop.f32.mrb[0].mxu0
  %5662 = vmatprep.mubr.f32.mxu0 0.0
  %5663 = vmatmul.mubr.f32.gmra.mrb[0].mxu0 %v3626
  %v5664 = vpop.f32.mrb[0].mxu0
  %v5665 = vadd.f32 %v5280, %v5664
  %v5666 = vpop.f32.mrb[0].mxu0
  %5667 = vmatprep.mubr.f32.mxu0 0.0
  %5668 = vmatmul.mubr.f32.gmra.mrb[0].mxu0 %v3627
  %v5669 = vpop.f32.mrb[0].mxu0
  %v5670 = vadd.f32 %v5285, %v5669
  %v5671 = vpop.f32.mrb[0].mxu0
  %5672 = vdwg.mxu0
  %v5673 = vld [vmem:[%s11] sm:$0x1]
  %v5674 = vld [vmem:[%s12] sm:$0x1]
  %vm5675 = vcmask 523264
  %v5676 = vsel %vm5675, %v5355, 0.0
  %v5677 = vsel %vm5675, %v5360, 0.0
  %v5678 = vadd.f32 %v5676, %v5677
  %v5679 = vsel %vm5675, %v5365, 0.0
  %v5680 = vadd.f32 %v5678, %v5679
  %v5681 = vsel %vm5675, %v5370, 0.0
  %v5682 = vadd.f32 %v5680, %v5681
  %v5683 = vsel %vm5675, %v5375, 0.0
  %v5684 = vadd.f32 %v5682, %v5683
  %v5685 = vsel %vm5675, %v5380, 0.0
  %v5686 = vadd.f32 %v5684, %v5685
  %v5687 = vsel %vm5675, %v5385, 0.0
  %v5688 = vadd.f32 %v5686, %v5687
  %v5689 = vsel %vm5675, %v5390, 0.0
  %v5690 = vadd.f32 %v5688, %v5689
  %v5691 = vsel %vm5675, %v5395, 0.0
  %v5692 = vadd.f32 %v5690, %v5691
  %v5693 = vsel %vm5675, %v5400, 0.0
  %v5694 = vadd.f32 %v5692, %v5693
  %v5695 = vsel %vm5675, %v5405, 0.0
  %v5696 = vadd.f32 %v5694, %v5695
  %v5697 = vsel %vm5675, %v5410, 0.0
  %v5698 = vadd.f32 %v5696, %v5697
  %v5699 = vsel %vm5675, %v5415, 0.0
  %v5700 = vadd.f32 %v5698, %v5699
  %v5701 = vsel %vm5675, %v5420, 0.0
  %v5702 = vadd.f32 %v5700, %v5701
  %v5703 = vsel %vm5675, %v5425, 0.0
  %v5704 = vadd.f32 %v5702, %v5703
  %v5705 = vsel %vm5675, %v5430, 0.0
  %v5706 = vadd.f32 %v5704, %v5705
  %v5707 = vsel %vm5675, %v5435, 0.0
  %v5708 = vadd.f32 %v5706, %v5707
  %v5709 = vsel %vm5675, %v5440, 0.0
  %v5710 = vadd.f32 %v5708, %v5709
  %v5711 = vsel %vm5675, %v5445, 0.0
  %v5712 = vadd.f32 %v5710, %v5711
  %v5713 = vsel %vm5675, %v5450, 0.0
  %v5714 = vadd.f32 %v5712, %v5713
  %v5715 = vsel %vm5675, %v5455, 0.0
  %v5716 = vadd.f32 %v5714, %v5715
  %v5717 = vsel %vm5675, %v5460, 0.0
  %v5718 = vadd.f32 %v5716, %v5717
  %v5719 = vsel %vm5675, %v5465, 0.0
  %v5720 = vadd.f32 %v5718, %v5719
  %v5721 = vsel %vm5675, %v5470, 0.0
  %v5722 = vadd.f32 %v5720, %v5721
  %v5723 = vsel %vm5675, %v5475, 0.0
  %v5724 = vadd.f32 %v5722, %v5723
  %v5725 = vsel %vm5675, %v5480, 0.0
  %v5726 = vadd.f32 %v5724, %v5725
  %v5727 = vsel %vm5675, %v5485, 0.0
  %v5728 = vadd.f32 %v5726, %v5727
  %v5729 = vsel %vm5675, %v5490, 0.0
  %v5730 = vadd.f32 %v5728, %v5729
  %v5731 = vsel %vm5675, %v5495, 0.0
  %v5732 = vadd.f32 %v5730, %v5731
  %v5733 = vsel %vm5675, %v5500, 0.0
  %v5734 = vadd.f32 %v5732, %v5733
  %v5735 = vsel %vm5675, %v5505, 0.0
  %v5736 = vadd.f32 %v5734, %v5735
  %v5737 = vsel %vm5675, %v5510, 0.0
  %v5738 = vadd.f32 %v5736, %v5737
  %v5739 = vsel %vm5675, %v5515, 0.0
  %v5740 = vadd.f32 %v5738, %v5739
  %v5741 = vsel %vm5675, %v5520, 0.0
  %v5742 = vadd.f32 %v5740, %v5741
  %v5743 = vsel %vm5675, %v5525, 0.0
  %v5744 = vadd.f32 %v5742, %v5743
  %v5745 = vsel %vm5675, %v5530, 0.0
  %v5746 = vadd.f32 %v5744, %v5745
  %v5747 = vsel %vm5675, %v5535, 0.0
  %v5748 = vadd.f32 %v5746, %v5747
  %v5749 = vsel %vm5675, %v5540, 0.0
  %v5750 = vadd.f32 %v5748, %v5749
  %v5751 = vsel %vm5675, %v5545, 0.0
  %v5752 = vadd.f32 %v5750, %v5751
  %v5753 = vsel %vm5675, %v5550, 0.0
  %v5754 = vadd.f32 %v5752, %v5753
  %v5755 = vsel %vm5675, %v5555, 0.0
  %v5756 = vadd.f32 %v5754, %v5755
  %v5757 = vsel %vm5675, %v5560, 0.0
  %v5758 = vadd.f32 %v5756, %v5757
  %v5759 = vsel %vm5675, %v5565, 0.0
  %v5760 = vadd.f32 %v5758, %v5759
  %v5761 = vsel %vm5675, %v5570, 0.0
  %v5762 = vadd.f32 %v5760, %v5761
  %v5763 = vsel %vm5675, %v5575, 0.0
  %v5764 = vadd.f32 %v5762, %v5763
  %v5765 = vsel %vm5675, %v5580, 0.0
  %v5766 = vadd.f32 %v5764, %v5765
  %v5767 = vsel %vm5675, %v5585, 0.0
  %v5768 = vadd.f32 %v5766, %v5767
  %v5769 = vsel %vm5675, %v5590, 0.0
  %v5770 = vadd.f32 %v5768, %v5769
  %v5771 = vsel %vm5675, %v5595, 0.0
  %v5772 = vadd.f32 %v5770, %v5771
  %v5773 = vsel %vm5675, %v5600, 0.0
  %v5774 = vadd.f32 %v5772, %v5773
  %v5775 = vsel %vm5675, %v5605, 0.0
  %v5776 = vadd.f32 %v5774, %v5775
  %v5777 = vsel %vm5675, %v5610, 0.0
  %v5778 = vadd.f32 %v5776, %v5777
  %v5779 = vsel %vm5675, %v5615, 0.0
  %v5780 = vadd.f32 %v5778, %v5779
  %v5781 = vsel %vm5675, %v5620, 0.0
  %v5782 = vadd.f32 %v5780, %v5781
  %v5783 = vsel %vm5675, %v5625, 0.0
  %v5784 = vadd.f32 %v5782, %v5783
  %v5785 = vsel %vm5675, %v5630, 0.0
  %v5786 = vadd.f32 %v5784, %v5785
  %v5787 = vsel %vm5675, %v5635, 0.0
  %v5788 = vadd.f32 %v5786, %v5787
  %v5789 = vsel %vm5675, %v5640, 0.0
  %v5790 = vadd.f32 %v5788, %v5789
  %v5791 = vsel %vm5675, %v5645, 0.0
  %v5792 = vadd.f32 %v5790, %v5791
  %v5793 = vsel %vm5675, %v5650, 0.0
  %v5794 = vadd.f32 %v5792, %v5793
  %v5795 = vsel %vm5675, %v5655, 0.0
  %v5796 = vadd.f32 %v5794, %v5795
  %v5797 = vsel %vm5675, %v5660, 0.0
  %v5798 = vadd.f32 %v5796, %v5797
  %v5799 = vsel %vm5675, %v5665, 0.0
  %v5800 = vadd.f32 %v5798, %v5799
  %v5801 = vsel %vm5675, %v5670, 0.0
  %v5802 = vadd.f32 %v5800, %v5801
  %v5803 = vrot.slane %v5802, 4
  %v5804 = vadd.f32 %v5802, %v5803
  %v5805 = vrot.slane %v5804, 2
  %v5806 = vadd.f32 %v5804, %v5805
  %v5807 = vrot.slane %v5806, 1
  %v5808 = vadd.f32 %v5806, %v5807
  %v5809 = vrcp.pop 512.0
  %v5810 = vmul.f32 %v5808, %v5809
  %v5811 = vmul.f32 %v5355, %v5355
  %v5812 = vmul.f32 %v5360, %v5360
  %v5813 = vmul.f32 %v5365, %v5365
  %v5814 = vmul.f32 %v5370, %v5370
  %v5815 = vmul.f32 %v5375, %v5375
  %v5816 = vmul.f32 %v5380, %v5380
  %v5817 = vmul.f32 %v5385, %v5385
  %v5818 = vmul.f32 %v5390, %v5390
  %v5819 = vmul.f32 %v5395, %v5395
  %v5820 = vmul.f32 %v5400, %v5400
  %v5821 = vmul.f32 %v5405, %v5405
  %v5822 = vmul.f32 %v5410, %v5410
  %v5823 = vmul.f32 %v5415, %v5415
  %v5824 = vmul.f32 %v5420, %v5420
  %v5825 = vmul.f32 %v5425, %v5425
  %v5826 = vmul.f32 %v5430, %v5430
  %v5827 = vmul.f32 %v5435, %v5435
  %v5828 = vmul.f32 %v5440, %v5440
  %v5829 = vmul.f32 %v5445, %v5445
  %v5830 = vmul.f32 %v5450, %v5450
  %v5831 = vmul.f32 %v5455, %v5455
  %v5832 = vmul.f32 %v5460, %v5460
  %v5833 = vmul.f32 %v5465, %v5465
  %v5834 = vmul.f32 %v5470, %v5470
  %v5835 = vmul.f32 %v5475, %v5475
  %v5836 = vmul.f32 %v5480, %v5480
  %v5837 = vmul.f32 %v5485, %v5485
  %v5838 = vmul.f32 %v5490, %v5490
  %v5839 = vmul.f32 %v5495, %v5495
  %v5840 = vmul.f32 %v5500, %v5500
  %v5841 = vmul.f32 %v5505, %v5505
  %v5842 = vmul.f32 %v5510, %v5510
  %v5843 = vmul.f32 %v5515, %v5515
  %v5844 = vmul.f32 %v5520, %v5520
  %v5845 = vmul.f32 %v5525, %v5525
  %v5846 = vmul.f32 %v5530, %v5530
  %v5847 = vmul.f32 %v5535, %v5535
  %v5848 = vmul.f32 %v5540, %v5540
  %v5849 = vmul.f32 %v5545, %v5545
  %v5850 = vmul.f32 %v5550, %v5550
  %v5851 = vmul.f32 %v5555, %v5555
  %v5852 = vmul.f32 %v5560, %v5560
  %v5853 = vmul.f32 %v5565, %v5565
  %v5854 = vmul.f32 %v5570, %v5570
  %v5855 = vmul.f32 %v5575, %v5575
  %v5856 = vmul.f32 %v5580, %v5580
  %v5857 = vmul.f32 %v5585, %v5585
  %v5858 = vmul.f32 %v5590, %v5590
  %v5859 = vmul.f32 %v5595, %v5595
  %v5860 = vmul.f32 %v5600, %v5600
  %v5861 = vmul.f32 %v5605, %v5605
  %v5862 = vmul.f32 %v5610, %v5610
  %v5863 = vmul.f32 %v5615, %v5615
  %v5864 = vmul.f32 %v5620, %v5620
  %v5865 = vmul.f32 %v5625, %v5625
  %v5866 = vmul.f32 %v5630, %v5630
  %v5867 = vmul.f32 %v5635, %v5635
  %v5868 = vmul.f32 %v5640, %v5640
  %v5869 = vmul.f32 %v5645, %v5645
  %v5870 = vmul.f32 %v5650, %v5650
  %v5871 = vmul.f32 %v5655, %v5655
  %v5872 = vmul.f32 %v5660, %v5660
  %v5873 = vmul.f32 %v5665, %v5665
  %v5874 = vmul.f32 %v5670, %v5670
  %v5875 = vsel %vm5675, %v5811, 0.0
  %v5876 = vsel %vm5675, %v5812, 0.0
  %v5877 = vadd.f32 %v5875, %v5876
  %v5878 = vsel %vm5675, %v5813, 0.0
  %v5879 = vadd.f32 %v5877, %v5878
  %v5880 = vsel %vm5675, %v5814, 0.0
  %v5881 = vadd.f32 %v5879, %v5880
  %v5882 = vsel %vm5675, %v5815, 0.0
  %v5883 = vadd.f32 %v5881, %v5882
  %v5884 = vsel %vm5675, %v5816, 0.0
  %v5885 = vadd.f32 %v5883, %v5884
  %v5886 = vsel %vm5675, %v5817, 0.0
  %v5887 = vadd.f32 %v5885, %v5886
  %v5888 = vsel %vm5675, %v5818, 0.0
  %v5889 = vadd.f32 %v5887, %v5888
  %v5890 = vsel %vm5675, %v5819, 0.0
  %v5891 = vadd.f32 %v5889, %v5890
  %v5892 = vsel %vm5675, %v5820, 0.0
  %v5893 = vadd.f32 %v5891, %v5892
  %v5894 = vsel %vm5675, %v5821, 0.0
  %v5895 = vadd.f32 %v5893, %v5894
  %v5896 = vsel %vm5675, %v5822, 0.0
  %v5897 = vadd.f32 %v5895, %v5896
  %v5898 = vsel %vm5675, %v5823, 0.0
  %v5899 = vadd.f32 %v5897, %v5898
  %v5900 = vsel %vm5675, %v5824, 0.0
  %v5901 = vadd.f32 %v5899, %v5900
  %v5902 = vsel %vm5675, %v5825, 0.0
  %v5903 = vadd.f32 %v5901, %v5902
  %v5904 = vsel %vm5675, %v5826, 0.0
  %v5905 = vadd.f32 %v5903, %v5904
  %v5906 = vsel %vm5675, %v5827, 0.0
  %v5907 = vadd.f32 %v5905, %v5906
  %v5908 = vsel %vm5675, %v5828, 0.0
  %v5909 = vadd.f32 %v5907, %v5908
  %v5910 = vsel %vm5675, %v5829, 0.0
  %v5911 = vadd.f32 %v5909, %v5910
  %v5912 = vsel %vm5675, %v5830, 0.0
  %v5913 = vadd.f32 %v5911, %v5912
  %v5914 = vsel %vm5675, %v5831, 0.0
  %v5915 = vadd.f32 %v5913, %v5914
  %v5916 = vsel %vm5675, %v5832, 0.0
  %v5917 = vadd.f32 %v5915, %v5916
  %v5918 = vsel %vm5675, %v5833, 0.0
  %v5919 = vadd.f32 %v5917, %v5918
  %v5920 = vsel %vm5675, %v5834, 0.0
  %v5921 = vadd.f32 %v5919, %v5920
  %v5922 = vsel %vm5675, %v5835, 0.0
  %v5923 = vadd.f32 %v5921, %v5922
  %v5924 = vsel %vm5675, %v5836, 0.0
  %v5925 = vadd.f32 %v5923, %v5924
  %v5926 = vsel %vm5675, %v5837, 0.0
  %v5927 = vadd.f32 %v5925, %v5926
  %v5928 = vsel %vm5675, %v5838, 0.0
  %v5929 = vadd.f32 %v5927, %v5928
  %v5930 = vsel %vm5675, %v5839, 0.0
  %v5931 = vadd.f32 %v5929, %v5930
  %v5932 = vsel %vm5675, %v5840, 0.0
  %v5933 = vadd.f32 %v5931, %v5932
  %v5934 = vsel %vm5675, %v5841, 0.0
  %v5935 = vadd.f32 %v5933, %v5934
  %v5936 = vsel %vm5675, %v5842, 0.0
  %v5937 = vadd.f32 %v5935, %v5936
  %v5938 = vsel %vm5675, %v5843, 0.0
  %v5939 = vadd.f32 %v5937, %v5938
  %v5940 = vsel %vm5675, %v5844, 0.0
  %v5941 = vadd.f32 %v5939, %v5940
  %v5942 = vsel %vm5675, %v5845, 0.0
  %v5943 = vadd.f32 %v5941, %v5942
  %v5944 = vsel %vm5675, %v5846, 0.0
  %v5945 = vadd.f32 %v5943, %v5944
  %v5946 = vsel %vm5675, %v5847, 0.0
  %v5947 = vadd.f32 %v5945, %v5946
  %v5948 = vsel %vm5675, %v5848, 0.0
  %v5949 = vadd.f32 %v5947, %v5948
  %v5950 = vsel %vm5675, %v5849, 0.0
  %v5951 = vadd.f32 %v5949, %v5950
  %v5952 = vsel %vm5675, %v5850, 0.0
  %v5953 = vadd.f32 %v5951, %v5952
  %v5954 = vsel %vm5675, %v5851, 0.0
  %v5955 = vadd.f32 %v5953, %v5954
  %v5956 = vsel %vm5675, %v5852, 0.0
  %v5957 = vadd.f32 %v5955, %v5956
  %v5958 = vsel %vm5675, %v5853, 0.0
  %v5959 = vadd.f32 %v5957, %v5958
  %v5960 = vsel %vm5675, %v5854, 0.0
  %v5961 = vadd.f32 %v5959, %v5960
  %v5962 = vsel %vm5675, %v5855, 0.0
  %v5963 = vadd.f32 %v5961, %v5962
  %v5964 = vsel %vm5675, %v5856, 0.0
  %v5965 = vadd.f32 %v5963, %v5964
  %v5966 = vsel %vm5675, %v5857, 0.0
  %v5967 = vadd.f32 %v5965, %v5966
  %v5968 = vsel %vm5675, %v5858, 0.0
  %v5969 = vadd.f32 %v5967, %v5968
  %v5970 = vsel %vm5675, %v5859, 0.0
  %v5971 = vadd.f32 %v5969, %v5970
  %v5972 = vsel %vm5675, %v5860, 0.0
  %v5973 = vadd.f32 %v5971, %v5972
  %v5974 = vsel %vm5675, %v5861, 0.0
  %v5975 = vadd.f32 %v5973, %v5974
  %v5976 = vsel %vm5675, %v5862, 0.0
  %v5977 = vadd.f32 %v5975, %v5976
  %v5978 = vsel %vm5675, %v5863, 0.0
  %v5979 = vadd.f32 %v5977, %v5978
  %v5980 = vsel %vm5675, %v5864, 0.0
  %v5981 = vadd.f32 %v5979, %v5980
  %v5982 = vsel %vm5675, %v5865, 0.0
  %v5983 = vadd.f32 %v5981, %v5982
  %v5984 = vsel %vm5675, %v5866, 0.0
  %v5985 = vadd.f32 %v5983, %v5984
  %v5986 = vsel %vm5675, %v5867, 0.0
  %v5987 = vadd.f32 %v5985, %v5986
  %v5988 = vsel %vm5675, %v5868, 0.0
  %v5989 = vadd.f32 %v5987, %v5988
  %v5990 = vsel %vm5675, %v5869, 0.0
  %v5991 = vadd.f32 %v5989, %v5990
  %v5992 = vsel %vm5675, %v5870, 0.0
  %v5993 = vadd.f32 %v5991, %v5992
  %v5994 = vsel %vm5675, %v5871, 0.0
  %v5995 = vadd.f32 %v5993, %v5994
  %v5996 = vsel %vm5675, %v5872, 0.0
  %v5997 = vadd.f32 %v5995, %v5996
  %v5998 = vsel %vm5675, %v5873, 0.0
  %v5999 = vadd.f32 %v5997, %v5998
  %v6000 = vsel %vm5675, %v5874, 0.0
  %v6001 = vadd.f32 %v5999, %v6000
  %v6002 = vrot.slane %v6001, 4
  %v6003 = vadd.f32 %v6001, %v6002
  %v6004 = vrot.slane %v6003, 2
  %v6005 = vadd.f32 %v6003, %v6004
  %v6006 = vrot.slane %v6005, 1
  %v6007 = vadd.f32 %v6005, %v6006
  %v6008 = vmul.f32 %v6007, %v5809
  %v6009 = vmul.f32 %v5810, %v5810
  %v6010 = vsub.f32 %v6008, %v6009
  %v6011 = vadd.f32 %v6010, 0.8
  %v6012 = vrsqrt.pop %v6011
  %v6013 = vmul.f32 %v5673, %v6012
  %v6014 = vmul.f32 %v5810, %v6013
  %v6015 = vsub.f32 %v5674, %v6014
  %v6017 = vlaneseq
  %v6018 = vshrl.u32 %v6017, 7
  %v6019 = vsub.s32 0, %v6018
  %v6020 = vrot.slane %v6013, %v6019
  %v6022 = vmul.f32 %v5355, %v6020
  %v6023 = vmul.f32 %v5360, %v6020
  %v6024 = vmul.f32 %v5365, %v6020
  %v6025 = vmul.f32 %v5370, %v6020
  %v6026 = vmul.f32 %v5375, %v6020
  %v6027 = vmul.f32 %v5380, %v6020
  %v6028 = vmul.f32 %v5385, %v6020
  %v6029 = vmul.f32 %v5390, %v6020
  %v6030 = vmul.f32 %v5395, %v6020
  %v6031 = vmul.f32 %v5400, %v6020
  %v6032 = vmul.f32 %v5405, %v6020
  %v6033 = vmul.f32 %v5410, %v6020
  %v6034 = vmul.f32 %v5415, %v6020
  %v6035 = vmul.f32 %v5420, %v6020
  %v6036 = vmul.f32 %v5425, %v6020
  %v6037 = vmul.f32 %v5430, %v6020
  %v6038 = vmul.f32 %v5435, %v6020
  %v6039 = vmul.f32 %v5440, %v6020
  %v6040 = vmul.f32 %v5445, %v6020
  %v6041 = vmul.f32 %v5450, %v6020
  %v6042 = vmul.f32 %v5455, %v6020
  %v6043 = vmul.f32 %v5460, %v6020
  %v6044 = vmul.f32 %v5465, %v6020
  %v6045 = vmul.f32 %v5470, %v6020
  %v6046 = vmul.f32 %v5475, %v6020
  %v6047 = vmul.f32 %v5480, %v6020
  %v6048 = vmul.f32 %v5485, %v6020
  %v6049 = vmul.f32 %v5490, %v6020
  %v6050 = vmul.f32 %v5495, %v6020
  %v6051 = vmul.f32 %v5500, %v6020
  %v6052 = vmul.f32 %v5505, %v6020
  %v6053 = vmul.f32 %v5510, %v6020
  %v6054 = vmul.f32 %v5515, %v6020
  %v6055 = vmul.f32 %v5520, %v6020
  %v6056 = vmul.f32 %v5525, %v6020
  %v6057 = vmul.f32 %v5530, %v6020
  %v6058 = vmul.f32 %v5535, %v6020
  %v6059 = vmul.f32 %v5540, %v6020
  %v6060 = vmul.f32 %v5545, %v6020
  %v6061 = vmul.f32 %v5550, %v6020
  %v6062 = vmul.f32 %v5555, %v6020
  %v6063 = vmul.f32 %v5560, %v6020
  %v6064 = vmul.f32 %v5565, %v6020
  %v6065 = vmul.f32 %v5570, %v6020
  %v6066 = vmul.f32 %v5575, %v6020
  %v6067 = vmul.f32 %v5580, %v6020
  %v6068 = vmul.f32 %v5585, %v6020
  %v6069 = vmul.f32 %v5590, %v6020
  %v6070 = vmul.f32 %v5595, %v6020
  %v6071 = vmul.f32 %v5600, %v6020
  %v6072 = vmul.f32 %v5605, %v6020
  %v6073 = vmul.f32 %v5610, %v6020
  %v6074 = vmul.f32 %v5615, %v6020
  %v6075 = vmul.f32 %v5620, %v6020
  %v6076 = vmul.f32 %v5625, %v6020
  %v6077 = vmul.f32 %v5630, %v6020
  %v6078 = vmul.f32 %v5635, %v6020
  %v6079 = vmul.f32 %v5640, %v6020
  %v6080 = vmul.f32 %v5645, %v6020
  %v6081 = vmul.f32 %v5650, %v6020
  %v6082 = vmul.f32 %v5655, %v6020
  %v6083 = vmul.f32 %v5660, %v6020
  %v6084 = vmul.f32 %v5665, %v6020
  %v6085 = vmul.f32 %v5670, %v6020
  %v6087 = vlaneseq
  %v6088 = vshrl.u32 %v6087, 7
  %v6089 = vsub.s32 0, %v6088
  %v6090 = vrot.slane %v6015, %v6089
  %v6092 = vadd.f32 %v6022, %v6090
  %v6093 = vadd.f32 %v6023, %v6090
  %v6094 = vadd.f32 %v6024, %v6090
  %v6095 = vadd.f32 %v6025, %v6090
  %v6096 = vadd.f32 %v6026, %v6090
  %v6097 = vadd.f32 %v6027, %v6090
  %v6098 = vadd.f32 %v6028, %v6090
  %v6099 = vadd.f32 %v6029, %v6090
  %v6100 = vadd.f32 %v6030, %v6090
  %v6101 = vadd.f32 %v6031, %v6090
  %v6102 = vadd.f32 %v6032, %v6090
  %v6103 = vadd.f32 %v6033, %v6090
  %v6104 = vadd.f32 %v6034, %v6090
  %v6105 = vadd.f32 %v6035, %v6090
  %v6106 = vadd.f32 %v6036, %v6090
  %v6107 = vadd.f32 %v6037, %v6090
  %v6108 = vadd.f32 %v6038, %v6090
  %v6109 = vadd.f32 %v6039, %v6090
  %v6110 = vadd.f32 %v6040, %v6090
  %v6111 = vadd.f32 %v6041, %v6090
  %v6112 = vadd.f32 %v6042, %v6090
  %v6113 = vadd.f32 %v6043, %v6090
  %v6114 = vadd.f32 %v6044, %v6090
  %v6115 = vadd.f32 %v6045, %v6090
  %v6116 = vadd.f32 %v6046, %v6090
  %v6117 = vadd.f32 %v6047, %v6090
  %v6118 = vadd.f32 %v6048, %v6090
  %v6119 = vadd.f32 %v6049, %v6090
  %v6120 = vadd.f32 %v6050, %v6090
  %v6121 = vadd.f32 %v6051, %v6090
  %v6122 = vadd.f32 %v6052, %v6090
  %v6123 = vadd.f32 %v6053, %v6090
  %v6124 = vadd.f32 %v6054, %v6090
  %v6125 = vadd.f32 %v6055, %v6090
  %v6126 = vadd.f32 %v6056, %v6090
  %v6127 = vadd.f32 %v6057, %v6090
  %v6128 = vadd.f32 %v6058, %v6090
  %v6129 = vadd.f32 %v6059, %v6090
  %v6130 = vadd.f32 %v6060, %v6090
  %v6131 = vadd.f32 %v6061, %v6090
  %v6132 = vadd.f32 %v6062, %v6090
  %v6133 = vadd.f32 %v6063, %v6090
  %v6134 = vadd.f32 %v6064, %v6090
  %v6135 = vadd.f32 %v6065, %v6090
  %v6136 = vadd.f32 %v6066, %v6090
  %v6137 = vadd.f32 %v6067, %v6090
  %v6138 = vadd.f32 %v6068, %v6090
  %v6139 = vadd.f32 %v6069, %v6090
  %v6140 = vadd.f32 %v6070, %v6090
  %v6141 = vadd.f32 %v6071, %v6090
  %v6142 = vadd.f32 %v6072, %v6090
  %v6143 = vadd.f32 %v6073, %v6090
  %v6144 = vadd.f32 %v6074, %v6090
  %v6145 = vadd.f32 %v6075, %v6090
  %v6146 = vadd.f32 %v6076, %v6090
  %v6147 = vadd.f32 %v6077, %v6090
  %v6148 = vadd.f32 %v6078, %v6090
  %v6149 = vadd.f32 %v6079, %v6090
  %v6150 = vadd.f32 %v6080, %v6090
  %v6151 = vadd.f32 %v6081, %v6090
  %v6152 = vadd.f32 %v6082, %v6090
  %v6153 = vadd.f32 %v6083, %v6090
  %v6154 = vadd.f32 %v6084, %v6090
  %v6155 = vadd.f32 %v6085, %v6090
  %vm6156 = vcmp.ge.f32.partialorder %v6092, 0.0
  %vm6157 = vcmp.ge.f32.partialorder %v6093, 0.0
  %vm6158 = vcmp.ge.f32.partialorder %v6094, 0.0
  %vm6159 = vcmp.ge.f32.partialorder %v6095, 0.0
  %vm6160 = vcmp.ge.f32.partialorder %v6096, 0.0
  %vm6161 = vcmp.ge.f32.partialorder %v6097, 0.0
  %vm6162 = vcmp.ge.f32.partialorder %v6098, 0.0
  %vm6163 = vcmp.ge.f32.partialorder %v6099, 0.0
  %vm6164 = vcmp.ge.f32.partialorder %v6100, 0.0
  %vm6165 = vcmp.ge.f32.partialorder %v6101, 0.0
  %vm6166 = vcmp.ge.f32.partialorder %v6102, 0.0
  %vm6167 = vcmp.ge.f32.partialorder %v6103, 0.0
  %vm6168 = vcmp.ge.f32.partialorder %v6104, 0.0
  %vm6169 = vcmp.ge.f32.partialorder %v6105, 0.0
  %vm6170 = vcmp.ge.f32.partialorder %v6106, 0.0
  %vm6171 = vcmp.ge.f32.partialorder %v6107, 0.0
  %vm6172 = vcmp.ge.f32.partialorder %v6108, 0.0
  %vm6173 = vcmp.ge.f32.partialorder %v6109, 0.0
  %vm6174 = vcmp.ge.f32.partialorder %v6110, 0.0
  %vm6175 = vcmp.ge.f32.partialorder %v6111, 0.0
  %vm6176 = vcmp.ge.f32.partialorder %v6112, 0.0
  %vm6177 = vcmp.ge.f32.partialorder %v6113, 0.0
  %vm6178 = vcmp.ge.f32.partialorder %v6114, 0.0
  %vm6179 = vcmp.ge.f32.partialorder %v6115, 0.0
  %vm6180 = vcmp.ge.f32.partialorder %v6116, 0.0
  %vm6181 = vcmp.ge.f32.partialorder %v6117, 0.0
  %vm6182 = vcmp.ge.f32.partialorder %v6118, 0.0
  %vm6183 = vcmp.ge.f32.partialorder %v6119, 0.0
  %vm6184 = vcmp.ge.f32.partialorder %v6120, 0.0
  %vm6185 = vcmp.ge.f32.partialorder %v6121, 0.0
  %vm6186 = vcmp.ge.f32.partialorder %v6122, 0.0
  %vm6187 = vcmp.ge.f32.partialorder %v6123, 0.0
  %vm6188 = vcmp.ge.f32.partialorder %v6124, 0.0
  %vm6189 = vcmp.ge.f32.partialorder %v6125, 0.0
  %vm6190 = vcmp.ge.f32.partialorder %v6126, 0.0
  %vm6191 = vcmp.ge.f32.partialorder %v6127, 0.0
  %vm6192 = vcmp.ge.f32.partialorder %v6128, 0.0
  %vm6193 = vcmp.ge.f32.partialorder %v6129, 0.0
  %vm6194 = vcmp.ge.f32.partialorder %v6130, 0.0
  %vm6195 = vcmp.ge.f32.partialorder %v6131, 0.0
  %vm6196 = vcmp.ge.f32.partialorder %v6132, 0.0
  %vm6197 = vcmp.ge.f32.partialorder %v6133, 0.0
  %vm6198 = vcmp.ge.f32.partialorder %v6134, 0.0
  %vm6199 = vcmp.ge.f32.partialorder %v6135, 0.0
  %vm6200 = vcmp.ge.f32.partialorder %v6136, 0.0
  %vm6201 = vcmp.ge.f32.partialorder %v6137, 0.0
  %vm6202 = vcmp.ge.f32.partialorder %v6138, 0.0
  %vm6203 = vcmp.ge.f32.partialorder %v6139, 0.0
  %vm6204 = vcmp.ge.f32.partialorder %v6140, 0.0
  %vm6205 = vcmp.ge.f32.partialorder %v6141, 0.0
  %vm6206 = vcmp.ge.f32.partialorder %v6142, 0.0
  %vm6207 = vcmp.ge.f32.partialorder %v6143, 0.0
  %vm6208 = vcmp.ge.f32.partialorder %v6144, 0.0
  %vm6209 = vcmp.ge.f32.partialorder %v6145, 0.0
  %vm6210 = vcmp.ge.f32.partialorder %v6146, 0.0
  %vm6211 = vcmp.ge.f32.partialorder %v6147, 0.0
  %vm6212 = vcmp.ge.f32.partialorder %v6148, 0.0
  %vm6213 = vcmp.ge.f32.partialorder %v6149, 0.0
  %vm6214 = vcmp.ge.f32.partialorder %v6150, 0.0
  %vm6215 = vcmp.ge.f32.partialorder %v6151, 0.0
  %vm6216 = vcmp.ge.f32.partialorder %v6152, 0.0
  %vm6217 = vcmp.ge.f32.partialorder %v6153, 0.0
  %vm6218 = vcmp.ge.f32.partialorder %v6154, 0.0
  %vm6219 = vcmp.ge.f32.partialorder %v6155, 0.0
  %v6220 = vmul.f32 %v6092, 0.2
  %v6221 = vmul.f32 %v6093, 0.2
  %v6222 = vmul.f32 %v6094, 0.2
  %v6223 = vmul.f32 %v6095, 0.2
  %v6224 = vmul.f32 %v6096, 0.2
  %v6225 = vmul.f32 %v6097, 0.2
  %v6226 = vmul.f32 %v6098, 0.2
  %v6227 = vmul.f32 %v6099, 0.2
  %v6228 = vmul.f32 %v6100, 0.2
  %v6229 = vmul.f32 %v6101, 0.2
  %v6230 = vmul.f32 %v6102, 0.2
  %v6231 = vmul.f32 %v6103, 0.2
  %v6232 = vmul.f32 %v6104, 0.2
  %v6233 = vmul.f32 %v6105, 0.2
  %v6234 = vmul.f32 %v6106, 0.2
  %v6235 = vmul.f32 %v6107, 0.2
  %v6236 = vmul.f32 %v6108, 0.2
  %v6237 = vmul.f32 %v6109, 0.2
  %v6238 = vmul.f32 %v6110, 0.2
  %v6239 = vmul.f32 %v6111, 0.2
  %v6240 = vmul.f32 %v6112, 0.2
  %v6241 = vmul.f32 %v6113, 0.2
  %v6242 = vmul.f32 %v6114, 0.2
  %v6243 = vmul.f32 %v6115, 0.2
  %v6244 = vmul.f32 %v6116, 0.2
  %v6245 = vmul.f32 %v6117, 0.2
  %v6246 = vmul.f32 %v6118, 0.2
  %v6247 = vmul.f32 %v6119, 0.2
  %v6248 = vmul.f32 %v6120, 0.2
  %v6249 = vmul.f32 %v6121, 0.2
  %v6250 = vmul.f32 %v6122, 0.2
  %v6251 = vmul.f32 %v6123, 0.2
  %v6252 = vmul.f32 %v6124, 0.2
  %v6253 = vmul.f32 %v6125, 0.2
  %v6254 = vmul.f32 %v6126, 0.2
  %v6255 = vmul.f32 %v6127, 0.2
  %v6256 = vmul.f32 %v6128, 0.2
  %v6257 = vmul.f32 %v6129, 0.2
  %v6258 = vmul.f32 %v6130, 0.2
  %v6259 = vmul.f32 %v6131, 0.2
  %v6260 = vmul.f32 %v6132, 0.2
  %v6261 = vmul.f32 %v6133, 0.2
  %v6262 = vmul.f32 %v6134, 0.2
  %v6263 = vmul.f32 %v6135, 0.2
  %v6264 = vmul.f32 %v6136, 0.2
  %v6265 = vmul.f32 %v6137, 0.2
  %v6266 = vmul.f32 %v6138, 0.2
  %v6267 = vmul.f32 %v6139, 0.2
  %v6268 = vmul.f32 %v6140, 0.2
  %v6269 = vmul.f32 %v6141, 0.2
  %v6270 = vmul.f32 %v6142, 0.2
  %v6271 = vmul.f32 %v6143, 0.2
  %v6272 = vmul.f32 %v6144, 0.2
  %v6273 = vmul.f32 %v6145, 0.2
  %v6274 = vmul.f32 %v6146, 0.2
  %v6275 = vmul.f32 %v6147, 0.2
  %v6276 = vmul.f32 %v6148, 0.2
  %v6277 = vmul.f32 %v6149, 0.2
  %v6278 = vmul.f32 %v6150, 0.2
  %v6279 = vmul.f32 %v6151, 0.2
  %v6280 = vmul.f32 %v6152, 0.2
  %v6281 = vmul.f32 %v6153, 0.2
  %v6282 = vmul.f32 %v6154, 0.2
  %v6283 = vmul.f32 %v6155, 0.2
  %v6284 = vsel %vm6156, %v6092, %v6220
  %v6285 = vsel %vm6157, %v6093, %v6221
  %v6286 = vsel %vm6158, %v6094, %v6222
  %v6287 = vsel %vm6159, %v6095, %v6223
  %v6288 = vsel %vm6160, %v6096, %v6224
  %v6289 = vsel %vm6161, %v6097, %v6225
  %v6290 = vsel %vm6162, %v6098, %v6226
  %v6291 = vsel %vm6163, %v6099, %v6227
  %v6292 = vsel %vm6164, %v6100, %v6228
  %v6293 = vsel %vm6165, %v6101, %v6229
  %v6294 = vsel %vm6166, %v6102, %v6230
  %v6295 = vsel %vm6167, %v6103, %v6231
  %v6296 = vsel %vm6168, %v6104, %v6232
  %v6297 = vsel %vm6169, %v6105, %v6233
  %v6298 = vsel %vm6170, %v6106, %v6234
  %v6299 = vsel %vm6171, %v6107, %v6235
  %v6300 = vsel %vm6172, %v6108, %v6236
  %v6301 = vsel %vm6173, %v6109, %v6237
  %v6302 = vsel %vm6174, %v6110, %v6238
  %v6303 = vsel %vm6175, %v6111, %v6239
  %v6304 = vsel %vm6176, %v6112, %v6240
  %v6305 = vsel %vm6177, %v6113, %v6241
  %v6306 = vsel %vm6178, %v6114, %v6242
  %v6307 = vsel %vm6179, %v6115, %v6243
  %v6308 = vsel %vm6180, %v6116, %v6244
  %v6309 = vsel %vm6181, %v6117, %v6245
  %v6310 = vsel %vm6182, %v6118, %v6246
  %v6311 = vsel %vm6183, %v6119, %v6247
  %v6312 = vsel %vm6184, %v6120, %v6248
  %v6313 = vsel %vm6185, %v6121, %v6249
  %v6314 = vsel %vm6186, %v6122, %v6250
  %v6315 = vsel %vm6187, %v6123, %v6251
  %v6316 = vsel %vm6188, %v6124, %v6252
  %v6317 = vsel %vm6189, %v6125, %v6253
  %v6318 = vsel %vm6190, %v6126, %v6254
  %v6319 = vsel %vm6191, %v6127, %v6255
  %v6320 = vsel %vm6192, %v6128, %v6256
  %v6321 = vsel %vm6193, %v6129, %v6257
  %v6322 = vsel %vm6194, %v6130, %v6258
  %v6323 = vsel %vm6195, %v6131, %v6259
  %v6324 = vsel %vm6196, %v6132, %v6260
  %v6325 = vsel %vm6197, %v6133, %v6261
  %v6326 = vsel %vm6198, %v6134, %v6262
  %v6327 = vsel %vm6199, %v6135, %v6263
  %v6328 = vsel %vm6200, %v6136, %v6264
  %v6329 = vsel %vm6201, %v6137, %v6265
  %v6330 = vsel %vm6202, %v6138, %v6266
  %v6331 = vsel %vm6203, %v6139, %v6267
  %v6332 = vsel %vm6204, %v6140, %v6268
  %v6333 = vsel %vm6205, %v6141, %v6269
  %v6334 = vsel %vm6206, %v6142, %v6270
  %v6335 = vsel %vm6207, %v6143, %v6271
  %v6336 = vsel %vm6208, %v6144, %v6272
  %v6337 = vsel %vm6209, %v6145, %v6273
  %v6338 = vsel %vm6210, %v6146, %v6274
  %v6339 = vsel %vm6211, %v6147, %v6275
  %v6340 = vsel %vm6212, %v6148, %v6276
  %v6341 = vsel %vm6213, %v6149, %v6277
  %v6342 = vsel %vm6214, %v6150, %v6278
  %v6343 = vsel %vm6215, %v6151, %v6279
  %v6344 = vsel %vm6216, %v6152, %v6280
  %v6345 = vsel %vm6217, %v6153, %v6281
  %v6346 = vsel %vm6218, %v6154, %v6282
  %v6347 = vsel %vm6219, %v6155, %v6283
  %v6412 = vrot.slane %v6284, 7
  %v6413 = vrot.slane %v6285, 7
  %v6414 = vsel %vm912, %v6412, %v6413
  %v6415 = vrot.slane %v6286, 7
  %v6416 = vrot.slane %v6287, 7
  %v6417 = vsel %vm912, %v6415, %v6416
  %v6418 = vrot.slane %v6288, 7
  %v6419 = vrot.slane %v6289, 7
  %v6420 = vsel %vm912, %v6418, %v6419
  %v6421 = vrot.slane %v6290, 7
  %v6422 = vrot.slane %v6291, 7
  %v6423 = vsel %vm912, %v6421, %v6422
  %v6424 = vrot.slane %v6292, 7
  %v6425 = vrot.slane %v6293, 7
  %v6426 = vsel %vm912, %v6424, %v6425
  %v6427 = vrot.slane %v6294, 7
  %v6428 = vrot.slane %v6295, 7
  %v6429 = vsel %vm912, %v6427, %v6428
  %v6430 = vrot.slane %v6296, 7
  %v6431 = vrot.slane %v6297, 7
  %v6432 = vsel %vm912, %v6430, %v6431
  %v6433 = vrot.slane %v6298, 7
  %v6434 = vrot.slane %v6299, 7
  %v6435 = vsel %vm912, %v6433, %v6434
  %v6436 = vrot.slane %v6300, 7
  %v6437 = vrot.slane %v6301, 7
  %v6438 = vsel %vm912, %v6436, %v6437
  %v6439 = vrot.slane %v6302, 7
  %v6440 = vrot.slane %v6303, 7
  %v6441 = vsel %vm912, %v6439, %v6440
  %v6442 = vrot.slane %v6304, 7
  %v6443 = vrot.slane %v6305, 7
  %v6444 = vsel %vm912, %v6442, %v6443
  %v6445 = vrot.slane %v6306, 7
  %v6446 = vrot.slane %v6307, 7
  %v6447 = vsel %vm912, %v6445, %v6446
  %v6448 = vrot.slane %v6308, 7
  %v6449 = vrot.slane %v6309, 7
  %v6450 = vsel %vm912, %v6448, %v6449
  %v6451 = vrot.slane %v6310, 7
  %v6452 = vrot.slane %v6311, 7
  %v6453 = vsel %vm912, %v6451, %v6452
  %v6454 = vrot.slane %v6312, 7
  %v6455 = vrot.slane %v6313, 7
  %v6456 = vsel %vm912, %v6454, %v6455
  %v6457 = vrot.slane %v6314, 7
  %v6458 = vrot.slane %v6315, 7
  %v6459 = vsel %vm912, %v6457, %v6458
  %v6460 = vrot.slane %v6316, 7
  %v6461 = vrot.slane %v6317, 7
  %v6462 = vsel %vm912, %v6460, %v6461
  %v6463 = vrot.slane %v6318, 7
  %v6464 = vrot.slane %v6319, 7
  %v6465 = vsel %vm912, %v6463, %v6464
  %v6466 = vrot.slane %v6320, 7
  %v6467 = vrot.slane %v6321, 7
  %v6468 = vsel %vm912, %v6466, %v6467
  %v6469 = vrot.slane %v6322, 7
  %v6470 = vrot.slane %v6323, 7
  %v6471 = vsel %vm912, %v6469, %v6470
  %v6472 = vrot.slane %v6324, 7
  %v6473 = vrot.slane %v6325, 7
  %v6474 = vsel %vm912, %v6472, %v6473
  %v6475 = vrot.slane %v6326, 7
  %v6476 = vrot.slane %v6327, 7
  %v6477 = vsel %vm912, %v6475, %v6476
  %v6478 = vrot.slane %v6328, 7
  %v6479 = vrot.slane %v6329, 7
  %v6480 = vsel %vm912, %v6478, %v6479
  %v6481 = vrot.slane %v6330, 7
  %v6482 = vrot.slane %v6331, 7
  %v6483 = vsel %vm912, %v6481, %v6482
  %v6484 = vrot.slane %v6332, 7
  %v6485 = vrot.slane %v6333, 7
  %v6486 = vsel %vm912, %v6484, %v6485
  %v6487 = vrot.slane %v6334, 7
  %v6488 = vrot.slane %v6335, 7
  %v6489 = vsel %vm912, %v6487, %v6488
  %v6490 = vrot.slane %v6336, 7
  %v6491 = vrot.slane %v6337, 7
  %v6492 = vsel %vm912, %v6490, %v6491
  %v6493 = vrot.slane %v6338, 7
  %v6494 = vrot.slane %v6339, 7
  %v6495 = vsel %vm912, %v6493, %v6494
  %v6496 = vrot.slane %v6340, 7
  %v6497 = vrot.slane %v6341, 7
  %v6498 = vsel %vm912, %v6496, %v6497
  %v6499 = vrot.slane %v6342, 7
  %v6500 = vrot.slane %v6343, 7
  %v6501 = vsel %vm912, %v6499, %v6500
  %v6502 = vrot.slane %v6344, 7
  %v6503 = vrot.slane %v6345, 7
  %v6504 = vsel %vm912, %v6502, %v6503
  %v6505 = vrot.slane %v6346, 7
  %v6506 = vrot.slane %v6347, 7
  %v6507 = vsel %vm912, %v6505, %v6506
  %v6604 = vsel %vm912, 0.0, %v6412
  %v6605 = vsel %vm912, 0.0, %v6415
  %v6606 = vsel %vm912, 0.0, %v6418
  %v6607 = vsel %vm912, 0.0, %v6421
  %v6608 = vsel %vm912, 0.0, %v6424
  %v6609 = vsel %vm912, 0.0, %v6427
  %v6610 = vsel %vm912, 0.0, %v6430
  %v6611 = vsel %vm912, 0.0, %v6433
  %v6612 = vsel %vm912, 0.0, %v6436
  %v6613 = vsel %vm912, 0.0, %v6439
  %v6614 = vsel %vm912, 0.0, %v6442
  %v6615 = vsel %vm912, 0.0, %v6445
  %v6616 = vsel %vm912, 0.0, %v6448
  %v6617 = vsel %vm912, 0.0, %v6451
  %v6618 = vsel %vm912, 0.0, %v6454
  %v6619 = vsel %vm912, 0.0, %v6457
  %v6620 = vsel %vm912, 0.0, %v6460
  %v6621 = vsel %vm912, 0.0, %v6463
  %v6622 = vsel %vm912, 0.0, %v6466
  %v6623 = vsel %vm912, 0.0, %v6469
  %v6624 = vsel %vm912, 0.0, %v6472
  %v6625 = vsel %vm912, 0.0, %v6475
  %v6626 = vsel %vm912, 0.0, %v6478
  %v6627 = vsel %vm912, 0.0, %v6481
  %v6628 = vsel %vm912, 0.0, %v6484
  %v6629 = vsel %vm912, 0.0, %v6487
  %v6630 = vsel %vm912, 0.0, %v6490
  %v6631 = vsel %vm912, 0.0, %v6493
  %v6632 = vsel %vm912, 0.0, %v6496
  %v6633 = vsel %vm912, 0.0, %v6499
  %v6634 = vsel %vm912, 0.0, %v6502
  %v6635 = vsel %vm912, 0.0, %v6505
  %v6636 = vsel %vm912, %v6413, 0.0
  %v6637 = vsel %vm912, %v6416, 0.0
  %v6638 = vsel %vm912, %v6419, 0.0
  %v6639 = vsel %vm912, %v6422, 0.0
  %v6640 = vsel %vm912, %v6425, 0.0
  %v6641 = vsel %vm912, %v6428, 0.0
  %v6642 = vsel %vm912, %v6431, 0.0
  %v6643 = vsel %vm912, %v6434, 0.0
  %v6644 = vsel %vm912, %v6437, 0.0
  %v6645 = vsel %vm912, %v6440, 0.0
  %v6646 = vsel %vm912, %v6443, 0.0
  %v6647 = vsel %vm912, %v6446, 0.0
  %v6648 = vsel %vm912, %v6449, 0.0
  %v6649 = vsel %vm912, %v6452, 0.0
  %v6650 = vsel %vm912, %v6455, 0.0
  %v6651 = vsel %vm912, %v6458, 0.0
  %v6652 = vsel %vm912, %v6461, 0.0
  %v6653 = vsel %vm912, %v6464, 0.0
  %v6654 = vsel %vm912, %v6467, 0.0
  %v6655 = vsel %vm912, %v6470, 0.0
  %v6656 = vsel %vm912, %v6473, 0.0
  %v6657 = vsel %vm912, %v6476, 0.0
  %v6658 = vsel %vm912, %v6479, 0.0
  %v6659 = vsel %vm912, %v6482, 0.0
  %v6660 = vsel %vm912, %v6485, 0.0
  %v6661 = vsel %vm912, %v6488, 0.0
  %v6662 = vsel %vm912, %v6491, 0.0
  %v6663 = vsel %vm912, %v6494, 0.0
  %v6664 = vsel %vm912, %v6497, 0.0
  %v6665 = vsel %vm912, %v6500, 0.0
  %v6666 = vsel %vm912, %v6503, 0.0
  %v6667 = vsel %vm912, %v6506, 0.0
  %v6728 = vrot.slane %v6604, 1
  %v6729 = vrot.slane %v6414, 1
  %v6730 = vsel %vm1523, %v6728, %v6729
  %v6731 = vrot.slane %v6636, 1
  %v6732 = vsel %vm1523, %v6729, %v6731
  %v6733 = vrot.slane %v6605, 1
  %v6734 = vrot.slane %v6417, 1
  %v6735 = vsel %vm1523, %v6733, %v6734
  %v6736 = vrot.slane %v6637, 1
  %v6737 = vsel %vm1523, %v6734, %v6736
  %v6738 = vrot.slane %v6606, 1
  %v6739 = vrot.slane %v6420, 1
  %v6740 = vsel %vm1523, %v6738, %v6739
  %v6741 = vrot.slane %v6638, 1
  %v6742 = vsel %vm1523, %v6739, %v6741
  %v6743 = vrot.slane %v6607, 1
  %v6744 = vrot.slane %v6423, 1
  %v6745 = vsel %vm1523, %v6743, %v6744
  %v6746 = vrot.slane %v6639, 1
  %v6747 = vsel %vm1523, %v6744, %v6746
  %v6748 = vrot.slane %v6608, 1
  %v6749 = vrot.slane %v6426, 1
  %v6750 = vsel %vm1523, %v6748, %v6749
  %v6751 = vrot.slane %v6640, 1
  %v6752 = vsel %vm1523, %v6749, %v6751
  %v6753 = vrot.slane %v6609, 1
  %v6754 = vrot.slane %v6429, 1
  %v6755 = vsel %vm1523, %v6753, %v6754
  %v6756 = vrot.slane %v6641, 1
  %v6757 = vsel %vm1523, %v6754, %v6756
  %v6758 = vrot.slane %v6610, 1
  %v6759 = vrot.slane %v6432, 1
  %v6760 = vsel %vm1523, %v6758, %v6759
  %v6761 = vrot.slane %v6642, 1
  %v6762 = vsel %vm1523, %v6759, %v6761
  %v6763 = vrot.slane %v6611, 1
  %v6764 = vrot.slane %v6435, 1
  %v6765 = vsel %vm1523, %v6763, %v6764
  %v6766 = vrot.slane %v6643, 1
  %v6767 = vsel %vm1523, %v6764, %v6766
  %v6768 = vrot.slane %v6612, 1
  %v6769 = vrot.slane %v6438, 1
  %v6770 = vsel %vm1523, %v6768, %v6769
  %v6771 = vrot.slane %v6644, 1
  %v6772 = vsel %vm1523, %v6769, %v6771
  %v6773 = vrot.slane %v6613, 1
  %v6774 = vrot.slane %v6441, 1
  %v6775 = vsel %vm1523, %v6773, %v6774
  %v6776 = vrot.slane %v6645, 1
  %v6777 = vsel %vm1523, %v6774, %v6776
  %v6778 = vrot.slane %v6614, 1
  %v6779 = vrot.slane %v6444, 1
  %v6780 = vsel %vm1523, %v6778, %v6779
  %v6781 = vrot.slane %v6646, 1
  %v6782 = vsel %vm1523, %v6779, %v6781
  %v6783 = vrot.slane %v6615, 1
  %v6784 = vrot.slane %v6447, 1
  %v6785 = vsel %vm1523, %v6783, %v6784
  %v6786 = vrot.slane %v6647, 1
  %v6787 = vsel %vm1523, %v6784, %v6786
  %v6788 = vrot.slane %v6616, 1
  %v6789 = vrot.slane %v6450, 1
  %v6790 = vsel %vm1523, %v6788, %v6789
  %v6791 = vrot.slane %v6648, 1
  %v6792 = vsel %vm1523, %v6789, %v6791
  %v6793 = vrot.slane %v6617, 1
  %v6794 = vrot.slane %v6453, 1
  %v6795 = vsel %vm1523, %v6793, %v6794
  %v6796 = vrot.slane %v6649, 1
  %v6797 = vsel %vm1523, %v6794, %v6796
  %v6798 = vrot.slane %v6618, 1
  %v6799 = vrot.slane %v6456, 1
  %v6800 = vsel %vm1523, %v6798, %v6799
  %v6801 = vrot.slane %v6650, 1
  %v6802 = vsel %vm1523, %v6799, %v6801
  %v6803 = vrot.slane %v6620, 1
  %v6804 = vrot.slane %v6462, 1
  %v6805 = vsel %vm1523, %v6803, %v6804
  %v6806 = vrot.slane %v6652, 1
  %v6807 = vsel %vm1523, %v6804, %v6806
  %v6808 = vrot.slane %v6621, 1
  %v6809 = vrot.slane %v6465, 1
  %v6810 = vsel %vm1523, %v6808, %v6809
  %v6811 = vrot.slane %v6653, 1
  %v6812 = vsel %vm1523, %v6809, %v6811
  %v6813 = vrot.slane %v6622, 1
  %v6814 = vrot.slane %v6468, 1
  %v6815 = vsel %vm1523, %v6813, %v6814
  %v6816 = vrot.slane %v6654, 1
  %v6817 = vsel %vm1523, %v6814, %v6816
  %v6818 = vrot.slane %v6623, 1
  %v6819 = vrot.slane %v6471, 1
  %v6820 = vsel %vm1523, %v6818, %v6819
  %v6821 = vrot.slane %v6655, 1
  %v6822 = vsel %vm1523, %v6819, %v6821
  %v6823 = vrot.slane %v6624, 1
  %v6824 = vrot.slane %v6474, 1
  %v6825 = vsel %vm1523, %v6823, %v6824
  %v6826 = vrot.slane %v6656, 1
  %v6827 = vsel %vm1523, %v6824, %v6826
  %v6828 = vrot.slane %v6625, 1
  %v6829 = vrot.slane %v6477, 1
  %v6830 = vsel %vm1523, %v6828, %v6829
  %v6831 = vrot.slane %v6657, 1
  %v6832 = vsel %vm1523, %v6829, %v6831
  %v6833 = vrot.slane %v6626, 1
  %v6834 = vrot.slane %v6480, 1
  %v6835 = vsel %vm1523, %v6833, %v6834
  %v6836 = vrot.slane %v6658, 1
  %v6837 = vsel %vm1523, %v6834, %v6836
  %v6838 = vrot.slane %v6627, 1
  %v6839 = vrot.slane %v6483, 1
  %v6840 = vsel %vm1523, %v6838, %v6839
  %v6841 = vrot.slane %v6659, 1
  %v6842 = vsel %vm1523, %v6839, %v6841
  %v6843 = vrot.slane %v6628, 1
  %v6844 = vrot.slane %v6486, 1
  %v6845 = vsel %vm1523, %v6843, %v6844
  %v6846 = vrot.slane %v6660, 1
  %v6847 = vsel %vm1523, %v6844, %v6846
  %v6848 = vrot.slane %v6629, 1
  %v6849 = vrot.slane %v6489, 1
  %v6850 = vsel %vm1523, %v6848, %v6849
  %v6851 = vrot.slane %v6661, 1
  %v6852 = vsel %vm1523, %v6849, %v6851
  %v6853 = vrot.slane %v6630, 1
  %v6854 = vrot.slane %v6492, 1
  %v6855 = vsel %vm1523, %v6853, %v6854
  %v6856 = vrot.slane %v6662, 1
  %v6857 = vsel %vm1523, %v6854, %v6856
  %v6858 = vrot.slane %v6631, 1
  %v6859 = vrot.slane %v6495, 1
  %v6860 = vsel %vm1523, %v6858, %v6859
  %v6861 = vrot.slane %v6663, 1
  %v6862 = vsel %vm1523, %v6859, %v6861
  %v6863 = vrot.slane %v6632, 1
  %v6864 = vrot.slane %v6498, 1
  %v6865 = vsel %vm1523, %v6863, %v6864
  %v6866 = vrot.slane %v6664, 1
  %v6867 = vsel %vm1523, %v6864, %v6866
  %v6868 = vrot.slane %v6633, 1
  %v6869 = vrot.slane %v6501, 1
  %v6870 = vsel %vm1523, %v6868, %v6869
  %v6871 = vrot.slane %v6665, 1
  %v6872 = vsel %vm1523, %v6869, %v6871
  %v6873 = vrot.slane %v6634, 1
  %v6874 = vrot.slane %v6504, 1
  %v6875 = vsel %vm1523, %v6873, %v6874
  %v6876 = vrot.slane %v6666, 1
  %v6877 = vsel %vm1523, %v6874, %v6876
  %6878 = vrot.lane.b32.xlu0 %v3509, 64
  %v6879 = vpop.permute.xlu0 %6878
  %6880 = vrot.lane.b32.xlu0 %v3510, 64
  %v6881 = vpop.permute.xlu0 %6880
  %6882 = vrot.lane.b32.xlu0 %v6730, 64
  %v6883 = vpop.permute.xlu0 %6882
  %6884 = vrot.lane.b32.xlu0 %v6732, 64
  %v6885 = vpop.permute.xlu0 %6884
  %6886 = vrot.lane.b32.xlu0 %v6735, 64
  %v6887 = vpop.permute.xlu0 %6886
  %6888 = vrot.lane.b32.xlu0 %v6737, 64
  %v6889 = vpop.permute.xlu0 %6888
  %6890 = vrot.lane.b32.xlu0 %v6740, 64
  %v6891 = vpop.permute.xlu0 %6890
  %6892 = vrot.lane.b32.xlu0 %v6742, 64
  %v6893 = vpop.permute.xlu0 %6892
  %6894 = vrot.lane.b32.xlu0 %v6745, 64
  %v6895 = vpop.permute.xlu0 %6894
  %6896 = vrot.lane.b32.xlu0 %v6747, 64
  %v6897 = vpop.permute.xlu0 %6896
  %6898 = vrot.lane.b32.xlu0 %v6750, 64
  %v6899 = vpop.permute.xlu0 %6898
  %6900 = vrot.lane.b32.xlu0 %v6752, 64
  %v6901 = vpop.permute.xlu0 %6900
  %6902 = vrot.lane.b32.xlu0 %v6755, 64
  %v6903 = vpop.permute.xlu0 %6902
  %6904 = vrot.lane.b32.xlu0 %v6757, 64
  %v6905 = vpop.permute.xlu0 %6904
  %6906 = vrot.lane.b32.xlu0 %v6760, 64
  %v6907 = vpop.permute.xlu0 %6906
  %6908 = vrot.lane.b32.xlu0 %v6762, 64
  %v6909 = vpop.permute.xlu0 %6908
  %6910 = vrot.lane.b32.xlu0 %v6765, 64
  %v6911 = vpop.permute.xlu0 %6910
  %6912 = vrot.lane.b32.xlu0 %v6767, 64
  %v6913 = vpop.permute.xlu0 %6912
  %6914 = vrot.lane.b32.xlu0 %v6770, 64
  %v6915 = vpop.permute.xlu0 %6914
  %6916 = vrot.lane.b32.xlu0 %v6772, 64
  %v6917 = vpop.permute.xlu0 %6916
  %6918 = vrot.lane.b32.xlu0 %v6775, 64
  %v6919 = vpop.permute.xlu0 %6918
  %6920 = vrot.lane.b32.xlu0 %v6777, 64
  %v6921 = vpop.permute.xlu0 %6920
  %6922 = vrot.lane.b32.xlu0 %v6780, 64
  %v6923 = vpop.permute.xlu0 %6922
  %6924 = vrot.lane.b32.xlu0 %v6782, 64
  %v6925 = vpop.permute.xlu0 %6924
  %6926 = vrot.lane.b32.xlu0 %v6785, 64
  %v6927 = vpop.permute.xlu0 %6926
  %6928 = vrot.lane.b32.xlu0 %v6787, 64
  %v6929 = vpop.permute.xlu0 %6928
  %6930 = vrot.lane.b32.xlu0 %v6790, 64
  %v6931 = vpop.permute.xlu0 %6930
  %6932 = vrot.lane.b32.xlu0 %v6792, 64
  %v6933 = vpop.permute.xlu0 %6932
  %6934 = vrot.lane.b32.xlu0 %v6795, 64
  %v6935 = vpop.permute.xlu0 %6934
  %6936 = vrot.lane.b32.xlu0 %v6797, 64
  %v6937 = vpop.permute.xlu0 %6936
  %6938 = vrot.lane.b32.xlu0 %v6800, 64
  %v6939 = vpop.permute.xlu0 %6938
  %6940 = vrot.lane.b32.xlu0 %v6802, 64
  %v6941 = vpop.permute.xlu0 %6940
  %6942 = vrot.lane.b32.xlu0 %v6805, 64
  %v6943 = vpop.permute.xlu0 %6942
  %6944 = vrot.lane.b32.xlu0 %v6807, 64
  %v6945 = vpop.permute.xlu0 %6944
  %6946 = vrot.lane.b32.xlu0 %v6810, 64
  %v6947 = vpop.permute.xlu0 %6946
  %6948 = vrot.lane.b32.xlu0 %v6812, 64
  %v6949 = vpop.permute.xlu0 %6948
  %6950 = vrot.lane.b32.xlu0 %v6815, 64
  %v6951 = vpop.permute.xlu0 %6950
  %6952 = vrot.lane.b32.xlu0 %v6817, 64
  %v6953 = vpop.permute.xlu0 %6952
  %6954 = vrot.lane.b32.xlu0 %v6820, 64
  %v6955 = vpop.permute.xlu0 %6954
  %6956 = vrot.lane.b32.xlu0 %v6822, 64
  %v6957 = vpop.permute.xlu0 %6956
  %6958 = vrot.lane.b32.xlu0 %v6825, 64
  %v6959 = vpop.permute.xlu0 %6958
  %6960 = vrot.lane.b32.xlu0 %v6827, 64
  %v6961 = vpop.permute.xlu0 %6960
  %6962 = vrot.lane.b32.xlu0 %v6830, 64
  %v6963 = vpop.permute.xlu0 %6962
  %6964 = vrot.lane.b32.xlu0 %v6832, 64
  %v6965 = vpop.permute.xlu0 %6964
  %6966 = vrot.lane.b32.xlu0 %v6835, 64
  %v6967 = vpop.permute.xlu0 %6966
  %6968 = vrot.lane.b32.xlu0 %v6837, 64
  %v6969 = vpop.permute.xlu0 %6968
  %6970 = vrot.lane.b32.xlu0 %v6840, 64
  %v6971 = vpop.permute.xlu0 %6970
  %6972 = vrot.lane.b32.xlu0 %v6842, 64
  %v6973 = vpop.permute.xlu0 %6972
  %6974 = vrot.lane.b32.xlu0 %v6845, 64
  %v6975 = vpop.permute.xlu0 %6974
  %6976 = vrot.lane.b32.xlu0 %v6847, 64
  %v6977 = vpop.permute.xlu0 %6976
  %6978 = vrot.lane.b32.xlu0 %v6850, 64
  %v6979 = vpop.permute.xlu0 %6978
  %6980 = vrot.lane.b32.xlu0 %v6852, 64
  %v6981 = vpop.permute.xlu0 %6980
  %6982 = vrot.lane.b32.xlu0 %v6855, 64
  %v6983 = vpop.permute.xlu0 %6982
  %6984 = vrot.lane.b32.xlu0 %v6857, 64
  %v6985 = vpop.permute.xlu0 %6984
  %6986 = vrot.lane.b32.xlu0 %v6860, 64
  %v6987 = vpop.permute.xlu0 %6986
  %6988 = vrot.lane.b32.xlu0 %v6862, 64
  %v6989 = vpop.permute.xlu0 %6988
  %6990 = vrot.lane.b32.xlu0 %v6865, 64
  %v6991 = vpop.permute.xlu0 %6990
  %6992 = vrot.lane.b32.xlu0 %v6867, 64
  %v6993 = vpop.permute.xlu0 %6992
  %6994 = vrot.lane.b32.xlu0 %v6870, 64
  %v6995 = vpop.permute.xlu0 %6994
  %6996 = vrot.lane.b32.xlu0 %v6872, 64
  %v6997 = vpop.permute.xlu0 %6996
  %6998 = vrot.lane.b32.xlu0 %v6875, 64
  %v6999 = vpop.permute.xlu0 %6998
  %7000 = vrot.lane.b32.xlu0 %v6877, 64
  %v7001 = vpop.permute.xlu0 %7000
  %v7064 = vrot.slane %v6604, 2
  %v7065 = vrot.slane %v6414, 2
  %v7066 = vsel %vm171, %v7064, %v7065
  %v7067 = vrot.slane %v6636, 2
  %v7068 = vsel %vm171, %v7065, %v7067
  %v7069 = vrot.slane %v6605, 2
  %v7070 = vrot.slane %v6417, 2
  %v7071 = vsel %vm171, %v7069, %v7070
  %v7072 = vrot.slane %v6637, 2
  %v7073 = vsel %vm171, %v7070, %v7072
  %v7074 = vrot.slane %v6606, 2
  %v7075 = vrot.slane %v6420, 2
  %v7076 = vsel %vm171, %v7074, %v7075
  %v7077 = vrot.slane %v6638, 2
  %v7078 = vsel %vm171, %v7075, %v7077
  %v7079 = vrot.slane %v6607, 2
  %v7080 = vrot.slane %v6423, 2
  %v7081 = vsel %vm171, %v7079, %v7080
  %v7082 = vrot.slane %v6639, 2
  %v7083 = vsel %vm171, %v7080, %v7082
  %v7084 = vrot.slane %v6608, 2
  %v7085 = vrot.slane %v6426, 2
  %v7086 = vsel %vm171, %v7084, %v7085
  %v7087 = vrot.slane %v6640, 2
  %v7088 = vsel %vm171, %v7085, %v7087
  %v7089 = vrot.slane %v6609, 2
  %v7090 = vrot.slane %v6429, 2
  %v7091 = vsel %vm171, %v7089, %v7090
  %v7092 = vrot.slane %v6641, 2
  %v7093 = vsel %vm171, %v7090, %v7092
  %v7094 = vrot.slane %v6610, 2
  %v7095 = vrot.slane %v6432, 2
  %v7096 = vsel %vm171, %v7094, %v7095
  %v7097 = vrot.slane %v6642, 2
  %v7098 = vsel %vm171, %v7095, %v7097
  %v7099 = vrot.slane %v6611, 2
  %v7100 = vrot.slane %v6435, 2
  %v7101 = vsel %vm171, %v7099, %v7100
  %v7102 = vrot.slane %v6643, 2
  %v7103 = vsel %vm171, %v7100, %v7102
  %v7104 = vrot.slane %v6612, 2
  %v7105 = vrot.slane %v6438, 2
  %v7106 = vsel %vm171, %v7104, %v7105
  %v7107 = vrot.slane %v6644, 2
  %v7108 = vsel %vm171, %v7105, %v7107
  %v7109 = vrot.slane %v6613, 2
  %v7110 = vrot.slane %v6441, 2
  %v7111 = vsel %vm171, %v7109, %v7110
  %v7112 = vrot.slane %v6645, 2
  %v7113 = vsel %vm171, %v7110, %v7112
  %v7114 = vrot.slane %v6614, 2
  %v7115 = vrot.slane %v6444, 2
  %v7116 = vsel %vm171, %v7114, %v7115
  %v7117 = vrot.slane %v6646, 2
  %v7118 = vsel %vm171, %v7115, %v7117
  %v7119 = vrot.slane %v6615, 2
  %v7120 = vrot.slane %v6447, 2
  %v7121 = vsel %vm171, %v7119, %v7120
  %v7122 = vrot.slane %v6647, 2
  %v7123 = vsel %vm171, %v7120, %v7122
  %v7124 = vrot.slane %v6616, 2
  %v7125 = vrot.slane %v6450, 2
  %v7126 = vsel %vm171, %v7124, %v7125
  %v7127 = vrot.slane %v6648, 2
  %v7128 = vsel %vm171, %v7125, %v7127
  %v7129 = vrot.slane %v6617, 2
  %v7130 = vrot.slane %v6453, 2
  %v7131 = vsel %vm171, %v7129, %v7130
  %v7132 = vrot.slane %v6649, 2
  %v7133 = vsel %vm171, %v7130, %v7132
  %v7134 = vrot.slane %v6618, 2
  %v7135 = vrot.slane %v6456, 2
  %v7136 = vsel %vm171, %v7134, %v7135
  %v7137 = vrot.slane %v6650, 2
  %v7138 = vsel %vm171, %v7135, %v7137
  %v7139 = vrot.slane %v6620, 2
  %v7140 = vrot.slane %v6462, 2
  %v7141 = vsel %vm171, %v7139, %v7140
  %v7142 = vrot.slane %v6652, 2
  %v7143 = vsel %vm171, %v7140, %v7142
  %v7144 = vrot.slane %v6621, 2
  %v7145 = vrot.slane %v6465, 2
  %v7146 = vsel %vm171, %v7144, %v7145
  %v7147 = vrot.slane %v6653, 2
  %v7148 = vsel %vm171, %v7145, %v7147
  %v7149 = vrot.slane %v6622, 2
  %v7150 = vrot.slane %v6468, 2
  %v7151 = vsel %vm171, %v7149, %v7150
  %v7152 = vrot.slane %v6654, 2
  %v7153 = vsel %vm171, %v7150, %v7152
  %v7154 = vrot.slane %v6623, 2
  %v7155 = vrot.slane %v6471, 2
  %v7156 = vsel %vm171, %v7154, %v7155
  %v7157 = vrot.slane %v6655, 2
  %v7158 = vsel %vm171, %v7155, %v7157
  %v7159 = vrot.slane %v6624, 2
  %v7160 = vrot.slane %v6474, 2
  %v7161 = vsel %vm171, %v7159, %v7160
  %v7162 = vrot.slane %v6656, 2
  %v7163 = vsel %vm171, %v7160, %v7162
  %v7164 = vrot.slane %v6625, 2
  %v7165 = vrot.slane %v6477, 2
  %v7166 = vsel %vm171, %v7164, %v7165
  %v7167 = vrot.slane %v6657, 2
  %v7168 = vsel %vm171, %v7165, %v7167
  %v7169 = vrot.slane %v6626, 2
  %v7170 = vrot.slane %v6480, 2
  %v7171 = vsel %vm171, %v7169, %v7170
  %v7172 = vrot.slane %v6658, 2
  %v7173 = vsel %vm171, %v7170, %v7172
  %v7174 = vrot.slane %v6627, 2
  %v7175 = vrot.slane %v6483, 2
  %v7176 = vsel %vm171, %v7174, %v7175
  %v7177 = vrot.slane %v6659, 2
  %v7178 = vsel %vm171, %v7175, %v7177
  %v7179 = vrot.slane %v6628, 2
  %v7180 = vrot.slane %v6486, 2
  %v7181 = vsel %vm171, %v7179, %v7180
  %v7182 = vrot.slane %v6660, 2
  %v7183 = vsel %vm171, %v7180, %v7182
  %v7184 = vrot.slane %v6629, 2
  %v7185 = vrot.slane %v6489, 2
  %v7186 = vsel %vm171, %v7184, %v7185
  %v7187 = vrot.slane %v6661, 2
  %v7188 = vsel %vm171, %v7185, %v7187
  %v7189 = vrot.slane %v6630, 2
  %v7190 = vrot.slane %v6492, 2
  %v7191 = vsel %vm171, %v7189, %v7190
  %v7192 = vrot.slane %v6662, 2
  %v7193 = vsel %vm171, %v7190, %v7192
  %v7194 = vrot.slane %v6631, 2
  %v7195 = vrot.slane %v6495, 2
  %v7196 = vsel %vm171, %v7194, %v7195
  %v7197 = vrot.slane %v6663, 2
  %v7198 = vsel %vm171, %v7195, %v7197
  %v7199 = vrot.slane %v6632, 2
  %v7200 = vrot.slane %v6498, 2
  %v7201 = vsel %vm171, %v7199, %v7200
  %v7202 = vrot.slane %v6664, 2
  %v7203 = vsel %vm171, %v7200, %v7202
  %v7204 = vrot.slane %v6633, 2
  %v7205 = vrot.slane %v6501, 2
  %v7206 = vsel %vm171, %v7204, %v7205
  %v7207 = vrot.slane %v6665, 2
  %v7208 = vsel %vm171, %v7205, %v7207
  %v7209 = vrot.slane %v6634, 2
  %v7210 = vrot.slane %v6504, 2
  %v7211 = vsel %vm171, %v7209, %v7210
  %v7212 = vrot.slane %v6666, 2
  %v7213 = vsel %vm171, %v7210, %v7212
  %7276 = vrot.lane.b32.xlu0 %v6604, 64
  %v7277 = vpop.permute.xlu0 %7276
  %7278 = vrot.lane.b32.xlu0 %v6414, 64
  %v7279 = vpop.permute.xlu0 %7278
  %7280 = vrot.lane.b32.xlu0 %v6605, 64
  %v7281 = vpop.permute.xlu0 %7280
  %7282 = vrot.lane.b32.xlu0 %v6417, 64
  %v7283 = vpop.permute.xlu0 %7282
  %7284 = vrot.lane.b32.xlu0 %v6606, 64
  %v7285 = vpop.permute.xlu0 %7284
  %7286 = vrot.lane.b32.xlu0 %v6420, 64
  %v7287 = vpop.permute.xlu0 %7286
  %7288 = vrot.lane.b32.xlu0 %v6607, 64
  %v7289 = vpop.permute.xlu0 %7288
  %7290 = vrot.lane.b32.xlu0 %v6423, 64
  %v7291 = vpop.permute.xlu0 %7290
  %7292 = vrot.lane.b32.xlu0 %v6608, 64
  %v7293 = vpop.permute.xlu0 %7292
  %7294 = vrot.lane.b32.xlu0 %v6426, 64
  %v7295 = vpop.permute.xlu0 %7294
  %7296 = vrot.lane.b32.xlu0 %v6609, 64
  %v7297 = vpop.permute.xlu0 %7296
  %7298 = vrot.lane.b32.xlu0 %v6429, 64
  %v7299 = vpop.permute.xlu0 %7298
  %7300 = vrot.lane.b32.xlu0 %v6610, 64
  %v7301 = vpop.permute.xlu0 %7300
  %7302 = vrot.lane.b32.xlu0 %v6432, 64
  %v7303 = vpop.permute.xlu0 %7302
  %7304 = vrot.lane.b32.xlu0 %v6611, 64
  %v7305 = vpop.permute.xlu0 %7304
  %7306 = vrot.lane.b32.xlu0 %v6435, 64
  %v7307 = vpop.permute.xlu0 %7306
  %7308 = vrot.lane.b32.xlu0 %v6612, 64
  %v7309 = vpop.permute.xlu0 %7308
  %7310 = vrot.lane.b32.xlu0 %v6438, 64
  %v7311 = vpop.permute.xlu0 %7310
  %7312 = vrot.lane.b32.xlu0 %v6613, 64
  %v7313 = vpop.permute.xlu0 %7312
  %7314 = vrot.lane.b32.xlu0 %v6441, 64
  %v7315 = vpop.permute.xlu0 %7314
  %7316 = vrot.lane.b32.xlu0 %v6614, 64
  %v7317 = vpop.permute.xlu0 %7316
  %7318 = vrot.lane.b32.xlu0 %v6444, 64
  %v7319 = vpop.permute.xlu0 %7318
  %7320 = vrot.lane.b32.xlu0 %v6615, 64
  %v7321 = vpop.permute.xlu0 %7320
  %7322 = vrot.lane.b32.xlu0 %v6447, 64
  %v7323 = vpop.permute.xlu0 %7322
  %7324 = vrot.lane.b32.xlu0 %v6616, 64
  %v7325 = vpop.permute.xlu0 %7324
  %7326 = vrot.lane.b32.xlu0 %v6450, 64
  %v7327 = vpop.permute.xlu0 %7326
  %7328 = vrot.lane.b32.xlu0 %v6617, 64
  %v7329 = vpop.permute.xlu0 %7328
  %7330 = vrot.lane.b32.xlu0 %v6453, 64
  %v7331 = vpop.permute.xlu0 %7330
  %7332 = vrot.lane.b32.xlu0 %v6618, 64
  %v7333 = vpop.permute.xlu0 %7332
  %7334 = vrot.lane.b32.xlu0 %v6456, 64
  %v7335 = vpop.permute.xlu0 %7334
  %7336 = vrot.lane.b32.xlu0 %v6619, 64
  %v7337 = vpop.permute.xlu0 %7336
  %7338 = vrot.lane.b32.xlu0 %v6459, 64
  %v7339 = vpop.permute.xlu0 %7338
  %7340 = vrot.lane.b32.xlu0 %v6620, 64
  %v7341 = vpop.permute.xlu0 %7340
  %7342 = vrot.lane.b32.xlu0 %v6462, 64
  %v7343 = vpop.permute.xlu0 %7342
  %7344 = vrot.lane.b32.xlu0 %v6621, 64
  %v7345 = vpop.permute.xlu0 %7344
  %7346 = vrot.lane.b32.xlu0 %v6465, 64
  %v7347 = vpop.permute.xlu0 %7346
  %7348 = vrot.lane.b32.xlu0 %v6622, 64
  %v7349 = vpop.permute.xlu0 %7348
  %7350 = vrot.lane.b32.xlu0 %v6468, 64
  %v7351 = vpop.permute.xlu0 %7350
  %7352 = vrot.lane.b32.xlu0 %v6623, 64
  %v7353 = vpop.permute.xlu0 %7352
  %7354 = vrot.lane.b32.xlu0 %v6471, 64
  %v7355 = vpop.permute.xlu0 %7354
  %7356 = vrot.lane.b32.xlu0 %v6624, 64
  %v7357 = vpop.permute.xlu0 %7356
  %7358 = vrot.lane.b32.xlu0 %v6474, 64
  %v7359 = vpop.permute.xlu0 %7358
  %7360 = vrot.lane.b32.xlu0 %v6625, 64
  %v7361 = vpop.permute.xlu0 %7360
  %7362 = vrot.lane.b32.xlu0 %v6477, 64
  %v7363 = vpop.permute.xlu0 %7362
  %7364 = vrot.lane.b32.xlu0 %v6626, 64
  %v7365 = vpop.permute.xlu0 %7364
  %7366 = vrot.lane.b32.xlu0 %v6480, 64
  %v7367 = vpop.permute.xlu0 %7366
  %7368 = vrot.lane.b32.xlu0 %v6627, 64
  %v7369 = vpop.permute.xlu0 %7368
  %7370 = vrot.lane.b32.xlu0 %v6483, 64
  %v7371 = vpop.permute.xlu0 %7370
  %7372 = vrot.lane.b32.xlu0 %v6628, 64
  %v7373 = vpop.permute.xlu0 %7372
  %7374 = vrot.lane.b32.xlu0 %v6486, 64
  %v7375 = vpop.permute.xlu0 %7374
  %7376 = vrot.lane.b32.xlu0 %v6629, 64
  %v7377 = vpop.permute.xlu0 %7376
  %7378 = vrot.lane.b32.xlu0 %v6489, 64
  %v7379 = vpop.permute.xlu0 %7378
  %7380 = vrot.lane.b32.xlu0 %v6630, 64
  %v7381 = vpop.permute.xlu0 %7380
  %7382 = vrot.lane.b32.xlu0 %v6492, 64
  %v7383 = vpop.permute.xlu0 %7382
  %7384 = vrot.lane.b32.xlu0 %v6631, 64
  %v7385 = vpop.permute.xlu0 %7384
  %7386 = vrot.lane.b32.xlu0 %v6495, 64
  %v7387 = vpop.permute.xlu0 %7386
  %7388 = vrot.lane.b32.xlu0 %v6632, 64
  %v7389 = vpop.permute.xlu0 %7388
  %7390 = vrot.lane.b32.xlu0 %v6498, 64
  %v7391 = vpop.permute.xlu0 %7390
  %7392 = vrot.lane.b32.xlu0 %v6633, 64
  %v7393 = vpop.permute.xlu0 %7392
  %7394 = vrot.lane.b32.xlu0 %v6501, 64
  %v7395 = vpop.permute.xlu0 %7394
  %7396 = vrot.lane.b32.xlu0 %v6634, 64
  %v7397 = vpop.permute.xlu0 %7396
  %7398 = vrot.lane.b32.xlu0 %v6504, 64
  %v7399 = vpop.permute.xlu0 %7398
  %7400 = vrot.lane.b32.xlu0 %v6635, 64
  %v7401 = vpop.permute.xlu0 %7400
  %7402 = vrot.lane.b32.xlu0 %v6507, 64
  %v7403 = vpop.permute.xlu0 %7402
  %v7470 = vrot.slane %v6619, 1
  %v7471 = vrot.slane %v6459, 1
  %v7472 = vsel %vm1523, %v7470, %v7471
  %v7473 = vrot.slane %v6651, 1
  %v7474 = vsel %vm1523, %v7471, %v7473
  %v7475 = vrot.slane %v6635, 1
  %v7476 = vrot.slane %v6507, 1
  %v7477 = vsel %vm1523, %v7475, %v7476
  %v7478 = vrot.slane %v6667, 1
  %v7479 = vsel %vm1523, %v7476, %v7478
  %v7544 = vrot.slane %v6619, 2
  %v7545 = vrot.slane %v6459, 2
  %v7546 = vsel %vm171, %v7544, %v7545
  %v7547 = vrot.slane %v6651, 2
  %v7548 = vsel %vm171, %v7545, %v7547
  %v7549 = vrot.slane %v6635, 2
  %v7550 = vrot.slane %v6507, 2
  %v7551 = vsel %vm171, %v7549, %v7550
  %v7552 = vrot.slane %v6667, 2
  %v7553 = vsel %vm171, %v7550, %v7552
  %7554 = vrot.lane.b32.xlu0 %v7066, 64
  %v7555 = vpop.permute.xlu0 %7554
  %7556 = vrot.lane.b32.xlu0 %v7068, 64
  %v7557 = vpop.permute.xlu0 %7556
  %7558 = vrot.lane.b32.xlu0 %v7071, 64
  %v7559 = vpop.permute.xlu0 %7558
  %7560 = vrot.lane.b32.xlu0 %v7073, 64
  %v7561 = vpop.permute.xlu0 %7560
  %7562 = vrot.lane.b32.xlu0 %v7076, 64
  %v7563 = vpop.permute.xlu0 %7562
  %7564 = vrot.lane.b32.xlu0 %v7078, 64
  %v7565 = vpop.permute.xlu0 %7564
  %7566 = vrot.lane.b32.xlu0 %v7081, 64
  %v7567 = vpop.permute.xlu0 %7566
  %7568 = vrot.lane.b32.xlu0 %v7083, 64
  %v7569 = vpop.permute.xlu0 %7568
  %7570 = vrot.lane.b32.xlu0 %v7086, 64
  %v7571 = vpop.permute.xlu0 %7570
  %7572 = vrot.lane.b32.xlu0 %v7088, 64
  %v7573 = vpop.permute.xlu0 %7572
  %7574 = vrot.lane.b32.xlu0 %v7091, 64
  %v7575 = vpop.permute.xlu0 %7574
  %7576 = vrot.lane.b32.xlu0 %v7093, 64
  %v7577 = vpop.permute.xlu0 %7576
  %7578 = vrot.lane.b32.xlu0 %v7096, 64
  %v7579 = vpop.permute.xlu0 %7578
  %7580 = vrot.lane.b32.xlu0 %v7098, 64
  %v7581 = vpop.permute.xlu0 %7580
  %7582 = vrot.lane.b32.xlu0 %v7101, 64
  %v7583 = vpop.permute.xlu0 %7582
  %7584 = vrot.lane.b32.xlu0 %v7103, 64
  %v7585 = vpop.permute.xlu0 %7584
  %7586 = vrot.lane.b32.xlu0 %v7106, 64
  %v7587 = vpop.permute.xlu0 %7586
  %7588 = vrot.lane.b32.xlu0 %v7108, 64
  %v7589 = vpop.permute.xlu0 %7588
  %7590 = vrot.lane.b32.xlu0 %v7111, 64
  %v7591 = vpop.permute.xlu0 %7590
  %7592 = vrot.lane.b32.xlu0 %v7113, 64
  %v7593 = vpop.permute.xlu0 %7592
  %7594 = vrot.lane.b32.xlu0 %v7116, 64
  %v7595 = vpop.permute.xlu0 %7594
  %7596 = vrot.lane.b32.xlu0 %v7118, 64
  %v7597 = vpop.permute.xlu0 %7596
  %7598 = vrot.lane.b32.xlu0 %v7121, 64
  %v7599 = vpop.permute.xlu0 %7598
  %7600 = vrot.lane.b32.xlu0 %v7123, 64
  %v7601 = vpop.permute.xlu0 %7600
  %7602 = vrot.lane.b32.xlu0 %v7126, 64
  %v7603 = vpop.permute.xlu0 %7602
  %7604 = vrot.lane.b32.xlu0 %v7128, 64
  %v7605 = vpop.permute.xlu0 %7604
  %7606 = vrot.lane.b32.xlu0 %v7131, 64
  %v7607 = vpop.permute.xlu0 %7606
  %7608 = vrot.lane.b32.xlu0 %v7133, 64
  %v7609 = vpop.permute.xlu0 %7608
  %7610 = vrot.lane.b32.xlu0 %v7136, 64
  %v7611 = vpop.permute.xlu0 %7610
  %7612 = vrot.lane.b32.xlu0 %v7138, 64
  %v7613 = vpop.permute.xlu0 %7612
  %7614 = vrot.lane.b32.xlu0 %v7546, 64
  %v7615 = vpop.permute.xlu0 %7614
  %7616 = vrot.lane.b32.xlu0 %v7548, 64
  %v7617 = vpop.permute.xlu0 %7616
  %7618 = vrot.lane.b32.xlu0 %v7141, 64
  %v7619 = vpop.permute.xlu0 %7618
  %7620 = vrot.lane.b32.xlu0 %v7143, 64
  %v7621 = vpop.permute.xlu0 %7620
  %7622 = vrot.lane.b32.xlu0 %v7146, 64
  %v7623 = vpop.permute.xlu0 %7622
  %7624 = vrot.lane.b32.xlu0 %v7148, 64
  %v7625 = vpop.permute.xlu0 %7624
  %7626 = vrot.lane.b32.xlu0 %v7151, 64
  %v7627 = vpop.permute.xlu0 %7626
  %7628 = vrot.lane.b32.xlu0 %v7153, 64
  %v7629 = vpop.permute.xlu0 %7628
  %7630 = vrot.lane.b32.xlu0 %v7156, 64
  %v7631 = vpop.permute.xlu0 %7630
  %7632 = vrot.lane.b32.xlu0 %v7158, 64
  %v7633 = vpop.permute.xlu0 %7632
  %7634 = vrot.lane.b32.xlu0 %v7161, 64
  %v7635 = vpop.permute.xlu0 %7634
  %7636 = vrot.lane.b32.xlu0 %v7163, 64
  %v7637 = vpop.permute.xlu0 %7636
  %7638 = vrot.lane.b32.xlu0 %v7166, 64
  %v7639 = vpop.permute.xlu0 %7638
  %7640 = vrot.lane.b32.xlu0 %v7168, 64
  %v7641 = vpop.permute.xlu0 %7640
  %7642 = vrot.lane.b32.xlu0 %v7171, 64
  %v7643 = vpop.permute.xlu0 %7642
  %7644 = vrot.lane.b32.xlu0 %v7173, 64
  %v7645 = vpop.permute.xlu0 %7644
  %7646 = vrot.lane.b32.xlu0 %v7176, 64
  %v7647 = vpop.permute.xlu0 %7646
  %7648 = vrot.lane.b32.xlu0 %v7178, 64
  %v7649 = vpop.permute.xlu0 %7648
  %7650 = vrot.lane.b32.xlu0 %v7181, 64
  %v7651 = vpop.permute.xlu0 %7650
  %7652 = vrot.lane.b32.xlu0 %v7183, 64
  %v7653 = vpop.permute.xlu0 %7652
  %7654 = vrot.lane.b32.xlu0 %v7186, 64
  %v7655 = vpop.permute.xlu0 %7654
  %7656 = vrot.lane.b32.xlu0 %v7188, 64
  %v7657 = vpop.permute.xlu0 %7656
  %7658 = vrot.lane.b32.xlu0 %v7191, 64
  %v7659 = vpop.permute.xlu0 %7658
  %7660 = vrot.lane.b32.xlu0 %v7193, 64
  %v7661 = vpop.permute.xlu0 %7660
  %7662 = vrot.lane.b32.xlu0 %v7196, 64
  %v7663 = vpop.permute.xlu0 %7662
  %7664 = vrot.lane.b32.xlu0 %v7198, 64
  %v7665 = vpop.permute.xlu0 %7664
  %7666 = vrot.lane.b32.xlu0 %v7201, 64
  %v7667 = vpop.permute.xlu0 %7666
  %7668 = vrot.lane.b32.xlu0 %v7203, 64
  %v7669 = vpop.permute.xlu0 %7668
  %7670 = vrot.lane.b32.xlu0 %v7206, 64
  %v7671 = vpop.permute.xlu0 %7670
  %7672 = vrot.lane.b32.xlu0 %v7208, 64
  %v7673 = vpop.permute.xlu0 %7672
  %7674 = vrot.lane.b32.xlu0 %v7211, 64
  %v7675 = vpop.permute.xlu0 %7674
  %7676 = vrot.lane.b32.xlu0 %v7213, 64
  %v7677 = vpop.permute.xlu0 %7676
  %7678 = vrot.lane.b32.xlu0 %v7551, 64
  %v7679 = vpop.permute.xlu0 %7678
  %7680 = vrot.lane.b32.xlu0 %v7553, 64
  %v7681 = vpop.permute.xlu0 %7680
  %7746 = vrot.lane.b32.xlu0 %v7472, 64
  %v7747 = vpop.permute.xlu0 %7746
  %7748 = vrot.lane.b32.xlu0 %v7474, 64
  %v7749 = vpop.permute.xlu0 %7748
  %7750 = vrot.lane.b32.xlu0 %v7477, 64
  %v7751 = vpop.permute.xlu0 %7750
  %7752 = vrot.lane.b32.xlu0 %v7479, 64
  %v7753 = vpop.permute.xlu0 %7752
  %v7758 = vsel %vm5675, %v1704, %v6879
  %v7759 = vsel %vm5675, %v3346, %v6881
  %v7760 = vsel %vm5675, %v6604, %v6883
  %v7761 = vsel %vm5675, %v6414, %v6885
  %v7762 = vsel %vm5675, %v6605, %v6887
  %v7763 = vsel %vm5675, %v6417, %v6889
  %v7764 = vsel %vm5675, %v6606, %v6891
  %v7765 = vsel %vm5675, %v6420, %v6893
  %v7766 = vsel %vm5675, %v6607, %v6895
  %v7767 = vsel %vm5675, %v6423, %v6897
  %v7768 = vsel %vm5675, %v6608, %v6899
  %v7769 = vsel %vm5675, %v6426, %v6901
  %v7770 = vsel %vm5675, %v6609, %v6903
  %v7771 = vsel %vm5675, %v6429, %v6905
  %v7772 = vsel %vm5675, %v6610, %v6907
  %v7773 = vsel %vm5675, %v6432, %v6909
  %v7774 = vsel %vm5675, %v6611, %v6911
  %v7775 = vsel %vm5675, %v6435, %v6913
  %v7776 = vsel %vm5675, %v6612, %v6915
  %v7777 = vsel %vm5675, %v6438, %v6917
  %v7778 = vsel %vm5675, %v6613, %v6919
  %v7779 = vsel %vm5675, %v6441, %v6921
  %v7780 = vsel %vm5675, %v6614, %v6923
  %v7781 = vsel %vm5675, %v6444, %v6925
  %v7782 = vsel %vm5675, %v6615, %v6927
  %v7783 = vsel %vm5675, %v6447, %v6929
  %v7784 = vsel %vm5675, %v6616, %v6931
  %v7785 = vsel %vm5675, %v6450, %v6933
  %v7786 = vsel %vm5675, %v6617, %v6935
  %v7787 = vsel %vm5675, %v6453, %v6937
  %v7788 = vsel %vm5675, %v6618, %v6939
  %v7789 = vsel %vm5675, %v6456, %v6941
  %v7790 = vsel %vm5675, %v6620, %v6943
  %v7791 = vsel %vm5675, %v6462, %v6945
  %v7792 = vsel %vm5675, %v6621, %v6947
  %v7793 = vsel %vm5675, %v6465, %v6949
  %v7794 = vsel %vm5675, %v6622, %v6951
  %v7795 = vsel %vm5675, %v6468, %v6953
  %v7796 = vsel %vm5675, %v6623, %v6955
  %v7797 = vsel %vm5675, %v6471, %v6957
  %v7798 = vsel %vm5675, %v6624, %v6959
  %v7799 = vsel %vm5675, %v6474, %v6961
  %v7800 = vsel %vm5675, %v6625, %v6963
  %v7801 = vsel %vm5675, %v6477, %v6965
  %v7802 = vsel %vm5675, %v6626, %v6967
  %v7803 = vsel %vm5675, %v6480, %v6969
  %v7804 = vsel %vm5675, %v6627, %v6971
  %v7805 = vsel %vm5675, %v6483, %v6973
  %v7806 = vsel %vm5675, %v6628, %v6975
  %v7807 = vsel %vm5675, %v6486, %v6977
  %v7808 = vsel %vm5675, %v6629, %v6979
  %v7809 = vsel %vm5675, %v6489, %v6981
  %v7810 = vsel %vm5675, %v6630, %v6983
  %v7811 = vsel %vm5675, %v6492, %v6985
  %v7812 = vsel %vm5675, %v6631, %v6987
  %v7813 = vsel %vm5675, %v6495, %v6989
  %v7814 = vsel %vm5675, %v6632, %v6991
  %v7815 = vsel %vm5675, %v6498, %v6993
  %v7816 = vsel %vm5675, %v6633, %v6995
  %v7817 = vsel %vm5675, %v6501, %v6997
  %v7818 = vsel %vm5675, %v6634, %v6999
  %v7819 = vsel %vm5675, %v6504, %v7001
  %v7820 = vsel %vm5675, %v3626, %v7277
  %v7821 = vsel %vm5675, %v3627, %v7279
  %v7822 = vsel %vm5675, %v7066, %v7281
  %v7823 = vsel %vm5675, %v7068, %v7283
  %v7824 = vsel %vm5675, %v7071, %v7285
  %v7825 = vsel %vm5675, %v7073, %v7287
  %v7826 = vsel %vm5675, %v7076, %v7289
  %v7827 = vsel %vm5675, %v7078, %v7291
  %v7828 = vsel %vm5675, %v7081, %v7293
  %v7829 = vsel %vm5675, %v7083, %v7295
  %v7830 = vsel %vm5675, %v7086, %v7297
  %v7831 = vsel %vm5675, %v7088, %v7299
  %v7832 = vsel %vm5675, %v7091, %v7301
  %v7833 = vsel %vm5675, %v7093, %v7303
  %v7834 = vsel %vm5675, %v7096, %v7305
  %v7835 = vsel %vm5675, %v7098, %v7307
  %v7836 = vsel %vm5675, %v7101, %v7309
  %v7837 = vsel %vm5675, %v7103, %v7311
  %v7838 = vsel %vm5675, %v7106, %v7313
  %v7839 = vsel %vm5675, %v7108, %v7315
  %v7840 = vsel %vm5675, %v7111, %v7317
  %v7841 = vsel %vm5675, %v7113, %v7319
  %v7842 = vsel %vm5675, %v7116, %v7321
  %v7843 = vsel %vm5675, %v7118, %v7323
  %v7844 = vsel %vm5675, %v7121, %v7325
  %v7845 = vsel %vm5675, %v7123, %v7327
  %v7846 = vsel %vm5675, %v7126, %v7329
  %v7847 = vsel %vm5675, %v7128, %v7331
  %v7848 = vsel %vm5675, %v7131, %v7333
  %v7849 = vsel %vm5675, %v7133, %v7335
  %v7850 = vsel %vm5675, %v7136, %v7337
  %v7851 = vsel %vm5675, %v7138, %v7339
  %v7852 = vsel %vm5675, %v3626, %v7341
  %v7853 = vsel %vm5675, %v3627, %v7343
  %v7854 = vsel %vm5675, %v7141, %v7345
  %v7855 = vsel %vm5675, %v7143, %v7347
  %v7856 = vsel %vm5675, %v7146, %v7349
  %v7857 = vsel %vm5675, %v7148, %v7351
  %v7858 = vsel %vm5675, %v7151, %v7353
  %v7859 = vsel %vm5675, %v7153, %v7355
  %v7860 = vsel %vm5675, %v7156, %v7357
  %v7861 = vsel %vm5675, %v7158, %v7359
  %v7862 = vsel %vm5675, %v7161, %v7361
  %v7863 = vsel %vm5675, %v7163, %v7363
  %v7864 = vsel %vm5675, %v7166, %v7365
  %v7865 = vsel %vm5675, %v7168, %v7367
  %v7866 = vsel %vm5675, %v7171, %v7369
  %v7867 = vsel %vm5675, %v7173, %v7371
  %v7868 = vsel %vm5675, %v7176, %v7373
  %v7869 = vsel %vm5675, %v7178, %v7375
  %v7870 = vsel %vm5675, %v7181, %v7377
  %v7871 = vsel %vm5675, %v7183, %v7379
  %v7872 = vsel %vm5675, %v7186, %v7381
  %v7873 = vsel %vm5675, %v7188, %v7383
  %v7874 = vsel %vm5675, %v7191, %v7385
  %v7875 = vsel %vm5675, %v7193, %v7387
  %v7876 = vsel %vm5675, %v7196, %v7389
  %v7877 = vsel %vm5675, %v7198, %v7391
  %v7878 = vsel %vm5675, %v7201, %v7393
  %v7879 = vsel %vm5675, %v7203, %v7395
  %v7880 = vsel %vm5675, %v7206, %v7397
  %v7881 = vsel %vm5675, %v7208, %v7399
  %v7882 = vsel %vm5675, %v7211, %v7401
  %v7883 = vsel %vm5675, %v7213, %v7403
  %v7884 = vsel %vm5675, %v6730, %v7555
  %v7885 = vsel %vm5675, %v6732, %v7557
  %v7886 = vsel %vm5675, %v6735, %v7559
  %v7887 = vsel %vm5675, %v6737, %v7561
  %v7888 = vsel %vm5675, %v6740, %v7563
  %v7889 = vsel %vm5675, %v6742, %v7565
  %v7890 = vsel %vm5675, %v6745, %v7567
  %v7891 = vsel %vm5675, %v6747, %v7569
  %v7892 = vsel %vm5675, %v6750, %v7571
  %v7893 = vsel %vm5675, %v6752, %v7573
  %v7894 = vsel %vm5675, %v6755, %v7575
  %v7895 = vsel %vm5675, %v6757, %v7577
  %v7896 = vsel %vm5675, %v6760, %v7579
  %v7897 = vsel %vm5675, %v6762, %v7581
  %v7898 = vsel %vm5675, %v6765, %v7583
  %v7899 = vsel %vm5675, %v6767, %v7585
  %v7900 = vsel %vm5675, %v6770, %v7587
  %v7901 = vsel %vm5675, %v6772, %v7589
  %v7902 = vsel %vm5675, %v6775, %v7591
  %v7903 = vsel %vm5675, %v6777, %v7593
  %v7904 = vsel %vm5675, %v6780, %v7595
  %v7905 = vsel %vm5675, %v6782, %v7597
  %v7906 = vsel %vm5675, %v6785, %v7599
  %v7907 = vsel %vm5675, %v6787, %v7601
  %v7908 = vsel %vm5675, %v6790, %v7603
  %v7909 = vsel %vm5675, %v6792, %v7605
  %v7910 = vsel %vm5675, %v6795, %v7607
  %v7911 = vsel %vm5675, %v6797, %v7609
  %v7912 = vsel %vm5675, %v6800, %v7611
  %v7913 = vsel %vm5675, %v6802, %v7613
  %v7914 = vsel %vm5675, %v7472, %v7615
  %v7915 = vsel %vm5675, %v7474, %v7617
  %v7916 = vsel %vm5675, %v6805, %v7619
  %v7917 = vsel %vm5675, %v6807, %v7621
  %v7918 = vsel %vm5675, %v6810, %v7623
  %v7919 = vsel %vm5675, %v6812, %v7625
  %v7920 = vsel %vm5675, %v6815, %v7627
  %v7921 = vsel %vm5675, %v6817, %v7629
  %v7922 = vsel %vm5675, %v6820, %v7631
  %v7923 = vsel %vm5675, %v6822, %v7633
  %v7924 = vsel %vm5675, %v6825, %v7635
  %v7925 = vsel %vm5675, %v6827, %v7637
  %v7926 = vsel %vm5675, %v6830, %v7639
  %v7927 = vsel %vm5675, %v6832, %v7641
  %v7928 = vsel %vm5675, %v6835, %v7643
  %v7929 = vsel %vm5675, %v6837, %v7645
  %v7930 = vsel %vm5675, %v6840, %v7647
  %v7931 = vsel %vm5675, %v6842, %v7649
  %v7932 = vsel %vm5675, %v6845, %v7651
  %v7933 = vsel %vm5675, %v6847, %v7653
  %v7934 = vsel %vm5675, %v6850, %v7655
  %v7935 = vsel %vm5675, %v6852, %v7657
  %v7936 = vsel %vm5675, %v6855, %v7659
  %v7937 = vsel %vm5675, %v6857, %v7661
  %v7938 = vsel %vm5675, %v6860, %v7663
  %v7939 = vsel %vm5675, %v6862, %v7665
  %v7940 = vsel %vm5675, %v6865, %v7667
  %v7941 = vsel %vm5675, %v6867, %v7669
  %v7942 = vsel %vm5675, %v6870, %v7671
  %v7943 = vsel %vm5675, %v6872, %v7673
  %v7944 = vsel %vm5675, %v6875, %v7675
  %v7945 = vsel %vm5675, %v6877, %v7677
  %v7946 = vsel %vm5675, %v7477, %v7679
  %v7947 = vsel %vm5675, %v7479, %v7681
  %v7948 = vsel %vm5675, %v6619, %v7747
  %v7949 = vsel %vm5675, %v6459, %v7749
  %v7950 = vsel %vm5675, %v6635, %v7751
  %v7951 = vsel %vm5675, %v6507, %v7753
  %v7952 = vld [vmem:[%s13] sm:$0x77]
  %v7953 = vld [vmem:[%s13 + $0x8] sm:$0x77]
  %v7954 = vld [vmem:[%s13 + $0x10] sm:$0x7]
  %v7955 = vld [vmem:[%s14] sm:$0x7]
  %7957 = vset.pattern.permute.xlu0 0
  %7958 = vperm.xlu0 %7957, %v7955
  %v7959 = vpop.permute.xlu0 %7958
  %v7964 = vcombine.high %v7952, %v7952
  %v7965 = vcombine.high %v7953, %v7953
  %v7968 = vsel %vm5675, %v7954, 0
  %v7970 = vsel %vm5675, %v7071, 0
  %v7972 = vsel %vm5675, %v7073, 0
  %v7974 = vsel %vm5675, %v7076, 0
  %v7976 = vsel %vm5675, %v7078, 0
  %v7978 = vsel %vm5675, %v7081, 0
  %v7980 = vsel %vm5675, %v7083, 0
  %v7982 = vsel %vm5675, %v7086, 0
  %v7984 = vsel %vm5675, %v7088, 0
  %v7986 = vsel %vm5675, %v7091, 0
  %v7988 = vsel %vm5675, %v7093, 0
  %v7990 = vsel %vm5675, %v7096, 0
  %v7992 = vsel %vm5675, %v7098, 0
  %v7994 = vsel %vm5675, %v7101, 0
  %v7996 = vsel %vm5675, %v7103, 0
  %v7998 = vsel %vm5675, %v7106, 0
  %v8000 = vsel %vm5675, %v7108, 0
  %v8002 = vsel %vm5675, %v7111, 0
  %v8004 = vsel %vm5675, %v7113, 0
  %v8006 = vsel %vm5675, %v7116, 0
  %v8008 = vsel %vm5675, %v7118, 0
  %v8010 = vsel %vm5675, %v7121, 0
  %v8012 = vsel %vm5675, %v7123, 0
  %v8014 = vsel %vm5675, %v7126, 0
  %v8016 = vsel %vm5675, %v7128, 0
  %v8018 = vsel %vm5675, %v7131, 0
  %v8020 = vsel %vm5675, %v7133, 0
  %v8022 = vsel %vm5675, %v7136, 0
  %v8024 = vsel %vm5675, %v7138, 0
  %v8026 = vsel %vm5675, %v7546, 0
  %v8028 = vsel %vm5675, %v7548, 0
  %v8030 = vsel %vm5675, %v3626, 0
  %v8032 = vsel %vm5675, %v3627, 0
  %v8034 = vsel %vm5675, %v7146, 0
  %v8036 = vsel %vm5675, %v7148, 0
  %v8038 = vsel %vm5675, %v7151, 0
  %v8040 = vsel %vm5675, %v7153, 0
  %v8042 = vsel %vm5675, %v7156, 0
  %v8044 = vsel %vm5675, %v7158, 0
  %v8046 = vsel %vm5675, %v7161, 0
  %v8048 = vsel %vm5675, %v7163, 0
  %v8050 = vsel %vm5675, %v7166, 0
  %v8052 = vsel %vm5675, %v7168, 0
  %v8054 = vsel %vm5675, %v7171, 0
  %v8056 = vsel %vm5675, %v7173, 0
  %v8058 = vsel %vm5675, %v7176, 0
  %v8060 = vsel %vm5675, %v7178, 0
  %v8062 = vsel %vm5675, %v7181, 0
  %v8064 = vsel %vm5675, %v7183, 0
  %v8066 = vsel %vm5675, %v7186, 0
  %v8068 = vsel %vm5675, %v7188, 0
  %v8070 = vsel %vm5675, %v7191, 0
  %v8072 = vsel %vm5675, %v7193, 0
  %v8074 = vsel %vm5675, %v7196, 0
  %v8076 = vsel %vm5675, %v7198, 0
  %v8078 = vsel %vm5675, %v7201, 0
  %v8080 = vsel %vm5675, %v7203, 0
  %v8082 = vsel %vm5675, %v7206, 0
  %v8084 = vsel %vm5675, %v7208, 0
  %v8086 = vsel %vm5675, %v7211, 0
  %v8088 = vsel %vm5675, %v7213, 0
  %v8090 = vsel %vm5675, %v7551, 0
  %v8092 = vsel %vm5675, %v7553, 0
  %8094 = vmatprep.subr.mxu0 %v7820
  %8095 = vmatpush1.xpose.msra.mxu0 %v7758
  %8096 = vmatprep.subr.mxu0 %v7821
  %8097 = vmatpush1.xpose.msra.mxu0 %v7759
  %8098 = vmatprep.subr.mxu0 %v7822
  %8099 = vmatpush1.xpose.msra.mxu0 %v7760
  %8100 = vmatprep.subr.mxu0 %v7823
  %8101 = vmatpush1.xpose.msra.mxu0 %v7761
  %8102 = vmatprep.subr.mxu0 %v7824
  %8103 = vmatpush1.xpose.msra.mxu0 %v7762
  %8104 = vmatprep.subr.mxu0 %v7825
  %8105 = vmatpush1.xpose.msra.mxu0 %v7763
  %8106 = vmatprep.subr.mxu0 %v7826
  %8107 = vmatpush1.xpose.msra.mxu0 %v7764
  %8108 = vmatprep.subr.mxu0 %v7827
  %8109 = vmatpush1.xpose.msra.mxu0 %v7765
  %8110 = vmatprep.subr.mxu0 %v7828
  %8111 = vmatpush1.xpose.msra.mxu0 %v7766
  %8112 = vmatprep.subr.mxu0 %v7829
  %8113 = vmatpush1.xpose.msra.mxu0 %v7767
  %8114 = vmatprep.subr.mxu0 %v7830
  %8115 = vmatpush1.xpose.msra.mxu0 %v7768
  %8116 = vmatprep.subr.mxu0 %v7831
  %8117 = vmatpush1.xpose.msra.mxu0 %v7769
  %8118 = vmatprep.subr.mxu0 %v7832
  %8119 = vmatpush1.xpose.msra.mxu0 %v7770
  %8120 = vmatprep.subr.mxu0 %v7833
  %8121 = vmatpush1.xpose.msra.mxu0 %v7771
  %8122 = vmatprep.subr.mxu0 %v7834
  %8123 = vmatpush1.xpose.msra.mxu0 %v7772
  %8124 = vmatprep.subr.mxu0 %v7835
  %8125 = vmatpush1.xpose.msra.mxu0 %v7773
  %8126 = vmatprep.subr.mxu0 %v7836
  %8127 = vmatpush1.xpose.msra.mxu0 %v7774
  %8128 = vmatprep.subr.mxu0 %v7837
  %8129 = vmatpush1.xpose.msra.mxu0 %v7775
  %8130 = vmatprep.subr.mxu0 %v7838
  %8131 = vmatpush1.xpose.msra.mxu0 %v7776
  %8132 = vmatprep.subr.mxu0 %v7839
  %8133 = vmatpush1.xpose.msra.mxu0 %v7777
  %8134 = vmatprep.subr.mxu0 %v7840
  %8135 = vmatpush1.xpose.msra.mxu0 %v7778
  %8136 = vmatprep.subr.mxu0 %v7841
  %8137 = vmatpush1.xpose.msra.mxu0 %v7779
  %8138 = vmatprep.subr.mxu0 %v7842
  %8139 = vmatpush1.xpose.msra.mxu0 %v7780
  %8140 = vmatprep.subr.mxu0 %v7843
  %8141 = vmatpush1.xpose.msra.mxu0 %v7781
  %8142 = vmatprep.subr.mxu0 %v7844
  %8143 = vmatpush1.xpose.msra.mxu0 %v7782
  %8144 = vmatprep.subr.mxu0 %v7845
  %8145 = vmatpush1.xpose.msra.mxu0 %v7783
  %8146 = vmatprep.subr.mxu0 %v7846
  %8147 = vmatpush1.xpose.msra.mxu0 %v7784
  %8148 = vmatprep.subr.mxu0 %v7847
  %8149 = vmatpush1.xpose.msra.mxu0 %v7785
  %8150 = vmatprep.subr.mxu0 %v7848
  %8151 = vmatpush1.xpose.msra.mxu0 %v7786
  %8152 = vmatprep.subr.mxu0 %v7849
  %8153 = vmatpush1.xpose.msra.mxu0 %v7787
  %8154 = vmatprep.subr.mxu0 %v7850
  %8155 = vmatpush1.xpose.msra.mxu0 %v7788
  %8156 = vmatprep.subr.mxu0 %v7851
  %8157 = vmatpush1.xpose.msra.mxu0 %v7789
  %8158 = vmatprep.mubr.f32.mxu0 %v7964
  %8159 = vmatmul.mubr.f32.gmra.mrb[0].mxu0 %v7952
  %v8160 = vpop.f32.mrb[0].mxu0
  %v8161 = vadd.f32 %v7959, %v8160
  %v8162 = vpop.f32.mrb[0].mxu0
  %v8163 = vadd.f32 %v7959, %v8162
  %8164 = vdwg.mxu0
  %8165 = vmatprep.subr.mxu0 %v7762
  %8166 = vmatpush1.xpose.msra.mxu0 %v7884
  %8167 = vmatprep.subr.mxu0 %v7763
  %8168 = vmatpush1.xpose.msra.mxu0 %v7885
  %8169 = vmatprep.subr.mxu0 %v7764
  %8170 = vmatpush1.xpose.msra.mxu0 %v7886
  %8171 = vmatprep.subr.mxu0 %v7765
  %8172 = vmatpush1.xpose.msra.mxu0 %v7887
  %8173 = vmatprep.subr.mxu0 %v7766
  %8174 = vmatpush1.xpose.msra.mxu0 %v7888
  %8175 = vmatprep.subr.mxu0 %v7767
  %8176 = vmatpush1.xpose.msra.mxu0 %v7889
  %8177 = vmatprep.subr.mxu0 %v7768
  %8178 = vmatpush1.xpose.msra.mxu0 %v7890
  %8179 = vmatprep.subr.mxu0 %v7769
  %8180 = vmatpush1.xpose.msra.mxu0 %v7891
  %8181 = vmatprep.subr.mxu0 %v7770
  %8182 = vmatpush1.xpose.msra.mxu0 %v7892
  %8183 = vmatprep.subr.mxu0 %v7771
  %8184 = vmatpush1.xpose.msra.mxu0 %v7893
  %8185 = vmatprep.subr.mxu0 %v7772
  %8186 = vmatpush1.xpose.msra.mxu0 %v7894
  %8187 = vmatprep.subr.mxu0 %v7773
  %8188 = vmatpush1.xpose.msra.mxu0 %v7895
  %8189 = vmatprep.subr.mxu0 %v7774
  %8190 = vmatpush1.xpose.msra.mxu0 %v7896
  %8191 = vmatprep.subr.mxu0 %v7775
  %8192 = vmatpush1.xpose.msra.mxu0 %v7897
  %8193 = vmatprep.subr.mxu0 %v7776
  %8194 = vmatpush1.xpose.msra.mxu0 %v7898
  %8195 = vmatprep.subr.mxu0 %v7777
  %8196 = vmatpush1.xpose.msra.mxu0 %v7899
  %8197 = vmatprep.subr.mxu0 %v7778
  %8198 = vmatpush1.xpose.msra.mxu0 %v7900
  %8199 = vmatprep.subr.mxu0 %v7779
  %8200 = vmatpush1.xpose.msra.mxu0 %v7901
  %8201 = vmatprep.subr.mxu0 %v7780
  %8202 = vmatpush1.xpose.msra.mxu0 %v7902
  %8203 = vmatprep.subr.mxu0 %v7781
  %8204 = vmatpush1.xpose.msra.mxu0 %v7903
  %8205 = vmatprep.subr.mxu0 %v7782
  %8206 = vmatpush1.xpose.msra.mxu0 %v7904
  %8207 = vmatprep.subr.mxu0 %v7783
  %8208 = vmatpush1.xpose.msra.mxu0 %v7905
  %8209 = vmatprep.subr.mxu0 %v7784
  %8210 = vmatpush1.xpose.msra.mxu0 %v7906
  %8211 = vmatprep.subr.mxu0 %v7785
  %8212 = vmatpush1.xpose.msra.mxu0 %v7907
  %8213 = vmatprep.subr.mxu0 %v7786
  %8214 = vmatpush1.xpose.msra.mxu0 %v7908
  %8215 = vmatprep.subr.mxu0 %v7787
  %8216 = vmatpush1.xpose.msra.mxu0 %v7909
  %8217 = vmatprep.subr.mxu0 %v7788
  %8218 = vmatpush1.xpose.msra.mxu0 %v7910
  %8219 = vmatprep.subr.mxu0 %v7789
  %8220 = vmatpush1.xpose.msra.mxu0 %v7911
  %8221 = vmatprep.subr.mxu0 %v7948
  %8222 = vmatpush1.xpose.msra.mxu0 %v7912
  %8223 = vmatprep.subr.mxu0 %v7949
  %8224 = vmatpush1.xpose.msra.mxu0 %v7913
  %8225 = vmatprep.subr.mxu0 %v7758
  %8226 = vmatpush1.xpose.msra.mxu0 %v7914
  %8227 = vmatprep.subr.mxu0 %v7759
  %8228 = vmatpush1.xpose.msra.mxu0 %v7915
  %8229 = vmatprep.mubr.f32.mxu0 %v7965
  %8230 = vmatmul.mubr.f32.gmra.mrb[0].mxu0 %v7953
  %v8231 = vpop.f32.mrb[0].mxu0
  %v8232 = vadd.f32 %v8161, %v8231
  %v8233 = vpop.f32.mrb[0].mxu0
  %v8234 = vadd.f32 %v8163, %v8233
  %8235 = vdwg.mxu0
  %8236 = vmatprep.subr.mxu0 0.0
  %8237 = vmatpush1.xpose.msra.mxu0 %v7970
  %8238 = vmatprep.subr.mxu0 0.0
  %8239 = vmatpush1.xpose.msra.mxu0 %v7972
  %8240 = vmatprep.subr.mxu0 0.0
  %8241 = vmatpush1.xpose.msra.mxu0 %v7974
  %8242 = vmatprep.subr.mxu0 0.0
  %8243 = vmatpush1.xpose.msra.mxu0 %v7976
  %8244 = vmatprep.subr.mxu0 0.0
  %8245 = vmatpush1.xpose.msra.mxu0 %v7978
  %8246 = vmatprep.subr.mxu0 0.0
  %8247 = vmatpush1.xpose.msra.mxu0 %v7980
  %8248 = vmatprep.subr.mxu0 0.0
  %8249 = vmatpush1.xpose.msra.mxu0 %v7982
  %8250 = vmatprep.subr.mxu0 0.0
  %8251 = vmatpush1.xpose.msra.mxu0 %v7984
  %8252 = vmatprep.subr.mxu0 0.0
  %8253 = vmatpush1.xpose.msra.mxu0 %v7986
  %8254 = vmatprep.subr.mxu0 0.0
  %8255 = vmatpush1.xpose.msra.mxu0 %v7988
  %8256 = vmatprep.subr.mxu0 0.0
  %8257 = vmatpush1.xpose.msra.mxu0 %v7990
  %8258 = vmatprep.subr.mxu0 0.0
  %8259 = vmatpush1.xpose.msra.mxu0 %v7992
  %8260 = vmatprep.subr.mxu0 0.0
  %8261 = vmatpush1.xpose.msra.mxu0 %v7994
  %8262 = vmatprep.subr.mxu0 0.0
  %8263 = vmatpush1.xpose.msra.mxu0 %v7996
  %8264 = vmatprep.subr.mxu0 0.0
  %8265 = vmatpush1.xpose.msra.mxu0 %v7998
  %8266 = vmatprep.subr.mxu0 0.0
  %8267 = vmatpush1.xpose.msra.mxu0 %v8000
  %8268 = vmatprep.subr.mxu0 0.0
  %8269 = vmatpush1.xpose.msra.mxu0 %v8002
  %8270 = vmatprep.subr.mxu0 0.0
  %8271 = vmatpush1.xpose.msra.mxu0 %v8004
  %8272 = vmatprep.subr.mxu0 0.0
  %8273 = vmatpush1.xpose.msra.mxu0 %v8006
  %8274 = vmatprep.subr.mxu0 0.0
  %8275 = vmatpush1.xpose.msra.mxu0 %v8008
  %8276 = vmatprep.subr.mxu0 0.0
  %8277 = vmatpush1.xpose.msra.mxu0 %v8010
  %8278 = vmatprep.subr.mxu0 0.0
  %8279 = vmatpush1.xpose.msra.mxu0 %v8012
  %8280 = vmatprep.subr.mxu0 0.0
  %8281 = vmatpush1.xpose.msra.mxu0 %v8014
  %8282 = vmatprep.subr.mxu0 0.0
  %8283 = vmatpush1.xpose.msra.mxu0 %v8016
  %8284 = vmatprep.subr.mxu0 0.0
  %8285 = vmatpush1.xpose.msra.mxu0 %v8018
  %8286 = vmatprep.subr.mxu0 0.0
  %8287 = vmatpush1.xpose.msra.mxu0 %v8020
  %8288 = vmatprep.subr.mxu0 0.0
  %8289 = vmatpush1.xpose.msra.mxu0 %v8022
  %8290 = vmatprep.subr.mxu0 0.0
  %8291 = vmatpush1.xpose.msra.mxu0 %v8024
  %8292 = vmatprep.subr.mxu0 0.0
  %8293 = vmatpush1.xpose.msra.mxu0 %v8026
  %8294 = vmatprep.subr.mxu0 0.0
  %8295 = vmatpush1.xpose.msra.mxu0 %v8028
  %8296 = vmatprep.subr.mxu0 0.0
  %8297 = vmatpush1.xpose.msra.mxu0 %v8030
  %8298 = vmatprep.subr.mxu0 0.0
  %8299 = vmatpush1.xpose.msra.mxu0 %v8032
  %8300 = vmatprep.mubr.f32.mxu0 0.0
  %8301 = vmatmul.mubr.f32.gmra.mrb[0].mxu0 %v7968
  %v8302 = vpop.f32.mrb[0].mxu0
  %v8303 = vadd.f32 %v8232, %v8302
  %v8304 = vpop.f32.mrb[0].mxu0
  %v8305 = vadd.f32 %v8234, %v8304
  %8306 = vdwg.mxu0
  %8307 = vmatprep.subr.mxu0 %v7852
  %8308 = vmatpush1.xpose.msra.mxu0 %v7758
  %8309 = vmatprep.subr.mxu0 %v7853
  %8310 = vmatpush1.xpose.msra.mxu0 %v7759
  %8311 = vmatprep.subr.mxu0 %v7854
  %8312 = vmatpush1.xpose.msra.mxu0 %v7790
  %8313 = vmatprep.subr.mxu0 %v7855
  %8314 = vmatpush1.xpose.msra.mxu0 %v7791
  %8315 = vmatprep.subr.mxu0 %v7856
  %8316 = vmatpush1.xpose.msra.mxu0 %v7792
  %8317 = vmatprep.subr.mxu0 %v7857
  %8318 = vmatpush1.xpose.msra.mxu0 %v7793
  %8319 = vmatprep.subr.mxu0 %v7858
  %8320 = vmatpush1.xpose.msra.mxu0 %v7794
  %8321 = vmatprep.subr.mxu0 %v7859
  %8322 = vmatpush1.xpose.msra.mxu0 %v7795
  %8323 = vmatprep.subr.mxu0 %v7860
  %8324 = vmatpush1.xpose.msra.mxu0 %v7796
  %8325 = vmatprep.subr.mxu0 %v7861
  %8326 = vmatpush1.xpose.msra.mxu0 %v7797
  %8327 = vmatprep.subr.mxu0 %v7862
  %8328 = vmatpush1.xpose.msra.mxu0 %v7798
  %8329 = vmatprep.subr.mxu0 %v7863
  %8330 = vmatpush1.xpose.msra.mxu0 %v7799
  %8331 = vmatprep.subr.mxu0 %v7864
  %8332 = vmatpush1.xpose.msra.mxu0 %v7800
  %8333 = vmatprep.subr.mxu0 %v7865
  %8334 = vmatpush1.xpose.msra.mxu0 %v7801
  %8335 = vmatprep.subr.mxu0 %v7866
  %8336 = vmatpush1.xpose.msra.mxu0 %v7802
  %8337 = vmatprep.subr.mxu0 %v7867
  %8338 = vmatpush1.xpose.msra.mxu0 %v7803
  %8339 = vmatprep.subr.mxu0 %v7868
  %8340 = vmatpush1.xpose.msra.mxu0 %v7804
  %8341 = vmatprep.subr.mxu0 %v7869
  %8342 = vmatpush1.xpose.msra.mxu0 %v7805
  %8343 = vmatprep.subr.mxu0 %v7870
  %8344 = vmatpush1.xpose.msra.mxu0 %v7806
  %8345 = vmatprep.subr.mxu0 %v7871
  %8346 = vmatpush1.xpose.msra.mxu0 %v7807
  %8347 = vmatprep.subr.mxu0 %v7872
  %8348 = vmatpush1.xpose.msra.mxu0 %v7808
  %8349 = vmatprep.subr.mxu0 %v7873
  %8350 = vmatpush1.xpose.msra.mxu0 %v7809
  %8351 = vmatprep.subr.mxu0 %v7874
  %8352 = vmatpush1.xpose.msra.mxu0 %v7810
  %8353 = vmatprep.subr.mxu0 %v7875
  %8354 = vmatpush1.xpose.msra.mxu0 %v7811
  %8355 = vmatprep.subr.mxu0 %v7876
  %8356 = vmatpush1.xpose.msra.mxu0 %v7812
  %8357 = vmatprep.subr.mxu0 %v7877
  %8358 = vmatpush1.xpose.msra.mxu0 %v7813
  %8359 = vmatprep.subr.mxu0 %v7878
  %8360 = vmatpush1.xpose.msra.mxu0 %v7814
  %8361 = vmatprep.subr.mxu0 %v7879
  %8362 = vmatpush1.xpose.msra.mxu0 %v7815
  %8363 = vmatprep.subr.mxu0 %v7880
  %8364 = vmatpush1.xpose.msra.mxu0 %v7816
  %8365 = vmatprep.subr.mxu0 %v7881
  %8366 = vmatpush1.xpose.msra.mxu0 %v7817
  %8367 = vmatprep.subr.mxu0 %v7882
  %8368 = vmatpush1.xpose.msra.mxu0 %v7818
  %8369 = vmatprep.subr.mxu0 %v7883
  %8370 = vmatpush1.xpose.msra.mxu0 %v7819
  %8371 = vmatprep.mubr.f32.mxu0 %v7964
  %8372 = vmatmul.mubr.f32.gmra.mrb[0].mxu0 %v7952
  %v8373 = vpop.f32.mrb[0].mxu0
  %v8374 = vadd.f32 %v7959, %v8373
  %v8375 = vpop.f32.mrb[0].mxu0
  %v8376 = vadd.f32 %v7959, %v8375
  %8377 = vdwg.mxu0
  %8378 = vmatprep.subr.mxu0 %v7792
  %8379 = vmatpush1.xpose.msra.mxu0 %v7916
  %8380 = vmatprep.subr.mxu0 %v7793
  %8381 = vmatpush1.xpose.msra.mxu0 %v7917
  %8382 = vmatprep.subr.mxu0 %v7794
  %8383 = vmatpush1.xpose.msra.mxu0 %v7918
  %8384 = vmatprep.subr.mxu0 %v7795
  %8385 = vmatpush1.xpose.msra.mxu0 %v7919
  %8386 = vmatprep.subr.mxu0 %v7796
  %8387 = vmatpush1.xpose.msra.mxu0 %v7920
  %8388 = vmatprep.subr.mxu0 %v7797
  %8389 = vmatpush1.xpose.msra.mxu0 %v7921
  %8390 = vmatprep.subr.mxu0 %v7798
  %8391 = vmatpush1.xpose.msra.mxu0 %v7922
  %8392 = vmatprep.subr.mxu0 %v7799
  %8393 = vmatpush1.xpose.msra.mxu0 %v7923
  %8394 = vmatprep.subr.mxu0 %v7800
  %8395 = vmatpush1.xpose.msra.mxu0 %v7924
  %8396 = vmatprep.subr.mxu0 %v7801
  %8397 = vmatpush1.xpose.msra.mxu0 %v7925
  %8398 = vmatprep.subr.mxu0 %v7802
  %8399 = vmatpush1.xpose.msra.mxu0 %v7926
  %8400 = vmatprep.subr.mxu0 %v7803
  %8401 = vmatpush1.xpose.msra.mxu0 %v7927
  %8402 = vmatprep.subr.mxu0 %v7804
  %8403 = vmatpush1.xpose.msra.mxu0 %v7928
  %8404 = vmatprep.subr.mxu0 %v7805
  %8405 = vmatpush1.xpose.msra.mxu0 %v7929
  %8406 = vmatprep.subr.mxu0 %v7806
  %8407 = vmatpush1.xpose.msra.mxu0 %v7930
  %8408 = vmatprep.subr.mxu0 %v7807
  %8409 = vmatpush1.xpose.msra.mxu0 %v7931
  %8410 = vmatprep.subr.mxu0 %v7808
  %8411 = vmatpush1.xpose.msra.mxu0 %v7932
  %8412 = vmatprep.subr.mxu0 %v7809
  %8413 = vmatpush1.xpose.msra.mxu0 %v7933
  %8414 = vmatprep.subr.mxu0 %v7810
  %8415 = vmatpush1.xpose.msra.mxu0 %v7934
  %8416 = vmatprep.subr.mxu0 %v7811
  %8417 = vmatpush1.xpose.msra.mxu0 %v7935
  %8418 = vmatprep.subr.mxu0 %v7812
  %8419 = vmatpush1.xpose.msra.mxu0 %v7936
  %8420 = vmatprep.subr.mxu0 %v7813
  %8421 = vmatpush1.xpose.msra.mxu0 %v7937
  %8422 = vmatprep.subr.mxu0 %v7814
  %8423 = vmatpush1.xpose.msra.mxu0 %v7938
  %8424 = vmatprep.subr.mxu0 %v7815
  %8425 = vmatpush1.xpose.msra.mxu0 %v7939
  %8426 = vmatprep.subr.mxu0 %v7816
  %8427 = vmatpush1.xpose.msra.mxu0 %v7940
  %8428 = vmatprep.subr.mxu0 %v7817
  %8429 = vmatpush1.xpose.msra.mxu0 %v7941
  %8430 = vmatprep.subr.mxu0 %v7818
  %8431 = vmatpush1.xpose.msra.mxu0 %v7942
  %8432 = vmatprep.subr.mxu0 %v7819
  %8433 = vmatpush1.xpose.msra.mxu0 %v7943
  %8434 = vmatprep.subr.mxu0 %v7950
  %8435 = vmatpush1.xpose.msra.mxu0 %v7944
  %8436 = vmatprep.subr.mxu0 %v7951
  %8437 = vmatpush1.xpose.msra.mxu0 %v7945
  %8438 = vmatprep.subr.mxu0 %v7758
  %8439 = vmatpush1.xpose.msra.mxu0 %v7946
  %8440 = vmatprep.subr.mxu0 %v7759
  %8441 = vmatpush1.xpose.msra.mxu0 %v7947
  %8442 = vmatprep.mubr.f32.mxu0 %v7965
  %8443 = vmatmul.mubr.f32.gmra.mrb[0].mxu0 %v7953
  %v8444 = vpop.f32.mrb[0].mxu0
  %v8445 = vadd.f32 %v8374, %v8444
  %v8446 = vpop.f32.mrb[0].mxu0
  %v8447 = vadd.f32 %v8376, %v8446
  %8448 = vdwg.mxu0
  %8449 = vmatprep.subr.mxu0 0.0
  %8450 = vmatpush1.xpose.msra.mxu0 %v8034
  %8451 = vmatprep.subr.mxu0 0.0
  %8452 = vmatpush1.xpose.msra.mxu0 %v8036
  %8453 = vmatprep.subr.mxu0 0.0
  %8454 = vmatpush1.xpose.msra.mxu0 %v8038
  %8455 = vmatprep.subr.mxu0 0.0
  %8456 = vmatpush1.xpose.msra.mxu0 %v8040
  %8457 = vmatprep.subr.mxu0 0.0
  %8458 = vmatpush1.xpose.msra.mxu0 %v8042
  %8459 = vmatprep.subr.mxu0 0.0
  %8460 = vmatpush1.xpose.msra.mxu0 %v8044
  %8461 = vmatprep.subr.mxu0 0.0
  %8462 = vmatpush1.xpose.msra.mxu0 %v8046
  %8463 = vmatprep.subr.mxu0 0.0
  %8464 = vmatpush1.xpose.msra.mxu0 %v8048
  %8465 = vmatprep.subr.mxu0 0.0
  %8466 = vmatpush1.xpose.msra.mxu0 %v8050
  %8467 = vmatprep.subr.mxu0 0.0
  %8468 = vmatpush1.xpose.msra.mxu0 %v8052
  %8469 = vmatprep.subr.mxu0 0.0
  %8470 = vmatpush1.xpose.msra.mxu0 %v8054
  %8471 = vmatprep.subr.mxu0 0.0
  %8472 = vmatpush1.xpose.msra.mxu0 %v8056
  %8473 = vmatprep.subr.mxu0 0.0
  %8474 = vmatpush1.xpose.msra.mxu0 %v8058
  %8475 = vmatprep.subr.mxu0 0.0
  %8476 = vmatpush1.xpose.msra.mxu0 %v8060
  %8477 = vmatprep.subr.mxu0 0.0
  %8478 = vmatpush1.xpose.msra.mxu0 %v8062
  %8479 = vmatprep.subr.mxu0 0.0
  %8480 = vmatpush1.xpose.msra.mxu0 %v8064
  %8481 = vmatprep.subr.mxu0 0.0
  %8482 = vmatpush1.xpose.msra.mxu0 %v8066
  %8483 = vmatprep.subr.mxu0 0.0
  %8484 = vmatpush1.xpose.msra.mxu0 %v8068
  %8485 = vmatprep.subr.mxu0 0.0
  %8486 = vmatpush1.xpose.msra.mxu0 %v8070
  %8487 = vmatprep.subr.mxu0 0.0
  %8488 = vmatpush1.xpose.msra.mxu0 %v8072
  %8489 = vmatprep.subr.mxu0 0.0
  %8490 = vmatpush1.xpose.msra.mxu0 %v8074
  %8491 = vmatprep.subr.mxu0 0.0
  %8492 = vmatpush1.xpose.msra.mxu0 %v8076
  %8493 = vmatprep.subr.mxu0 0.0
  %8494 = vmatpush1.xpose.msra.mxu0 %v8078
  %8495 = vmatprep.subr.mxu0 0.0
  %8496 = vmatpush1.xpose.msra.mxu0 %v8080
  %8497 = vmatprep.subr.mxu0 0.0
  %8498 = vmatpush1.xpose.msra.mxu0 %v8082
  %8499 = vmatprep.subr.mxu0 0.0
  %8500 = vmatpush1.xpose.msra.mxu0 %v8084
  %8501 = vmatprep.subr.mxu0 0.0
  %8502 = vmatpush1.xpose.msra.mxu0 %v8086
  %8503 = vmatprep.subr.mxu0 0.0
  %8504 = vmatpush1.xpose.msra.mxu0 %v8088
  %8505 = vmatprep.subr.mxu0 0.0
  %8506 = vmatpush1.xpose.msra.mxu0 %v8090
  %8507 = vmatprep.subr.mxu0 0.0
  %8508 = vmatpush1.xpose.msra.mxu0 %v8092
  %8509 = vmatprep.subr.mxu0 0.0
  %8510 = vmatpush1.xpose.msra.mxu0 %v8030
  %8511 = vmatprep.subr.mxu0 0.0
  %8512 = vmatpush1.xpose.msra.mxu0 %v8032
  %8513 = vmatprep.mubr.f32.mxu0 0.0
  %8514 = vmatmul.mubr.f32.gmra.mrb[0].mxu0 %v7968
  %v8515 = vpop.f32.mrb[0].mxu0
  %v8516 = vadd.f32 %v8445, %v8515
  %v8517 = vpop.f32.mrb[0].mxu0
  %v8518 = vadd.f32 %v8447, %v8517
  %8519 = vdwg.mxu0
  %v8520 = vtanh.pop %v8303
  %v8521 = vtanh.pop %v8305
  %v8522 = vtanh.pop %v8516
  %v8523 = vtanh.pop %v8518
  %v8526 = vcombine.low %v8520, %v8521
  %8528 = vst [vmem:[%s15] sm:$0x77] %v8526
  %v8531 = vcombine.low %v8522, %v8523
  %s8533 = scalar_lea.vmem %s15, 8
  %8534 = vst [vmem:[%s8533] sm:$0x77] %v8531
  // Predicated region
  $region62: #{generator_forward.1} parent=0 // pred_check
    _
  $region63: #{generator_forward.1} parent=0 // pred_check_branch
    %8536 = sbr.rel (0) target = $region65
  $region64: #{generator_forward.1} parent=0 // pred_region
    _
  $region65: #{generator_forward.1} parent=0 // pred_fallthru
    _
  // Predicated region
  $region66: #{generator_forward.1} parent=0 // pred_check
    _
  $region67: #{generator_forward.1} parent=0 // pred_check_branch
    %8538 = sbr.rel (0) target = $region69
  $region68: #{generator_forward.1} parent=0 // pred_region
    _
  $region69: #{generator_forward.1} parent=0 // pred_fallthru
    _

</llo_original>
